<compile_context>
chip_gen: v7x
topology: tpu7x:2x2x1
jax: 0.10.0
libtpu: 0.0.40
codegen_flags: <defaults>
</compile_context>

<pallas_src>
import functools

import jax
import jax.numpy as jnp
from jax import lax
from jax.experimental import pallas as pl
from jax.experimental.pallas import tpu as pltpu

_EPS = 1e-5
_HALO = 4          # rows in the extra halo block of the row-tiled fallback path


# ------------------------------ small helpers -------------------------------

def _itemsize(dt):
    return jnp.dtype(dt).itemsize


def _vmem_budget():
    """(vmem_limit_bytes for CompilerParams, per-step tile-footprint budget)."""
    try:
        cap = int(pltpu.get_tpu_info().vmem_capacity_bytes)
    except Exception:
        cap = 64 * 1024 * 1024                      # conservative (v7x-sized) default
    limit = min((cap * 3) // 4, 96 * 1024 * 1024)   # ~48 MiB on v7x, 96 MiB v5e/v6e
    return limit, (limit * 3) // 4


def _window(x_refs, split):
    """Return the (TH+4, W+2, C) haloed input window held in VMEM."""
    if split:
        # Row-tiled fallback: window arrives as two disjoint blocks (TH + 4 rows).
        # TODO(synk): an element-offset (overlapping) BlockSpec would hand the
        # kernel a single ref and drop this in-VMEM concat.
        xa_ref, xb_ref = x_refs
        return jnp.concatenate([xa_ref[...], xb_ref[...]], axis=0)
    (x_ref,) = x_refs
    return x_ref[...]


def _shifted_cols(xwin, w):
    """The three kx-shifted (rows, w, C) views of a column-padded window.

    Built once per conv, so only 3 (instead of 9) sublane-unaligned column
    copies happen; the per-(ky,kx) taps are cheap row slices of these.
    TODO(synk): move the kx=1,2 shifts to the XLU with pltpu.roll once sublane
    rotates of non-multiple-of-8 extents lower reliably.
    """
    return [xwin[:, kx:kx + w, :] for kx in range(3)]


def _conv3x3(xcols, row0, rows, w_ref, w, cin, mmdt, packed):
    """3x3 'valid' conv over `rows` output rows starting at window row `row0`.

    xcols: 3 column-shifted windows, each (>= row0+rows+2, w, cin), matmul dtype.
    w_ref: (9*cin, cout) packed weights, tap order (ky, kx, cin).
    Returns (rows*w, cout) float32.
    """
    if packed:
        # Single K = 9*cin GEMM: best MXU fill for >=128-channel stages.
        taps = [xcols[kx][row0 + ky:row0 + ky + rows]
                for ky in range(3) for kx in range(3)]
        patch = jnp.concatenate(taps, axis=-1).reshape(rows * w, 9 * cin)
        return jnp.dot(patch.astype(mmdt), w_ref[...],
                       preferred_element_type=jnp.float32)
    # Narrow channels: nine accumulating K=cin dots avoid the lane-repacking
    # concat of sub-128-wide taps.
    acc = None
    for ky in range(3):
        for kx in range(3):
            tap = xcols[kx][row0 + ky:row0 + ky + rows]
            tap = tap.reshape(rows * w, cin).astype(mmdt)
            k0 = (ky * 3 + kx) * cin
            y = jnp.dot(tap, w_ref[k0:k0 + cin, :],
                        preferred_element_type=jnp.float32)
            acc = y if acc is None else acc + y
    return acc


def _partial_stats(y):
    # y: (M, C) f32 -> per-channel partial (sum, sum-of-squares), each (1, C).
    return y.sum(axis=0, keepdims=True), (y * y).sum(axis=0, keepdims=True)


def _bn_affine(psum, psumsq, count, gamma, beta):
    # Fold BN (batch statistics, biased variance) into per-channel scale/shift.
    mean = psum / count
    var = jnp.maximum(psumsq / count - mean * mean, 0.0)   # cancellation guard
    scale = gamma * lax.rsqrt(var + _EPS)
    shift = beta - mean * scale
    return scale, shift


# --------------------------------- kernels ----------------------------------

def _bn1_stats_kernel(*refs, th, w, cin, mmdt, packed, split):
    """Pass 1: conv1 on this tile's rows only; emit BN1 partial statistics."""
    nx = 2 if split else 1
    x_refs = refs[:nx]
    w1_ref, s_ref, q_ref = refs[nx:]
    xwin = _window(x_refs, split)                         # (th+4, w+2, cin)
    xcols = _shifted_cols(xwin, w)
    y1 = _conv3x3(xcols, 1, th, w1_ref, w, cin, mmdt, packed)
    s, q = _partial_stats(y1)
    s_ref[...] = s
    q_ref[...] = q


def _main_kernel(*refs, th, h, w, cin, p, mmdt, packed1, packed2, proj, split):
    """Pass 2 (fused): conv1 -> BN1(scale/shift) -> ReLU -> conv2 plus the 1x1
    shortcut conv (or identity slice); h1 stays entirely in VMEM.  Emits the
    pre-BN conv2 / shortcut tensors (matmul dtype) and their partial stats."""
    nx = 2 if split else 1
    x_refs = refs[:nx]
    i = nx
    w1_ref, a1_ref, b1_ref, w2_ref = refs[i:i + 4]
    i += 4
    if proj:
        ws_ref = refs[i]
        i += 1
        y2_ref, sc_ref, s2_ref, q2_ref, ss_ref, qs_ref = refs[i:]
    else:
        y2_ref, sc_ref, s2_ref, q2_ref = refs[i:]

    r = pl.program_id(1)
    xwin = _window(x_refs, split)                         # (th+4, w+2, cin)
    xcols = _shifted_cols(xwin, w)

    # conv1 over th+2 rows (one-row halo each side, needed by conv2).
    y1 = _conv3x3(xcols, 0, th + 2, w1_ref, w, cin, mmdt, packed1)
    h1 = jnp.maximum(y1 * a1_ref[...] + b1_ref[...], 0.0)          # BN1 + ReLU (f32)
    h1 = h1.reshape(th + 2, w, p)

    # Halo rows outside the image must be conv2's zero padding, not
    # relu(bn1(conv1(zero-padded x))).
    grow = lax.broadcasted_iota(jnp.int32, (th + 2, 1, 1), 0) + (r * th - 1)
    h1 = jnp.where((grow >= 0) & (grow < h), h1, 0.0)
    h1 = h1.astype(mmdt)                                  # cast once, before taps

    zcol = jnp.zeros((th + 2, 1, p), mmdt)
    h1p = jnp.concatenate([zcol, h1, zcol], axis=1)       # (th+2, w+2, p)
    hcols = _shifted_cols(h1p, w)
    y2 = _conv3x3(hcols, 0, th, w2_ref, w, p, mmdt, packed2)       # (th*w, p) f32

    # Store in the matmul dtype (halves pass-3 traffic); stats are taken from
    # the rounded values so pass 3 matches the reference convention exactly.
    y2r = y2.astype(mmdt)
    y2_ref[...] = y2r.reshape(th, w, p)
    s2, q2 = _partial_stats(y2r.astype(jnp.float32))
    s2_ref[...] = s2
    q2_ref[...] = q2

    xs = xwin[2:th + 2, 1:w + 1, :]                       # this tile's unpadded input
    if proj:
        ysc = jnp.dot(xs.reshape(th * w, cin).astype(mmdt), ws_ref[...],
                      preferred_element_type=jnp.float32)
        yscr = ysc.astype(mmdt)
        sc_ref[...] = yscr.reshape(th, w, p)
        ss, qs = _partial_stats(yscr.astype(jnp.float32))
        ss_ref[...] = ss
        qs_ref[...] = qs
    else:
        sc_ref[...] = xs.astype(mmdt)                     # identity shortcut


def _finish_kernel(y2_ref, sc_ref, a2_ref, b2_ref, *rest, proj):
    """Pass 3: BN2 scale/shift + shortcut (BN_s scale/shift or identity) + ReLU."""
    if proj:
        as_ref, bs_ref, out_ref = rest
        short = (sc_ref[...].astype(jnp.float32) * as_ref[...].reshape(1, 1, -1)
                 + bs_ref[...].reshape(1, 1, -1))
    else:
        (out_ref,) = rest
        short = sc_ref[...].astype(jnp.float32)
    main = (y2_ref[...].astype(jnp.float32) * a2_ref[...].reshape(1, 1, -1)
            + b2_ref[...].reshape(1, 1, -1))
    out_ref[...] = jnp.maximum(main + short, 0.0)


# --------------------------------- wrapper -----------------------------------

class BasicBlockPallas:
    expansion = 1

    def __init__(self, in_planes, planes, stride=1, key=None,
                 matmul_dtype=jnp.bfloat16, row_tile=None):
        if stride != 1:
            # TODO(synk): strided 3x3 / 1x1 convolutions (downsampling blocks).
            raise NotImplementedError("stride != 1 not supported in this Pallas port")
        key = jax.random.PRNGKey(0) if key is None else key
        ks = jax.random.split(key, 9)
        self.in_planes, self.planes = in_planes, planes
        self.matmul_dtype = matmul_dtype
        self.row_tile = row_tile

        # f32 master weights (HWIO) + BN affine parameters.
        self.w1 = 0.1 * jax.random.normal(ks[0], (3, 3, in_planes, planes), jnp.float32)
        self.g1 = 1.0 + 0.1 * jax.random.normal(ks[1], (1, planes), jnp.float32)
        self.b1 = 0.1 * jax.random.normal(ks[2], (1, planes), jnp.float32)
        self.w2 = 0.1 * jax.random.normal(ks[3], (3, 3, planes, planes), jnp.float32)
        self.g2 = 1.0 + 0.1 * jax.random.normal(ks[4], (1, planes), jnp.float32)
        self.b2 = 0.1 * jax.random.normal(ks[5], (1, planes), jnp.float32)

        self.use_proj = (stride != 1) or (in_planes != self.expansion * planes)
        if self.use_proj:
            self.ws = 0.1 * jax.random.normal(ks[6], (in_planes, planes), jnp.float32)
            self.gs = 1.0 + 0.1 * jax.random.normal(ks[7], (1, planes), jnp.float32)
            self.bs = 0.1 * jax.random.normal(ks[8], (1, planes), jnp.float32)

        # GEMM-packed conv weights (K = 9*Cin, tap order ky,kx,cin).
        self.w1p = self.w1.reshape(9 * in_planes, planes).astype(matmul_dtype)
        self.w2p = self.w2.reshape(9 * planes, planes).astype(matmul_dtype)
        if self.use_proj:
            self.wsp = self.ws.astype(matmul_dtype)

        self._vmem_limit, self._tile_budget = _vmem_budget()

    # -- generation/VMEM-aware row-tile selection ------------------------------
    def _choose_tile(self, H, fits, prefer_split):
        if self.row_tile is not None:
            th = int(self.row_tile)
            if H % th != 0 or (th != H and th % _HALO != 0):
                raise NotImplementedError(
                    "row_tile must divide H and be a multiple of 4 (or equal H)")
            return th, th != H
        split_cands = [t for t in range(_HALO, H, _HALO) if H % t == 0 and fits(t)]
        if prefer_split and split_cands:
            return max(split_cands), True
        if fits(H):
            return H, False                       # whole rows -> single ref, no halo
        if split_cands:
            return max(split_cands), True
        # TODO(synk): ragged row tiling for shapes whose H has no suitable divisor.
        raise NotImplementedError("no row tile fits the VMEM budget for this shape")

    def __call__(self, x_nchw):
        N, C, H, W = x_nchw.shape
        assert C == self.in_planes
        P = self.planes
        md = self.matmul_dtype
        isz = _itemsize(md)
        proj = self.use_proj
        packed1 = C >= 128
        packed2 = P >= 128
        Wp = W + 2

        # The only wrapper-side HBM copy of the input: NCHW -> NHWC, cast to the
        # matmul dtype and pad (2 rows / 1 column each side) in one fused op.
        # TODO(synk): keep activations NHWC + pre-padded across a chain of blocks
        # so even this copy (and the output transpose) disappears.
        xp = jnp.pad(jnp.transpose(x_nchw, (0, 2, 3, 1)).astype(md),
                     ((0, 0), (2, 2), (1, 1), (0, 0)))

        slack = 2 * 1024 * 1024

        def fits1(th):   # pass 1: window + shifted cols + conv1 temporaries
            win = 2 * (th + 4) * Wp * C * isz                  # double-buffered input
            cols = 3 * (th + 4) * W * C * isz
            tmp = th * W * (9 * C if packed1 else C) * isz + th * W * P * 4
            wts = 2 * 9 * C * P * isz
            return win + cols + tmp + wts + slack <= self._tile_budget

        def fits2(th):   # pass 2: + h1 / conv2 / outputs / all weights
            win = 2 * (th + 4) * Wp * C * isz
            cols = 3 * (th + 4) * W * C * isz
            c1 = (th + 2) * W * (9 * C if packed1 else C) * isz + (th + 2) * W * P * 4
            h1b = (th + 2) * W * P * (4 + isz) + (th + 2) * Wp * P * isz
            hcols = 3 * (th + 2) * W * P * isz
            c2 = th * W * (9 * P if packed2 else P) * isz + th * W * P * 4
            outs = 2 * 2 * th * W * P * isz                    # y2 + sc, double-buffered
            wts = 2 * (9 * C * P + 9 * P * P + (C * P if proj else 0)) * isz
            return (win + cols + c1 + h1b + hcols + c2 + outs + wts + slack
                    <= self._tile_budget)

        def fits3(th):   # pass 3: y2 + sc in, f32 out, all double-buffered
            return 2 * th * W * P * (2 * isz + 4) + slack <= self._tile_budget

        prefer_split = (N == 1)    # keep >= 2 parallel grid points for v7x's 2 TCs
        th1, split1 = self._choose_tile(H, fits1, prefer_split)
        th2, split2 = self._choose_tile(H, fits2, prefer_split)
        th3, _ = self._choose_tile(H, fits3, False)
        rt1, rt2, rt3 = H // th1, H // th2, H // th3

        cparams = pltpu.CompilerParams(
            dimension_semantics=("parallel", "parallel"),     # megacore on v7x
            vmem_limit_bytes=self._vmem_limit)

        def x_specs(th, split):
            if not split:
                return [pl.BlockSpec((None, H + 4, Wp, C), lambda n, r: (n, 0, 0, 0))]

            def halo_map(n, r):
                return (n, (r + 1) * (th // _HALO), 0, 0)
            return [pl.BlockSpec((None, th, Wp, C), lambda n, r: (n, r, 0, 0)),
                    pl.BlockSpec((None, _HALO, Wp, C), halo_map)]

        def _full(shape):
            # Constant-index-map operands (weights, BN scale/shift vectors).
            # TODO(synk): pipeline_mode=pl.Buffered(1) would single-buffer these
            # and save VMEM for wide-channel stages (v7x).
            zeros = (0,) * len(shape)
            return pl.BlockSpec(shape, lambda n, r: zeros)

        def _act_spec(th):
            return pl.BlockSpec((None, th, W, P), lambda n, r: (n, r, 0, 0))

        def _stat_spec(rt):
            return pl.BlockSpec((None, 1, P), lambda n, r: (n * rt + r, 0, 0))

        count = float(N * H * W)
        xp_bytes = xp.size * isz

        # -------- pass 1: BN1 batch statistics --------------------------------
        k1 = functools.partial(_bn1_stats_kernel, th=th1, w=W, cin=C, mmdt=md,
                               packed=packed1, split=split1)
        stat_shape1 = jax.ShapeDtypeStruct((N * rt1, 1, P), jnp.float32)
        s1, q1 = pl.pallas_call(
            k1, grid=(N, rt1),
            in_specs=x_specs(th1, split1) + [_full((9 * C, P))],
            out_specs=[_stat_spec(rt1), _stat_spec(rt1)],
            out_shape=[stat_shape1, stat_shape1],
            compiler_params=cparams,
            cost_estimate=pl.CostEstimate(
                flops=2 * N * H * W * 9 * C * P, transcendentals=0,
                bytes_accessed=xp_bytes + 9 * C * P * isz + 2 * N * rt1 * P * 4),
        )(*(([xp, xp] if split1 else [xp]) + [self.w1p]))
        sc1, sh1 = _bn_affine(s1.sum(axis=0), q1.sum(axis=0), count, self.g1, self.b1)

        # -------- pass 2: fused conv1 -> BN1 -> ReLU -> conv2 (+ shortcut) -----
        k2 = functools.partial(_main_kernel, th=th2, h=H, w=W, cin=C, p=P, mmdt=md,
                               packed1=packed1, packed2=packed2, proj=proj,
                               split=split2)
        in_specs2 = x_specs(th2, split2) + [
            _full((9 * C, P)), _full((1, P)), _full((1, P)), _full((9 * P, P))]
        operands2 = ([xp, xp] if split2 else [xp]) + [self.w1p, sc1, sh1, self.w2p]
        if proj:
            in_specs2.append(_full((C, P)))
            operands2.append(self.wsp)
        act_shape_md = jax.ShapeDtypeStruct((N, H, W, P), md)
        stat_shape2 = jax.ShapeDtypeStruct((N * rt2, 1, P), jnp.float32)
        n_stats = 4 if proj else 2
        out_specs2 = [_act_spec(th2), _act_spec(th2)] + [_stat_spec(rt2)] * n_stats
        out_shape2 = [act_shape_md, act_shape_md] + [stat_shape2] * n_stats
        flops2 = 2 * N * H * W * (9 * C * P + 9 * P * P + (C * P if proj else 0))
        res = pl.pallas_call(
            k2, grid=(N, rt2), in_specs=in_specs2, out_specs=out_specs2,
            out_shape=out_shape2, compiler_params=cparams,
            cost_estimate=pl.CostEstimate(
                flops=flops2, transcendentals=0,
                bytes_accessed=xp_bytes + 2 * N * H * W * P * isz
                               + (9 * C * P + 9 * P * P) * isz),
        )(*operands2)
        if proj:
            y2, sc, s2, q2, ss, qs = res
        else:
            y2, sc, s2, q2 = res
        sc2, sh2 = _bn_affine(s2.sum(axis=0), q2.sum(axis=0), count, self.g2, self.b2)

        # -------- pass 3: BN2 + shortcut (+BN_s) + residual add + ReLU ---------
        k3 = functools.partial(_finish_kernel, proj=proj)
        in_specs3 = [_act_spec(th3), _act_spec(th3), _full((1, P)), _full((1, P))]
        operands3 = [y2, sc, sc2, sh2]
        if proj:
            scs, shs = _bn_affine(ss.sum(axis=0), qs.sum(axis=0), count,
                                  self.gs, self.bs)
            in_specs3 += [_full((1, P)), _full((1, P))]
            operands3 += [scs, shs]
        out = pl.pallas_call(
            k3, grid=(N, rt3), in_specs=in_specs3,
            out_specs=_act_spec(th3),
            out_shape=jax.ShapeDtypeStruct((N, H, W, P), jnp.float32),
            compiler_params=cparams,
            cost_estimate=pl.CostEstimate(
                flops=8 * N * H * W * P, transcendentals=0,
                bytes_accessed=N * H * W * P * (2 * isz + 4)),
        )(*operands3)

        return jnp.transpose(out, (0, 3, 1, 2))               # NHWC -> NCHW (f32)


# ------------------------- pure-JAX reference (check) -------------------------

def _reference(block, x_nchw):
    """Pure-JAX reference with the same mixed-precision convention:
    conv/matmul operands cast to block.matmul_dtype (f32 accumulation), the
    padded input / y2 / shortcut stored once in that dtype, f32 training-mode
    BatchNorm with batch statistics."""
    md = block.matmul_dtype

    def conv3(x, w):
        return lax.conv_general_dilated(
            x.astype(md), w.astype(md), (1, 1), "SAME",
            dimension_numbers=("NHWC", "HWIO", "NHWC"),
            preferred_element_type=jnp.float32)

    def bn(y, g, b):
        mean = jnp.mean(y, axis=(0, 1, 2), keepdims=True)
        var = jnp.mean((y - mean) ** 2, axis=(0, 1, 2), keepdims=True)
        return ((y - mean) * lax.rsqrt(var + _EPS) * g.reshape(1, 1, 1, -1)
                + b.reshape(1, 1, 1, -1))

    x = jnp.transpose(x_nchw, (0, 2, 3, 1)).astype(jnp.float32)
    x_md = x.astype(md).astype(jnp.float32)                   # one input rounding
    h1 = jax.nn.relu(bn(conv3(x_md, block.w1), block.g1, block.b1))
    y2 = conv3(h1, block.w2).astype(md).astype(jnp.float32)   # y2 storage rounding
    y2 = bn(y2, block.g2, block.b2)
    if block.use_proj:
        scv = jnp.einsum("nhwc,cd->nhwd", x_md.astype(md), block.ws.astype(md),
                         preferred_element_type=jnp.float32)
        scv = scv.astype(md).astype(jnp.float32)
        scv = bn(scv, block.gs, block.bs)
    else:
        scv = x_md                                            # identity (md storage)
    out = jax.nn.relu(y2 + scv)
    return jnp.transpose(out, (0, 3, 1, 2))


if __name__ == "__main__":
    key = jax.random.PRNGKey(0)
    kx, kp1, kp2 = jax.random.split(key, 3)
    x = jax.random.normal(kx, (2, 4, 16, 16), jnp.float32)    # NCHW, like PyTorch

    # 1) projection-shortcut block (in_planes != planes), auto whole-image tiling.
    blk_proj = BasicBlockPallas(in_planes=4, planes=8, stride=1, key=kp1)
    out_p = jax.block_until_ready(jax.jit(blk_proj.__call__)(x))
    assert out_p.shape == (2, 8, 16, 16)
    ref_p = _reference(blk_proj, x)
    err_p = float(jnp.max(jnp.abs(out_p - ref_p)))
    assert jnp.allclose(out_p, ref_p, rtol=2e-2, atol=2e-2), f"proj max err {err_p}"

    # 2) identity-shortcut block with forced row_tile=8: exercises the row-tiled
    #    halo path (cross-tile BN statistics, halo masking, split window).
    blk_id = BasicBlockPallas(in_planes=4, planes=4, stride=1, key=kp2, row_tile=8)
    out_i = jax.block_until_ready(jax.jit(blk_id.__call__)(x))
    assert out_i.shape == (2, 4, 16, 16)
    ref_i = _reference(blk_id, x)
    err_i = float(jnp.max(jnp.abs(out_i - ref_i)))
    assert jnp.allclose(out_i, ref_i, rtol=2e-2, atol=2e-2), f"identity max err {err_i}"

    print("KERNEL_OK")
</pallas_src>

<mosaic_0001>
module attributes {stable_mosaic.version = 11 : i64} {
  func.func @_bn1_stats_kernel(%arg0: i32, %arg1: i32, %arg2: memref<1x20x18x4xbf16, #tpu.memory_space<vmem>>, %arg3: memref<36x8xbf16, #tpu.memory_space<vmem>>, %arg4: memref<1x1x8xf32, #tpu.memory_space<vmem>>, %arg5: memref<1x1x8xf32, #tpu.memory_space<vmem>>) attributes {dimension_semantics = [#tpu.dimension_semantics<parallel>, #tpu.dimension_semantics<parallel>], iteration_bounds = array<i64: 2, 1>, scalar_prefetch = 0 : i64, scratch_operands = 0 : i64, tpu.core_type = #tpu.core_type<tc>, window_params = [{transform_indices = @transform_0, window_bounds = array<i64: 1, 20, 18, 4>}, {pipeline_mode = #tpu.pipeline_mode<synchronous>, transform_indices = @transform_1, window_bounds = array<i64: 36, 8>}, {transform_indices = @transform_2, window_bounds = array<i64: 1, 1, 8>}, {transform_indices = @transform_3, window_bounds = array<i64: 1, 1, 8>}]} {
    %c0 = arith.constant 0 : index
    %c0_0 = arith.constant 0 : index
    %c0_1 = arith.constant 0 : index
    %c0_2 = arith.constant 0 : index
    %0 = vector.load %arg2[%c0, %c0_0, %c0_1, %c0_2] : memref<1x20x18x4xbf16, #tpu.memory_space<vmem>>, vector<1x20x18x4xbf16>
    %1 = vector.shape_cast %0 : vector<1x20x18x4xbf16> to vector<20x18x4xbf16>
    %2 = vector.extract_strided_slice %1 {offsets = [0, 0, 0], sizes = [20, 16, 4], strides = [1, 1, 1]} : vector<20x18x4xbf16> to vector<20x16x4xbf16>
    %3 = vector.extract_strided_slice %1 {offsets = [0, 1, 0], sizes = [20, 16, 4], strides = [1, 1, 1]} : vector<20x18x4xbf16> to vector<20x16x4xbf16>
    %4 = vector.extract_strided_slice %1 {offsets = [0, 2, 0], sizes = [20, 16, 4], strides = [1, 1, 1]} : vector<20x18x4xbf16> to vector<20x16x4xbf16>
    %5 = vector.extract_strided_slice %2 {offsets = [1, 0, 0], sizes = [16, 16, 4], strides = [1, 1, 1]} : vector<20x16x4xbf16> to vector<16x16x4xbf16>
    %6 = vector.shape_cast %5 : vector<16x16x4xbf16> to vector<256x4xbf16>
    %c0_3 = arith.constant 0 : index
    %c0_4 = arith.constant 0 : index
    %7 = vector.load %arg3[%c0_3, %c0_4] : memref<36x8xbf16, #tpu.memory_space<vmem>>, vector<4x8xbf16>
    %cst = arith.constant dense<0.000000e+00> : vector<256x8xf32>
    %8 = tpu.matmul %6, %7, %cst {dimension_numbers = #tpu.dot_dimension_numbers<[1], [0], [0], [1], [0, 0, 1, 1], [], []>} : vector<256x4xbf16>, vector<4x8xbf16>, vector<256x8xf32> -> vector<256x8xf32>
    %9 = vector.extract_strided_slice %3 {offsets = [1, 0, 0], sizes = [16, 16, 4], strides = [1, 1, 1]} : vector<20x16x4xbf16> to vector<16x16x4xbf16>
    %10 = vector.shape_cast %9 : vector<16x16x4xbf16> to vector<256x4xbf16>
    %c4 = arith.constant 4 : index
    %c0_5 = arith.constant 0 : index
    %11 = vector.load %arg3[%c4, %c0_5] : memref<36x8xbf16, #tpu.memory_space<vmem>>, vector<4x8xbf16>
    %cst_6 = arith.constant dense<0.000000e+00> : vector<256x8xf32>
    %12 = tpu.matmul %10, %11, %cst_6 {dimension_numbers = #tpu.dot_dimension_numbers<[1], [0], [0], [1], [0, 0, 1, 1], [], []>} : vector<256x4xbf16>, vector<4x8xbf16>, vector<256x8xf32> -> vector<256x8xf32>
    %13 = arith.addf %8, %12 : vector<256x8xf32>
    %14 = vector.extract_strided_slice %4 {offsets = [1, 0, 0], sizes = [16, 16, 4], strides = [1, 1, 1]} : vector<20x16x4xbf16> to vector<16x16x4xbf16>
    %15 = vector.shape_cast %14 : vector<16x16x4xbf16> to vector<256x4xbf16>
    %c8 = arith.constant 8 : index
    %c0_7 = arith.constant 0 : index
    %16 = vector.load %arg3[%c8, %c0_7] : memref<36x8xbf16, #tpu.memory_space<vmem>>, vector<4x8xbf16>
    %cst_8 = arith.constant dense<0.000000e+00> : vector<256x8xf32>
    %17 = tpu.matmul %15, %16, %cst_8 {dimension_numbers = #tpu.dot_dimension_numbers<[1], [0], [0], [1], [0, 0, 1, 1], [], []>} : vector<256x4xbf16>, vector<4x8xbf16>, vector<256x8xf32> -> vector<256x8xf32>
    %18 = arith.addf %13, %17 : vector<256x8xf32>
    %19 = vector.extract_strided_slice %2 {offsets = [2, 0, 0], sizes = [16, 16, 4], strides = [1, 1, 1]} : vector<20x16x4xbf16> to vector<16x16x4xbf16>
    %20 = vector.shape_cast %19 : vector<16x16x4xbf16> to vector<256x4xbf16>
    %c12 = arith.constant 12 : index
    %c0_9 = arith.constant 0 : index
    %21 = vector.load %arg3[%c12, %c0_9] : memref<36x8xbf16, #tpu.memory_space<vmem>>, vector<4x8xbf16>
    %cst_10 = arith.constant dense<0.000000e+00> : vector<256x8xf32>
    %22 = tpu.matmul %20, %21, %cst_10 {dimension_numbers = #tpu.dot_dimension_numbers<[1], [0], [0], [1], [0, 0, 1, 1], [], []>} : vector<256x4xbf16>, vector<4x8xbf16>, vector<256x8xf32> -> vector<256x8xf32>
    %23 = arith.addf %18, %22 : vector<256x8xf32>
    %24 = vector.extract_strided_slice %3 {offsets = [2, 0, 0], sizes = [16, 16, 4], strides = [1, 1, 1]} : vector<20x16x4xbf16> to vector<16x16x4xbf16>
    %25 = vector.shape_cast %24 : vector<16x16x4xbf16> to vector<256x4xbf16>
    %c16 = arith.constant 16 : index
    %c0_11 = arith.constant 0 : index
    %26 = vector.load %arg3[%c16, %c0_11] : memref<36x8xbf16, #tpu.memory_space<vmem>>, vector<4x8xbf16>
    %cst_12 = arith.constant dense<0.000000e+00> : vector<256x8xf32>
    %27 = tpu.matmul %25, %26, %cst_12 {dimension_numbers = #tpu.dot_dimension_numbers<[1], [0], [0], [1], [0, 0, 1, 1], [], []>} : vector<256x4xbf16>, vector<4x8xbf16>, vector<256x8xf32> -> vector<256x8xf32>
    %28 = arith.addf %23, %27 : vector<256x8xf32>
    %29 = vector.extract_strided_slice %4 {offsets = [2, 0, 0], sizes = [16, 16, 4], strides = [1, 1, 1]} : vector<20x16x4xbf16> to vector<16x16x4xbf16>
    %30 = vector.shape_cast %29 : vector<16x16x4xbf16> to vector<256x4xbf16>
    %c20 = arith.constant 20 : index
    %c0_13 = arith.constant 0 : index
    %31 = vector.load %arg3[%c20, %c0_13] : memref<36x8xbf16, #tpu.memory_space<vmem>>, vector<4x8xbf16>
    %cst_14 = arith.constant dense<0.000000e+00> : vector<256x8xf32>
    %32 = tpu.matmul %30, %31, %cst_14 {dimension_numbers = #tpu.dot_dimension_numbers<[1], [0], [0], [1], [0, 0, 1, 1], [], []>} : vector<256x4xbf16>, vector<4x8xbf16>, vector<256x8xf32> -> vector<256x8xf32>
    %33 = arith.addf %28, %32 : vector<256x8xf32>
    %34 = vector.extract_strided_slice %2 {offsets = [3, 0, 0], sizes = [16, 16, 4], strides = [1, 1, 1]} : vector<20x16x4xbf16> to vector<16x16x4xbf16>
    %35 = vector.shape_cast %34 : vector<16x16x4xbf16> to vector<256x4xbf16>
    %c24 = arith.constant 24 : index
    %c0_15 = arith.constant 0 : index
    %36 = vector.load %arg3[%c24, %c0_15] : memref<36x8xbf16, #tpu.memory_space<vmem>>, vector<4x8xbf16>
    %cst_16 = arith.constant dense<0.000000e+00> : vector<256x8xf32>
    %37 = tpu.matmul %35, %36, %cst_16 {dimension_numbers = #tpu.dot_dimension_numbers<[1], [0], [0], [1], [0, 0, 1, 1], [], []>} : vector<256x4xbf16>, vector<4x8xbf16>, vector<256x8xf32> -> vector<256x8xf32>
    %38 = arith.addf %33, %37 : vector<256x8xf32>
    %39 = vector.extract_strided_slice %3 {offsets = [3, 0, 0], sizes = [16, 16, 4], strides = [1, 1, 1]} : vector<20x16x4xbf16> to vector<16x16x4xbf16>
    %40 = vector.shape_cast %39 : vector<16x16x4xbf16> to vector<256x4xbf16>
    %c28 = arith.constant 28 : index
    %c0_17 = arith.constant 0 : index
    %41 = vector.load %arg3[%c28, %c0_17] : memref<36x8xbf16, #tpu.memory_space<vmem>>, vector<4x8xbf16>
    %cst_18 = arith.constant dense<0.000000e+00> : vector<256x8xf32>
    %42 = tpu.matmul %40, %41, %cst_18 {dimension_numbers = #tpu.dot_dimension_numbers<[1], [0], [0], [1], [0, 0, 1, 1], [], []>} : vector<256x4xbf16>, vector<4x8xbf16>, vector<256x8xf32> -> vector<256x8xf32>
    %43 = arith.addf %38, %42 : vector<256x8xf32>
    %44 = vector.extract_strided_slice %4 {offsets = [3, 0, 0], sizes = [16, 16, 4], strides = [1, 1, 1]} : vector<20x16x4xbf16> to vector<16x16x4xbf16>
    %45 = vector.shape_cast %44 : vector<16x16x4xbf16> to vector<256x4xbf16>
    %c32 = arith.constant 32 : index
    %c0_19 = arith.constant 0 : index
    %46 = vector.load %arg3[%c32, %c0_19] : memref<36x8xbf16, #tpu.memory_space<vmem>>, vector<4x8xbf16>
    %cst_20 = arith.constant dense<0.000000e+00> : vector<256x8xf32>
    %47 = tpu.matmul %45, %46, %cst_20 {dimension_numbers = #tpu.dot_dimension_numbers<[1], [0], [0], [1], [0, 0, 1, 1], [], []>} : vector<256x4xbf16>, vector<4x8xbf16>, vector<256x8xf32> -> vector<256x8xf32>
    %48 = arith.addf %43, %47 : vector<256x8xf32>
    %cst_21 = arith.constant dense<0.000000e+00> : vector<8xf32>
    %49 = vector.multi_reduction <add>, %48, %cst_21 [0] : vector<256x8xf32> to vector<8xf32>
    %50 = vector.shape_cast %49 : vector<8xf32> to vector<1x8xf32>
    %51 = arith.mulf %48, %48 : vector<256x8xf32>
    %cst_22 = arith.constant dense<0.000000e+00> : vector<8xf32>
    %52 = vector.multi_reduction <add>, %51, %cst_22 [0] : vector<256x8xf32> to vector<8xf32>
    %53 = vector.shape_cast %52 : vector<8xf32> to vector<1x8xf32>
    %c0_23 = arith.constant 0 : index
    %c0_24 = arith.constant 0 : index
    %c0_25 = arith.constant 0 : index
    %54 = vector.load %arg4[%c0_23, %c0_24, %c0_25] : memref<1x1x8xf32, #tpu.memory_space<vmem>>, vector<1x1x8xf32>
    %55 = vector.shape_cast %54 : vector<1x1x8xf32> to vector<1x8xf32>
    %56 = vector.shape_cast %50 : vector<1x8xf32> to vector<1x1x8xf32>
    tpu.vector_store %arg4[%c0_23, %c0_24, %c0_25], %56 {strides = array<i32>} : memref<1x1x8xf32, #tpu.memory_space<vmem>>, vector<1x1x8xf32>,
    %c0_26 = arith.constant 0 : index
    %c0_27 = arith.constant 0 : index
    %c0_28 = arith.constant 0 : index
    %57 = vector.load %arg5[%c0_26, %c0_27, %c0_28] : memref<1x1x8xf32, #tpu.memory_space<vmem>>, vector<1x1x8xf32>
    %58 = vector.shape_cast %57 : vector<1x1x8xf32> to vector<1x8xf32>
    %59 = vector.shape_cast %53 : vector<1x8xf32> to vector<1x1x8xf32>
    tpu.vector_store %arg5[%c0_26, %c0_27, %c0_28], %59 {strides = array<i32>} : memref<1x1x8xf32, #tpu.memory_space<vmem>>, vector<1x1x8xf32>,
    return
  }
  func.func @transform_0(%arg0: i32, %arg1: i32) -> (i32, i32, i32, i32) {
    %c0_i32 = arith.constant 0 : i32
    %c0_i32_0 = arith.constant 0 : i32
    %c0_i32_1 = arith.constant 0 : i32
    %c0_i32_2 = arith.constant 0 : i32
    return %arg0, %c0_i32, %c0_i32_0, %c0_i32_1 : i32, i32, i32, i32
  }
  func.func @transform_1(%arg0: i32, %arg1: i32) -> (i32, i32) {
    %c0_i32 = arith.constant 0 : i32
    %c0_i32_0 = arith.constant 0 : i32
    %c0_i32_1 = arith.constant 0 : i32
    return %c0_i32, %c0_i32_0 : i32, i32
  }
  func.func @transform_2(%arg0: i32, %arg1: i32) -> (i32, i32, i32) {
    %c1_i32 = arith.constant 1 : i32
    %0 = arith.muli %arg0, %c1_i32 : i32
    %1 = arith.addi %0, %arg1 : i32
    %c0_i32 = arith.constant 0 : i32
    %c0_i32_0 = arith.constant 0 : i32
    %c0_i32_1 = arith.constant 0 : i32
    return %1, %c0_i32, %c0_i32_0 : i32, i32, i32
  }
  func.func @transform_3(%arg0: i32, %arg1: i32) -> (i32, i32, i32) {
    %c1_i32 = arith.constant 1 : i32
    %0 = arith.muli %arg0, %c1_i32 : i32
    %1 = arith.addi %0, %arg1 : i32
    %c0_i32 = arith.constant 0 : i32
    %c0_i32_0 = arith.constant 0 : i32
    %c0_i32_1 = arith.constant 0 : i32
    return %1, %c0_i32, %c0_i32_0 : i32, i32, i32
  }
}

module attributes {stable_mosaic.version = 11 : i64} {
  func.func @_finish_kernel(%arg0: i32, %arg1: i32, %arg2: memref<1x16x16x8xbf16, #tpu.memory_space<vmem>>, %arg3: memref<1x16x16x8xbf16, #tpu.memory_space<vmem>>, %arg4: memref<1x8xf32, #tpu.memory_space<vmem>>, %arg5: memref<1x8xf32, #tpu.memory_space<vmem>>, %arg6: memref<1x8xf32, #tpu.memory_space<vmem>>, %arg7: memref<1x8xf32, #tpu.memory_space<vmem>>, %arg8: memref<1x16x16x8xf32, #tpu.memory_space<vmem>>) attributes {dimension_semantics = [#tpu.dimension_semantics<parallel>, #tpu.dimension_semantics<parallel>], iteration_bounds = array<i64: 2, 1>, scalar_prefetch = 0 : i64, scratch_operands = 0 : i64, tpu.core_type = #tpu.core_type<tc>, window_params = [{transform_indices = @transform_0, window_bounds = array<i64: 1, 16, 16, 8>}, {transform_indices = @transform_1, window_bounds = array<i64: 1, 16, 16, 8>}, {pipeline_mode = #tpu.pipeline_mode<synchronous>, transform_indices = @transform_2, window_bounds = array<i64: 1, 8>}, {pipeline_mode = #tpu.pipeline_mode<synchronous>, transform_indices = @transform_3, window_bounds = array<i64: 1, 8>}, {pipeline_mode = #tpu.pipeline_mode<synchronous>, transform_indices = @transform_4, window_bounds = array<i64: 1, 8>}, {pipeline_mode = #tpu.pipeline_mode<synchronous>, transform_indices = @transform_5, window_bounds = array<i64: 1, 8>}, {transform_indices = @transform_6, window_bounds = array<i64: 1, 16, 16, 8>}]} {
    %c0 = arith.constant 0 : index
    %c0_0 = arith.constant 0 : index
    %c0_1 = arith.constant 0 : index
    %c0_2 = arith.constant 0 : index
    %0 = vector.load %arg3[%c0, %c0_0, %c0_1, %c0_2] : memref<1x16x16x8xbf16, #tpu.memory_space<vmem>>, vector<1x16x16x8xbf16>
    %1 = vector.shape_cast %0 : vector<1x16x16x8xbf16> to vector<16x16x8xbf16>
    %2 = arith.extf %1 : vector<16x16x8xbf16> to vector<16x16x8xf32>
    %c0_3 = arith.constant 0 : index
    %c0_4 = arith.constant 0 : index
    %3 = vector.load %arg6[%c0_3, %c0_4] : memref<1x8xf32, #tpu.memory_space<vmem>>, vector<1x8xf32>
    %4 = vector.shape_cast %3 : vector<1x8xf32> to vector<1x1x8xf32>
    %5 = vector.broadcast %4 : vector<1x1x8xf32> to vector<16x16x8xf32>
    %6 = arith.mulf %2, %5 : vector<16x16x8xf32>
    %c0_5 = arith.constant 0 : index
    %c0_6 = arith.constant 0 : index
    %7 = vector.load %arg7[%c0_5, %c0_6] : memref<1x8xf32, #tpu.memory_space<vmem>>, vector<1x8xf32>
    %8 = vector.shape_cast %7 : vector<1x8xf32> to vector<1x1x8xf32>
    %9 = vector.broadcast %8 : vector<1x1x8xf32> to vector<16x16x8xf32>
    %10 = arith.addf %6, %9 : vector<16x16x8xf32>
    %c0_7 = arith.constant 0 : index
    %c0_8 = arith.constant 0 : index
    %c0_9 = arith.constant 0 : index
    %c0_10 = arith.constant 0 : index
    %11 = vector.load %arg2[%c0_7, %c0_8, %c0_9, %c0_10] : memref<1x16x16x8xbf16, #tpu.memory_space<vmem>>, vector<1x16x16x8xbf16>
    %12 = vector.shape_cast %11 : vector<1x16x16x8xbf16> to vector<16x16x8xbf16>
    %13 = arith.extf %12 : vector<16x16x8xbf16> to vector<16x16x8xf32>
    %c0_11 = arith.constant 0 : index
    %c0_12 = arith.constant 0 : index
    %14 = vector.load %arg4[%c0_11, %c0_12] : memref<1x8xf32, #tpu.memory_space<vmem>>, vector<1x8xf32>
    %15 = vector.shape_cast %14 : vector<1x8xf32> to vector<1x1x8xf32>
    %16 = vector.broadcast %15 : vector<1x1x8xf32> to vector<16x16x8xf32>
    %17 = arith.mulf %13, %16 : vector<16x16x8xf32>
    %c0_13 = arith.constant 0 : index
    %c0_14 = arith.constant 0 : index
    %18 = vector.load %arg5[%c0_13, %c0_14] : memref<1x8xf32, #tpu.memory_space<vmem>>, vector<1x8xf32>
    %19 = vector.shape_cast %18 : vector<1x8xf32> to vector<1x1x8xf32>
    %20 = vector.broadcast %19 : vector<1x1x8xf32> to vector<16x16x8xf32>
    %21 = arith.addf %17, %20 : vector<16x16x8xf32>
    %22 = arith.addf %21, %10 : vector<16x16x8xf32>
    %cst = arith.constant 0.000000e+00 : f32
    %23 = vector.broadcast %cst : f32 to vector<16x16x8xf32>
    %24 = arith.maximumf %22, %23 : vector<16x16x8xf32>
    %c0_15 = arith.constant 0 : index
    %c0_16 = arith.constant 0 : index
    %c0_17 = arith.constant 0 : index
    %c0_18 = arith.constant 0 : index
    %25 = vector.load %arg8[%c0_15, %c0_16, %c0_17, %c0_18] : memref<1x16x16x8xf32, #tpu.memory_space<vmem>>, vector<1x16x16x8xf32>
    %26 = vector.shape_cast %25 : vector<1x16x16x8xf32> to vector<16x16x8xf32>
    %27 = vector.shape_cast %24 : vector<16x16x8xf32> to vector<1x16x16x8xf32>
    tpu.vector_store %arg8[%c0_15, %c0_16, %c0_17, %c0_18], %27 {strides = array<i32>} : memref<1x16x16x8xf32, #tpu.memory_space<vmem>>, vector<1x16x16x8xf32>,
    return
  }
  func.func @transform_0(%arg0: i32, %arg1: i32) -> (i32, i32, i32, i32) {
    %c0_i32 = arith.constant 0 : i32
    %c0_i32_0 = arith.constant 0 : i32
    %c0_i32_1 = arith.constant 0 : i32
    return %arg0, %arg1, %c0_i32, %c0_i32_0 : i32, i32, i32, i32
  }
  func.func @transform_1(%arg0: i32, %arg1: i32) -> (i32, i32, i32, i32) {
    %c0_i32 = arith.constant 0 : i32
    %c0_i32_0 = arith.constant 0 : i32
    %c0_i32_1 = arith.constant 0 : i32
    return %arg0, %arg1, %c0_i32, %c0_i32_0 : i32, i32, i32, i32
  }
  func.func @transform_2(%arg0: i32, %arg1: i32) -> (i32, i32) {
    %c0_i32 = arith.constant 0 : i32
    %c0_i32_0 = arith.constant 0 : i32
    %c0_i32_1 = arith.constant 0 : i32
    return %c0_i32, %c0_i32_0 : i32, i32
  }
  func.func @transform_3(%arg0: i32, %arg1: i32) -> (i32, i32) {
    %c0_i32 = arith.constant 0 : i32
    %c0_i32_0 = arith.constant 0 : i32
    %c0_i32_1 = arith.constant 0 : i32
    return %c0_i32, %c0_i32_0 : i32, i32
  }
  func.func @transform_4(%arg0: i32, %arg1: i32) -> (i32, i32) {
    %c0_i32 = arith.constant 0 : i32
    %c0_i32_0 = arith.constant 0 : i32
    %c0_i32_1 = arith.constant 0 : i32
    return %c0_i32, %c0_i32_0 : i32, i32
  }
  func.func @transform_5(%arg0: i32, %arg1: i32) -> (i32, i32) {
    %c0_i32 = arith.constant 0 : i32
    %c0_i32_0 = arith.constant 0 : i32
    %c0_i32_1 = arith.constant 0 : i32
    return %c0_i32, %c0_i32_0 : i32, i32
  }
  func.func @transform_6(%arg0: i32, %arg1: i32) -> (i32, i32, i32, i32) {
    %c0_i32 = arith.constant 0 : i32
    %c0_i32_0 = arith.constant 0 : i32
    %c0_i32_1 = arith.constant 0 : i32
    return %arg0, %arg1, %c0_i32, %c0_i32_0 : i32, i32, i32, i32
  }
}

module attributes {stable_mosaic.version = 11 : i64} {
  func.func @_main_kernel(%arg0: i32, %arg1: i32, %arg2: memref<1x20x18x4xbf16, #tpu.memory_space<vmem>>, %arg3: memref<36x8xbf16, #tpu.memory_space<vmem>>, %arg4: memref<1x8xf32, #tpu.memory_space<vmem>>, %arg5: memref<1x8xf32, #tpu.memory_space<vmem>>, %arg6: memref<72x8xbf16, #tpu.memory_space<vmem>>, %arg7: memref<4x8xbf16, #tpu.memory_space<vmem>>, %arg8: memref<1x16x16x8xbf16, #tpu.memory_space<vmem>>, %arg9: memref<1x16x16x8xbf16, #tpu.memory_space<vmem>>, %arg10: memref<1x1x8xf32, #tpu.memory_space<vmem>>, %arg11: memref<1x1x8xf32, #tpu.memory_space<vmem>>, %arg12: memref<1x1x8xf32, #tpu.memory_space<vmem>>, %arg13: memref<1x1x8xf32, #tpu.memory_space<vmem>>) attributes {dimension_semantics = [#tpu.dimension_semantics<parallel>, #tpu.dimension_semantics<parallel>], iteration_bounds = array<i64: 2, 1>, scalar_prefetch = 0 : i64, scratch_operands = 0 : i64, tpu.core_type = #tpu.core_type<tc>, window_params = [{transform_indices = @transform_0, window_bounds = array<i64: 1, 20, 18, 4>}, {pipeline_mode = #tpu.pipeline_mode<synchronous>, transform_indices = @transform_1, window_bounds = array<i64: 36, 8>}, {pipeline_mode = #tpu.pipeline_mode<synchronous>, transform_indices = @transform_2, window_bounds = array<i64: 1, 8>}, {pipeline_mode = #tpu.pipeline_mode<synchronous>, transform_indices = @transform_3, window_bounds = array<i64: 1, 8>}, {pipeline_mode = #tpu.pipeline_mode<synchronous>, transform_indices = @transform_4, window_bounds = array<i64: 72, 8>}, {pipeline_mode = #tpu.pipeline_mode<synchronous>, transform_indices = @transform_5, window_bounds = array<i64: 4, 8>}, {transform_indices = @transform_6, window_bounds = array<i64: 1, 16, 16, 8>}, {transform_indices = @transform_7, window_bounds = array<i64: 1, 16, 16, 8>}, {transform_indices = @transform_8, window_bounds = array<i64: 1, 1, 8>}, {transform_indices = @transform_9, window_bounds = array<i64: 1, 1, 8>}, {transform_indices = @transform_10, window_bounds = array<i64: 1, 1, 8>}, {transform_indices = @transform_11, window_bounds = array<i64: 1, 1, 8>}]} {
    %c0 = arith.constant 0 : index
    %c0_0 = arith.constant 0 : index
    %c0_1 = arith.constant 0 : index
    %c0_2 = arith.constant 0 : index
    %0 = vector.load %arg2[%c0, %c0_0, %c0_1, %c0_2] : memref<1x20x18x4xbf16, #tpu.memory_space<vmem>>, vector<1x20x18x4xbf16>
    %1 = vector.shape_cast %0 : vector<1x20x18x4xbf16> to vector<20x18x4xbf16>
    %2 = vector.extract_strided_slice %1 {offsets = [0, 0, 0], sizes = [20, 16, 4], strides = [1, 1, 1]} : vector<20x18x4xbf16> to vector<20x16x4xbf16>
    %3 = vector.extract_strided_slice %1 {offsets = [0, 1, 0], sizes = [20, 16, 4], strides = [1, 1, 1]} : vector<20x18x4xbf16> to vector<20x16x4xbf16>
    %4 = vector.extract_strided_slice %1 {offsets = [0, 2, 0], sizes = [20, 16, 4], strides = [1, 1, 1]} : vector<20x18x4xbf16> to vector<20x16x4xbf16>
    %5 = vector.extract_strided_slice %2 {offsets = [0, 0, 0], sizes = [18, 16, 4], strides = [1, 1, 1]} : vector<20x16x4xbf16> to vector<18x16x4xbf16>
    %6 = vector.shape_cast %5 : vector<18x16x4xbf16> to vector<288x4xbf16>
    %c0_3 = arith.constant 0 : index
    %c0_4 = arith.constant 0 : index
    %7 = vector.load %arg3[%c0_3, %c0_4] : memref<36x8xbf16, #tpu.memory_space<vmem>>, vector<4x8xbf16>
    %cst = arith.constant dense<0.000000e+00> : vector<288x8xf32>
    %8 = tpu.matmul %6, %7, %cst {dimension_numbers = #tpu.dot_dimension_numbers<[1], [0], [0], [1], [0, 0, 1, 1], [], []>} : vector<288x4xbf16>, vector<4x8xbf16>, vector<288x8xf32> -> vector<288x8xf32>
    %9 = vector.extract_strided_slice %3 {offsets = [0, 0, 0], sizes = [18, 16, 4], strides = [1, 1, 1]} : vector<20x16x4xbf16> to vector<18x16x4xbf16>
    %10 = vector.shape_cast %9 : vector<18x16x4xbf16> to vector<288x4xbf16>
    %c4 = arith.constant 4 : index
    %c0_5 = arith.constant 0 : index
    %11 = vector.load %arg3[%c4, %c0_5] : memref<36x8xbf16, #tpu.memory_space<vmem>>, vector<4x8xbf16>
    %cst_6 = arith.constant dense<0.000000e+00> : vector<288x8xf32>
    %12 = tpu.matmul %10, %11, %cst_6 {dimension_numbers = #tpu.dot_dimension_numbers<[1], [0], [0], [1], [0, 0, 1, 1], [], []>} : vector<288x4xbf16>, vector<4x8xbf16>, vector<288x8xf32> -> vector<288x8xf32>
    %13 = arith.addf %8, %12 : vector<288x8xf32>
    %14 = vector.extract_strided_slice %4 {offsets = [0, 0, 0], sizes = [18, 16, 4], strides = [1, 1, 1]} : vector<20x16x4xbf16> to vector<18x16x4xbf16>
    %15 = vector.shape_cast %14 : vector<18x16x4xbf16> to vector<288x4xbf16>
    %c8 = arith.constant 8 : index
    %c0_7 = arith.constant 0 : index
    %16 = vector.load %arg3[%c8, %c0_7] : memref<36x8xbf16, #tpu.memory_space<vmem>>, vector<4x8xbf16>
    %cst_8 = arith.constant dense<0.000000e+00> : vector<288x8xf32>
    %17 = tpu.matmul %15, %16, %cst_8 {dimension_numbers = #tpu.dot_dimension_numbers<[1], [0], [0], [1], [0, 0, 1, 1], [], []>} : vector<288x4xbf16>, vector<4x8xbf16>, vector<288x8xf32> -> vector<288x8xf32>
    %18 = arith.addf %13, %17 : vector<288x8xf32>
    %19 = vector.extract_strided_slice %2 {offsets = [1, 0, 0], sizes = [18, 16, 4], strides = [1, 1, 1]} : vector<20x16x4xbf16> to vector<18x16x4xbf16>
    %20 = vector.shape_cast %19 : vector<18x16x4xbf16> to vector<288x4xbf16>
    %c12 = arith.constant 12 : index
    %c0_9 = arith.constant 0 : index
    %21 = vector.load %arg3[%c12, %c0_9] : memref<36x8xbf16, #tpu.memory_space<vmem>>, vector<4x8xbf16>
    %cst_10 = arith.constant dense<0.000000e+00> : vector<288x8xf32>
    %22 = tpu.matmul %20, %21, %cst_10 {dimension_numbers = #tpu.dot_dimension_numbers<[1], [0], [0], [1], [0, 0, 1, 1], [], []>} : vector<288x4xbf16>, vector<4x8xbf16>, vector<288x8xf32> -> vector<288x8xf32>
    %23 = arith.addf %18, %22 : vector<288x8xf32>
    %24 = vector.extract_strided_slice %3 {offsets = [1, 0, 0], sizes = [18, 16, 4], strides = [1, 1, 1]} : vector<20x16x4xbf16> to vector<18x16x4xbf16>
    %25 = vector.shape_cast %24 : vector<18x16x4xbf16> to vector<288x4xbf16>
    %c16 = arith.constant 16 : index
    %c0_11 = arith.constant 0 : index
    %26 = vector.load %arg3[%c16, %c0_11] : memref<36x8xbf16, #tpu.memory_space<vmem>>, vector<4x8xbf16>
    %cst_12 = arith.constant dense<0.000000e+00> : vector<288x8xf32>
    %27 = tpu.matmul %25, %26, %cst_12 {dimension_numbers = #tpu.dot_dimension_numbers<[1], [0], [0], [1], [0, 0, 1, 1], [], []>} : vector<288x4xbf16>, vector<4x8xbf16>, vector<288x8xf32> -> vector<288x8xf32>
    %28 = arith.addf %23, %27 : vector<288x8xf32>
    %29 = vector.extract_strided_slice %4 {offsets = [1, 0, 0], sizes = [18, 16, 4], strides = [1, 1, 1]} : vector<20x16x4xbf16> to vector<18x16x4xbf16>
    %30 = vector.shape_cast %29 : vector<18x16x4xbf16> to vector<288x4xbf16>
    %c20 = arith.constant 20 : index
    %c0_13 = arith.constant 0 : index
    %31 = vector.load %arg3[%c20, %c0_13] : memref<36x8xbf16, #tpu.memory_space<vmem>>, vector<4x8xbf16>
    %cst_14 = arith.constant dense<0.000000e+00> : vector<288x8xf32>
    %32 = tpu.matmul %30, %31, %cst_14 {dimension_numbers = #tpu.dot_dimension_numbers<[1], [0], [0], [1], [0, 0, 1, 1], [], []>} : vector<288x4xbf16>, vector<4x8xbf16>, vector<288x8xf32> -> vector<288x8xf32>
    %33 = arith.addf %28, %32 : vector<288x8xf32>
    %34 = vector.extract_strided_slice %2 {offsets = [2, 0, 0], sizes = [18, 16, 4], strides = [1, 1, 1]} : vector<20x16x4xbf16> to vector<18x16x4xbf16>
    %35 = vector.shape_cast %34 : vector<18x16x4xbf16> to vector<288x4xbf16>
    %c24 = arith.constant 24 : index
    %c0_15 = arith.constant 0 : index
    %36 = vector.load %arg3[%c24, %c0_15] : memref<36x8xbf16, #tpu.memory_space<vmem>>, vector<4x8xbf16>
    %cst_16 = arith.constant dense<0.000000e+00> : vector<288x8xf32>
    %37 = tpu.matmul %35, %36, %cst_16 {dimension_numbers = #tpu.dot_dimension_numbers<[1], [0], [0], [1], [0, 0, 1, 1], [], []>} : vector<288x4xbf16>, vector<4x8xbf16>, vector<288x8xf32> -> vector<288x8xf32>
    %38 = arith.addf %33, %37 : vector<288x8xf32>
    %39 = vector.extract_strided_slice %3 {offsets = [2, 0, 0], sizes = [18, 16, 4], strides = [1, 1, 1]} : vector<20x16x4xbf16> to vector<18x16x4xbf16>
    %40 = vector.shape_cast %39 : vector<18x16x4xbf16> to vector<288x4xbf16>
    %c28 = arith.constant 28 : index
    %c0_17 = arith.constant 0 : index
    %41 = vector.load %arg3[%c28, %c0_17] : memref<36x8xbf16, #tpu.memory_space<vmem>>, vector<4x8xbf16>
    %cst_18 = arith.constant dense<0.000000e+00> : vector<288x8xf32>
    %42 = tpu.matmul %40, %41, %cst_18 {dimension_numbers = #tpu.dot_dimension_numbers<[1], [0], [0], [1], [0, 0, 1, 1], [], []>} : vector<288x4xbf16>, vector<4x8xbf16>, vector<288x8xf32> -> vector<288x8xf32>
    %43 = arith.addf %38, %42 : vector<288x8xf32>
    %44 = vector.extract_strided_slice %4 {offsets = [2, 0, 0], sizes = [18, 16, 4], strides = [1, 1, 1]} : vector<20x16x4xbf16> to vector<18x16x4xbf16>
    %45 = vector.shape_cast %44 : vector<18x16x4xbf16> to vector<288x4xbf16>
    %c32 = arith.constant 32 : index
    %c0_19 = arith.constant 0 : index
    %46 = vector.load %arg3[%c32, %c0_19] : memref<36x8xbf16, #tpu.memory_space<vmem>>, vector<4x8xbf16>
    %cst_20 = arith.constant dense<0.000000e+00> : vector<288x8xf32>
    %47 = tpu.matmul %45, %46, %cst_20 {dimension_numbers = #tpu.dot_dimension_numbers<[1], [0], [0], [1], [0, 0, 1, 1], [], []>} : vector<288x4xbf16>, vector<4x8xbf16>, vector<288x8xf32> -> vector<288x8xf32>
    %48 = arith.addf %43, %47 : vector<288x8xf32>
    %c0_21 = arith.constant 0 : index
    %c0_22 = arith.constant 0 : index
    %49 = vector.load %arg4[%c0_21, %c0_22] : memref<1x8xf32, #tpu.memory_space<vmem>>, vector<1x8xf32>
    %50 = vector.broadcast %49 : vector<1x8xf32> to vector<288x8xf32>
    %51 = arith.mulf %48, %50 : vector<288x8xf32>
    %c0_23 = arith.constant 0 : index
    %c0_24 = arith.constant 0 : index
    %52 = vector.load %arg5[%c0_23, %c0_24] : memref<1x8xf32, #tpu.memory_space<vmem>>, vector<1x8xf32>
    %53 = vector.broadcast %52 : vector<1x8xf32> to vector<288x8xf32>
    %54 = arith.addf %51, %53 : vector<288x8xf32>
    %cst_25 = arith.constant 0.000000e+00 : f32
    %55 = vector.broadcast %cst_25 : f32 to vector<288x8xf32>
    %56 = arith.maximumf %54, %55 : vector<288x8xf32>
    %57 = vector.shape_cast %56 : vector<288x8xf32> to vector<18x16x8xf32>
    %58 = tpu.iota {dimensions = array<i32: 0>} : vector<18x1x1xi32>
    %c16_i32 = arith.constant 16 : i32
    %59 = arith.muli %arg1, %c16_i32 : i32
    %c1_i32 = arith.constant 1 : i32
    %60 = arith.subi %59, %c1_i32 : i32
    %61 = vector.broadcast %60 : i32 to vector<18x1x1xi32>
    %62 = arith.addi %58, %61 : vector<18x1x1xi32>
    %c0_i32 = arith.constant 0 : i32
    %63 = vector.broadcast %c0_i32 : i32 to vector<18x1x1xi32>
    %64 = arith.cmpi sge, %62, %63 : vector<18x1x1xi32>
    %c16_i32_26 = arith.constant 16 : i32
    %65 = vector.broadcast %c16_i32_26 : i32 to vector<18x1x1xi32>
    %66 = arith.cmpi slt, %62, %65 : vector<18x1x1xi32>
    %67 = arith.andi %64, %66 : vector<18x1x1xi1>
    %cst_27 = arith.constant 0.000000e+00 : f32
    %68 = vector.shape_cast %67 : vector<18x1x1xi1> to vector<18x1x1xi1>
    %69 = vector.broadcast %68 : vector<18x1x1xi1> to vector<18x16x8xi1>
    %70 = vector.broadcast %cst_27 : f32 to vector<18x16x8xf32>
    %71 = arith.select %69, %57, %70 : vector<18x16x8xi1>, vector<18x16x8xf32>
    %72 = arith.truncf %71 : vector<18x16x8xf32> to vector<18x16x8xbf16>
    %cst_28 = arith.constant 0.000000e+00 : bf16
    %73 = vector.broadcast %cst_28 : bf16 to vector<18x1x8xbf16>
    %74 = tpu.concatenate %73, %72, %73 in 1 : vector<18x1x8xbf16>, vector<18x16x8xbf16>, vector<18x1x8xbf16> -> vector<18x18x8xbf16>
    %75 = vector.extract_strided_slice %74 {offsets = [0, 0, 0], sizes = [18, 16, 8], strides = [1, 1, 1]} : vector<18x18x8xbf16> to vector<18x16x8xbf16>
    %76 = vector.extract_strided_slice %74 {offsets = [0, 1, 0], sizes = [18, 16, 8], strides = [1, 1, 1]} : vector<18x18x8xbf16> to vector<18x16x8xbf16>
    %77 = vector.extract_strided_slice %74 {offsets = [0, 2, 0], sizes = [18, 16, 8], strides = [1, 1, 1]} : vector<18x18x8xbf16> to vector<18x16x8xbf16>
    %78 = vector.extract_strided_slice %75 {offsets = [0, 0, 0], sizes = [16, 16, 8], strides = [1, 1, 1]} : vector<18x16x8xbf16> to vector<16x16x8xbf16>
    %79 = vector.shape_cast %78 : vector<16x16x8xbf16> to vector<256x8xbf16>
    %c0_29 = arith.constant 0 : index
    %c0_30 = arith.constant 0 : index
    %80 = vector.load %arg6[%c0_29, %c0_30] : memref<72x8xbf16, #tpu.memory_space<vmem>>, vector<8x8xbf16>
    %cst_31 = arith.constant dense<0.000000e+00> : vector<256x8xf32>
    %81 = tpu.matmul %79, %80, %cst_31 {dimension_numbers = #tpu.dot_dimension_numbers<[1], [0], [0], [1], [0, 0, 1, 1], [], []>} : vector<256x8xbf16>, vector<8x8xbf16>, vector<256x8xf32> -> vector<256x8xf32>
    %82 = vector.extract_strided_slice %76 {offsets = [0, 0, 0], sizes = [16, 16, 8], strides = [1, 1, 1]} : vector<18x16x8xbf16> to vector<16x16x8xbf16>
    %83 = vector.shape_cast %82 : vector<16x16x8xbf16> to vector<256x8xbf16>
    %c8_32 = arith.constant 8 : index
    %c0_33 = arith.constant 0 : index
    %84 = vector.load %arg6[%c8_32, %c0_33] : memref<72x8xbf16, #tpu.memory_space<vmem>>, vector<8x8xbf16>
    %cst_34 = arith.constant dense<0.000000e+00> : vector<256x8xf32>
    %85 = tpu.matmul %83, %84, %cst_34 {dimension_numbers = #tpu.dot_dimension_numbers<[1], [0], [0], [1], [0, 0, 1, 1], [], []>} : vector<256x8xbf16>, vector<8x8xbf16>, vector<256x8xf32> -> vector<256x8xf32>
    %86 = arith.addf %81, %85 : vector<256x8xf32>
    %87 = vector.extract_strided_slice %77 {offsets = [0, 0, 0], sizes = [16, 16, 8], strides = [1, 1, 1]} : vector<18x16x8xbf16> to vector<16x16x8xbf16>
    %88 = vector.shape_cast %87 : vector<16x16x8xbf16> to vector<256x8xbf16>
    %c16_35 = arith.constant 16 : index
    %c0_36 = arith.constant 0 : index
    %89 = vector.load %arg6[%c16_35, %c0_36] : memref<72x8xbf16, #tpu.memory_space<vmem>>, vector<8x8xbf16>
    %cst_37 = arith.constant dense<0.000000e+00> : vector<256x8xf32>
    %90 = tpu.matmul %88, %89, %cst_37 {dimension_numbers = #tpu.dot_dimension_numbers<[1], [0], [0], [1], [0, 0, 1, 1], [], []>} : vector<256x8xbf16>, vector<8x8xbf16>, vector<256x8xf32> -> vector<256x8xf32>
    %91 = arith.addf %86, %90 : vector<256x8xf32>
    %92 = vector.extract_strided_slice %75 {offsets = [1, 0, 0], sizes = [16, 16, 8], strides = [1, 1, 1]} : vector<18x16x8xbf16> to vector<16x16x8xbf16>
    %93 = vector.shape_cast %92 : vector<16x16x8xbf16> to vector<256x8xbf16>
    %c24_38 = arith.constant 24 : index
    %c0_39 = arith.constant 0 : index
    %94 = vector.load %arg6[%c24_38, %c0_39] : memref<72x8xbf16, #tpu.memory_space<vmem>>, vector<8x8xbf16>
    %cst_40 = arith.constant dense<0.000000e+00> : vector<256x8xf32>
    %95 = tpu.matmul %93, %94, %cst_40 {dimension_numbers = #tpu.dot_dimension_numbers<[1], [0], [0], [1], [0, 0, 1, 1], [], []>} : vector<256x8xbf16>, vector<8x8xbf16>, vector<256x8xf32> -> vector<256x8xf32>
    %96 = arith.addf %91, %95 : vector<256x8xf32>
    %97 = vector.extract_strided_slice %76 {offsets = [1, 0, 0], sizes = [16, 16, 8], strides = [1, 1, 1]} : vector<18x16x8xbf16> to vector<16x16x8xbf16>
    %98 = vector.shape_cast %97 : vector<16x16x8xbf16> to vector<256x8xbf16>
    %c32_41 = arith.constant 32 : index
    %c0_42 = arith.constant 0 : index
    %99 = vector.load %arg6[%c32_41, %c0_42] : memref<72x8xbf16, #tpu.memory_space<vmem>>, vector<8x8xbf16>
    %cst_43 = arith.constant dense<0.000000e+00> : vector<256x8xf32>
    %100 = tpu.matmul %98, %99, %cst_43 {dimension_numbers = #tpu.dot_dimension_numbers<[1], [0], [0], [1], [0, 0, 1, 1], [], []>} : vector<256x8xbf16>, vector<8x8xbf16>, vector<256x8xf32> -> vector<256x8xf32>
    %101 = arith.addf %96, %100 : vector<256x8xf32>
    %102 = vector.extract_strided_slice %77 {offsets = [1, 0, 0], sizes = [16, 16, 8], strides = [1, 1, 1]} : vector<18x16x8xbf16> to vector<16x16x8xbf16>
    %103 = vector.shape_cast %102 : vector<16x16x8xbf16> to vector<256x8xbf16>
    %c40 = arith.constant 40 : index
    %c0_44 = arith.constant 0 : index
    %104 = vector.load %arg6[%c40, %c0_44] : memref<72x8xbf16, #tpu.memory_space<vmem>>, vector<8x8xbf16>
    %cst_45 = arith.constant dense<0.000000e+00> : vector<256x8xf32>
    %105 = tpu.matmul %103, %104, %cst_45 {dimension_numbers = #tpu.dot_dimension_numbers<[1], [0], [0], [1], [0, 0, 1, 1], [], []>} : vector<256x8xbf16>, vector<8x8xbf16>, vector<256x8xf32> -> vector<256x8xf32>
    %106 = arith.addf %101, %105 : vector<256x8xf32>
    %107 = vector.extract_strided_slice %75 {offsets = [2, 0, 0], sizes = [16, 16, 8], strides = [1, 1, 1]} : vector<18x16x8xbf16> to vector<16x16x8xbf16>
    %108 = vector.shape_cast %107 : vector<16x16x8xbf16> to vector<256x8xbf16>
    %c48 = arith.constant 48 : index
    %c0_46 = arith.constant 0 : index
    %109 = vector.load %arg6[%c48, %c0_46] : memref<72x8xbf16, #tpu.memory_space<vmem>>, vector<8x8xbf16>
    %cst_47 = arith.constant dense<0.000000e+00> : vector<256x8xf32>
    %110 = tpu.matmul %108, %109, %cst_47 {dimension_numbers = #tpu.dot_dimension_numbers<[1], [0], [0], [1], [0, 0, 1, 1], [], []>} : vector<256x8xbf16>, vector<8x8xbf16>, vector<256x8xf32> -> vector<256x8xf32>
    %111 = arith.addf %106, %110 : vector<256x8xf32>
    %112 = vector.extract_strided_slice %76 {offsets = [2, 0, 0], sizes = [16, 16, 8], strides = [1, 1, 1]} : vector<18x16x8xbf16> to vector<16x16x8xbf16>
    %113 = vector.shape_cast %112 : vector<16x16x8xbf16> to vector<256x8xbf16>
    %c56 = arith.constant 56 : index
    %c0_48 = arith.constant 0 : index
    %114 = vector.load %arg6[%c56, %c0_48] : memref<72x8xbf16, #tpu.memory_space<vmem>>, vector<8x8xbf16>
    %cst_49 = arith.constant dense<0.000000e+00> : vector<256x8xf32>
    %115 = tpu.matmul %113, %114, %cst_49 {dimension_numbers = #tpu.dot_dimension_numbers<[1], [0], [0], [1], [0, 0, 1, 1], [], []>} : vector<256x8xbf16>, vector<8x8xbf16>, vector<256x8xf32> -> vector<256x8xf32>
    %116 = arith.addf %111, %115 : vector<256x8xf32>
    %117 = vector.extract_strided_slice %77 {offsets = [2, 0, 0], sizes = [16, 16, 8], strides = [1, 1, 1]} : vector<18x16x8xbf16> to vector<16x16x8xbf16>
    %118 = vector.shape_cast %117 : vector<16x16x8xbf16> to vector<256x8xbf16>
    %c64 = arith.constant 64 : index
    %c0_50 = arith.constant 0 : index
    %119 = vector.load %arg6[%c64, %c0_50] : memref<72x8xbf16, #tpu.memory_space<vmem>>, vector<8x8xbf16>
    %cst_51 = arith.constant dense<0.000000e+00> : vector<256x8xf32>
    %120 = tpu.matmul %118, %119, %cst_51 {dimension_numbers = #tpu.dot_dimension_numbers<[1], [0], [0], [1], [0, 0, 1, 1], [], []>} : vector<256x8xbf16>, vector<8x8xbf16>, vector<256x8xf32> -> vector<256x8xf32>
    %121 = arith.addf %116, %120 : vector<256x8xf32>
    %122 = arith.truncf %121 : vector<256x8xf32> to vector<256x8xbf16>
    %123 = vector.shape_cast %122 : vector<256x8xbf16> to vector<16x16x8xbf16>
    %c0_52 = arith.constant 0 : index
    %c0_53 = arith.constant 0 : index
    %c0_54 = arith.constant 0 : index
    %c0_55 = arith.constant 0 : index
    %124 = vector.load %arg8[%c0_52, %c0_53, %c0_54, %c0_55] : memref<1x16x16x8xbf16, #tpu.memory_space<vmem>>, vector<1x16x16x8xbf16>
    %125 = vector.shape_cast %124 : vector<1x16x16x8xbf16> to vector<16x16x8xbf16>
    %126 = vector.shape_cast %123 : vector<16x16x8xbf16> to vector<1x16x16x8xbf16>
    tpu.vector_store %arg8[%c0_52, %c0_53, %c0_54, %c0_55], %126 {strides = array<i32>} : memref<1x16x16x8xbf16, #tpu.memory_space<vmem>>, vector<1x16x16x8xbf16>,
    %127 = arith.extf %122 : vector<256x8xbf16> to vector<256x8xf32>
    %cst_56 = arith.constant dense<0.000000e+00> : vector<8xf32>
    %128 = vector.multi_reduction <add>, %127, %cst_56 [0] : vector<256x8xf32> to vector<8xf32>
    %129 = vector.shape_cast %128 : vector<8xf32> to vector<1x8xf32>
    %130 = arith.mulf %127, %127 : vector<256x8xf32>
    %cst_57 = arith.constant dense<0.000000e+00> : vector<8xf32>
    %131 = vector.multi_reduction <add>, %130, %cst_57 [0] : vector<256x8xf32> to vector<8xf32>
    %132 = vector.shape_cast %131 : vector<8xf32> to vector<1x8xf32>
    %c0_58 = arith.constant 0 : index
    %c0_59 = arith.constant 0 : index
    %c0_60 = arith.constant 0 : index
    %133 = vector.load %arg10[%c0_58, %c0_59, %c0_60] : memref<1x1x8xf32, #tpu.memory_space<vmem>>, vector<1x1x8xf32>
    %134 = vector.shape_cast %133 : vector<1x1x8xf32> to vector<1x8xf32>
    %135 = vector.shape_cast %129 : vector<1x8xf32> to vector<1x1x8xf32>
    tpu.vector_store %arg10[%c0_58, %c0_59, %c0_60], %135 {strides = array<i32>} : memref<1x1x8xf32, #tpu.memory_space<vmem>>, vector<1x1x8xf32>,
    %c0_61 = arith.constant 0 : index
    %c0_62 = arith.constant 0 : index
    %c0_63 = arith.constant 0 : index
    %136 = vector.load %arg11[%c0_61, %c0_62, %c0_63] : memref<1x1x8xf32, #tpu.memory_space<vmem>>, vector<1x1x8xf32>
    %137 = vector.shape_cast %136 : vector<1x1x8xf32> to vector<1x8xf32>
    %138 = vector.shape_cast %132 : vector<1x8xf32> to vector<1x1x8xf32>
    tpu.vector_store %arg11[%c0_61, %c0_62, %c0_63], %138 {strides = array<i32>} : memref<1x1x8xf32, #tpu.memory_space<vmem>>, vector<1x1x8xf32>,
    %139 = vector.extract_strided_slice %1 {offsets = [2, 1, 0], sizes = [16, 16, 4], strides = [1, 1, 1]} : vector<20x18x4xbf16> to vector<16x16x4xbf16>
    %140 = vector.shape_cast %139 : vector<16x16x4xbf16> to vector<256x4xbf16>
    %c0_64 = arith.constant 0 : index
    %c0_65 = arith.constant 0 : index
    %141 = vector.load %arg7[%c0_64, %c0_65] : memref<4x8xbf16, #tpu.memory_space<vmem>>, vector<4x8xbf16>
    %cst_66 = arith.constant dense<0.000000e+00> : vector<256x8xf32>
    %142 = tpu.matmul %140, %141, %cst_66 {dimension_numbers = #tpu.dot_dimension_numbers<[1], [0], [0], [1], [0, 0, 1, 1], [], []>} : vector<256x4xbf16>, vector<4x8xbf16>, vector<256x8xf32> -> vector<256x8xf32>
    %143 = arith.truncf %142 : vector<256x8xf32> to vector<256x8xbf16>
    %144 = vector.shape_cast %143 : vector<256x8xbf16> to vector<16x16x8xbf16>
    %c0_67 = arith.constant 0 : index
    %c0_68 = arith.constant 0 : index
    %c0_69 = arith.constant 0 : index
    %c0_70 = arith.constant 0 : index
    %145 = vector.load %arg9[%c0_67, %c0_68, %c0_69, %c0_70] : memref<1x16x16x8xbf16, #tpu.memory_space<vmem>>, vector<1x16x16x8xbf16>
    %146 = vector.shape_cast %145 : vector<1x16x16x8xbf16> to vector<16x16x8xbf16>
    %147 = vector.shape_cast %144 : vector<16x16x8xbf16> to vector<1x16x16x8xbf16>
    tpu.vector_store %arg9[%c0_67, %c0_68, %c0_69, %c0_70], %147 {strides = array<i32>} : memref<1x16x16x8xbf16, #tpu.memory_space<vmem>>, vector<1x16x16x8xbf16>,
    %148 = arith.extf %143 : vector<256x8xbf16> to vector<256x8xf32>
    %cst_71 = arith.constant dense<0.000000e+00> : vector<8xf32>
    %149 = vector.multi_reduction <add>, %148, %cst_71 [0] : vector<256x8xf32> to vector<8xf32>
    %150 = vector.shape_cast %149 : vector<8xf32> to vector<1x8xf32>
    %151 = arith.mulf %148, %148 : vector<256x8xf32>
    %cst_72 = arith.constant dense<0.000000e+00> : vector<8xf32>
    %152 = vector.multi_reduction <add>, %151, %cst_72 [0] : vector<256x8xf32> to vector<8xf32>
    %153 = vector.shape_cast %152 : vector<8xf32> to vector<1x8xf32>
    %c0_73 = arith.constant 0 : index
    %c0_74 = arith.constant 0 : index
    %c0_75 = arith.constant 0 : index
    %154 = vector.load %arg12[%c0_73, %c0_74, %c0_75] : memref<1x1x8xf32, #tpu.memory_space<vmem>>, vector<1x1x8xf32>
    %155 = vector.shape_cast %154 : vector<1x1x8xf32> to vector<1x8xf32>
    %156 = vector.shape_cast %150 : vector<1x8xf32> to vector<1x1x8xf32>
    tpu.vector_store %arg12[%c0_73, %c0_74, %c0_75], %156 {strides = array<i32>} : memref<1x1x8xf32, #tpu.memory_space<vmem>>, vector<1x1x8xf32>,
    %c0_76 = arith.constant 0 : index
    %c0_77 = arith.constant 0 : index
    %c0_78 = arith.constant 0 : index
    %157 = vector.load %arg13[%c0_76, %c0_77, %c0_78] : memref<1x1x8xf32, #tpu.memory_space<vmem>>, vector<1x1x8xf32>
    %158 = vector.shape_cast %157 : vector<1x1x8xf32> to vector<1x8xf32>
    %159 = vector.shape_cast %153 : vector<1x8xf32> to vector<1x1x8xf32>
    tpu.vector_store %arg13[%c0_76, %c0_77, %c0_78], %159 {strides = array<i32>} : memref<1x1x8xf32, #tpu.memory_space<vmem>>, vector<1x1x8xf32>,
    return
  }
  func.func @transform_0(%arg0: i32, %arg1: i32) -> (i32, i32, i32, i32) {
    %c0_i32 = arith.constant 0 : i32
    %c0_i32_0 = arith.constant 0 : i32
    %c0_i32_1 = arith.constant 0 : i32
    %c0_i32_2 = arith.constant 0 : i32
    return %arg0, %c0_i32, %c0_i32_0, %c0_i32_1 : i32, i32, i32, i32
  }
  func.func @transform_1(%arg0: i32, %arg1: i32) -> (i32, i32) {
    %c0_i32 = arith.constant 0 : i32
    %c0_i32_0 = arith.constant 0 : i32
    %c0_i32_1 = arith.constant 0 : i32
    return %c0_i32, %c0_i32_0 : i32, i32
  }
  func.func @transform_2(%arg0: i32, %arg1: i32) -> (i32, i32) {
    %c0_i32 = arith.constant 0 : i32
    %c0_i32_0 = arith.constant 0 : i32
    %c0_i32_1 = arith.constant 0 : i32
    return %c0_i32, %c0_i32_0 : i32, i32
  }
  func.func @transform_3(%arg0: i32, %arg1: i32) -> (i32, i32) {
    %c0_i32 = arith.constant 0 : i32
    %c0_i32_0 = arith.constant 0 : i32
    %c0_i32_1 = arith.constant 0 : i32
    return %c0_i32, %c0_i32_0 : i32, i32
  }
  func.func @transform_4(%arg0: i32, %arg1: i32) -> (i32, i32) {
    %c0_i32 = arith.constant 0 : i32
    %c0_i32_0 = arith.constant 0 : i32
    %c0_i32_1 = arith.constant 0 : i32
    return %c0_i32, %c0_i32_0 : i32, i32
  }
  func.func @transform_5(%arg0: i32, %arg1: i32) -> (i32, i32) {
    %c0_i32 = arith.constant 0 : i32
    %c0_i32_0 = arith.constant 0 : i32
    %c0_i32_1 = arith.constant 0 : i32
    return %c0_i32, %c0_i32_0 : i32, i32
  }
  func.func @transform_6(%arg0: i32, %arg1: i32) -> (i32, i32, i32, i32) {
    %c0_i32 = arith.constant 0 : i32
    %c0_i32_0 = arith.constant 0 : i32
    %c0_i32_1 = arith.constant 0 : i32
    return %arg0, %arg1, %c0_i32, %c0_i32_0 : i32, i32, i32, i32
  }
  func.func @transform_7(%arg0: i32, %arg1: i32) -> (i32, i32, i32, i32) {
    %c0_i32 = arith.constant 0 : i32
    %c0_i32_0 = arith.constant 0 : i32
    %c0_i32_1 = arith.constant 0 : i32
    return %arg0, %arg1, %c0_i32, %c0_i32_0 : i32, i32, i32, i32
  }
  func.func @transform_8(%arg0: i32, %arg1: i32) -> (i32, i32, i32) {
    %c1_i32 = arith.constant 1 : i32
    %0 = arith.muli %arg0, %c1_i32 : i32
    %1 = arith.addi %0, %arg1 : i32
    %c0_i32 = arith.constant 0 : i32
    %c0_i32_0 = arith.constant 0 : i32
    %c0_i32_1 = arith.constant 0 : i32
    return %1, %c0_i32, %c0_i32_0 : i32, i32, i32
  }
  func.func @transform_9(%arg0: i32, %arg1: i32) -> (i32, i32, i32) {
    %c1_i32 = arith.constant 1 : i32
    %0 = arith.muli %arg0, %c1_i32 : i32
    %1 = arith.addi %0, %arg1 : i32
    %c0_i32 = arith.constant 0 : i32
    %c0_i32_0 = arith.constant 0 : i32
    %c0_i32_1 = arith.constant 0 : i32
    return %1, %c0_i32, %c0_i32_0 : i32, i32, i32
  }
  func.func @transform_10(%arg0: i32, %arg1: i32) -> (i32, i32, i32) {
    %c1_i32 = arith.constant 1 : i32
    %0 = arith.muli %arg0, %c1_i32 : i32
    %1 = arith.addi %0, %arg1 : i32
    %c0_i32 = arith.constant 0 : i32
    %c0_i32_0 = arith.constant 0 : i32
    %c0_i32_1 = arith.constant 0 : i32
    return %1, %c0_i32, %c0_i32_0 : i32, i32, i32
  }
  func.func @transform_11(%arg0: i32, %arg1: i32) -> (i32, i32, i32) {
    %c1_i32 = arith.constant 1 : i32
    %0 = arith.muli %arg0, %c1_i32 : i32
    %1 = arith.addi %0, %arg1 : i32
    %c0_i32 = arith.constant 0 : i32
    %c0_i32_0 = arith.constant 0 : i32
    %c0_i32_1 = arith.constant 0 : i32
    return %1, %c0_i32, %c0_i32_0 : i32, i32, i32
  }
}

</mosaic_0001>

<llo_original>
// kernel: a_call__.5
$region0: #{a_call__.5}
  #allocation0 [shape = 'u32[]', space=smem, size = 0x4, offset = 0x4, fixed_abs, tag = 'smem constant byte address 0x4 - core index']
  #allocation1 [shape = 'u32[144,128]{1,0:T(1,128)}', space=vmem, size = 0x12000, scoped, tag = 'internal scratch']
  %s0 = inlined_call_operand.vmem [shape: bf16[2,16,16,8], index: 0, kind: input, shape index: {}]
  %s1 = inlined_call_operand.vmem [shape: bf16[2,16,16,8], index: 1, kind: input, shape index: {}]
  %s2 = inlined_call_operand.vmem [shape: f32[1,8], index: 2, kind: input, shape index: {}]
  %s3 = inlined_call_operand.vmem [shape: f32[1,8], index: 3, kind: input, shape index: {}]
  %s4 = inlined_call_operand.vmem [shape: f32[1,8], index: 4, kind: input, shape index: {}]
  %s5 = inlined_call_operand.vmem [shape: f32[1,8], index: 5, kind: input, shape index: {}]
  %s6 = inlined_call_operand.vmem [shape: f32[2,16,16,8], index: 6, kind: output, shape index: {}]
  %s7 = sld [smem:[#allocation0]]
  $region57: #{a_call__.5} parent=0
    _
  %s9 = ssub.s32 1, %s7
  %s10 = scalar_select 0, %s9, %s7
  loop: start=0, step=1, limit=4
  $region2: #{a_call__.5} parent=0 // loop_pre_header
    _
  $region3: #{a_call__.5} parent=0 // loop_header
    %s12 = sphi 0, %s16
    %p13 = scmp.ge.s32.totalorder %s12, 4
    %s19 = sphi 0, %s31
    %s20 = sphi 0, %s27
    %s21 = sphi 0, %s19
    %s22 = sphi 0, %s20
    %s23 = sphi 0, %s21
    %s24 = sphi 0, %s22
    %s36 = sphi 0, %s38
    %s39 = sphi 0, %s36
    %s40 = sphi 0, %s39
    %s56 = sphi 0, %s40
    %s64 = sphi 0, %s66
    %s67 = sphi 0, %s64
    %s68 = sphi 0, %s67
    %s84 = sphi 0, %s68
    %s88 = sphi 0, %s88
    %s90 = sphi 0, %s88
    %s91 = sphi 0, %s90
    %s105 = sphi 0, %s91
    %s109 = sphi 0, %s109
    %s111 = sphi 0, %s109
    %s112 = sphi 0, %s111
    %s126 = sphi 0, %s112
    %s130 = sphi 0, %s130
    %s132 = sphi 0, %s130
    %s133 = sphi 0, %s132
    %s147 = sphi 0, %s133
    %s151 = sphi 0, %s151
    %s153 = sphi 0, %s151
    %s154 = sphi 0, %s153
    %s168 = sphi 0, %s154
    %s176 = sphi 0, %s178
    %s179 = sphi 0, %s176
    %s180 = sphi 0, %s179
    %s196 = sphi 0, %s180
  $region4: #{a_call__.5} parent=0 // loop_header_branch
    %15 = sbr.rel (%p13) target = $region8
  $region5: #{a_call__.5} parent=0 // loop_body
    %s17 = ssub.s32 %s12, 1
    %s18 = ssub.s32 %s12, 2
    %s25 = sadd.s32 1, %s20
    %p26 = scmp.ge.s32.totalorder %s25, 1
    %s27 = scalar_select %p26, 0, %s25
    %s28 = sadd.s32 1, %s19
    %s29 = scalar_select %p26, %s28, %s19
    %p30 = scmp.ge.s32.totalorder %s29, 2
    %s31 = scalar_select %p30, 0, %s29
    %s32 = ssub.s32 %s19, %s31
    %s33 = ssub.s32 %s20, %s27
    %s34 = sor.u32 %s32, %s33
    %p35 = scmp.eq.s32.totalorder %s34, 0
    %s37 = sadd.s32 %s36, 1
    %s38 = scalar_select %p35, %s36, %s37
    %p41 = pneg %p35
    %p42 = scmp.eq.s32.totalorder %s12, 1
    %p43 = por %p41, %p42
    %p44 = scmp.ne.s32.totalorder %s36, %s39
    %p45 = scmp.eq.s32.totalorder %s12, 0
    %p46 = por %p44, %p45
    %p47 = scmp.ne.s32.totalorder %s36, %s39
    %p48 = scmp.eq.s32.totalorder %s17, 1
    %p49 = por %p47, %p48
    %p50 = scmp.ne.s32.totalorder %s39, %s40
    %p51 = scmp.eq.s32.totalorder %s17, 0
    %p52 = por %p50, %p51
    %p53 = scmp.ne.s32.totalorder %s39, %s40
    %p54 = scmp.eq.s32.totalorder %s18, 1
    %p55 = por %p53, %p54
    %p57 = scmp.ne.s32.totalorder %s40, %s56
    %p58 = scmp.eq.s32.totalorder %s18, 0
    %p59 = por %p57, %p58
    %s60 = ssub.s32 %s19, %s31
    %s61 = ssub.s32 %s20, %s27
    %s62 = sor.u32 %s60, %s61
    %p63 = scmp.eq.s32.totalorder %s62, 0
    %s65 = sadd.s32 %s64, 1
    %s66 = scalar_select %p63, %s64, %s65
    %p69 = pneg %p63
    %p70 = scmp.eq.s32.totalorder %s12, 1
    %p71 = por %p69, %p70
    %p72 = scmp.ne.s32.totalorder %s64, %s67
    %p73 = scmp.eq.s32.totalorder %s12, 0
    %p74 = por %p72, %p73
    %p75 = scmp.ne.s32.totalorder %s64, %s67
    %p76 = scmp.eq.s32.totalorder %s17, 1
    %p77 = por %p75, %p76
    %p78 = scmp.ne.s32.totalorder %s67, %s68
    %p79 = scmp.eq.s32.totalorder %s17, 0
    %p80 = por %p78, %p79
    %p81 = scmp.ne.s32.totalorder %s67, %s68
    %p82 = scmp.eq.s32.totalorder %s18, 1
    %p83 = por %p81, %p82
    %p85 = scmp.ne.s32.totalorder %s68, %s84
    %p86 = scmp.eq.s32.totalorder %s18, 0
    %p87 = por %p85, %p86
    %s89 = sadd.s32 %s88, 1
    %p92 = scmp.eq.s32.totalorder %s12, 1
    %p93 = scmp.ne.s32.totalorder %s88, %s90
    %p94 = scmp.eq.s32.totalorder %s12, 0
    %p95 = por %p93, %p94
    %p96 = scmp.ne.s32.totalorder %s88, %s90
    %p97 = scmp.eq.s32.totalorder %s17, 1
    %p98 = por %p96, %p97
    %p99 = scmp.ne.s32.totalorder %s90, %s91
    %p100 = scmp.eq.s32.totalorder %s17, 0
    %p101 = por %p99, %p100
    %p102 = scmp.ne.s32.totalorder %s90, %s91
    %p103 = scmp.eq.s32.totalorder %s18, 1
    %p104 = por %p102, %p103
    %p106 = scmp.ne.s32.totalorder %s91, %s105
    %p107 = scmp.eq.s32.totalorder %s18, 0
    %p108 = por %p106, %p107
    %s110 = sadd.s32 %s109, 1
    %p113 = scmp.eq.s32.totalorder %s12, 1
    %p114 = scmp.ne.s32.totalorder %s109, %s111
    %p115 = scmp.eq.s32.totalorder %s12, 0
    %p116 = por %p114, %p115
    %p117 = scmp.ne.s32.totalorder %s109, %s111
    %p118 = scmp.eq.s32.totalorder %s17, 1
    %p119 = por %p117, %p118
    %p120 = scmp.ne.s32.totalorder %s111, %s112
    %p121 = scmp.eq.s32.totalorder %s17, 0
    %p122 = por %p120, %p121
    %p123 = scmp.ne.s32.totalorder %s111, %s112
    %p124 = scmp.eq.s32.totalorder %s18, 1
    %p125 = por %p123, %p124
    %p127 = scmp.ne.s32.totalorder %s112, %s126
    %p128 = scmp.eq.s32.totalorder %s18, 0
    %p129 = por %p127, %p128
    %s131 = sadd.s32 %s130, 1
    %p134 = scmp.eq.s32.totalorder %s12, 1
    %p135 = scmp.ne.s32.totalorder %s130, %s132
    %p136 = scmp.eq.s32.totalorder %s12, 0
    %p137 = por %p135, %p136
    %p138 = scmp.ne.s32.totalorder %s130, %s132
    %p139 = scmp.eq.s32.totalorder %s17, 1
    %p140 = por %p138, %p139
    %p141 = scmp.ne.s32.totalorder %s132, %s133
    %p142 = scmp.eq.s32.totalorder %s17, 0
    %p143 = por %p141, %p142
    %p144 = scmp.ne.s32.totalorder %s132, %s133
    %p145 = scmp.eq.s32.totalorder %s18, 1
    %p146 = por %p144, %p145
    %p148 = scmp.ne.s32.totalorder %s133, %s147
    %p149 = scmp.eq.s32.totalorder %s18, 0
    %p150 = por %p148, %p149
    %s152 = sadd.s32 %s151, 1
    %p155 = scmp.eq.s32.totalorder %s12, 1
    %p156 = scmp.ne.s32.totalorder %s151, %s153
    %p157 = scmp.eq.s32.totalorder %s12, 0
    %p158 = por %p156, %p157
    %p159 = scmp.ne.s32.totalorder %s151, %s153
    %p160 = scmp.eq.s32.totalorder %s17, 1
    %p161 = por %p159, %p160
    %p162 = scmp.ne.s32.totalorder %s153, %s154
    %p163 = scmp.eq.s32.totalorder %s17, 0
    %p164 = por %p162, %p163
    %p165 = scmp.ne.s32.totalorder %s153, %s154
    %p166 = scmp.eq.s32.totalorder %s18, 1
    %p167 = por %p165, %p166
    %p169 = scmp.ne.s32.totalorder %s154, %s168
    %p170 = scmp.eq.s32.totalorder %s18, 0
    %p171 = por %p169, %p170
    %s172 = ssub.s32 %s19, %s31
    %s173 = ssub.s32 %s20, %s27
    %s174 = sor.u32 %s172, %s173
    %p175 = scmp.eq.s32.totalorder %s174, 0
    %s177 = sadd.s32 %s176, 1
    %s178 = scalar_select %p175, %s176, %s177
    %p181 = pneg %p175
    %p182 = scmp.eq.s32.totalorder %s12, 1
    %p183 = por %p181, %p182
    %p184 = scmp.ne.s32.totalorder %s176, %s179
    %p185 = scmp.eq.s32.totalorder %s12, 0
    %p186 = por %p184, %p185
    %p187 = scmp.ne.s32.totalorder %s176, %s179
    %p188 = scmp.eq.s32.totalorder %s17, 1
    %p189 = por %p187, %p188
    %p190 = scmp.ne.s32.totalorder %s179, %s180
    %p191 = scmp.eq.s32.totalorder %s17, 0
    %p192 = por %p190, %p191
    %p193 = scmp.ne.s32.totalorder %s179, %s180
    %p194 = scmp.eq.s32.totalorder %s18, 1
    %p195 = por %p193, %p194
    %p197 = scmp.ne.s32.totalorder %s180, %s196
    %p198 = scmp.eq.s32.totalorder %s18, 0
    %p199 = por %p197, %p198
    %p200 = scmp.le.s32.totalorder 1, %s12
    %p201 = scmp.lt.s32.totalorder %s12, 3
    %p202 = pnand %p200, %p201
    %p203 = pneg %p202
    // Predicated region
    $region9: #{a_call__.5} parent=5 // pred_check
      _
    $region10: #{a_call__.5} parent=5 // pred_check_branch
      %205 = sbr.rel (%p202) target = $region12
    $region11: #{a_call__.5} parent=5 // pred_region
      %s206 = ssub.s32 %s12, 1
      // Predicated region
      $region13: #{a_call__.5} parent=11 // pred_check
        %p207 = pneg %p101
      $region14: #{a_call__.5} parent=11 // pred_check_branch
        %209 = sbr.rel (%p207) target = $region16
      $region15: #{a_call__.5} parent=11 // pred_region
        _
      $region16: #{a_call__.5} parent=11 // pred_fallthru
        _
      // Predicated region
      $region17: #{a_call__.5} parent=11 // pred_check
        %p210 = pneg %p122
      $region18: #{a_call__.5} parent=11 // pred_check_branch
        %212 = sbr.rel (%p210) target = $region20
      $region19: #{a_call__.5} parent=11 // pred_region
        _
      $region20: #{a_call__.5} parent=11 // pred_fallthru
        _
      // Predicated region
      $region21: #{a_call__.5} parent=11 // pred_check
        %p213 = pneg %p143
      $region22: #{a_call__.5} parent=11 // pred_check_branch
        %215 = sbr.rel (%p213) target = $region24
      $region23: #{a_call__.5} parent=11 // pred_region
        _
      $region24: #{a_call__.5} parent=11 // pred_fallthru
        _
      // Predicated region
      $region25: #{a_call__.5} parent=11 // pred_check
        %p216 = pneg %p164
      $region26: #{a_call__.5} parent=11 // pred_check_branch
        %218 = sbr.rel (%p216) target = $region28
      $region27: #{a_call__.5} parent=11 // pred_region
        _
      $region28: #{a_call__.5} parent=11 // pred_fallthru
        _
    $region12: #{a_call__.5} parent=5 // pred_fallthru
      _
    %p219 = scmp.lt.s32.totalorder %s12, 2
    // Predicated region
    $region29: #{a_call__.5} parent=5 // pred_check
      %p220 = pneg %p219
    $region30: #{a_call__.5} parent=5 // pred_check_branch
      %222 = sbr.rel (%p220) target = $region32
    $region31: #{a_call__.5} parent=5 // pred_region
      // Predicated region
      $region33: #{a_call__.5} parent=31 // pred_check
        %p223 = pneg %p46
      $region34: #{a_call__.5} parent=31 // pred_check_branch
        %225 = sbr.rel (%p223) target = $region36
      $region35: #{a_call__.5} parent=31 // pred_region
        %s226 = smul.u32 16, %s20
        %p227 = scmp.lt.s32.totalorder %s19, 1
        %s228 = scalar_select %p227, %s19, 1
        %p229 = scmp.lt.s32.totalorder %s226, 15
        %s230 = scalar_select %p229, %s226, 15
        %s231 = smul.addr %s230, 2
        %s232 = smul.addr %s228, 32
        %s233 = sadd.s32 %s231, %s232
        %s234 = smul.addr %s233, 4
        %s235 = scalar_lea.vmem %s0, %s234
        %s236 = smul.u32 16, %s20
      $region36: #{a_call__.5} parent=31 // pred_fallthru
        _
      // Predicated region
      $region37: #{a_call__.5} parent=31 // pred_check
        %p237 = pneg %p74
      $region38: #{a_call__.5} parent=31 // pred_check_branch
        %239 = sbr.rel (%p237) target = $region40
      $region39: #{a_call__.5} parent=31 // pred_region
        %s240 = smul.u32 16, %s20
        %p241 = scmp.lt.s32.totalorder %s19, 1
        %s242 = scalar_select %p241, %s19, 1
        %p243 = scmp.lt.s32.totalorder %s240, 15
        %s244 = scalar_select %p243, %s240, 15
        %s245 = smul.addr %s244, 2
        %s246 = smul.addr %s242, 32
        %s247 = sadd.s32 %s245, %s246
        %s248 = smul.addr %s247, 4
        %s249 = scalar_lea.vmem %s1, %s248
        %s250 = smul.u32 16, %s20
      $region40: #{a_call__.5} parent=31 // pred_fallthru
        _
    $region32: #{a_call__.5} parent=5 // pred_fallthru
      _
    %p251 = scmp.le.s32.totalorder 1, %s12
    %p252 = scmp.lt.s32.totalorder %s12, 3
    %p253 = pnand %p251, %p252
    %p254 = pneg %p253
    // Predicated region
    $region41: #{a_call__.5} parent=5 // pred_check
      _
    $region42: #{a_call__.5} parent=5 // pred_check_branch
      %256 = sbr.rel (%p253) target = $region44
    $region43: #{a_call__.5} parent=5 // pred_region
      %s257 = ssub.s32 %s12, 1
      %s258 = smul.u32 16, %s22
      %p259 = scmp.lt.s32.totalorder %s21, 1
      %s260 = scalar_select %p259, %s21, 1
      %p261 = scmp.lt.s32.totalorder %s258, 15
      %s262 = scalar_select %p261, %s258, 15
      %s263 = smul.addr %s262, 2
      %s264 = smul.addr %s260, 32
      %s265 = sadd.s32 %s263, %s264
      %s266 = smul.addr %s265, 4
      %s267 = scalar_lea.vmem %s0, %s266
      %p268 = pneg %p52
      %p269 = pneg %p49
      %s270 = smul.u32 16, %s22
      %p271 = scmp.lt.s32.totalorder %s21, 1
      %s272 = scalar_select %p271, %s21, 1
      %p273 = scmp.lt.s32.totalorder %s270, 15
      %s274 = scalar_select %p273, %s270, 15
      %s275 = smul.addr %s274, 2
      %s276 = smul.addr %s272, 32
      %s277 = sadd.s32 %s275, %s276
      %s278 = smul.addr %s277, 4
      %s279 = scalar_lea.vmem %s1, %s278
      %p280 = pneg %p80
      %p281 = pneg %p77
      %p282 = pneg %p101
      %p283 = pneg %p98
      %p284 = pneg %p122
      %p285 = pneg %p119
      %p286 = pneg %p143
      %p287 = pneg %p140
      %p288 = pneg %p164
      %p289 = pneg %p161
      %p290 = pneg %p192
      %p291 = pneg %p189
      %s292 = smul.u32 16, %s22
      %p293 = scmp.lt.s32.totalorder %s21, 1
      %s294 = scalar_select %p293, %s21, 1
      %p295 = scmp.lt.s32.totalorder %s292, 15
      %s296 = scalar_select %p295, %s292, 15
      %s297 = smul.addr %s296, 2
      %s298 = smul.addr %s294, 32
      %s299 = sadd.s32 %s297, %s298
      %s300 = smul.addr %s299, 8
      %s301 = scalar_lea.vmem %s6, %s300
      %s302 = smul.u32 16, %s22
      %p303 = scmp.lt.s32.totalorder %s21, 1
      %s304 = scalar_select %p303, %s21, 1
      %p305 = scmp.lt.s32.totalorder %s302, 15
      %s306 = scalar_select %p305, %s302, 15
      %s307 = smul.addr %s306, 2
      %s308 = smul.addr %s304, 32
      %s309 = sadd.s32 %s307, %s308
      %s310 = smul.addr %s309, 4
      %s311 = scalar_lea.vmem %s0, %s310
      %s312 = smul.u32 16, %s22
      %s313 = smul.u32 16, %s22
      %p314 = scmp.lt.s32.totalorder %s21, 1
      %s315 = scalar_select %p314, %s21, 1
      %p316 = scmp.lt.s32.totalorder %s313, 15
      %s317 = scalar_select %p316, %s313, 15
      %s318 = smul.addr %s317, 2
      %s319 = smul.addr %s315, 32
      %s320 = sadd.s32 %s318, %s319
      %s321 = smul.addr %s320, 4
      %s322 = scalar_lea.vmem %s1, %s321
      %s323 = smul.u32 16, %s22
      %s324 = smul.u32 16, %s22
      %p325 = scmp.lt.s32.totalorder %s21, 1
      %s326 = scalar_select %p325, %s21, 1
      %p327 = scmp.lt.s32.totalorder %s324, 15
      %s328 = scalar_select %p327, %s324, 15
      %s329 = smul.addr %s328, 2
      %s330 = smul.addr %s326, 32
      %s331 = sadd.s32 %s329, %s330
      %s332 = smul.addr %s331, 8
      %s333 = scalar_lea.vmem %s6, %s332
      %s334 = smul.u32 16, %s22
      %v335 = vld [vmem:[%s322] sm:$0xf]
      %v336 = vld [vmem:[%s322 + $0x4] sm:$0xf]
      %v337 = vld [vmem:[%s322 + $0x8] sm:$0xf]
      %v338 = vld [vmem:[%s322 + $0xc] sm:$0xf]
      %v339 = vld [vmem:[%s322 + $0x10] sm:$0xf]
      %v340 = vld [vmem:[%s322 + $0x14] sm:$0xf]
      %v341 = vld [vmem:[%s322 + $0x18] sm:$0xf]
      %v342 = vld [vmem:[%s322 + $0x1c] sm:$0xf]
      %v343 = vld [vmem:[%s322 + $0x20] sm:$0xf]
      %v344 = vld [vmem:[%s322 + $0x24] sm:$0xf]
      %v345 = vld [vmem:[%s322 + $0x28] sm:$0xf]
      %v346 = vld [vmem:[%s322 + $0x2c] sm:$0xf]
      %v347 = vld [vmem:[%s322 + $0x30] sm:$0xf]
      %v348 = vld [vmem:[%s322 + $0x34] sm:$0xf]
      %v349 = vld [vmem:[%s322 + $0x38] sm:$0xf]
      %v350 = vld [vmem:[%s322 + $0x3c] sm:$0xf]
      %v351 = vld [vmem:[%s322 + $0x40] sm:$0xf]
      %v352 = vld [vmem:[%s322 + $0x44] sm:$0xf]
      %v353 = vld [vmem:[%s322 + $0x48] sm:$0xf]
      %v354 = vld [vmem:[%s322 + $0x4c] sm:$0xf]
      %v355 = vld [vmem:[%s322 + $0x50] sm:$0xf]
      %v356 = vld [vmem:[%s322 + $0x54] sm:$0xf]
      %v357 = vld [vmem:[%s322 + $0x58] sm:$0xf]
      %v358 = vld [vmem:[%s322 + $0x5c] sm:$0xf]
      %v359 = vld [vmem:[%s322 + $0x60] sm:$0xf]
      %v360 = vld [vmem:[%s322 + $0x64] sm:$0xf]
      %v361 = vld [vmem:[%s322 + $0x68] sm:$0xf]
      %v362 = vld [vmem:[%s322 + $0x6c] sm:$0xf]
      %v363 = vld [vmem:[%s322 + $0x70] sm:$0xf]
      %v364 = vld [vmem:[%s322 + $0x74] sm:$0xf]
      %v365 = vld [vmem:[%s322 + $0x78] sm:$0xf]
      %v366 = vld [vmem:[%s322 + $0x7c] sm:$0xf]
      %v367 = vunpack.c.l.bf16 %v335
      %v368 = vunpack.c.l.bf16 %v336
      %v369 = vunpack.c.l.bf16 %v337
      %v370 = vunpack.c.l.bf16 %v338
      %v371 = vunpack.c.l.bf16 %v339
      %v372 = vunpack.c.l.bf16 %v340
      %v373 = vunpack.c.l.bf16 %v341
      %v374 = vunpack.c.l.bf16 %v342
      %v375 = vunpack.c.l.bf16 %v343
      %v376 = vunpack.c.l.bf16 %v344
      %v377 = vunpack.c.l.bf16 %v345
      %v378 = vunpack.c.l.bf16 %v346
      %v379 = vunpack.c.l.bf16 %v347
      %v380 = vunpack.c.l.bf16 %v348
      %v381 = vunpack.c.l.bf16 %v349
      %v382 = vunpack.c.l.bf16 %v350
      %v383 = vunpack.c.l.bf16 %v351
      %v384 = vunpack.c.l.bf16 %v352
      %v385 = vunpack.c.l.bf16 %v353
      %v386 = vunpack.c.l.bf16 %v354
      %v387 = vunpack.c.l.bf16 %v355
      %v388 = vunpack.c.l.bf16 %v356
      %v389 = vunpack.c.l.bf16 %v357
      %v390 = vunpack.c.l.bf16 %v358
      %v391 = vunpack.c.l.bf16 %v359
      %v392 = vunpack.c.l.bf16 %v360
      %v393 = vunpack.c.l.bf16 %v361
      %v394 = vunpack.c.l.bf16 %v362
      %v395 = vunpack.c.l.bf16 %v363
      %v396 = vunpack.c.l.bf16 %v364
      %v397 = vunpack.c.l.bf16 %v365
      %v398 = vunpack.c.l.bf16 %v366
      %v399 = vld [vmem:[%s4] sm:$0x1]
      %v401 = vlaneseq
      %v402 = vshrl.u32 %v401, 7
      %v403 = vsub.s32 0, %v402
      %v404 = vrot.slane %v399, %v403
      %v406 = vmul.f32 %v367, %v404
      %v407 = vmul.f32 %v368, %v404
      %v408 = vmul.f32 %v369, %v404
      %v409 = vmul.f32 %v370, %v404
      %v410 = vmul.f32 %v371, %v404
      %v411 = vmul.f32 %v372, %v404
      %v412 = vmul.f32 %v373, %v404
      %v413 = vmul.f32 %v374, %v404
      %v414 = vmul.f32 %v375, %v404
      %v415 = vmul.f32 %v376, %v404
      %v416 = vmul.f32 %v377, %v404
      %v417 = vmul.f32 %v378, %v404
      %v418 = vmul.f32 %v379, %v404
      %v419 = vmul.f32 %v380, %v404
      %v420 = vmul.f32 %v381, %v404
      %v421 = vmul.f32 %v382, %v404
      %v422 = vmul.f32 %v383, %v404
      %v423 = vmul.f32 %v384, %v404
      %v424 = vmul.f32 %v385, %v404
      %v425 = vmul.f32 %v386, %v404
      %v426 = vmul.f32 %v387, %v404
      %v427 = vmul.f32 %v388, %v404
      %v428 = vmul.f32 %v389, %v404
      %v429 = vmul.f32 %v390, %v404
      %v430 = vmul.f32 %v391, %v404
      %v431 = vmul.f32 %v392, %v404
      %v432 = vmul.f32 %v393, %v404
      %v433 = vmul.f32 %v394, %v404
      %v434 = vmul.f32 %v395, %v404
      %v435 = vmul.f32 %v396, %v404
      %v436 = vmul.f32 %v397, %v404
      %v437 = vmul.f32 %v398, %v404
      %v438 = vld [vmem:[%s5] sm:$0x1]
      %v440 = vlaneseq
      %v441 = vshrl.u32 %v440, 7
      %v442 = vsub.s32 0, %v441
      %v443 = vrot.slane %v438, %v442
      %v445 = vadd.f32 %v406, %v443
      %v446 = vadd.f32 %v407, %v443
      %v447 = vadd.f32 %v408, %v443
      %v448 = vadd.f32 %v409, %v443
      %v449 = vadd.f32 %v410, %v443
      %v450 = vadd.f32 %v411, %v443
      %v451 = vadd.f32 %v412, %v443
      %v452 = vadd.f32 %v413, %v443
      %v453 = vadd.f32 %v414, %v443
      %v454 = vadd.f32 %v415, %v443
      %v455 = vadd.f32 %v416, %v443
      %v456 = vadd.f32 %v417, %v443
      %v457 = vadd.f32 %v418, %v443
      %v458 = vadd.f32 %v419, %v443
      %v459 = vadd.f32 %v420, %v443
      %v460 = vadd.f32 %v421, %v443
      %v461 = vadd.f32 %v422, %v443
      %v462 = vadd.f32 %v423, %v443
      %v463 = vadd.f32 %v424, %v443
      %v464 = vadd.f32 %v425, %v443
      %v465 = vadd.f32 %v426, %v443
      %v466 = vadd.f32 %v427, %v443
      %v467 = vadd.f32 %v428, %v443
      %v468 = vadd.f32 %v429, %v443
      %v469 = vadd.f32 %v430, %v443
      %v470 = vadd.f32 %v431, %v443
      %v471 = vadd.f32 %v432, %v443
      %v472 = vadd.f32 %v433, %v443
      %v473 = vadd.f32 %v434, %v443
      %v474 = vadd.f32 %v435, %v443
      %v475 = vadd.f32 %v436, %v443
      %v476 = vadd.f32 %v437, %v443
      %v477 = vld [vmem:[%s311] sm:$0xf]
      %v478 = vld [vmem:[%s311 + $0x4] sm:$0xf]
      %v479 = vld [vmem:[%s311 + $0x8] sm:$0xf]
      %v480 = vld [vmem:[%s311 + $0xc] sm:$0xf]
      %v481 = vld [vmem:[%s311 + $0x10] sm:$0xf]
      %v482 = vld [vmem:[%s311 + $0x14] sm:$0xf]
      %v483 = vld [vmem:[%s311 + $0x18] sm:$0xf]
      %v484 = vld [vmem:[%s311 + $0x1c] sm:$0xf]
      %v485 = vld [vmem:[%s311 + $0x20] sm:$0xf]
      %v486 = vld [vmem:[%s311 + $0x24] sm:$0xf]
      %v487 = vld [vmem:[%s311 + $0x28] sm:$0xf]
      %v488 = vld [vmem:[%s311 + $0x2c] sm:$0xf]
      %v489 = vld [vmem:[%s311 + $0x30] sm:$0xf]
      %v490 = vld [vmem:[%s311 + $0x34] sm:$0xf]
      %v491 = vld [vmem:[%s311 + $0x38] sm:$0xf]
      %v492 = vld [vmem:[%s311 + $0x3c] sm:$0xf]
      %v493 = vld [vmem:[%s311 + $0x40] sm:$0xf]
      %v494 = vld [vmem:[%s311 + $0x44] sm:$0xf]
      %v495 = vld [vmem:[%s311 + $0x48] sm:$0xf]
      %v496 = vld [vmem:[%s311 + $0x4c] sm:$0xf]
      %v497 = vld [vmem:[%s311 + $0x50] sm:$0xf]
      %v498 = vld [vmem:[%s311 + $0x54] sm:$0xf]
      %v499 = vld [vmem:[%s311 + $0x58] sm:$0xf]
      %v500 = vld [vmem:[%s311 + $0x5c] sm:$0xf]
      %v501 = vld [vmem:[%s311 + $0x60] sm:$0xf]
      %v502 = vld [vmem:[%s311 + $0x64] sm:$0xf]
      %v503 = vld [vmem:[%s311 + $0x68] sm:$0xf]
      %v504 = vld [vmem:[%s311 + $0x6c] sm:$0xf]
      %v505 = vld [vmem:[%s311 + $0x70] sm:$0xf]
      %v506 = vld [vmem:[%s311 + $0x74] sm:$0xf]
      %v507 = vld [vmem:[%s311 + $0x78] sm:$0xf]
      %v508 = vld [vmem:[%s311 + $0x7c] sm:$0xf]
      %v509 = vunpack.c.l.bf16 %v477
      %v510 = vunpack.c.l.bf16 %v478
      %v511 = vunpack.c.l.bf16 %v479
      %v512 = vunpack.c.l.bf16 %v480
      %v513 = vunpack.c.l.bf16 %v481
      %v514 = vunpack.c.l.bf16 %v482
      %v515 = vunpack.c.l.bf16 %v483
      %v516 = vunpack.c.l.bf16 %v484
      %v517 = vunpack.c.l.bf16 %v485
      %v518 = vunpack.c.l.bf16 %v486
      %v519 = vunpack.c.l.bf16 %v487
      %v520 = vunpack.c.l.bf16 %v488
      %v521 = vunpack.c.l.bf16 %v489
      %v522 = vunpack.c.l.bf16 %v490
      %v523 = vunpack.c.l.bf16 %v491
      %v524 = vunpack.c.l.bf16 %v492
      %v525 = vunpack.c.l.bf16 %v493
      %v526 = vunpack.c.l.bf16 %v494
      %v527 = vunpack.c.l.bf16 %v495
      %v528 = vunpack.c.l.bf16 %v496
      %v529 = vunpack.c.l.bf16 %v497
      %v530 = vunpack.c.l.bf16 %v498
      %v531 = vunpack.c.l.bf16 %v499
      %v532 = vunpack.c.l.bf16 %v500
      %v533 = vunpack.c.l.bf16 %v501
      %v534 = vunpack.c.l.bf16 %v502
      %v535 = vunpack.c.l.bf16 %v503
      %v536 = vunpack.c.l.bf16 %v504
      %v537 = vunpack.c.l.bf16 %v505
      %v538 = vunpack.c.l.bf16 %v506
      %v539 = vunpack.c.l.bf16 %v507
      %v540 = vunpack.c.l.bf16 %v508
      %v541 = vld [vmem:[%s2] sm:$0x1]
      %v543 = vlaneseq
      %v544 = vshrl.u32 %v543, 7
      %v545 = vsub.s32 0, %v544
      %v546 = vrot.slane %v541, %v545
      %v548 = vmul.f32 %v509, %v546
      %v549 = vmul.f32 %v510, %v546
      %v550 = vmul.f32 %v511, %v546
      %v551 = vmul.f32 %v512, %v546
      %v552 = vmul.f32 %v513, %v546
      %v553 = vmul.f32 %v514, %v546
      %v554 = vmul.f32 %v515, %v546
      %v555 = vmul.f32 %v516, %v546
      %v556 = vmul.f32 %v517, %v546
      %v557 = vmul.f32 %v518, %v546
      %v558 = vmul.f32 %v519, %v546
      %v559 = vmul.f32 %v520, %v546
      %v560 = vmul.f32 %v521, %v546
      %v561 = vmul.f32 %v522, %v546
      %v562 = vmul.f32 %v523, %v546
      %v563 = vmul.f32 %v524, %v546
      %v564 = vmul.f32 %v525, %v546
      %v565 = vmul.f32 %v526, %v546
      %v566 = vmul.f32 %v527, %v546
      %v567 = vmul.f32 %v528, %v546
      %v568 = vmul.f32 %v529, %v546
      %v569 = vmul.f32 %v530, %v546
      %v570 = vmul.f32 %v531, %v546
      %v571 = vmul.f32 %v532, %v546
      %v572 = vmul.f32 %v533, %v546
      %v573 = vmul.f32 %v534, %v546
      %v574 = vmul.f32 %v535, %v546
      %v575 = vmul.f32 %v536, %v546
      %v576 = vmul.f32 %v537, %v546
      %v577 = vmul.f32 %v538, %v546
      %v578 = vmul.f32 %v539, %v546
      %v579 = vmul.f32 %v540, %v546
      %v580 = vld [vmem:[%s3] sm:$0x1]
      %v582 = vlaneseq
      %v583 = vshrl.u32 %v582, 7
      %v584 = vsub.s32 0, %v583
      %v585 = vrot.slane %v580, %v584
      %v587 = vadd.f32 %v548, %v585
      %v588 = vadd.f32 %v549, %v585
      %v589 = vadd.f32 %v550, %v585
      %v590 = vadd.f32 %v551, %v585
      %v591 = vadd.f32 %v552, %v585
      %v592 = vadd.f32 %v553, %v585
      %v593 = vadd.f32 %v554, %v585
      %v594 = vadd.f32 %v555, %v585
      %v595 = vadd.f32 %v556, %v585
      %v596 = vadd.f32 %v557, %v585
      %v597 = vadd.f32 %v558, %v585
      %v598 = vadd.f32 %v559, %v585
      %v599 = vadd.f32 %v560, %v585
      %v600 = vadd.f32 %v561, %v585
      %v601 = vadd.f32 %v562, %v585
      %v602 = vadd.f32 %v563, %v585
      %v603 = vadd.f32 %v564, %v585
      %v604 = vadd.f32 %v565, %v585
      %v605 = vadd.f32 %v566, %v585
      %v606 = vadd.f32 %v567, %v585
      %v607 = vadd.f32 %v568, %v585
      %v608 = vadd.f32 %v569, %v585
      %v609 = vadd.f32 %v570, %v585
      %v610 = vadd.f32 %v571, %v585
      %v611 = vadd.f32 %v572, %v585
      %v612 = vadd.f32 %v573, %v585
      %v613 = vadd.f32 %v574, %v585
      %v614 = vadd.f32 %v575, %v585
      %v615 = vadd.f32 %v576, %v585
      %v616 = vadd.f32 %v577, %v585
      %v617 = vadd.f32 %v578, %v585
      %v618 = vadd.f32 %v579, %v585
      %v619 = vadd.f32 %v587, %v445
      %v620 = vadd.f32 %v588, %v446
      %v621 = vadd.f32 %v589, %v447
      %v622 = vadd.f32 %v590, %v448
      %v623 = vadd.f32 %v591, %v449
      %v624 = vadd.f32 %v592, %v450
      %v625 = vadd.f32 %v593, %v451
      %v626 = vadd.f32 %v594, %v452
      %v627 = vadd.f32 %v595, %v453
      %v628 = vadd.f32 %v596, %v454
      %v629 = vadd.f32 %v597, %v455
      %v630 = vadd.f32 %v598, %v456
      %v631 = vadd.f32 %v599, %v457
      %v632 = vadd.f32 %v600, %v458
      %v633 = vadd.f32 %v601, %v459
      %v634 = vadd.f32 %v602, %v460
      %v635 = vadd.f32 %v603, %v461
      %v636 = vadd.f32 %v604, %v462
      %v637 = vadd.f32 %v605, %v463
      %v638 = vadd.f32 %v606, %v464
      %v639 = vadd.f32 %v607, %v465
      %v640 = vadd.f32 %v608, %v466
      %v641 = vadd.f32 %v609, %v467
      %v642 = vadd.f32 %v610, %v468
      %v643 = vadd.f32 %v611, %v469
      %v644 = vadd.f32 %v612, %v470
      %v645 = vadd.f32 %v613, %v471
      %v646 = vadd.f32 %v614, %v472
      %v647 = vadd.f32 %v615, %v473
      %v648 = vadd.f32 %v616, %v474
      %v649 = vadd.f32 %v617, %v475
      %v650 = vadd.f32 %v618, %v476
      %v651 = vmax.f32 %v619, 0.0
      %v652 = vmax.f32 %v620, 0.0
      %v653 = vmax.f32 %v621, 0.0
      %v654 = vmax.f32 %v622, 0.0
      %v655 = vmax.f32 %v623, 0.0
      %v656 = vmax.f32 %v624, 0.0
      %v657 = vmax.f32 %v625, 0.0
      %v658 = vmax.f32 %v626, 0.0
      %v659 = vmax.f32 %v627, 0.0
      %v660 = vmax.f32 %v628, 0.0
      %v661 = vmax.f32 %v629, 0.0
      %v662 = vmax.f32 %v630, 0.0
      %v663 = vmax.f32 %v631, 0.0
      %v664 = vmax.f32 %v632, 0.0
      %v665 = vmax.f32 %v633, 0.0
      %v666 = vmax.f32 %v634, 0.0
      %v667 = vmax.f32 %v635, 0.0
      %v668 = vmax.f32 %v636, 0.0
      %v669 = vmax.f32 %v637, 0.0
      %v670 = vmax.f32 %v638, 0.0
      %v671 = vmax.f32 %v639, 0.0
      %v672 = vmax.f32 %v640, 0.0
      %v673 = vmax.f32 %v641, 0.0
      %v674 = vmax.f32 %v642, 0.0
      %v675 = vmax.f32 %v643, 0.0
      %v676 = vmax.f32 %v644, 0.0
      %v677 = vmax.f32 %v645, 0.0
      %v678 = vmax.f32 %v646, 0.0
      %v679 = vmax.f32 %v647, 0.0
      %v680 = vmax.f32 %v648, 0.0
      %v681 = vmax.f32 %v649, 0.0
      %v682 = vmax.f32 %v650, 0.0
      %vm683 = vcmask 64512
      %684 = vst.msk [vmem:[%s333] sm:$0xff] %vm683, %v651
      %685 = vst.msk [vmem:[%s333 + $0x8] sm:$0xff] %vm683, %v652
      %686 = vst.msk [vmem:[%s333 + $0x10] sm:$0xff] %vm683, %v653
      %687 = vst.msk [vmem:[%s333 + $0x18] sm:$0xff] %vm683, %v654
      %688 = vst.msk [vmem:[%s333 + $0x20] sm:$0xff] %vm683, %v655
      %689 = vst.msk [vmem:[%s333 + $0x28] sm:$0xff] %vm683, %v656
      %690 = vst.msk [vmem:[%s333 + $0x30] sm:$0xff] %vm683, %v657
      %691 = vst.msk [vmem:[%s333 + $0x38] sm:$0xff] %vm683, %v658
      %692 = vst.msk [vmem:[%s333 + $0x40] sm:$0xff] %vm683, %v659
      %693 = vst.msk [vmem:[%s333 + $0x48] sm:$0xff] %vm683, %v660
      %694 = vst.msk [vmem:[%s333 + $0x50] sm:$0xff] %vm683, %v661
      %695 = vst.msk [vmem:[%s333 + $0x58] sm:$0xff] %vm683, %v662
      %696 = vst.msk [vmem:[%s333 + $0x60] sm:$0xff] %vm683, %v663
      %697 = vst.msk [vmem:[%s333 + $0x68] sm:$0xff] %vm683, %v664
      %698 = vst.msk [vmem:[%s333 + $0x70] sm:$0xff] %vm683, %v665
      %699 = vst.msk [vmem:[%s333 + $0x78] sm:$0xff] %vm683, %v666
      %700 = vst.msk [vmem:[%s333 + $0x80] sm:$0xff] %vm683, %v667
      %701 = vst.msk [vmem:[%s333 + $0x88] sm:$0xff] %vm683, %v668
      %702 = vst.msk [vmem:[%s333 + $0x90] sm:$0xff] %vm683, %v669
      %703 = vst.msk [vmem:[%s333 + $0x98] sm:$0xff] %vm683, %v670
      %704 = vst.msk [vmem:[%s333 + $0xa0] sm:$0xff] %vm683, %v671
      %705 = vst.msk [vmem:[%s333 + $0xa8] sm:$0xff] %vm683, %v672
      %706 = vst.msk [vmem:[%s333 + $0xb0] sm:$0xff] %vm683, %v673
      %707 = vst.msk [vmem:[%s333 + $0xb8] sm:$0xff] %vm683, %v674
      %708 = vst.msk [vmem:[%s333 + $0xc0] sm:$0xff] %vm683, %v675
      %709 = vst.msk [vmem:[%s333 + $0xc8] sm:$0xff] %vm683, %v676
      %710 = vst.msk [vmem:[%s333 + $0xd0] sm:$0xff] %vm683, %v677
      %711 = vst.msk [vmem:[%s333 + $0xd8] sm:$0xff] %vm683, %v678
      %712 = vst.msk [vmem:[%s333 + $0xe0] sm:$0xff] %vm683, %v679
      %713 = vst.msk [vmem:[%s333 + $0xe8] sm:$0xff] %vm683, %v680
      %714 = vst.msk [vmem:[%s333 + $0xf0] sm:$0xff] %vm683, %v681
      %715 = vst.msk [vmem:[%s333 + $0xf8] sm:$0xff] %vm683, %v682
      %s716 = smul.u32 16, %s22
      %p717 = scmp.lt.s32.totalorder %s21, 1
      %s718 = scalar_select %p717, %s21, 1
      %p719 = scmp.lt.s32.totalorder %s716, 15
      %s720 = scalar_select %p719, %s716, 15
      %s721 = smul.addr %s720, 2
      %s722 = smul.addr %s718, 32
      %s723 = sadd.s32 %s721, %s722
      %s724 = smul.addr %s723, 8
      %s725 = scalar_lea.vmem %s6, %s724
      // Predicated region
      $region45: #{a_call__.5} parent=43 // pred_check
        %p726 = pneg %p189
      $region46: #{a_call__.5} parent=43 // pred_check_branch
        %728 = sbr.rel (%p726) target = $region48
      $region47: #{a_call__.5} parent=43 // pred_region
        %s729 = smul.u32 16, %s22
      $region48: #{a_call__.5} parent=43 // pred_fallthru
        _
    $region44: #{a_call__.5} parent=5 // pred_fallthru
      _
    %p730 = scmp.le.s32.totalorder 2, %s12
    // Predicated region
    $region49: #{a_call__.5} parent=5 // pred_check
      %p731 = pneg %p730
    $region50: #{a_call__.5} parent=5 // pred_check_branch
      %733 = sbr.rel (%p731) target = $region52
    $region51: #{a_call__.5} parent=5 // pred_region
      %s734 = ssub.s32 %s12, 2
      // Predicated region
      $region53: #{a_call__.5} parent=51 // pred_check
        %p735 = pneg %p195
      $region54: #{a_call__.5} parent=51 // pred_check_branch
        %737 = sbr.rel (%p735) target = $region56
      $region55: #{a_call__.5} parent=51 // pred_region
        %s738 = smul.u32 16, %s24
        %p739 = scmp.lt.s32.totalorder %s23, 1
        %s740 = scalar_select %p739, %s23, 1
        %p741 = scmp.lt.s32.totalorder %s738, 15
        %s742 = scalar_select %p741, %s738, 15
        %s743 = smul.addr %s742, 2
        %s744 = smul.addr %s740, 32
        %s745 = sadd.s32 %s743, %s744
        %s746 = smul.addr %s745, 8
        %s747 = scalar_lea.vmem %s6, %s746
      $region56: #{a_call__.5} parent=51 // pred_fallthru
        _
    $region52: #{a_call__.5} parent=5 // pred_fallthru
      _
  $region6: #{a_call__.5} parent=0 // loop_footer
    %s16 = sadd.s32 1, %s12
  $region7: #{a_call__.5} parent=0 // loop_footer_branch
    %11 = sbr.rel target = $region3
  $region8: #{a_call__.5} parent=0 // loop_exit
    _

// kernel: a_call__.3
$region0: #{a_call__.3}
  #allocation0 [shape = 'u32[]', space=smem, size = 0x4, offset = 0x4, fixed_abs, tag = 'smem constant byte address 0x4 - core index']
  #allocation1 [shape = 'u32[144,128]{1,0:T(1,128)}', space=vmem, size = 0x12000, scoped, tag = 'internal scratch']
  %s0 = inlined_call_operand.vmem [shape: bf16[2,20,18,4], index: 0, kind: input, shape index: {}]
  %s1 = inlined_call_operand.vmem [shape: bf16[36,8], index: 1, kind: input, shape index: {}]
  %s2 = inlined_call_operand.vmem [shape: f32[2,1,8], index: 2, kind: output, shape index: {0}]
  %s3 = inlined_call_operand.vmem [shape: f32[2,1,8], index: 3, kind: output, shape index: {1}]
  %4 = xla_tuple %s2, %s3
  %s5 = sld [smem:[#allocation0]]
  $region49: #{a_call__.3} parent=0
    _
  %s7 = ssub.s32 1, %s5
  %s8 = scalar_select 0, %s7, %s5
  loop: start=0, step=1, limit=4
  $region2: #{a_call__.3} parent=0 // loop_pre_header
    _
  $region3: #{a_call__.3} parent=0 // loop_header
    %s10 = sphi 0, %s14
    %p11 = scmp.ge.s32.totalorder %s10, 4
    %s17 = sphi 0, %s29
    %s18 = sphi 0, %s25
    %s19 = sphi 0, %s17
    %s20 = sphi 0, %s18
    %s21 = sphi 0, %s19
    %s22 = sphi 0, %s20
    %s32 = sphi 0, %s34
    %s35 = sphi 0, %s32
    %s36 = sphi 0, %s35
    %s52 = sphi 0, %s36
    %s56 = sphi 0, %s56
    %s58 = sphi 0, %s56
    %s59 = sphi 0, %s58
    %s73 = sphi 0, %s59
    %s81 = sphi 0, %s83
    %s84 = sphi 0, %s81
    %s85 = sphi 0, %s84
    %s101 = sphi 0, %s85
    %s109 = sphi 0, %s111
    %s112 = sphi 0, %s109
    %s113 = sphi 0, %s112
    %s129 = sphi 0, %s113
  $region4: #{a_call__.3} parent=0 // loop_header_branch
    %13 = sbr.rel (%p11) target = $region8
  $region5: #{a_call__.3} parent=0 // loop_body
    %s15 = ssub.s32 %s10, 1
    %s16 = ssub.s32 %s10, 2
    %s23 = sadd.s32 1, %s18
    %p24 = scmp.ge.s32.totalorder %s23, 1
    %s25 = scalar_select %p24, 0, %s23
    %s26 = sadd.s32 1, %s17
    %s27 = scalar_select %p24, %s26, %s17
    %p28 = scmp.ge.s32.totalorder %s27, 2
    %s29 = scalar_select %p28, 0, %s27
    %s30 = ssub.s32 %s17, %s29
    %p31 = scmp.eq.s32.totalorder %s30, 0
    %s33 = sadd.s32 %s32, 1
    %s34 = scalar_select %p31, %s32, %s33
    %p37 = pneg %p31
    %p38 = scmp.eq.s32.totalorder %s10, 1
    %p39 = por %p37, %p38
    %p40 = scmp.ne.s32.totalorder %s32, %s35
    %p41 = scmp.eq.s32.totalorder %s10, 0
    %p42 = por %p40, %p41
    %p43 = scmp.ne.s32.totalorder %s32, %s35
    %p44 = scmp.eq.s32.totalorder %s15, 1
    %p45 = por %p43, %p44
    %p46 = scmp.ne.s32.totalorder %s35, %s36
    %p47 = scmp.eq.s32.totalorder %s15, 0
    %p48 = por %p46, %p47
    %p49 = scmp.ne.s32.totalorder %s35, %s36
    %p50 = scmp.eq.s32.totalorder %s16, 1
    %p51 = por %p49, %p50
    %p53 = scmp.ne.s32.totalorder %s36, %s52
    %p54 = scmp.eq.s32.totalorder %s16, 0
    %p55 = por %p53, %p54
    %s57 = sadd.s32 %s56, 1
    %p60 = scmp.eq.s32.totalorder %s10, 1
    %p61 = scmp.ne.s32.totalorder %s56, %s58
    %p62 = scmp.eq.s32.totalorder %s10, 0
    %p63 = por %p61, %p62
    %p64 = scmp.ne.s32.totalorder %s56, %s58
    %p65 = scmp.eq.s32.totalorder %s15, 1
    %p66 = por %p64, %p65
    %p67 = scmp.ne.s32.totalorder %s58, %s59
    %p68 = scmp.eq.s32.totalorder %s15, 0
    %p69 = por %p67, %p68
    %p70 = scmp.ne.s32.totalorder %s58, %s59
    %p71 = scmp.eq.s32.totalorder %s16, 1
    %p72 = por %p70, %p71
    %p74 = scmp.ne.s32.totalorder %s59, %s73
    %p75 = scmp.eq.s32.totalorder %s16, 0
    %p76 = por %p74, %p75
    %s77 = sadd.s32 %s17, %s18
    %s78 = sadd.s32 %s29, %s25
    %s79 = ssub.s32 %s77, %s78
    %p80 = scmp.eq.s32.totalorder %s79, 0
    %s82 = sadd.s32 %s81, 1
    %s83 = scalar_select %p80, %s81, %s82
    %p86 = pneg %p80
    %p87 = scmp.eq.s32.totalorder %s10, 1
    %p88 = por %p86, %p87
    %p89 = scmp.ne.s32.totalorder %s81, %s84
    %p90 = scmp.eq.s32.totalorder %s10, 0
    %p91 = por %p89, %p90
    %p92 = scmp.ne.s32.totalorder %s81, %s84
    %p93 = scmp.eq.s32.totalorder %s15, 1
    %p94 = por %p92, %p93
    %p95 = scmp.ne.s32.totalorder %s84, %s85
    %p96 = scmp.eq.s32.totalorder %s15, 0
    %p97 = por %p95, %p96
    %p98 = scmp.ne.s32.totalorder %s84, %s85
    %p99 = scmp.eq.s32.totalorder %s16, 1
    %p100 = por %p98, %p99
    %p102 = scmp.ne.s32.totalorder %s85, %s101
    %p103 = scmp.eq.s32.totalorder %s16, 0
    %p104 = por %p102, %p103
    %s105 = sadd.s32 %s17, %s18
    %s106 = sadd.s32 %s29, %s25
    %s107 = ssub.s32 %s105, %s106
    %p108 = scmp.eq.s32.totalorder %s107, 0
    %s110 = sadd.s32 %s109, 1
    %s111 = scalar_select %p108, %s109, %s110
    %p114 = pneg %p108
    %p115 = scmp.eq.s32.totalorder %s10, 1
    %p116 = por %p114, %p115
    %p117 = scmp.ne.s32.totalorder %s109, %s112
    %p118 = scmp.eq.s32.totalorder %s10, 0
    %p119 = por %p117, %p118
    %p120 = scmp.ne.s32.totalorder %s109, %s112
    %p121 = scmp.eq.s32.totalorder %s15, 1
    %p122 = por %p120, %p121
    %p123 = scmp.ne.s32.totalorder %s112, %s113
    %p124 = scmp.eq.s32.totalorder %s15, 0
    %p125 = por %p123, %p124
    %p126 = scmp.ne.s32.totalorder %s112, %s113
    %p127 = scmp.eq.s32.totalorder %s16, 1
    %p128 = por %p126, %p127
    %p130 = scmp.ne.s32.totalorder %s113, %s129
    %p131 = scmp.eq.s32.totalorder %s16, 0
    %p132 = por %p130, %p131
    %p133 = scmp.le.s32.totalorder 1, %s10
    %p134 = scmp.lt.s32.totalorder %s10, 3
    %p135 = pnand %p133, %p134
    %p136 = pneg %p135
    // Predicated region
    $region9: #{a_call__.3} parent=5 // pred_check
      _
    $region10: #{a_call__.3} parent=5 // pred_check_branch
      %138 = sbr.rel (%p135) target = $region12
    $region11: #{a_call__.3} parent=5 // pred_region
      %s139 = ssub.s32 %s10, 1
      // Predicated region
      $region13: #{a_call__.3} parent=11 // pred_check
        %p140 = pneg %p69
      $region14: #{a_call__.3} parent=11 // pred_check_branch
        %142 = sbr.rel (%p140) target = $region16
      $region15: #{a_call__.3} parent=11 // pred_region
        _
      $region16: #{a_call__.3} parent=11 // pred_fallthru
        _
    $region12: #{a_call__.3} parent=5 // pred_fallthru
      _
    %p143 = scmp.lt.s32.totalorder %s10, 2
    // Predicated region
    $region17: #{a_call__.3} parent=5 // pred_check
      %p144 = pneg %p143
    $region18: #{a_call__.3} parent=5 // pred_check_branch
      %146 = sbr.rel (%p144) target = $region20
    $region19: #{a_call__.3} parent=5 // pred_region
      // Predicated region
      $region21: #{a_call__.3} parent=19 // pred_check
        %p147 = pneg %p42
      $region22: #{a_call__.3} parent=19 // pred_check_branch
        %149 = sbr.rel (%p147) target = $region24
      $region23: #{a_call__.3} parent=19 // pred_region
        %p150 = scmp.lt.s32.totalorder %s17, 1
        %s151 = scalar_select %p150, %s17, 1
        %s152 = smul.addr %s151, 60
        %s153 = smul.addr %s152, 4
        %s154 = scalar_lea.vmem %s0, %s153
      $region24: #{a_call__.3} parent=19 // pred_fallthru
        _
    $region20: #{a_call__.3} parent=5 // pred_fallthru
      _
    %p155 = scmp.le.s32.totalorder 1, %s10
    %p156 = scmp.lt.s32.totalorder %s10, 3
    %p157 = pnand %p155, %p156
    %p158 = pneg %p157
    // Predicated region
    $region25: #{a_call__.3} parent=5 // pred_check
      _
    $region26: #{a_call__.3} parent=5 // pred_check_branch
      %160 = sbr.rel (%p157) target = $region28
    $region27: #{a_call__.3} parent=5 // pred_region
      %s161 = ssub.s32 %s10, 1
      %p162 = scmp.lt.s32.totalorder %s19, 1
      %s163 = scalar_select %p162, %s19, 1
      %s164 = smul.addr %s163, 60
      %s165 = smul.addr %s164, 4
      %s166 = scalar_lea.vmem %s0, %s165
      %p167 = pneg %p48
      %p168 = pneg %p45
      %p169 = pneg %p69
      %p170 = pneg %p66
      %p171 = pneg %p97
      %p172 = pneg %p94
      %s173 = sadd.s32 %s19, %s20
      %p174 = scmp.lt.s32.totalorder %s173, 1
      %s175 = scalar_select %p174, %s173, 1
      %s176 = scalar_lea.vmem %s2, %s175
      %p177 = pneg %p125
      %p178 = pneg %p122
      %s179 = sadd.s32 %s19, %s20
      %p180 = scmp.lt.s32.totalorder %s179, 1
      %s181 = scalar_select %p180, %s179, 1
      %s182 = scalar_lea.vmem %s3, %s181
      %p183 = scmp.lt.s32.totalorder %s19, 1
      %s184 = scalar_select %p183, %s19, 1
      %s185 = smul.addr %s184, 60
      %s186 = smul.addr %s185, 4
      %s187 = scalar_lea.vmem %s0, %s186
      %s188 = sadd.s32 %s19, %s20
      %p189 = scmp.lt.s32.totalorder %s188, 1
      %s190 = scalar_select %p189, %s188, 1
      %s191 = scalar_lea.vmem %s2, %s190
      %s192 = sadd.s32 %s19, %s20
      %s193 = sadd.s32 %s19, %s20
      %p194 = scmp.lt.s32.totalorder %s193, 1
      %s195 = scalar_select %p194, %s193, 1
      %s196 = scalar_lea.vmem %s3, %s195
      %s197 = sadd.s32 %s19, %s20
      %v199 = vld [vmem:[%s187 + $0xc] sm:$0xf]
      %v200 = vld [vmem:[%s187 + $0x10] sm:$0xf]
      %v201 = vld [vmem:[%s187 + $0x14] sm:$0x1]
      %v202 = vld [vmem:[%s187 + $0x18] sm:$0xf]
      %v203 = vld [vmem:[%s187 + $0x1c] sm:$0xf]
      %v204 = vld [vmem:[%s187 + $0x20] sm:$0x1]
      %v205 = vld [vmem:[%s187 + $0x24] sm:$0xf]
      %v206 = vld [vmem:[%s187 + $0x28] sm:$0xf]
      %v207 = vld [vmem:[%s187 + $0x2c] sm:$0x1]
      %v208 = vld [vmem:[%s187 + $0x30] sm:$0xf]
      %v209 = vld [vmem:[%s187 + $0x34] sm:$0xf]
      %v210 = vld [vmem:[%s187 + $0x38] sm:$0x1]
      %v211 = vld [vmem:[%s187 + $0x3c] sm:$0xf]
      %v212 = vld [vmem:[%s187 + $0x40] sm:$0xf]
      %v213 = vld [vmem:[%s187 + $0x44] sm:$0x1]
      %v214 = vld [vmem:[%s187 + $0x48] sm:$0xf]
      %v215 = vld [vmem:[%s187 + $0x4c] sm:$0xf]
      %v216 = vld [vmem:[%s187 + $0x50] sm:$0x1]
      %v217 = vld [vmem:[%s187 + $0x54] sm:$0xf]
      %v218 = vld [vmem:[%s187 + $0x58] sm:$0xf]
      %v219 = vld [vmem:[%s187 + $0x5c] sm:$0x1]
      %v220 = vld [vmem:[%s187 + $0x60] sm:$0xf]
      %v221 = vld [vmem:[%s187 + $0x64] sm:$0xf]
      %v222 = vld [vmem:[%s187 + $0x68] sm:$0x1]
      %v223 = vld [vmem:[%s187 + $0x6c] sm:$0xf]
      %v224 = vld [vmem:[%s187 + $0x70] sm:$0xf]
      %v225 = vld [vmem:[%s187 + $0x74] sm:$0x1]
      %v226 = vld [vmem:[%s187 + $0x78] sm:$0xf]
      %v227 = vld [vmem:[%s187 + $0x7c] sm:$0xf]
      %v228 = vld [vmem:[%s187 + $0x80] sm:$0x1]
      %v229 = vld [vmem:[%s187 + $0x84] sm:$0xf]
      %v230 = vld [vmem:[%s187 + $0x88] sm:$0xf]
      %v231 = vld [vmem:[%s187 + $0x8c] sm:$0x1]
      %v232 = vld [vmem:[%s187 + $0x90] sm:$0xf]
      %v233 = vld [vmem:[%s187 + $0x94] sm:$0xf]
      %v234 = vld [vmem:[%s187 + $0x98] sm:$0x1]
      %v235 = vld [vmem:[%s187 + $0x9c] sm:$0xf]
      %v236 = vld [vmem:[%s187 + $0xa0] sm:$0xf]
      %v237 = vld [vmem:[%s187 + $0xa4] sm:$0x1]
      %v238 = vld [vmem:[%s187 + $0xa8] sm:$0xf]
      %v239 = vld [vmem:[%s187 + $0xac] sm:$0xf]
      %v240 = vld [vmem:[%s187 + $0xb0] sm:$0x1]
      %v241 = vld [vmem:[%s187 + $0xb4] sm:$0xf]
      %v242 = vld [vmem:[%s187 + $0xb8] sm:$0xf]
      %v243 = vld [vmem:[%s187 + $0xbc] sm:$0x1]
      %v244 = vld [vmem:[%s187 + $0xc0] sm:$0xf]
      %v245 = vld [vmem:[%s187 + $0xc4] sm:$0xf]
      %v246 = vld [vmem:[%s187 + $0xc8] sm:$0x1]
      %v247 = vld [vmem:[%s187 + $0xcc] sm:$0xf]
      %v248 = vld [vmem:[%s187 + $0xd0] sm:$0xf]
      %v249 = vld [vmem:[%s187 + $0xd4] sm:$0x1]
      %v250 = vld [vmem:[%s187 + $0xd8] sm:$0xf]
      %v251 = vld [vmem:[%s187 + $0xdc] sm:$0xf]
      %v252 = vld [vmem:[%s187 + $0xe0] sm:$0x1]
      %v253 = vld [vmem:[%s1] sm:$0x3]
      %vm254 = vsmask.f32 3328
      %vm255 = vsmask.f32 7440
      %vm256 = vmor %vm254, %vm255
      %v258 = vshrl.u32 %v199, 16
      %v260 = vrot.slane %v258, 4
      %v261 = vshll.u32 %v199, 16
      %v263 = vrot.slane %v261, 5
      %v264 = vor.u32 %v260, %v263
      %v265 = vrot.slane %v264, 4
      %v267 = vshll.u32 %v200, 16
      %v269 = vrot.slane %v267, 5
      %v270 = vsel %vm256, %v265, %v269
      %v271 = vshrl.u32 %v200, 16
      %v273 = vrot.slane %v271, 4
      %v274 = vor.u32 %v273, %v269
      %v275 = vrot.slane %v274, 4
      %v277 = vshll.u32 %v201, 16
      %v279 = vrot.slane %v277, 5
      %v280 = vsel %vm256, %v275, %v279
      %v282 = vshrl.u32 %v202, 16
      %v284 = vrot.slane %v282, 4
      %v285 = vshll.u32 %v202, 16
      %v287 = vrot.slane %v285, 5
      %v288 = vor.u32 %v284, %v287
      %v289 = vrot.slane %v288, 4
      %v291 = vshll.u32 %v203, 16
      %v293 = vrot.slane %v291, 5
      %v294 = vsel %vm256, %v289, %v293
      %v295 = vshrl.u32 %v203, 16
      %v297 = vrot.slane %v295, 4
      %v298 = vor.u32 %v297, %v293
      %v299 = vrot.slane %v298, 4
      %v301 = vshll.u32 %v204, 16
      %v303 = vrot.slane %v301, 5
      %v304 = vsel %vm256, %v299, %v303
      %v306 = vshrl.u32 %v205, 16
      %v308 = vrot.slane %v306, 4
      %v309 = vshll.u32 %v205, 16
      %v311 = vrot.slane %v309, 5
      %v312 = vor.u32 %v308, %v311
      %v313 = vrot.slane %v312, 4
      %v315 = vshll.u32 %v206, 16
      %v317 = vrot.slane %v315, 5
      %v318 = vsel %vm256, %v313, %v317
      %v319 = vshrl.u32 %v206, 16
      %v321 = vrot.slane %v319, 4
      %v322 = vor.u32 %v321, %v317
      %v323 = vrot.slane %v322, 4
      %v325 = vshll.u32 %v207, 16
      %v327 = vrot.slane %v325, 5
      %v328 = vsel %vm256, %v323, %v327
      %v330 = vshrl.u32 %v208, 16
      %v332 = vrot.slane %v330, 4
      %v333 = vshll.u32 %v208, 16
      %v335 = vrot.slane %v333, 5
      %v336 = vor.u32 %v332, %v335
      %v337 = vrot.slane %v336, 4
      %v339 = vshll.u32 %v209, 16
      %v341 = vrot.slane %v339, 5
      %v342 = vsel %vm256, %v337, %v341
      %v343 = vshrl.u32 %v209, 16
      %v345 = vrot.slane %v343, 4
      %v346 = vor.u32 %v345, %v341
      %v347 = vrot.slane %v346, 4
      %v349 = vshll.u32 %v210, 16
      %v351 = vrot.slane %v349, 5
      %v352 = vsel %vm256, %v347, %v351
      %v354 = vshrl.u32 %v211, 16
      %v356 = vrot.slane %v354, 4
      %v357 = vshll.u32 %v211, 16
      %v359 = vrot.slane %v357, 5
      %v360 = vor.u32 %v356, %v359
      %v361 = vrot.slane %v360, 4
      %v363 = vshll.u32 %v212, 16
      %v365 = vrot.slane %v363, 5
      %v366 = vsel %vm256, %v361, %v365
      %v367 = vshrl.u32 %v212, 16
      %v369 = vrot.slane %v367, 4
      %v370 = vor.u32 %v369, %v365
      %v371 = vrot.slane %v370, 4
      %v373 = vshll.u32 %v213, 16
      %v375 = vrot.slane %v373, 5
      %v376 = vsel %vm256, %v371, %v375
      %v378 = vshrl.u32 %v214, 16
      %v380 = vrot.slane %v378, 4
      %v381 = vshll.u32 %v214, 16
      %v383 = vrot.slane %v381, 5
      %v384 = vor.u32 %v380, %v383
      %v385 = vrot.slane %v384, 4
      %v387 = vshll.u32 %v215, 16
      %v389 = vrot.slane %v387, 5
      %v390 = vsel %vm256, %v385, %v389
      %v391 = vshrl.u32 %v215, 16
      %v393 = vrot.slane %v391, 4
      %v394 = vor.u32 %v393, %v389
      %v395 = vrot.slane %v394, 4
      %v397 = vshll.u32 %v216, 16
      %v399 = vrot.slane %v397, 5
      %v400 = vsel %vm256, %v395, %v399
      %v402 = vshrl.u32 %v217, 16
      %v404 = vrot.slane %v402, 4
      %v405 = vshll.u32 %v217, 16
      %v407 = vrot.slane %v405, 5
      %v408 = vor.u32 %v404, %v407
      %v409 = vrot.slane %v408, 4
      %v411 = vshll.u32 %v218, 16
      %v413 = vrot.slane %v411, 5
      %v414 = vsel %vm256, %v409, %v413
      %v415 = vshrl.u32 %v218, 16
      %v417 = vrot.slane %v415, 4
      %v418 = vor.u32 %v417, %v413
      %v419 = vrot.slane %v418, 4
      %v421 = vshll.u32 %v219, 16
      %v423 = vrot.slane %v421, 5
      %v424 = vsel %vm256, %v419, %v423
      %v426 = vshrl.u32 %v220, 16
      %v428 = vrot.slane %v426, 4
      %v429 = vshll.u32 %v220, 16
      %v431 = vrot.slane %v429, 5
      %v432 = vor.u32 %v428, %v431
      %v433 = vrot.slane %v432, 4
      %v435 = vshll.u32 %v221, 16
      %v437 = vrot.slane %v435, 5
      %v438 = vsel %vm256, %v433, %v437
      %v439 = vshrl.u32 %v221, 16
      %v441 = vrot.slane %v439, 4
      %v442 = vor.u32 %v441, %v437
      %v443 = vrot.slane %v442, 4
      %v445 = vshll.u32 %v222, 16
      %v447 = vrot.slane %v445, 5
      %v448 = vsel %vm256, %v443, %v447
      %v450 = vshrl.u32 %v223, 16
      %v452 = vrot.slane %v450, 4
      %v453 = vshll.u32 %v223, 16
      %v455 = vrot.slane %v453, 5
      %v456 = vor.u32 %v452, %v455
      %v457 = vrot.slane %v456, 4
      %v459 = vshll.u32 %v224, 16
      %v461 = vrot.slane %v459, 5
      %v462 = vsel %vm256, %v457, %v461
      %v463 = vshrl.u32 %v224, 16
      %v465 = vrot.slane %v463, 4
      %v466 = vor.u32 %v465, %v461
      %v467 = vrot.slane %v466, 4
      %v469 = vshll.u32 %v225, 16
      %v471 = vrot.slane %v469, 5
      %v472 = vsel %vm256, %v467, %v471
      %v474 = vshrl.u32 %v226, 16
      %v476 = vrot.slane %v474, 4
      %v477 = vshll.u32 %v226, 16
      %v479 = vrot.slane %v477, 5
      %v480 = vor.u32 %v476, %v479
      %v481 = vrot.slane %v480, 4
      %v483 = vshll.u32 %v227, 16
      %v485 = vrot.slane %v483, 5
      %v486 = vsel %vm256, %v481, %v485
      %v487 = vshrl.u32 %v227, 16
      %v489 = vrot.slane %v487, 4
      %v490 = vor.u32 %v489, %v485
      %v491 = vrot.slane %v490, 4
      %v493 = vshll.u32 %v228, 16
      %v495 = vrot.slane %v493, 5
      %v496 = vsel %vm256, %v491, %v495
      %v498 = vshrl.u32 %v229, 16
      %v500 = vrot.slane %v498, 4
      %v501 = vshll.u32 %v229, 16
      %v503 = vrot.slane %v501, 5
      %v504 = vor.u32 %v500, %v503
      %v505 = vrot.slane %v504, 4
      %v507 = vshll.u32 %v230, 16
      %v509 = vrot.slane %v507, 5
      %v510 = vsel %vm256, %v505, %v509
      %v511 = vshrl.u32 %v230, 16
      %v513 = vrot.slane %v511, 4
      %v514 = vor.u32 %v513, %v509
      %v515 = vrot.slane %v514, 4
      %v517 = vshll.u32 %v231, 16
      %v519 = vrot.slane %v517, 5
      %v520 = vsel %vm256, %v515, %v519
      %v522 = vshrl.u32 %v232, 16
      %v524 = vrot.slane %v522, 4
      %v525 = vshll.u32 %v232, 16
      %v527 = vrot.slane %v525, 5
      %v528 = vor.u32 %v524, %v527
      %v529 = vrot.slane %v528, 4
      %v531 = vshll.u32 %v233, 16
      %v533 = vrot.slane %v531, 5
      %v534 = vsel %vm256, %v529, %v533
      %v535 = vshrl.u32 %v233, 16
      %v537 = vrot.slane %v535, 4
      %v538 = vor.u32 %v537, %v533
      %v539 = vrot.slane %v538, 4
      %v541 = vshll.u32 %v234, 16
      %v543 = vrot.slane %v541, 5
      %v544 = vsel %vm256, %v539, %v543
      %v546 = vshrl.u32 %v235, 16
      %v548 = vrot.slane %v546, 4
      %v549 = vshll.u32 %v235, 16
      %v551 = vrot.slane %v549, 5
      %v552 = vor.u32 %v548, %v551
      %v553 = vrot.slane %v552, 4
      %v555 = vshll.u32 %v236, 16
      %v557 = vrot.slane %v555, 5
      %v558 = vsel %vm256, %v553, %v557
      %v559 = vshrl.u32 %v236, 16
      %v561 = vrot.slane %v559, 4
      %v562 = vor.u32 %v561, %v557
      %v563 = vrot.slane %v562, 4
      %v565 = vshll.u32 %v237, 16
      %v567 = vrot.slane %v565, 5
      %v568 = vsel %vm256, %v563, %v567
      %v570 = vshrl.u32 %v238, 16
      %v572 = vrot.slane %v570, 4
      %v573 = vshll.u32 %v238, 16
      %v575 = vrot.slane %v573, 5
      %v576 = vor.u32 %v572, %v575
      %v577 = vrot.slane %v576, 4
      %v579 = vshll.u32 %v239, 16
      %v581 = vrot.slane %v579, 5
      %v582 = vsel %vm256, %v577, %v581
      %v583 = vshrl.u32 %v239, 16
      %v585 = vrot.slane %v583, 4
      %v586 = vor.u32 %v585, %v581
      %v587 = vrot.slane %v586, 4
      %v589 = vshll.u32 %v240, 16
      %v591 = vrot.slane %v589, 5
      %v592 = vsel %vm256, %v587, %v591
      %v594 = vshrl.u32 %v241, 16
      %v596 = vrot.slane %v594, 4
      %v597 = vshll.u32 %v241, 16
      %v599 = vrot.slane %v597, 5
      %v600 = vor.u32 %v596, %v599
      %v601 = vrot.slane %v600, 4
      %v603 = vshll.u32 %v242, 16
      %v605 = vrot.slane %v603, 5
      %v606 = vsel %vm256, %v601, %v605
      %v607 = vshrl.u32 %v242, 16
      %v609 = vrot.slane %v607, 4
      %v610 = vor.u32 %v609, %v605
      %v611 = vrot.slane %v610, 4
      %v613 = vshll.u32 %v243, 16
      %v615 = vrot.slane %v613, 5
      %v616 = vsel %vm256, %v611, %v615
      %v618 = vshrl.u32 %v244, 16
      %v620 = vrot.slane %v618, 4
      %v621 = vshll.u32 %v244, 16
      %v623 = vrot.slane %v621, 5
      %v624 = vor.u32 %v620, %v623
      %v625 = vrot.slane %v624, 4
      %v627 = vshll.u32 %v245, 16
      %v629 = vrot.slane %v627, 5
      %v630 = vsel %vm256, %v625, %v629
      %v631 = vshrl.u32 %v245, 16
      %v633 = vrot.slane %v631, 4
      %v634 = vor.u32 %v633, %v629
      %v635 = vrot.slane %v634, 4
      %v637 = vshll.u32 %v246, 16
      %v639 = vrot.slane %v637, 5
      %v640 = vsel %vm256, %v635, %v639
      %v641 = vld [vmem:[%s1] sm:$0xc]
      %v642 = vunpack.c.l.b16 %v270
      %v643 = vunpack.c.l.b16 %v280
      %v644 = vunpack.c.l.b16 %v294
      %v645 = vunpack.c.l.b16 %v304
      %v646 = vunpack.c.l.b16 %v318
      %v647 = vunpack.c.l.b16 %v328
      %v648 = vunpack.c.l.b16 %v342
      %v649 = vunpack.c.l.b16 %v352
      %v650 = vunpack.c.l.b16 %v366
      %v651 = vunpack.c.l.b16 %v376
      %v652 = vunpack.c.l.b16 %v390
      %v653 = vunpack.c.l.b16 %v400
      %v654 = vunpack.c.l.b16 %v414
      %v655 = vunpack.c.l.b16 %v424
      %v656 = vunpack.c.l.b16 %v438
      %v657 = vunpack.c.l.b16 %v448
      %v658 = vunpack.c.l.b16 %v462
      %v659 = vunpack.c.l.b16 %v472
      %v660 = vunpack.c.l.b16 %v486
      %v661 = vunpack.c.l.b16 %v496
      %v662 = vunpack.c.l.b16 %v510
      %v663 = vunpack.c.l.b16 %v520
      %v664 = vunpack.c.l.b16 %v534
      %v665 = vunpack.c.l.b16 %v544
      %v666 = vunpack.c.l.b16 %v558
      %v667 = vunpack.c.l.b16 %v568
      %v668 = vunpack.c.l.b16 %v582
      %v669 = vunpack.c.l.b16 %v592
      %v670 = vunpack.c.l.b16 %v606
      %v671 = vunpack.c.l.b16 %v616
      %v672 = vunpack.c.l.b16 %v630
      %v673 = vunpack.c.l.b16 %v640
      %v674 = vpack.c.b16 %v643, %v642
      %v675 = vpack.c.b16 %v645, %v644
      %v676 = vpack.c.b16 %v647, %v646
      %v677 = vpack.c.b16 %v649, %v648
      %v678 = vpack.c.b16 %v651, %v650
      %v679 = vpack.c.b16 %v653, %v652
      %v680 = vpack.c.b16 %v655, %v654
      %v681 = vpack.c.b16 %v657, %v656
      %v682 = vpack.c.b16 %v659, %v658
      %v683 = vpack.c.b16 %v661, %v660
      %v684 = vpack.c.b16 %v663, %v662
      %v685 = vpack.c.b16 %v665, %v664
      %v686 = vpack.c.b16 %v667, %v666
      %v687 = vpack.c.b16 %v669, %v668
      %v688 = vpack.c.b16 %v671, %v670
      %v689 = vpack.c.b16 %v673, %v672
      %v691 = vunpack.c.l.b16 %v641
      %v692 = vpack.c.b16 %v691, %v691
      %v693 = vrot.slane %v692, 2
      %vm694 = vcmask 31744
      %v696 = vsel %vm694, %v674, 0
      %v699 = vsel %vm694, %v675, 0
      %v702 = vsel %vm694, %v676, 0
      %v705 = vsel %vm694, %v677, 0
      %v708 = vsel %vm694, %v678, 0
      %v711 = vsel %vm694, %v679, 0
      %v714 = vsel %vm694, %v680, 0
      %v717 = vsel %vm694, %v681, 0
      %v720 = vsel %vm694, %v682, 0
      %v723 = vsel %vm694, %v683, 0
      %v726 = vsel %vm694, %v684, 0
      %v729 = vsel %vm694, %v685, 0
      %v732 = vsel %vm694, %v686, 0
      %v735 = vsel %vm694, %v687, 0
      %v738 = vsel %vm694, %v688, 0
      %v741 = vsel %vm694, %v689, 0
      %vm743 = vcmask 1041408
      %v745 = vsel %vm743, %v693, 0
      %747 = vmatprep.subr.bf16.mxu0 0
      %748 = vmatpush1.bf16.msra.mxu0 %v745
      %749 = vmatprep.subr.bf16.mxu0 0
      %750 = vmatpush1.bf16.msra.mxu0 0
      %751 = vmatprep.subr.bf16.mxu0 0
      %752 = vmatpush1.bf16.msra.mxu0 0
      %753 = vmatprep.subr.bf16.mxu0 0
      %754 = vmatpush1.bf16.msra.mxu0 0
      %755 = vmatprep.subr.bf16.mxu0 0
      %756 = vmatpush1.bf16.msra.mxu0 0
      %757 = vmatprep.subr.bf16.mxu0 0
      %758 = vmatpush1.bf16.msra.mxu0 0
      %759 = vmatprep.subr.bf16.mxu0 0
      %760 = vmatpush1.bf16.msra.mxu0 0
      %761 = vmatprep.subr.bf16.mxu0 0
      %762 = vmatpush1.bf16.msra.mxu0 0
      %763 = vmatprep.subr.bf16.mxu0 0
      %764 = vmatpush1.bf16.msra.mxu0 0
      %765 = vmatprep.subr.bf16.mxu0 0
      %766 = vmatpush1.bf16.msra.mxu0 0
      %767 = vmatprep.subr.bf16.mxu0 0
      %768 = vmatpush1.bf16.msra.mxu0 0
      %769 = vmatprep.subr.bf16.mxu0 0
      %770 = vmatpush1.bf16.msra.mxu0 0
      %771 = vmatprep.subr.bf16.mxu0 0
      %772 = vmatpush1.bf16.msra.mxu0 0
      %773 = vmatprep.subr.bf16.mxu0 0
      %774 = vmatpush1.bf16.msra.mxu0 0
      %775 = vmatprep.subr.bf16.mxu0 0
      %776 = vmatpush1.bf16.msra.mxu0 0
      %777 = vmatprep.subr.bf16.mxu0 0
      %778 = vmatpush1.bf16.msra.mxu0 0
      %779 = vmatprep.mubr.bf16.mxu0 0
      %780 = vmatmul.mubr.bf16.gmra.mrb[0].mxu0 %v696
      %v781 = vpop.f32.mrb[0].mxu0
      %v782 = vadd.f32 0.0, %v781
      %v783 = vpop.f32.mrb[0].mxu0
      %v784 = vpop.f32.mrb[0].mxu0
      %v785 = vadd.f32 0.0, %v784
      %v786 = vpop.f32.mrb[0].mxu0
      %787 = vmatprep.mubr.bf16.mxu0 0
      %788 = vmatmul.mubr.bf16.gmra.mrb[0].mxu0 %v699
      %v789 = vpop.f32.mrb[0].mxu0
      %v790 = vadd.f32 0.0, %v789
      %v791 = vpop.f32.mrb[0].mxu0
      %v792 = vpop.f32.mrb[0].mxu0
      %v793 = vadd.f32 0.0, %v792
      %v794 = vpop.f32.mrb[0].mxu0
      %795 = vmatprep.mubr.bf16.mxu0 0
      %796 = vmatmul.mubr.bf16.gmra.mrb[0].mxu0 %v702
      %v797 = vpop.f32.mrb[0].mxu0
      %v798 = vadd.f32 0.0, %v797
      %v799 = vpop.f32.mrb[0].mxu0
      %v800 = vpop.f32.mrb[0].mxu0
      %v801 = vadd.f32 0.0, %v800
      %v802 = vpop.f32.mrb[0].mxu0
      %803 = vmatprep.mubr.bf16.mxu0 0
      %804 = vmatmul.mubr.bf16.gmra.mrb[0].mxu0 %v705
      %v805 = vpop.f32.mrb[0].mxu0
      %v806 = vadd.f32 0.0, %v805
      %v807 = vpop.f32.mrb[0].mxu0
      %v808 = vpop.f32.mrb[0].mxu0
      %v809 = vadd.f32 0.0, %v808
      %v810 = vpop.f32.mrb[0].mxu0
      %811 = vmatprep.mubr.bf16.mxu0 0
      %812 = vmatmul.mubr.bf16.gmra.mrb[0].mxu0 %v708
      %v813 = vpop.f32.mrb[0].mxu0
      %v814 = vadd.f32 0.0, %v813
      %v815 = vpop.f32.mrb[0].mxu0
      %v816 = vpop.f32.mrb[0].mxu0
      %v817 = vadd.f32 0.0, %v816
      %v818 = vpop.f32.mrb[0].mxu0
      %819 = vmatprep.mubr.bf16.mxu0 0
      %820 = vmatmul.mubr.bf16.gmra.mrb[0].mxu0 %v711
      %v821 = vpop.f32.mrb[0].mxu0
      %v822 = vadd.f32 0.0, %v821
      %v823 = vpop.f32.mrb[0].mxu0
      %v824 = vpop.f32.mrb[0].mxu0
      %v825 = vadd.f32 0.0, %v824
      %v826 = vpop.f32.mrb[0].mxu0
      %827 = vmatprep.mubr.bf16.mxu0 0
      %828 = vmatmul.mubr.bf16.gmra.mrb[0].mxu0 %v714
      %v829 = vpop.f32.mrb[0].mxu0
      %v830 = vadd.f32 0.0, %v829
      %v831 = vpop.f32.mrb[0].mxu0
      %v832 = vpop.f32.mrb[0].mxu0
      %v833 = vadd.f32 0.0, %v832
      %v834 = vpop.f32.mrb[0].mxu0
      %835 = vmatprep.mubr.bf16.mxu0 0
      %836 = vmatmul.mubr.bf16.gmra.mrb[0].mxu0 %v717
      %v837 = vpop.f32.mrb[0].mxu0
      %v838 = vadd.f32 0.0, %v837
      %v839 = vpop.f32.mrb[0].mxu0
      %v840 = vpop.f32.mrb[0].mxu0
      %v841 = vadd.f32 0.0, %v840
      %v842 = vpop.f32.mrb[0].mxu0
      %843 = vmatprep.mubr.bf16.mxu0 0
      %844 = vmatmul.mubr.bf16.gmra.mrb[0].mxu0 %v720
      %v845 = vpop.f32.mrb[0].mxu0
      %v846 = vadd.f32 0.0, %v845
      %v847 = vpop.f32.mrb[0].mxu0
      %v848 = vpop.f32.mrb[0].mxu0
      %v849 = vadd.f32 0.0, %v848
      %v850 = vpop.f32.mrb[0].mxu0
      %851 = vmatprep.mubr.bf16.mxu0 0
      %852 = vmatmul.mubr.bf16.gmra.mrb[0].mxu0 %v723
      %v853 = vpop.f32.mrb[0].mxu0
      %v854 = vadd.f32 0.0, %v853
      %v855 = vpop.f32.mrb[0].mxu0
      %v856 = vpop.f32.mrb[0].mxu0
      %v857 = vadd.f32 0.0, %v856
      %v858 = vpop.f32.mrb[0].mxu0
      %859 = vmatprep.mubr.bf16.mxu0 0
      %860 = vmatmul.mubr.bf16.gmra.mrb[0].mxu0 %v726
      %v861 = vpop.f32.mrb[0].mxu0
      %v862 = vadd.f32 0.0, %v861
      %v863 = vpop.f32.mrb[0].mxu0
      %v864 = vpop.f32.mrb[0].mxu0
      %v865 = vadd.f32 0.0, %v864
      %v866 = vpop.f32.mrb[0].mxu0
      %867 = vmatprep.mubr.bf16.mxu0 0
      %868 = vmatmul.mubr.bf16.gmra.mrb[0].mxu0 %v729
      %v869 = vpop.f32.mrb[0].mxu0
      %v870 = vadd.f32 0.0, %v869
      %v871 = vpop.f32.mrb[0].mxu0
      %v872 = vpop.f32.mrb[0].mxu0
      %v873 = vadd.f32 0.0, %v872
      %v874 = vpop.f32.mrb[0].mxu0
      %875 = vmatprep.mubr.bf16.mxu0 0
      %876 = vmatmul.mubr.bf16.gmra.mrb[0].mxu0 %v732
      %v877 = vpop.f32.mrb[0].mxu0
      %v878 = vadd.f32 0.0, %v877
      %v879 = vpop.f32.mrb[0].mxu0
      %v880 = vpop.f32.mrb[0].mxu0
      %v881 = vadd.f32 0.0, %v880
      %v882 = vpop.f32.mrb[0].mxu0
      %883 = vmatprep.mubr.bf16.mxu0 0
      %884 = vmatmul.mubr.bf16.gmra.mrb[0].mxu0 %v735
      %v885 = vpop.f32.mrb[0].mxu0
      %v886 = vadd.f32 0.0, %v885
      %v887 = vpop.f32.mrb[0].mxu0
      %v888 = vpop.f32.mrb[0].mxu0
      %v889 = vadd.f32 0.0, %v888
      %v890 = vpop.f32.mrb[0].mxu0
      %891 = vmatprep.mubr.bf16.mxu0 0
      %892 = vmatmul.mubr.bf16.gmra.mrb[0].mxu0 %v738
      %v893 = vpop.f32.mrb[0].mxu0
      %v894 = vadd.f32 0.0, %v893
      %v895 = vpop.f32.mrb[0].mxu0
      %v896 = vpop.f32.mrb[0].mxu0
      %v897 = vadd.f32 0.0, %v896
      %v898 = vpop.f32.mrb[0].mxu0
      %899 = vmatprep.mubr.bf16.mxu0 0
      %900 = vmatmul.mubr.bf16.gmra.mrb[0].mxu0 %v741
      %v901 = vpop.f32.mrb[0].mxu0
      %v902 = vadd.f32 0.0, %v901
      %v903 = vpop.f32.mrb[0].mxu0
      %v904 = vpop.f32.mrb[0].mxu0
      %v905 = vadd.f32 0.0, %v904
      %v906 = vpop.f32.mrb[0].mxu0
      %907 = vdwg.mxu0
      %v940 = vunpack.c.l.b16 %v199
      %v941 = vunpack.c.l.b16 %v200
      %v942 = vunpack.c.l.b16 %v202
      %v943 = vunpack.c.l.b16 %v203
      %v944 = vunpack.c.l.b16 %v205
      %v945 = vunpack.c.l.b16 %v206
      %v946 = vunpack.c.l.b16 %v208
      %v947 = vunpack.c.l.b16 %v209
      %v948 = vunpack.c.l.b16 %v211
      %v949 = vunpack.c.l.b16 %v212
      %v950 = vunpack.c.l.b16 %v214
      %v951 = vunpack.c.l.b16 %v215
      %v952 = vunpack.c.l.b16 %v217
      %v953 = vunpack.c.l.b16 %v218
      %v954 = vunpack.c.l.b16 %v220
      %v955 = vunpack.c.l.b16 %v221
      %v956 = vunpack.c.l.b16 %v223
      %v957 = vunpack.c.l.b16 %v224
      %v958 = vunpack.c.l.b16 %v226
      %v959 = vunpack.c.l.b16 %v227
      %v960 = vunpack.c.l.b16 %v229
      %v961 = vunpack.c.l.b16 %v230
      %v962 = vunpack.c.l.b16 %v232
      %v963 = vunpack.c.l.b16 %v233
      %v964 = vunpack.c.l.b16 %v235
      %v965 = vunpack.c.l.b16 %v236
      %v966 = vunpack.c.l.b16 %v238
      %v967 = vunpack.c.l.b16 %v239
      %v968 = vunpack.c.l.b16 %v241
      %v969 = vunpack.c.l.b16 %v242
      %v970 = vunpack.c.l.b16 %v244
      %v971 = vunpack.c.l.b16 %v245
      %v972 = vpack.c.b16 %v941, %v940
      %v973 = vpack.c.b16 %v943, %v942
      %v974 = vpack.c.b16 %v945, %v944
      %v975 = vpack.c.b16 %v947, %v946
      %v976 = vpack.c.b16 %v949, %v948
      %v977 = vpack.c.b16 %v951, %v950
      %v978 = vpack.c.b16 %v953, %v952
      %v979 = vpack.c.b16 %v955, %v954
      %v980 = vpack.c.b16 %v957, %v956
      %v981 = vpack.c.b16 %v959, %v958
      %v982 = vpack.c.b16 %v961, %v960
      %v983 = vpack.c.b16 %v963, %v962
      %v984 = vpack.c.b16 %v965, %v964
      %v985 = vpack.c.b16 %v967, %v966
      %v986 = vpack.c.b16 %v969, %v968
      %v987 = vpack.c.b16 %v971, %v970
      %v989 = vsel %vm694, %v972, 0
      %v992 = vsel %vm694, %v973, 0
      %v995 = vsel %vm694, %v974, 0
      %v998 = vsel %vm694, %v975, 0
      %v1001 = vsel %vm694, %v976, 0
      %v1004 = vsel %vm694, %v977, 0
      %v1007 = vsel %vm694, %v978, 0
      %v1010 = vsel %vm694, %v979, 0
      %v1013 = vsel %vm694, %v980, 0
      %v1016 = vsel %vm694, %v981, 0
      %v1019 = vsel %vm694, %v982, 0
      %v1022 = vsel %vm694, %v983, 0
      %v1025 = vsel %vm694, %v984, 0
      %v1028 = vsel %vm694, %v985, 0
      %v1031 = vsel %vm694, %v986, 0
      %v1034 = vsel %vm694, %v987, 0
      %v1037 = vsel %vm743, %v253, 0
      %1039 = vmatprep.subr.bf16.mxu0 0
      %1040 = vmatpush1.bf16.msra.mxu0 %v1037
      %1041 = vmatprep.subr.bf16.mxu0 0
      %1042 = vmatpush1.bf16.msra.mxu0 0
      %1043 = vmatprep.subr.bf16.mxu0 0
      %1044 = vmatpush1.bf16.msra.mxu0 0
      %1045 = vmatprep.subr.bf16.mxu0 0
      %1046 = vmatpush1.bf16.msra.mxu0 0
      %1047 = vmatprep.subr.bf16.mxu0 0
      %1048 = vmatpush1.bf16.msra.mxu0 0
      %1049 = vmatprep.subr.bf16.mxu0 0
      %1050 = vmatpush1.bf16.msra.mxu0 0
      %1051 = vmatprep.subr.bf16.mxu0 0
      %1052 = vmatpush1.bf16.msra.mxu0 0
      %1053 = vmatprep.subr.bf16.mxu0 0
      %1054 = vmatpush1.bf16.msra.mxu0 0
      %1055 = vmatprep.subr.bf16.mxu0 0
      %1056 = vmatpush1.bf16.msra.mxu0 0
      %1057 = vmatprep.subr.bf16.mxu0 0
      %1058 = vmatpush1.bf16.msra.mxu0 0
      %1059 = vmatprep.subr.bf16.mxu0 0
      %1060 = vmatpush1.bf16.msra.mxu0 0
      %1061 = vmatprep.subr.bf16.mxu0 0
      %1062 = vmatpush1.bf16.msra.mxu0 0
      %1063 = vmatprep.subr.bf16.mxu0 0
      %1064 = vmatpush1.bf16.msra.mxu0 0
      %1065 = vmatprep.subr.bf16.mxu0 0
      %1066 = vmatpush1.bf16.msra.mxu0 0
      %1067 = vmatprep.subr.bf16.mxu0 0
      %1068 = vmatpush1.bf16.msra.mxu0 0
      %1069 = vmatprep.subr.bf16.mxu0 0
      %1070 = vmatpush1.bf16.msra.mxu0 0
      %1071 = vmatprep.mubr.bf16.mxu0 0
      %1072 = vmatmul.mubr.bf16.gmra.mrb[0].mxu0 %v989
      %v1073 = vpop.f32.mrb[0].mxu0
      %v1074 = vadd.f32 %v782, %v1073
      %v1075 = vpop.f32.mrb[0].mxu0
      %v1076 = vpop.f32.mrb[0].mxu0
      %v1077 = vadd.f32 %v785, %v1076
      %v1078 = vpop.f32.mrb[0].mxu0
      %1079 = vmatprep.mubr.bf16.mxu0 0
      %1080 = vmatmul.mubr.bf16.gmra.mrb[0].mxu0 %v992
      %v1081 = vpop.f32.mrb[0].mxu0
      %v1082 = vadd.f32 %v790, %v1081
      %v1083 = vpop.f32.mrb[0].mxu0
      %v1084 = vpop.f32.mrb[0].mxu0
      %v1085 = vadd.f32 %v793, %v1084
      %v1086 = vpop.f32.mrb[0].mxu0
      %1087 = vmatprep.mubr.bf16.mxu0 0
      %1088 = vmatmul.mubr.bf16.gmra.mrb[0].mxu0 %v995
      %v1089 = vpop.f32.mrb[0].mxu0
      %v1090 = vadd.f32 %v798, %v1089
      %v1091 = vpop.f32.mrb[0].mxu0
      %v1092 = vpop.f32.mrb[0].mxu0
      %v1093 = vadd.f32 %v801, %v1092
      %v1094 = vpop.f32.mrb[0].mxu0
      %1095 = vmatprep.mubr.bf16.mxu0 0
      %1096 = vmatmul.mubr.bf16.gmra.mrb[0].mxu0 %v998
      %v1097 = vpop.f32.mrb[0].mxu0
      %v1098 = vadd.f32 %v806, %v1097
      %v1099 = vpop.f32.mrb[0].mxu0
      %v1100 = vpop.f32.mrb[0].mxu0
      %v1101 = vadd.f32 %v809, %v1100
      %v1102 = vpop.f32.mrb[0].mxu0
      %1103 = vmatprep.mubr.bf16.mxu0 0
      %1104 = vmatmul.mubr.bf16.gmra.mrb[0].mxu0 %v1001
      %v1105 = vpop.f32.mrb[0].mxu0
      %v1106 = vadd.f32 %v814, %v1105
      %v1107 = vpop.f32.mrb[0].mxu0
      %v1108 = vpop.f32.mrb[0].mxu0
      %v1109 = vadd.f32 %v817, %v1108
      %v1110 = vpop.f32.mrb[0].mxu0
      %1111 = vmatprep.mubr.bf16.mxu0 0
      %1112 = vmatmul.mubr.bf16.gmra.mrb[0].mxu0 %v1004
      %v1113 = vpop.f32.mrb[0].mxu0
      %v1114 = vadd.f32 %v822, %v1113
      %v1115 = vpop.f32.mrb[0].mxu0
      %v1116 = vpop.f32.mrb[0].mxu0
      %v1117 = vadd.f32 %v825, %v1116
      %v1118 = vpop.f32.mrb[0].mxu0
      %1119 = vmatprep.mubr.bf16.mxu0 0
      %1120 = vmatmul.mubr.bf16.gmra.mrb[0].mxu0 %v1007
      %v1121 = vpop.f32.mrb[0].mxu0
      %v1122 = vadd.f32 %v830, %v1121
      %v1123 = vpop.f32.mrb[0].mxu0
      %v1124 = vpop.f32.mrb[0].mxu0
      %v1125 = vadd.f32 %v833, %v1124
      %v1126 = vpop.f32.mrb[0].mxu0
      %1127 = vmatprep.mubr.bf16.mxu0 0
      %1128 = vmatmul.mubr.bf16.gmra.mrb[0].mxu0 %v1010
      %v1129 = vpop.f32.mrb[0].mxu0
      %v1130 = vadd.f32 %v838, %v1129
      %v1131 = vpop.f32.mrb[0].mxu0
      %v1132 = vpop.f32.mrb[0].mxu0
      %v1133 = vadd.f32 %v841, %v1132
      %v1134 = vpop.f32.mrb[0].mxu0
      %1135 = vmatprep.mubr.bf16.mxu0 0
      %1136 = vmatmul.mubr.bf16.gmra.mrb[0].mxu0 %v1013
      %v1137 = vpop.f32.mrb[0].mxu0
      %v1138 = vadd.f32 %v846, %v1137
      %v1139 = vpop.f32.mrb[0].mxu0
      %v1140 = vpop.f32.mrb[0].mxu0
      %v1141 = vadd.f32 %v849, %v1140
      %v1142 = vpop.f32.mrb[0].mxu0
      %1143 = vmatprep.mubr.bf16.mxu0 0
      %1144 = vmatmul.mubr.bf16.gmra.mrb[0].mxu0 %v1016
      %v1145 = vpop.f32.mrb[0].mxu0
      %v1146 = vadd.f32 %v854, %v1145
      %v1147 = vpop.f32.mrb[0].mxu0
      %v1148 = vpop.f32.mrb[0].mxu0
      %v1149 = vadd.f32 %v857, %v1148
      %v1150 = vpop.f32.mrb[0].mxu0
      %1151 = vmatprep.mubr.bf16.mxu0 0
      %1152 = vmatmul.mubr.bf16.gmra.mrb[0].mxu0 %v1019
      %v1153 = vpop.f32.mrb[0].mxu0
      %v1154 = vadd.f32 %v862, %v1153
      %v1155 = vpop.f32.mrb[0].mxu0
      %v1156 = vpop.f32.mrb[0].mxu0
      %v1157 = vadd.f32 %v865, %v1156
      %v1158 = vpop.f32.mrb[0].mxu0
      %1159 = vmatprep.mubr.bf16.mxu0 0
      %1160 = vmatmul.mubr.bf16.gmra.mrb[0].mxu0 %v1022
      %v1161 = vpop.f32.mrb[0].mxu0
      %v1162 = vadd.f32 %v870, %v1161
      %v1163 = vpop.f32.mrb[0].mxu0
      %v1164 = vpop.f32.mrb[0].mxu0
      %v1165 = vadd.f32 %v873, %v1164
      %v1166 = vpop.f32.mrb[0].mxu0
      %1167 = vmatprep.mubr.bf16.mxu0 0
      %1168 = vmatmul.mubr.bf16.gmra.mrb[0].mxu0 %v1025
      %v1169 = vpop.f32.mrb[0].mxu0
      %v1170 = vadd.f32 %v878, %v1169
      %v1171 = vpop.f32.mrb[0].mxu0
      %v1172 = vpop.f32.mrb[0].mxu0
      %v1173 = vadd.f32 %v881, %v1172
      %v1174 = vpop.f32.mrb[0].mxu0
      %1175 = vmatprep.mubr.bf16.mxu0 0
      %1176 = vmatmul.mubr.bf16.gmra.mrb[0].mxu0 %v1028
      %v1177 = vpop.f32.mrb[0].mxu0
      %v1178 = vadd.f32 %v886, %v1177
      %v1179 = vpop.f32.mrb[0].mxu0
      %v1180 = vpop.f32.mrb[0].mxu0
      %v1181 = vadd.f32 %v889, %v1180
      %v1182 = vpop.f32.mrb[0].mxu0
      %1183 = vmatprep.mubr.bf16.mxu0 0
      %1184 = vmatmul.mubr.bf16.gmra.mrb[0].mxu0 %v1031
      %v1185 = vpop.f32.mrb[0].mxu0
      %v1186 = vadd.f32 %v894, %v1185
      %v1187 = vpop.f32.mrb[0].mxu0
      %v1188 = vpop.f32.mrb[0].mxu0
      %v1189 = vadd.f32 %v897, %v1188
      %v1190 = vpop.f32.mrb[0].mxu0
      %1191 = vmatprep.mubr.bf16.mxu0 0
      %1192 = vmatmul.mubr.bf16.gmra.mrb[0].mxu0 %v1034
      %v1193 = vpop.f32.mrb[0].mxu0
      %v1194 = vadd.f32 %v902, %v1193
      %v1195 = vpop.f32.mrb[0].mxu0
      %v1196 = vpop.f32.mrb[0].mxu0
      %v1197 = vadd.f32 %v905, %v1196
      %v1198 = vpop.f32.mrb[0].mxu0
      %1199 = vdwg.mxu0
      %vm1216 = vcmask 1042432
      %vm1217 = vcmask 1046532
      %vm1218 = vmor %vm1216, %vm1217
      %v1219 = vrot.slane %v199, 5
      %v1220 = vrot.slane %v1219, 4
      %v1221 = vrot.slane %v200, 5
      %v1222 = vsel %vm1218, %v1220, %v1221
      %v1223 = vrot.slane %v1221, 4
      %v1224 = vrot.slane %v201, 5
      %v1225 = vsel %vm1218, %v1223, %v1224
      %v1226 = vrot.slane %v202, 5
      %v1227 = vrot.slane %v1226, 4
      %v1228 = vrot.slane %v203, 5
      %v1229 = vsel %vm1218, %v1227, %v1228
      %v1230 = vrot.slane %v1228, 4
      %v1231 = vrot.slane %v204, 5
      %v1232 = vsel %vm1218, %v1230, %v1231
      %v1233 = vrot.slane %v205, 5
      %v1234 = vrot.slane %v1233, 4
      %v1235 = vrot.slane %v206, 5
      %v1236 = vsel %vm1218, %v1234, %v1235
      %v1237 = vrot.slane %v1235, 4
      %v1238 = vrot.slane %v207, 5
      %v1239 = vsel %vm1218, %v1237, %v1238
      %v1240 = vrot.slane %v208, 5
      %v1241 = vrot.slane %v1240, 4
      %v1242 = vrot.slane %v209, 5
      %v1243 = vsel %vm1218, %v1241, %v1242
      %v1244 = vrot.slane %v1242, 4
      %v1245 = vrot.slane %v210, 5
      %v1246 = vsel %vm1218, %v1244, %v1245
      %v1247 = vrot.slane %v211, 5
      %v1248 = vrot.slane %v1247, 4
      %v1249 = vrot.slane %v212, 5
      %v1250 = vsel %vm1218, %v1248, %v1249
      %v1251 = vrot.slane %v1249, 4
      %v1252 = vrot.slane %v213, 5
      %v1253 = vsel %vm1218, %v1251, %v1252
      %v1254 = vrot.slane %v214, 5
      %v1255 = vrot.slane %v1254, 4
      %v1256 = vrot.slane %v215, 5
      %v1257 = vsel %vm1218, %v1255, %v1256
      %v1258 = vrot.slane %v1256, 4
      %v1259 = vrot.slane %v216, 5
      %v1260 = vsel %vm1218, %v1258, %v1259
      %v1261 = vrot.slane %v217, 5
      %v1262 = vrot.slane %v1261, 4
      %v1263 = vrot.slane %v218, 5
      %v1264 = vsel %vm1218, %v1262, %v1263
      %v1265 = vrot.slane %v1263, 4
      %v1266 = vrot.slane %v219, 5
      %v1267 = vsel %vm1218, %v1265, %v1266
      %v1268 = vrot.slane %v220, 5
      %v1269 = vrot.slane %v1268, 4
      %v1270 = vrot.slane %v221, 5
      %v1271 = vsel %vm1218, %v1269, %v1270
      %v1272 = vrot.slane %v1270, 4
      %v1273 = vrot.slane %v222, 5
      %v1274 = vsel %vm1218, %v1272, %v1273
      %v1275 = vrot.slane %v223, 5
      %v1276 = vrot.slane %v1275, 4
      %v1277 = vrot.slane %v224, 5
      %v1278 = vsel %vm1218, %v1276, %v1277
      %v1279 = vrot.slane %v1277, 4
      %v1280 = vrot.slane %v225, 5
      %v1281 = vsel %vm1218, %v1279, %v1280
      %v1282 = vrot.slane %v226, 5
      %v1283 = vrot.slane %v1282, 4
      %v1284 = vrot.slane %v227, 5
      %v1285 = vsel %vm1218, %v1283, %v1284
      %v1286 = vrot.slane %v1284, 4
      %v1287 = vrot.slane %v228, 5
      %v1288 = vsel %vm1218, %v1286, %v1287
      %v1289 = vrot.slane %v229, 5
      %v1290 = vrot.slane %v1289, 4
      %v1291 = vrot.slane %v230, 5
      %v1292 = vsel %vm1218, %v1290, %v1291
      %v1293 = vrot.slane %v1291, 4
      %v1294 = vrot.slane %v231, 5
      %v1295 = vsel %vm1218, %v1293, %v1294
      %v1296 = vrot.slane %v232, 5
      %v1297 = vrot.slane %v1296, 4
      %v1298 = vrot.slane %v233, 5
      %v1299 = vsel %vm1218, %v1297, %v1298
      %v1300 = vrot.slane %v1298, 4
      %v1301 = vrot.slane %v234, 5
      %v1302 = vsel %vm1218, %v1300, %v1301
      %v1303 = vrot.slane %v235, 5
      %v1304 = vrot.slane %v1303, 4
      %v1305 = vrot.slane %v236, 5
      %v1306 = vsel %vm1218, %v1304, %v1305
      %v1307 = vrot.slane %v1305, 4
      %v1308 = vrot.slane %v237, 5
      %v1309 = vsel %vm1218, %v1307, %v1308
      %v1310 = vrot.slane %v238, 5
      %v1311 = vrot.slane %v1310, 4
      %v1312 = vrot.slane %v239, 5
      %v1313 = vsel %vm1218, %v1311, %v1312
      %v1314 = vrot.slane %v1312, 4
      %v1315 = vrot.slane %v240, 5
      %v1316 = vsel %vm1218, %v1314, %v1315
      %v1317 = vrot.slane %v241, 5
      %v1318 = vrot.slane %v1317, 4
      %v1319 = vrot.slane %v242, 5
      %v1320 = vsel %vm1218, %v1318, %v1319
      %v1321 = vrot.slane %v1319, 4
      %v1322 = vrot.slane %v243, 5
      %v1323 = vsel %vm1218, %v1321, %v1322
      %v1324 = vrot.slane %v244, 5
      %v1325 = vrot.slane %v1324, 4
      %v1326 = vrot.slane %v245, 5
      %v1327 = vsel %vm1218, %v1325, %v1326
      %v1328 = vrot.slane %v1326, 4
      %v1329 = vrot.slane %v246, 5
      %v1330 = vsel %vm1218, %v1328, %v1329
      %v1331 = vld [vmem:[%s1 + $0x4] sm:$0x3]
      %v1332 = vunpack.c.l.b16 %v1222
      %v1333 = vunpack.c.l.b16 %v1225
      %v1334 = vunpack.c.l.b16 %v1229
      %v1335 = vunpack.c.l.b16 %v1232
      %v1336 = vunpack.c.l.b16 %v1236
      %v1337 = vunpack.c.l.b16 %v1239
      %v1338 = vunpack.c.l.b16 %v1243
      %v1339 = vunpack.c.l.b16 %v1246
      %v1340 = vunpack.c.l.b16 %v1250
      %v1341 = vunpack.c.l.b16 %v1253
      %v1342 = vunpack.c.l.b16 %v1257
      %v1343 = vunpack.c.l.b16 %v1260
      %v1344 = vunpack.c.l.b16 %v1264
      %v1345 = vunpack.c.l.b16 %v1267
      %v1346 = vunpack.c.l.b16 %v1271
      %v1347 = vunpack.c.l.b16 %v1274
      %v1348 = vunpack.c.l.b16 %v1278
      %v1349 = vunpack.c.l.b16 %v1281
      %v1350 = vunpack.c.l.b16 %v1285
      %v1351 = vunpack.c.l.b16 %v1288
      %v1352 = vunpack.c.l.b16 %v1292
      %v1353 = vunpack.c.l.b16 %v1295
      %v1354 = vunpack.c.l.b16 %v1299
      %v1355 = vunpack.c.l.b16 %v1302
      %v1356 = vunpack.c.l.b16 %v1306
      %v1357 = vunpack.c.l.b16 %v1309
      %v1358 = vunpack.c.l.b16 %v1313
      %v1359 = vunpack.c.l.b16 %v1316
      %v1360 = vunpack.c.l.b16 %v1320
      %v1361 = vunpack.c.l.b16 %v1323
      %v1362 = vunpack.c.l.b16 %v1327
      %v1363 = vunpack.c.l.b16 %v1330
      %v1364 = vpack.c.b16 %v1333, %v1332
      %v1365 = vpack.c.b16 %v1335, %v1334
      %v1366 = vpack.c.b16 %v1337, %v1336
      %v1367 = vpack.c.b16 %v1339, %v1338
      %v1368 = vpack.c.b16 %v1341, %v1340
      %v1369 = vpack.c.b16 %v1343, %v1342
      %v1370 = vpack.c.b16 %v1345, %v1344
      %v1371 = vpack.c.b16 %v1347, %v1346
      %v1372 = vpack.c.b16 %v1349, %v1348
      %v1373 = vpack.c.b16 %v1351, %v1350
      %v1374 = vpack.c.b16 %v1353, %v1352
      %v1375 = vpack.c.b16 %v1355, %v1354
      %v1376 = vpack.c.b16 %v1357, %v1356
      %v1377 = vpack.c.b16 %v1359, %v1358
      %v1378 = vpack.c.b16 %v1361, %v1360
      %v1379 = vpack.c.b16 %v1363, %v1362
      %v1381 = vsel %vm694, %v1364, 0
      %v1384 = vsel %vm694, %v1365, 0
      %v1387 = vsel %vm694, %v1366, 0
      %v1390 = vsel %vm694, %v1367, 0
      %v1393 = vsel %vm694, %v1368, 0
      %v1396 = vsel %vm694, %v1369, 0
      %v1399 = vsel %vm694, %v1370, 0
      %v1402 = vsel %vm694, %v1371, 0
      %v1405 = vsel %vm694, %v1372, 0
      %v1408 = vsel %vm694, %v1373, 0
      %v1411 = vsel %vm694, %v1374, 0
      %v1414 = vsel %vm694, %v1375, 0
      %v1417 = vsel %vm694, %v1376, 0
      %v1420 = vsel %vm694, %v1377, 0
      %v1423 = vsel %vm694, %v1378, 0
      %v1426 = vsel %vm694, %v1379, 0
      %v1429 = vsel %vm743, %v1331, 0
      %1431 = vmatprep.subr.bf16.mxu0 0
      %1432 = vmatpush1.bf16.msra.mxu0 %v1429
      %1433 = vmatprep.subr.bf16.mxu0 0
      %1434 = vmatpush1.bf16.msra.mxu0 0
      %1435 = vmatprep.subr.bf16.mxu0 0
      %1436 = vmatpush1.bf16.msra.mxu0 0
      %1437 = vmatprep.subr.bf16.mxu0 0
      %1438 = vmatpush1.bf16.msra.mxu0 0
      %1439 = vmatprep.subr.bf16.mxu0 0
      %1440 = vmatpush1.bf16.msra.mxu0 0
      %1441 = vmatprep.subr.bf16.mxu0 0
      %1442 = vmatpush1.bf16.msra.mxu0 0
      %1443 = vmatprep.subr.bf16.mxu0 0
      %1444 = vmatpush1.bf16.msra.mxu0 0
      %1445 = vmatprep.subr.bf16.mxu0 0
      %1446 = vmatpush1.bf16.msra.mxu0 0
      %1447 = vmatprep.subr.bf16.mxu0 0
      %1448 = vmatpush1.bf16.msra.mxu0 0
      %1449 = vmatprep.subr.bf16.mxu0 0
      %1450 = vmatpush1.bf16.msra.mxu0 0
      %1451 = vmatprep.subr.bf16.mxu0 0
      %1452 = vmatpush1.bf16.msra.mxu0 0
      %1453 = vmatprep.subr.bf16.mxu0 0
      %1454 = vmatpush1.bf16.msra.mxu0 0
      %1455 = vmatprep.subr.bf16.mxu0 0
      %1456 = vmatpush1.bf16.msra.mxu0 0
      %1457 = vmatprep.subr.bf16.mxu0 0
      %1458 = vmatpush1.bf16.msra.mxu0 0
      %1459 = vmatprep.subr.bf16.mxu0 0
      %1460 = vmatpush1.bf16.msra.mxu0 0
      %1461 = vmatprep.subr.bf16.mxu0 0
      %1462 = vmatpush1.bf16.msra.mxu0 0
      %1463 = vmatprep.mubr.bf16.mxu0 0
      %1464 = vmatmul.mubr.bf16.gmra.mrb[0].mxu0 %v1381
      %v1465 = vpop.f32.mrb[0].mxu0
      %v1466 = vadd.f32 0.0, %v1465
      %v1467 = vpop.f32.mrb[0].mxu0
      %v1468 = vpop.f32.mrb[0].mxu0
      %v1469 = vadd.f32 0.0, %v1468
      %v1470 = vpop.f32.mrb[0].mxu0
      %1471 = vmatprep.mubr.bf16.mxu0 0
      %1472 = vmatmul.mubr.bf16.gmra.mrb[0].mxu0 %v1384
      %v1473 = vpop.f32.mrb[0].mxu0
      %v1474 = vadd.f32 0.0, %v1473
      %v1475 = vpop.f32.mrb[0].mxu0
      %v1476 = vpop.f32.mrb[0].mxu0
      %v1477 = vadd.f32 0.0, %v1476
      %v1478 = vpop.f32.mrb[0].mxu0
      %1479 = vmatprep.mubr.bf16.mxu0 0
      %1480 = vmatmul.mubr.bf16.gmra.mrb[0].mxu0 %v1387
      %v1481 = vpop.f32.mrb[0].mxu0
      %v1482 = vadd.f32 0.0, %v1481
      %v1483 = vpop.f32.mrb[0].mxu0
      %v1484 = vpop.f32.mrb[0].mxu0
      %v1485 = vadd.f32 0.0, %v1484
      %v1486 = vpop.f32.mrb[0].mxu0
      %1487 = vmatprep.mubr.bf16.mxu0 0
      %1488 = vmatmul.mubr.bf16.gmra.mrb[0].mxu0 %v1390
      %v1489 = vpop.f32.mrb[0].mxu0
      %v1490 = vadd.f32 0.0, %v1489
      %v1491 = vpop.f32.mrb[0].mxu0
      %v1492 = vpop.f32.mrb[0].mxu0
      %v1493 = vadd.f32 0.0, %v1492
      %v1494 = vpop.f32.mrb[0].mxu0
      %1495 = vmatprep.mubr.bf16.mxu0 0
      %1496 = vmatmul.mubr.bf16.gmra.mrb[0].mxu0 %v1393
      %v1497 = vpop.f32.mrb[0].mxu0
      %v1498 = vadd.f32 0.0, %v1497
      %v1499 = vpop.f32.mrb[0].mxu0
      %v1500 = vpop.f32.mrb[0].mxu0
      %v1501 = vadd.f32 0.0, %v1500
      %v1502 = vpop.f32.mrb[0].mxu0
      %1503 = vmatprep.mubr.bf16.mxu0 0
      %1504 = vmatmul.mubr.bf16.gmra.mrb[0].mxu0 %v1396
      %v1505 = vpop.f32.mrb[0].mxu0
      %v1506 = vadd.f32 0.0, %v1505
      %v1507 = vpop.f32.mrb[0].mxu0
      %v1508 = vpop.f32.mrb[0].mxu0
      %v1509 = vadd.f32 0.0, %v1508
      %v1510 = vpop.f32.mrb[0].mxu0
      %1511 = vmatprep.mubr.bf16.mxu0 0
      %1512 = vmatmul.mubr.bf16.gmra.mrb[0].mxu0 %v1399
      %v1513 = vpop.f32.mrb[0].mxu0
      %v1514 = vadd.f32 0.0, %v1513
      %v1515 = vpop.f32.mrb[0].mxu0
      %v1516 = vpop.f32.mrb[0].mxu0
      %v1517 = vadd.f32 0.0, %v1516
      %v1518 = vpop.f32.mrb[0].mxu0
      %1519 = vmatprep.mubr.bf16.mxu0 0
      %1520 = vmatmul.mubr.bf16.gmra.mrb[0].mxu0 %v1402
      %v1521 = vpop.f32.mrb[0].mxu0
      %v1522 = vadd.f32 0.0, %v1521
      %v1523 = vpop.f32.mrb[0].mxu0
      %v1524 = vpop.f32.mrb[0].mxu0
      %v1525 = vadd.f32 0.0, %v1524
      %v1526 = vpop.f32.mrb[0].mxu0
      %1527 = vmatprep.mubr.bf16.mxu0 0
      %1528 = vmatmul.mubr.bf16.gmra.mrb[0].mxu0 %v1405
      %v1529 = vpop.f32.mrb[0].mxu0
      %v1530 = vadd.f32 0.0, %v1529
      %v1531 = vpop.f32.mrb[0].mxu0
      %v1532 = vpop.f32.mrb[0].mxu0
      %v1533 = vadd.f32 0.0, %v1532
      %v1534 = vpop.f32.mrb[0].mxu0
      %1535 = vmatprep.mubr.bf16.mxu0 0
      %1536 = vmatmul.mubr.bf16.gmra.mrb[0].mxu0 %v1408
      %v1537 = vpop.f32.mrb[0].mxu0
      %v1538 = vadd.f32 0.0, %v1537
      %v1539 = vpop.f32.mrb[0].mxu0
      %v1540 = vpop.f32.mrb[0].mxu0
      %v1541 = vadd.f32 0.0, %v1540
      %v1542 = vpop.f32.mrb[0].mxu0
      %1543 = vmatprep.mubr.bf16.mxu0 0
      %1544 = vmatmul.mubr.bf16.gmra.mrb[0].mxu0 %v1411
      %v1545 = vpop.f32.mrb[0].mxu0
      %v1546 = vadd.f32 0.0, %v1545
      %v1547 = vpop.f32.mrb[0].mxu0
      %v1548 = vpop.f32.mrb[0].mxu0
      %v1549 = vadd.f32 0.0, %v1548
      %v1550 = vpop.f32.mrb[0].mxu0
      %1551 = vmatprep.mubr.bf16.mxu0 0
      %1552 = vmatmul.mubr.bf16.gmra.mrb[0].mxu0 %v1414
      %v1553 = vpop.f32.mrb[0].mxu0
      %v1554 = vadd.f32 0.0, %v1553
      %v1555 = vpop.f32.mrb[0].mxu0
      %v1556 = vpop.f32.mrb[0].mxu0
      %v1557 = vadd.f32 0.0, %v1556
      %v1558 = vpop.f32.mrb[0].mxu0
      %1559 = vmatprep.mubr.bf16.mxu0 0
      %1560 = vmatmul.mubr.bf16.gmra.mrb[0].mxu0 %v1417
      %v1561 = vpop.f32.mrb[0].mxu0
      %v1562 = vadd.f32 0.0, %v1561
      %v1563 = vpop.f32.mrb[0].mxu0
      %v1564 = vpop.f32.mrb[0].mxu0
      %v1565 = vadd.f32 0.0, %v1564
      %v1566 = vpop.f32.mrb[0].mxu0
      %1567 = vmatprep.mubr.bf16.mxu0 0
      %1568 = vmatmul.mubr.bf16.gmra.mrb[0].mxu0 %v1420
      %v1569 = vpop.f32.mrb[0].mxu0
      %v1570 = vadd.f32 0.0, %v1569
      %v1571 = vpop.f32.mrb[0].mxu0
      %v1572 = vpop.f32.mrb[0].mxu0
      %v1573 = vadd.f32 0.0, %v1572
      %v1574 = vpop.f32.mrb[0].mxu0
      %1575 = vmatprep.mubr.bf16.mxu0 0
      %1576 = vmatmul.mubr.bf16.gmra.mrb[0].mxu0 %v1423
      %v1577 = vpop.f32.mrb[0].mxu0
      %v1578 = vadd.f32 0.0, %v1577
      %v1579 = vpop.f32.mrb[0].mxu0
      %v1580 = vpop.f32.mrb[0].mxu0
      %v1581 = vadd.f32 0.0, %v1580
      %v1582 = vpop.f32.mrb[0].mxu0
      %1583 = vmatprep.mubr.bf16.mxu0 0
      %1584 = vmatmul.mubr.bf16.gmra.mrb[0].mxu0 %v1426
      %v1585 = vpop.f32.mrb[0].mxu0
      %v1586 = vadd.f32 0.0, %v1585
      %v1587 = vpop.f32.mrb[0].mxu0
      %v1588 = vpop.f32.mrb[0].mxu0
      %v1589 = vadd.f32 0.0, %v1588
      %v1590 = vpop.f32.mrb[0].mxu0
      %1591 = vdwg.mxu0
      %v1592 = vadd.f32 %v1074, %v1466
      %v1593 = vadd.f32 %v1077, %v1469
      %v1594 = vadd.f32 %v1082, %v1474
      %v1595 = vadd.f32 %v1085, %v1477
      %v1596 = vadd.f32 %v1090, %v1482
      %v1597 = vadd.f32 %v1093, %v1485
      %v1598 = vadd.f32 %v1098, %v1490
      %v1599 = vadd.f32 %v1101, %v1493
      %v1600 = vadd.f32 %v1106, %v1498
      %v1601 = vadd.f32 %v1109, %v1501
      %v1602 = vadd.f32 %v1114, %v1506
      %v1603 = vadd.f32 %v1117, %v1509
      %v1604 = vadd.f32 %v1122, %v1514
      %v1605 = vadd.f32 %v1125, %v1517
      %v1606 = vadd.f32 %v1130, %v1522
      %v1607 = vadd.f32 %v1133, %v1525
      %v1608 = vadd.f32 %v1138, %v1530
      %v1609 = vadd.f32 %v1141, %v1533
      %v1610 = vadd.f32 %v1146, %v1538
      %v1611 = vadd.f32 %v1149, %v1541
      %v1612 = vadd.f32 %v1154, %v1546
      %v1613 = vadd.f32 %v1157, %v1549
      %v1614 = vadd.f32 %v1162, %v1554
      %v1615 = vadd.f32 %v1165, %v1557
      %v1616 = vadd.f32 %v1170, %v1562
      %v1617 = vadd.f32 %v1173, %v1565
      %v1618 = vadd.f32 %v1178, %v1570
      %v1619 = vadd.f32 %v1181, %v1573
      %v1620 = vadd.f32 %v1186, %v1578
      %v1621 = vadd.f32 %v1189, %v1581
      %v1622 = vadd.f32 %v1194, %v1586
      %v1623 = vadd.f32 %v1197, %v1589
      %v1624 = vld [vmem:[%s1 + $0x4] sm:$0xc]
      %v1627 = vunpack.c.l.b16 %v247
      %v1628 = vunpack.c.l.b16 %v248
      %v1629 = vpack.c.b16 %v1628, %v1627
      %v1631 = vunpack.c.l.b16 %v1624
      %v1632 = vpack.c.b16 %v1631, %v1631
      %v1633 = vrot.slane %v1632, 2
      %v1635 = vsel %vm694, %v1629, 0
      %v1638 = vsel %vm743, %v1633, 0
      %1640 = vmatprep.subr.bf16.mxu0 0
      %1641 = vmatpush1.bf16.msra.mxu0 %v1638
      %1642 = vmatprep.subr.bf16.mxu0 0
      %1643 = vmatpush1.bf16.msra.mxu0 0
      %1644 = vmatprep.subr.bf16.mxu0 0
      %1645 = vmatpush1.bf16.msra.mxu0 0
      %1646 = vmatprep.subr.bf16.mxu0 0
      %1647 = vmatpush1.bf16.msra.mxu0 0
      %1648 = vmatprep.subr.bf16.mxu0 0
      %1649 = vmatpush1.bf16.msra.mxu0 0
      %1650 = vmatprep.subr.bf16.mxu0 0
      %1651 = vmatpush1.bf16.msra.mxu0 0
      %1652 = vmatprep.subr.bf16.mxu0 0
      %1653 = vmatpush1.bf16.msra.mxu0 0
      %1654 = vmatprep.subr.bf16.mxu0 0
      %1655 = vmatpush1.bf16.msra.mxu0 0
      %1656 = vmatprep.subr.bf16.mxu0 0
      %1657 = vmatpush1.bf16.msra.mxu0 0
      %1658 = vmatprep.subr.bf16.mxu0 0
      %1659 = vmatpush1.bf16.msra.mxu0 0
      %1660 = vmatprep.subr.bf16.mxu0 0
      %1661 = vmatpush1.bf16.msra.mxu0 0
      %1662 = vmatprep.subr.bf16.mxu0 0
      %1663 = vmatpush1.bf16.msra.mxu0 0
      %1664 = vmatprep.subr.bf16.mxu0 0
      %1665 = vmatpush1.bf16.msra.mxu0 0
      %1666 = vmatprep.subr.bf16.mxu0 0
      %1667 = vmatpush1.bf16.msra.mxu0 0
      %1668 = vmatprep.subr.bf16.mxu0 0
      %1669 = vmatpush1.bf16.msra.mxu0 0
      %1670 = vmatprep.subr.bf16.mxu0 0
      %1671 = vmatpush1.bf16.msra.mxu0 0
      %1672 = vmatprep.mubr.bf16.mxu0 0
      %1673 = vmatmul.mubr.bf16.gmra.mrb[0].mxu0 %v992
      %v1674 = vpop.f32.mrb[0].mxu0
      %v1675 = vadd.f32 0.0, %v1674
      %v1676 = vpop.f32.mrb[0].mxu0
      %v1677 = vpop.f32.mrb[0].mxu0
      %v1678 = vadd.f32 0.0, %v1677
      %v1679 = vpop.f32.mrb[0].mxu0
      %1680 = vmatprep.mubr.bf16.mxu0 0
      %1681 = vmatmul.mubr.bf16.gmra.mrb[0].mxu0 %v995
      %v1682 = vpop.f32.mrb[0].mxu0
      %v1683 = vadd.f32 0.0, %v1682
      %v1684 = vpop.f32.mrb[0].mxu0
      %v1685 = vpop.f32.mrb[0].mxu0
      %v1686 = vadd.f32 0.0, %v1685
      %v1687 = vpop.f32.mrb[0].mxu0
      %1688 = vmatprep.mubr.bf16.mxu0 0
      %1689 = vmatmul.mubr.bf16.gmra.mrb[0].mxu0 %v998
      %v1690 = vpop.f32.mrb[0].mxu0
      %v1691 = vadd.f32 0.0, %v1690
      %v1692 = vpop.f32.mrb[0].mxu0
      %v1693 = vpop.f32.mrb[0].mxu0
      %v1694 = vadd.f32 0.0, %v1693
      %v1695 = vpop.f32.mrb[0].mxu0
      %1696 = vmatprep.mubr.bf16.mxu0 0
      %1697 = vmatmul.mubr.bf16.gmra.mrb[0].mxu0 %v1001
      %v1698 = vpop.f32.mrb[0].mxu0
      %v1699 = vadd.f32 0.0, %v1698
      %v1700 = vpop.f32.mrb[0].mxu0
      %v1701 = vpop.f32.mrb[0].mxu0
      %v1702 = vadd.f32 0.0, %v1701
      %v1703 = vpop.f32.mrb[0].mxu0
      %1704 = vmatprep.mubr.bf16.mxu0 0
      %1705 = vmatmul.mubr.bf16.gmra.mrb[0].mxu0 %v1004
      %v1706 = vpop.f32.mrb[0].mxu0
      %v1707 = vadd.f32 0.0, %v1706
      %v1708 = vpop.f32.mrb[0].mxu0
      %v1709 = vpop.f32.mrb[0].mxu0
      %v1710 = vadd.f32 0.0, %v1709
      %v1711 = vpop.f32.mrb[0].mxu0
      %1712 = vmatprep.mubr.bf16.mxu0 0
      %1713 = vmatmul.mubr.bf16.gmra.mrb[0].mxu0 %v1007
      %v1714 = vpop.f32.mrb[0].mxu0
      %v1715 = vadd.f32 0.0, %v1714
      %v1716 = vpop.f32.mrb[0].mxu0
      %v1717 = vpop.f32.mrb[0].mxu0
      %v1718 = vadd.f32 0.0, %v1717
      %v1719 = vpop.f32.mrb[0].mxu0
      %1720 = vmatprep.mubr.bf16.mxu0 0
      %1721 = vmatmul.mubr.bf16.gmra.mrb[0].mxu0 %v1010
      %v1722 = vpop.f32.mrb[0].mxu0
      %v1723 = vadd.f32 0.0, %v1722
      %v1724 = vpop.f32.mrb[0].mxu0
      %v1725 = vpop.f32.mrb[0].mxu0
      %v1726 = vadd.f32 0.0, %v1725
      %v1727 = vpop.f32.mrb[0].mxu0
      %1728 = vmatprep.mubr.bf16.mxu0 0
      %1729 = vmatmul.mubr.bf16.gmra.mrb[0].mxu0 %v1013
      %v1730 = vpop.f32.mrb[0].mxu0
      %v1731 = vadd.f32 0.0, %v1730
      %v1732 = vpop.f32.mrb[0].mxu0
      %v1733 = vpop.f32.mrb[0].mxu0
      %v1734 = vadd.f32 0.0, %v1733
      %v1735 = vpop.f32.mrb[0].mxu0
      %1736 = vmatprep.mubr.bf16.mxu0 0
      %1737 = vmatmul.mubr.bf16.gmra.mrb[0].mxu0 %v1016
      %v1738 = vpop.f32.mrb[0].mxu0
      %v1739 = vadd.f32 0.0, %v1738
      %v1740 = vpop.f32.mrb[0].mxu0
      %v1741 = vpop.f32.mrb[0].mxu0
      %v1742 = vadd.f32 0.0, %v1741
      %v1743 = vpop.f32.mrb[0].mxu0
      %1744 = vmatprep.mubr.bf16.mxu0 0
      %1745 = vmatmul.mubr.bf16.gmra.mrb[0].mxu0 %v1019
      %v1746 = vpop.f32.mrb[0].mxu0
      %v1747 = vadd.f32 0.0, %v1746
      %v1748 = vpop.f32.mrb[0].mxu0
      %v1749 = vpop.f32.mrb[0].mxu0
      %v1750 = vadd.f32 0.0, %v1749
      %v1751 = vpop.f32.mrb[0].mxu0
      %1752 = vmatprep.mubr.bf16.mxu0 0
      %1753 = vmatmul.mubr.bf16.gmra.mrb[0].mxu0 %v1022
      %v1754 = vpop.f32.mrb[0].mxu0
      %v1755 = vadd.f32 0.0, %v1754
      %v1756 = vpop.f32.mrb[0].mxu0
      %v1757 = vpop.f32.mrb[0].mxu0
      %v1758 = vadd.f32 0.0, %v1757
      %v1759 = vpop.f32.mrb[0].mxu0
      %1760 = vmatprep.mubr.bf16.mxu0 0
      %1761 = vmatmul.mubr.bf16.gmra.mrb[0].mxu0 %v1025
      %v1762 = vpop.f32.mrb[0].mxu0
      %v1763 = vadd.f32 0.0, %v1762
      %v1764 = vpop.f32.mrb[0].mxu0
      %v1765 = vpop.f32.mrb[0].mxu0
      %v1766 = vadd.f32 0.0, %v1765
      %v1767 = vpop.f32.mrb[0].mxu0
      %1768 = vmatprep.mubr.bf16.mxu0 0
      %1769 = vmatmul.mubr.bf16.gmra.mrb[0].mxu0 %v1028
      %v1770 = vpop.f32.mrb[0].mxu0
      %v1771 = vadd.f32 0.0, %v1770
      %v1772 = vpop.f32.mrb[0].mxu0
      %v1773 = vpop.f32.mrb[0].mxu0
      %v1774 = vadd.f32 0.0, %v1773
      %v1775 = vpop.f32.mrb[0].mxu0
      %1776 = vmatprep.mubr.bf16.mxu0 0
      %1777 = vmatmul.mubr.bf16.gmra.mrb[0].mxu0 %v1031
      %v1778 = vpop.f32.mrb[0].mxu0
      %v1779 = vadd.f32 0.0, %v1778
      %v1780 = vpop.f32.mrb[0].mxu0
      %v1781 = vpop.f32.mrb[0].mxu0
      %v1782 = vadd.f32 0.0, %v1781
      %v1783 = vpop.f32.mrb[0].mxu0
      %1784 = vmatprep.mubr.bf16.mxu0 0
      %1785 = vmatmul.mubr.bf16.gmra.mrb[0].mxu0 %v1034
      %v1786 = vpop.f32.mrb[0].mxu0
      %v1787 = vadd.f32 0.0, %v1786
      %v1788 = vpop.f32.mrb[0].mxu0
      %v1789 = vpop.f32.mrb[0].mxu0
      %v1790 = vadd.f32 0.0, %v1789
      %v1791 = vpop.f32.mrb[0].mxu0
      %1792 = vmatprep.mubr.bf16.mxu0 0
      %1793 = vmatmul.mubr.bf16.gmra.mrb[0].mxu0 %v1635
      %v1794 = vpop.f32.mrb[0].mxu0
      %v1795 = vadd.f32 0.0, %v1794
      %v1796 = vpop.f32.mrb[0].mxu0
      %v1797 = vpop.f32.mrb[0].mxu0
      %v1798 = vadd.f32 0.0, %v1797
      %v1799 = vpop.f32.mrb[0].mxu0
      %1800 = vdwg.mxu0
      %v1801 = vadd.f32 %v1592, %v1675
      %v1802 = vadd.f32 %v1593, %v1678
      %v1803 = vadd.f32 %v1594, %v1683
      %v1804 = vadd.f32 %v1595, %v1686
      %v1805 = vadd.f32 %v1596, %v1691
      %v1806 = vadd.f32 %v1597, %v1694
      %v1807 = vadd.f32 %v1598, %v1699
      %v1808 = vadd.f32 %v1599, %v1702
      %v1809 = vadd.f32 %v1600, %v1707
      %v1810 = vadd.f32 %v1601, %v1710
      %v1811 = vadd.f32 %v1602, %v1715
      %v1812 = vadd.f32 %v1603, %v1718
      %v1813 = vadd.f32 %v1604, %v1723
      %v1814 = vadd.f32 %v1605, %v1726
      %v1815 = vadd.f32 %v1606, %v1731
      %v1816 = vadd.f32 %v1607, %v1734
      %v1817 = vadd.f32 %v1608, %v1739
      %v1818 = vadd.f32 %v1609, %v1742
      %v1819 = vadd.f32 %v1610, %v1747
      %v1820 = vadd.f32 %v1611, %v1750
      %v1821 = vadd.f32 %v1612, %v1755
      %v1822 = vadd.f32 %v1613, %v1758
      %v1823 = vadd.f32 %v1614, %v1763
      %v1824 = vadd.f32 %v1615, %v1766
      %v1825 = vadd.f32 %v1616, %v1771
      %v1826 = vadd.f32 %v1617, %v1774
      %v1827 = vadd.f32 %v1618, %v1779
      %v1828 = vadd.f32 %v1619, %v1782
      %v1829 = vadd.f32 %v1620, %v1787
      %v1830 = vadd.f32 %v1621, %v1790
      %v1831 = vadd.f32 %v1622, %v1795
      %v1832 = vadd.f32 %v1623, %v1798
      %v1834 = vshrl.u32 %v247, 16
      %v1836 = vrot.slane %v1834, 4
      %v1837 = vshll.u32 %v247, 16
      %v1839 = vrot.slane %v1837, 5
      %v1840 = vor.u32 %v1836, %v1839
      %v1841 = vrot.slane %v1840, 4
      %v1843 = vshll.u32 %v248, 16
      %v1845 = vrot.slane %v1843, 5
      %v1846 = vsel %vm256, %v1841, %v1845
      %v1847 = vshrl.u32 %v248, 16
      %v1849 = vrot.slane %v1847, 4
      %v1850 = vor.u32 %v1849, %v1845
      %v1851 = vrot.slane %v1850, 4
      %v1853 = vshll.u32 %v249, 16
      %v1855 = vrot.slane %v1853, 5
      %v1856 = vsel %vm256, %v1851, %v1855
      %v1857 = vld [vmem:[%s1 + $0x8] sm:$0x3]
      %v1858 = vunpack.c.l.b16 %v1846
      %v1859 = vunpack.c.l.b16 %v1856
      %v1860 = vpack.c.b16 %v1859, %v1858
      %v1862 = vsel %vm694, %v1860, 0
      %v1865 = vsel %vm743, %v1857, 0
      %1867 = vmatprep.subr.bf16.mxu0 0
      %1868 = vmatpush1.bf16.msra.mxu0 %v1865
      %1869 = vmatprep.subr.bf16.mxu0 0
      %1870 = vmatpush1.bf16.msra.mxu0 0
      %1871 = vmatprep.subr.bf16.mxu0 0
      %1872 = vmatpush1.bf16.msra.mxu0 0
      %1873 = vmatprep.subr.bf16.mxu0 0
      %1874 = vmatpush1.bf16.msra.mxu0 0
      %1875 = vmatprep.subr.bf16.mxu0 0
      %1876 = vmatpush1.bf16.msra.mxu0 0
      %1877 = vmatprep.subr.bf16.mxu0 0
      %1878 = vmatpush1.bf16.msra.mxu0 0
      %1879 = vmatprep.subr.bf16.mxu0 0
      %1880 = vmatpush1.bf16.msra.mxu0 0
      %1881 = vmatprep.subr.bf16.mxu0 0
      %1882 = vmatpush1.bf16.msra.mxu0 0
      %1883 = vmatprep.subr.bf16.mxu0 0
      %1884 = vmatpush1.bf16.msra.mxu0 0
      %1885 = vmatprep.subr.bf16.mxu0 0
      %1886 = vmatpush1.bf16.msra.mxu0 0
      %1887 = vmatprep.subr.bf16.mxu0 0
      %1888 = vmatpush1.bf16.msra.mxu0 0
      %1889 = vmatprep.subr.bf16.mxu0 0
      %1890 = vmatpush1.bf16.msra.mxu0 0
      %1891 = vmatprep.subr.bf16.mxu0 0
      %1892 = vmatpush1.bf16.msra.mxu0 0
      %1893 = vmatprep.subr.bf16.mxu0 0
      %1894 = vmatpush1.bf16.msra.mxu0 0
      %1895 = vmatprep.subr.bf16.mxu0 0
      %1896 = vmatpush1.bf16.msra.mxu0 0
      %1897 = vmatprep.subr.bf16.mxu0 0
      %1898 = vmatpush1.bf16.msra.mxu0 0
      %1899 = vmatprep.mubr.bf16.mxu0 0
      %1900 = vmatmul.mubr.bf16.gmra.mrb[0].mxu0 %v699
      %v1901 = vpop.f32.mrb[0].mxu0
      %v1902 = vadd.f32 0.0, %v1901
      %v1903 = vpop.f32.mrb[0].mxu0
      %v1904 = vpop.f32.mrb[0].mxu0
      %v1905 = vadd.f32 0.0, %v1904
      %v1906 = vpop.f32.mrb[0].mxu0
      %1907 = vmatprep.mubr.bf16.mxu0 0
      %1908 = vmatmul.mubr.bf16.gmra.mrb[0].mxu0 %v702
      %v1909 = vpop.f32.mrb[0].mxu0
      %v1910 = vadd.f32 0.0, %v1909
      %v1911 = vpop.f32.mrb[0].mxu0
      %v1912 = vpop.f32.mrb[0].mxu0
      %v1913 = vadd.f32 0.0, %v1912
      %v1914 = vpop.f32.mrb[0].mxu0
      %1915 = vmatprep.mubr.bf16.mxu0 0
      %1916 = vmatmul.mubr.bf16.gmra.mrb[0].mxu0 %v705
      %v1917 = vpop.f32.mrb[0].mxu0
      %v1918 = vadd.f32 0.0, %v1917
      %v1919 = vpop.f32.mrb[0].mxu0
      %v1920 = vpop.f32.mrb[0].mxu0
      %v1921 = vadd.f32 0.0, %v1920
      %v1922 = vpop.f32.mrb[0].mxu0
      %1923 = vmatprep.mubr.bf16.mxu0 0
      %1924 = vmatmul.mubr.bf16.gmra.mrb[0].mxu0 %v708
      %v1925 = vpop.f32.mrb[0].mxu0
      %v1926 = vadd.f32 0.0, %v1925
      %v1927 = vpop.f32.mrb[0].mxu0
      %v1928 = vpop.f32.mrb[0].mxu0
      %v1929 = vadd.f32 0.0, %v1928
      %v1930 = vpop.f32.mrb[0].mxu0
      %1931 = vmatprep.mubr.bf16.mxu0 0
      %1932 = vmatmul.mubr.bf16.gmra.mrb[0].mxu0 %v711
      %v1933 = vpop.f32.mrb[0].mxu0
      %v1934 = vadd.f32 0.0, %v1933
      %v1935 = vpop.f32.mrb[0].mxu0
      %v1936 = vpop.f32.mrb[0].mxu0
      %v1937 = vadd.f32 0.0, %v1936
      %v1938 = vpop.f32.mrb[0].mxu0
      %1939 = vmatprep.mubr.bf16.mxu0 0
      %1940 = vmatmul.mubr.bf16.gmra.mrb[0].mxu0 %v714
      %v1941 = vpop.f32.mrb[0].mxu0
      %v1942 = vadd.f32 0.0, %v1941
      %v1943 = vpop.f32.mrb[0].mxu0
      %v1944 = vpop.f32.mrb[0].mxu0
      %v1945 = vadd.f32 0.0, %v1944
      %v1946 = vpop.f32.mrb[0].mxu0
      %1947 = vmatprep.mubr.bf16.mxu0 0
      %1948 = vmatmul.mubr.bf16.gmra.mrb[0].mxu0 %v717
      %v1949 = vpop.f32.mrb[0].mxu0
      %v1950 = vadd.f32 0.0, %v1949
      %v1951 = vpop.f32.mrb[0].mxu0
      %v1952 = vpop.f32.mrb[0].mxu0
      %v1953 = vadd.f32 0.0, %v1952
      %v1954 = vpop.f32.mrb[0].mxu0
      %1955 = vmatprep.mubr.bf16.mxu0 0
      %1956 = vmatmul.mubr.bf16.gmra.mrb[0].mxu0 %v720
      %v1957 = vpop.f32.mrb[0].mxu0
      %v1958 = vadd.f32 0.0, %v1957
      %v1959 = vpop.f32.mrb[0].mxu0
      %v1960 = vpop.f32.mrb[0].mxu0
      %v1961 = vadd.f32 0.0, %v1960
      %v1962 = vpop.f32.mrb[0].mxu0
      %1963 = vmatprep.mubr.bf16.mxu0 0
      %1964 = vmatmul.mubr.bf16.gmra.mrb[0].mxu0 %v723
      %v1965 = vpop.f32.mrb[0].mxu0
      %v1966 = vadd.f32 0.0, %v1965
      %v1967 = vpop.f32.mrb[0].mxu0
      %v1968 = vpop.f32.mrb[0].mxu0
      %v1969 = vadd.f32 0.0, %v1968
      %v1970 = vpop.f32.mrb[0].mxu0
      %1971 = vmatprep.mubr.bf16.mxu0 0
      %1972 = vmatmul.mubr.bf16.gmra.mrb[0].mxu0 %v726
      %v1973 = vpop.f32.mrb[0].mxu0
      %v1974 = vadd.f32 0.0, %v1973
      %v1975 = vpop.f32.mrb[0].mxu0
      %v1976 = vpop.f32.mrb[0].mxu0
      %v1977 = vadd.f32 0.0, %v1976
      %v1978 = vpop.f32.mrb[0].mxu0
      %1979 = vmatprep.mubr.bf16.mxu0 0
      %1980 = vmatmul.mubr.bf16.gmra.mrb[0].mxu0 %v729
      %v1981 = vpop.f32.mrb[0].mxu0
      %v1982 = vadd.f32 0.0, %v1981
      %v1983 = vpop.f32.mrb[0].mxu0
      %v1984 = vpop.f32.mrb[0].mxu0
      %v1985 = vadd.f32 0.0, %v1984
      %v1986 = vpop.f32.mrb[0].mxu0
      %1987 = vmatprep.mubr.bf16.mxu0 0
      %1988 = vmatmul.mubr.bf16.gmra.mrb[0].mxu0 %v732
      %v1989 = vpop.f32.mrb[0].mxu0
      %v1990 = vadd.f32 0.0, %v1989
      %v1991 = vpop.f32.mrb[0].mxu0
      %v1992 = vpop.f32.mrb[0].mxu0
      %v1993 = vadd.f32 0.0, %v1992
      %v1994 = vpop.f32.mrb[0].mxu0
      %1995 = vmatprep.mubr.bf16.mxu0 0
      %1996 = vmatmul.mubr.bf16.gmra.mrb[0].mxu0 %v735
      %v1997 = vpop.f32.mrb[0].mxu0
      %v1998 = vadd.f32 0.0, %v1997
      %v1999 = vpop.f32.mrb[0].mxu0
      %v2000 = vpop.f32.mrb[0].mxu0
      %v2001 = vadd.f32 0.0, %v2000
      %v2002 = vpop.f32.mrb[0].mxu0
      %2003 = vmatprep.mubr.bf16.mxu0 0
      %2004 = vmatmul.mubr.bf16.gmra.mrb[0].mxu0 %v738
      %v2005 = vpop.f32.mrb[0].mxu0
      %v2006 = vadd.f32 0.0, %v2005
      %v2007 = vpop.f32.mrb[0].mxu0
      %v2008 = vpop.f32.mrb[0].mxu0
      %v2009 = vadd.f32 0.0, %v2008
      %v2010 = vpop.f32.mrb[0].mxu0
      %2011 = vmatprep.mubr.bf16.mxu0 0
      %2012 = vmatmul.mubr.bf16.gmra.mrb[0].mxu0 %v741
      %v2013 = vpop.f32.mrb[0].mxu0
      %v2014 = vadd.f32 0.0, %v2013
      %v2015 = vpop.f32.mrb[0].mxu0
      %v2016 = vpop.f32.mrb[0].mxu0
      %v2017 = vadd.f32 0.0, %v2016
      %v2018 = vpop.f32.mrb[0].mxu0
      %2019 = vmatprep.mubr.bf16.mxu0 0
      %2020 = vmatmul.mubr.bf16.gmra.mrb[0].mxu0 %v1862
      %v2021 = vpop.f32.mrb[0].mxu0
      %v2022 = vadd.f32 0.0, %v2021
      %v2023 = vpop.f32.mrb[0].mxu0
      %v2024 = vpop.f32.mrb[0].mxu0
      %v2025 = vadd.f32 0.0, %v2024
      %v2026 = vpop.f32.mrb[0].mxu0
      %2027 = vdwg.mxu0
      %v2028 = vadd.f32 %v1801, %v1902
      %v2029 = vadd.f32 %v1802, %v1905
      %v2030 = vadd.f32 %v1803, %v1910
      %v2031 = vadd.f32 %v1804, %v1913
      %v2032 = vadd.f32 %v1805, %v1918
      %v2033 = vadd.f32 %v1806, %v1921
      %v2034 = vadd.f32 %v1807, %v1926
      %v2035 = vadd.f32 %v1808, %v1929
      %v2036 = vadd.f32 %v1809, %v1934
      %v2037 = vadd.f32 %v1810, %v1937
      %v2038 = vadd.f32 %v1811, %v1942
      %v2039 = vadd.f32 %v1812, %v1945
      %v2040 = vadd.f32 %v1813, %v1950
      %v2041 = vadd.f32 %v1814, %v1953
      %v2042 = vadd.f32 %v1815, %v1958
      %v2043 = vadd.f32 %v1816, %v1961
      %v2044 = vadd.f32 %v1817, %v1966
      %v2045 = vadd.f32 %v1818, %v1969
      %v2046 = vadd.f32 %v1819, %v1974
      %v2047 = vadd.f32 %v1820, %v1977
      %v2048 = vadd.f32 %v1821, %v1982
      %v2049 = vadd.f32 %v1822, %v1985
      %v2050 = vadd.f32 %v1823, %v1990
      %v2051 = vadd.f32 %v1824, %v1993
      %v2052 = vadd.f32 %v1825, %v1998
      %v2053 = vadd.f32 %v1826, %v2001
      %v2054 = vadd.f32 %v1827, %v2006
      %v2055 = vadd.f32 %v1828, %v2009
      %v2056 = vadd.f32 %v1829, %v2014
      %v2057 = vadd.f32 %v1830, %v2017
      %v2058 = vadd.f32 %v1831, %v2022
      %v2059 = vadd.f32 %v1832, %v2025
      %v2061 = vrot.slane %v247, 5
      %v2062 = vrot.slane %v2061, 4
      %v2063 = vrot.slane %v248, 5
      %v2064 = vsel %vm1218, %v2062, %v2063
      %v2065 = vrot.slane %v2063, 4
      %v2066 = vrot.slane %v249, 5
      %v2067 = vsel %vm1218, %v2065, %v2066
      %v2068 = vld [vmem:[%s1 + $0x8] sm:$0xc]
      %v2069 = vunpack.c.l.b16 %v2064
      %v2070 = vunpack.c.l.b16 %v2067
      %v2071 = vpack.c.b16 %v2070, %v2069
      %v2073 = vunpack.c.l.b16 %v2068
      %v2074 = vpack.c.b16 %v2073, %v2073
      %v2075 = vrot.slane %v2074, 2
      %v2077 = vsel %vm694, %v2071, 0
      %v2080 = vsel %vm743, %v2075, 0
      %2082 = vmatprep.subr.bf16.mxu0 0
      %2083 = vmatpush1.bf16.msra.mxu0 %v2080
      %2084 = vmatprep.subr.bf16.mxu0 0
      %2085 = vmatpush1.bf16.msra.mxu0 0
      %2086 = vmatprep.subr.bf16.mxu0 0
      %2087 = vmatpush1.bf16.msra.mxu0 0
      %2088 = vmatprep.subr.bf16.mxu0 0
      %2089 = vmatpush1.bf16.msra.mxu0 0
      %2090 = vmatprep.subr.bf16.mxu0 0
      %2091 = vmatpush1.bf16.msra.mxu0 0
      %2092 = vmatprep.subr.bf16.mxu0 0
      %2093 = vmatpush1.bf16.msra.mxu0 0
      %2094 = vmatprep.subr.bf16.mxu0 0
      %2095 = vmatpush1.bf16.msra.mxu0 0
      %2096 = vmatprep.subr.bf16.mxu0 0
      %2097 = vmatpush1.bf16.msra.mxu0 0
      %2098 = vmatprep.subr.bf16.mxu0 0
      %2099 = vmatpush1.bf16.msra.mxu0 0
      %2100 = vmatprep.subr.bf16.mxu0 0
      %2101 = vmatpush1.bf16.msra.mxu0 0
      %2102 = vmatprep.subr.bf16.mxu0 0
      %2103 = vmatpush1.bf16.msra.mxu0 0
      %2104 = vmatprep.subr.bf16.mxu0 0
      %2105 = vmatpush1.bf16.msra.mxu0 0
      %2106 = vmatprep.subr.bf16.mxu0 0
      %2107 = vmatpush1.bf16.msra.mxu0 0
      %2108 = vmatprep.subr.bf16.mxu0 0
      %2109 = vmatpush1.bf16.msra.mxu0 0
      %2110 = vmatprep.subr.bf16.mxu0 0
      %2111 = vmatpush1.bf16.msra.mxu0 0
      %2112 = vmatprep.subr.bf16.mxu0 0
      %2113 = vmatpush1.bf16.msra.mxu0 0
      %2114 = vmatprep.mubr.bf16.mxu0 0
      %2115 = vmatmul.mubr.bf16.gmra.mrb[0].mxu0 %v1384
      %v2116 = vpop.f32.mrb[0].mxu0
      %v2117 = vadd.f32 0.0, %v2116
      %v2118 = vpop.f32.mrb[0].mxu0
      %v2119 = vpop.f32.mrb[0].mxu0
      %v2120 = vadd.f32 0.0, %v2119
      %v2121 = vpop.f32.mrb[0].mxu0
      %2122 = vmatprep.mubr.bf16.mxu0 0
      %2123 = vmatmul.mubr.bf16.gmra.mrb[0].mxu0 %v1387
      %v2124 = vpop.f32.mrb[0].mxu0
      %v2125 = vadd.f32 0.0, %v2124
      %v2126 = vpop.f32.mrb[0].mxu0
      %v2127 = vpop.f32.mrb[0].mxu0
      %v2128 = vadd.f32 0.0, %v2127
      %v2129 = vpop.f32.mrb[0].mxu0
      %2130 = vmatprep.mubr.bf16.mxu0 0
      %2131 = vmatmul.mubr.bf16.gmra.mrb[0].mxu0 %v1390
      %v2132 = vpop.f32.mrb[0].mxu0
      %v2133 = vadd.f32 0.0, %v2132
      %v2134 = vpop.f32.mrb[0].mxu0
      %v2135 = vpop.f32.mrb[0].mxu0
      %v2136 = vadd.f32 0.0, %v2135
      %v2137 = vpop.f32.mrb[0].mxu0
      %2138 = vmatprep.mubr.bf16.mxu0 0
      %2139 = vmatmul.mubr.bf16.gmra.mrb[0].mxu0 %v1393
      %v2140 = vpop.f32.mrb[0].mxu0
      %v2141 = vadd.f32 0.0, %v2140
      %v2142 = vpop.f32.mrb[0].mxu0
      %v2143 = vpop.f32.mrb[0].mxu0
      %v2144 = vadd.f32 0.0, %v2143
      %v2145 = vpop.f32.mrb[0].mxu0
      %2146 = vmatprep.mubr.bf16.mxu0 0
      %2147 = vmatmul.mubr.bf16.gmra.mrb[0].mxu0 %v1396
      %v2148 = vpop.f32.mrb[0].mxu0
      %v2149 = vadd.f32 0.0, %v2148
      %v2150 = vpop.f32.mrb[0].mxu0
      %v2151 = vpop.f32.mrb[0].mxu0
      %v2152 = vadd.f32 0.0, %v2151
      %v2153 = vpop.f32.mrb[0].mxu0
      %2154 = vmatprep.mubr.bf16.mxu0 0
      %2155 = vmatmul.mubr.bf16.gmra.mrb[0].mxu0 %v1399
      %v2156 = vpop.f32.mrb[0].mxu0
      %v2157 = vadd.f32 0.0, %v2156
      %v2158 = vpop.f32.mrb[0].mxu0
      %v2159 = vpop.f32.mrb[0].mxu0
      %v2160 = vadd.f32 0.0, %v2159
      %v2161 = vpop.f32.mrb[0].mxu0
      %2162 = vmatprep.mubr.bf16.mxu0 0
      %2163 = vmatmul.mubr.bf16.gmra.mrb[0].mxu0 %v1402
      %v2164 = vpop.f32.mrb[0].mxu0
      %v2165 = vadd.f32 0.0, %v2164
      %v2166 = vpop.f32.mrb[0].mxu0
      %v2167 = vpop.f32.mrb[0].mxu0
      %v2168 = vadd.f32 0.0, %v2167
      %v2169 = vpop.f32.mrb[0].mxu0
      %2170 = vmatprep.mubr.bf16.mxu0 0
      %2171 = vmatmul.mubr.bf16.gmra.mrb[0].mxu0 %v1405
      %v2172 = vpop.f32.mrb[0].mxu0
      %v2173 = vadd.f32 0.0, %v2172
      %v2174 = vpop.f32.mrb[0].mxu0
      %v2175 = vpop.f32.mrb[0].mxu0
      %v2176 = vadd.f32 0.0, %v2175
      %v2177 = vpop.f32.mrb[0].mxu0
      %2178 = vmatprep.mubr.bf16.mxu0 0
      %2179 = vmatmul.mubr.bf16.gmra.mrb[0].mxu0 %v1408
      %v2180 = vpop.f32.mrb[0].mxu0
      %v2181 = vadd.f32 0.0, %v2180
      %v2182 = vpop.f32.mrb[0].mxu0
      %v2183 = vpop.f32.mrb[0].mxu0
      %v2184 = vadd.f32 0.0, %v2183
      %v2185 = vpop.f32.mrb[0].mxu0
      %2186 = vmatprep.mubr.bf16.mxu0 0
      %2187 = vmatmul.mubr.bf16.gmra.mrb[0].mxu0 %v1411
      %v2188 = vpop.f32.mrb[0].mxu0
      %v2189 = vadd.f32 0.0, %v2188
      %v2190 = vpop.f32.mrb[0].mxu0
      %v2191 = vpop.f32.mrb[0].mxu0
      %v2192 = vadd.f32 0.0, %v2191
      %v2193 = vpop.f32.mrb[0].mxu0
      %2194 = vmatprep.mubr.bf16.mxu0 0
      %2195 = vmatmul.mubr.bf16.gmra.mrb[0].mxu0 %v1414
      %v2196 = vpop.f32.mrb[0].mxu0
      %v2197 = vadd.f32 0.0, %v2196
      %v2198 = vpop.f32.mrb[0].mxu0
      %v2199 = vpop.f32.mrb[0].mxu0
      %v2200 = vadd.f32 0.0, %v2199
      %v2201 = vpop.f32.mrb[0].mxu0
      %2202 = vmatprep.mubr.bf16.mxu0 0
      %2203 = vmatmul.mubr.bf16.gmra.mrb[0].mxu0 %v1417
      %v2204 = vpop.f32.mrb[0].mxu0
      %v2205 = vadd.f32 0.0, %v2204
      %v2206 = vpop.f32.mrb[0].mxu0
      %v2207 = vpop.f32.mrb[0].mxu0
      %v2208 = vadd.f32 0.0, %v2207
      %v2209 = vpop.f32.mrb[0].mxu0
      %2210 = vmatprep.mubr.bf16.mxu0 0
      %2211 = vmatmul.mubr.bf16.gmra.mrb[0].mxu0 %v1420
      %v2212 = vpop.f32.mrb[0].mxu0
      %v2213 = vadd.f32 0.0, %v2212
      %v2214 = vpop.f32.mrb[0].mxu0
      %v2215 = vpop.f32.mrb[0].mxu0
      %v2216 = vadd.f32 0.0, %v2215
      %v2217 = vpop.f32.mrb[0].mxu0
      %2218 = vmatprep.mubr.bf16.mxu0 0
      %2219 = vmatmul.mubr.bf16.gmra.mrb[0].mxu0 %v1423
      %v2220 = vpop.f32.mrb[0].mxu0
      %v2221 = vadd.f32 0.0, %v2220
      %v2222 = vpop.f32.mrb[0].mxu0
      %v2223 = vpop.f32.mrb[0].mxu0
      %v2224 = vadd.f32 0.0, %v2223
      %v2225 = vpop.f32.mrb[0].mxu0
      %2226 = vmatprep.mubr.bf16.mxu0 0
      %2227 = vmatmul.mubr.bf16.gmra.mrb[0].mxu0 %v1426
      %v2228 = vpop.f32.mrb[0].mxu0
      %v2229 = vadd.f32 0.0, %v2228
      %v2230 = vpop.f32.mrb[0].mxu0
      %v2231 = vpop.f32.mrb[0].mxu0
      %v2232 = vadd.f32 0.0, %v2231
      %v2233 = vpop.f32.mrb[0].mxu0
      %2234 = vmatprep.mubr.bf16.mxu0 0
      %2235 = vmatmul.mubr.bf16.gmra.mrb[0].mxu0 %v2077
      %v2236 = vpop.f32.mrb[0].mxu0
      %v2237 = vadd.f32 0.0, %v2236
      %v2238 = vpop.f32.mrb[0].mxu0
      %v2239 = vpop.f32.mrb[0].mxu0
      %v2240 = vadd.f32 0.0, %v2239
      %v2241 = vpop.f32.mrb[0].mxu0
      %2242 = vdwg.mxu0
      %v2243 = vadd.f32 %v2028, %v2117
      %v2244 = vadd.f32 %v2029, %v2120
      %v2245 = vadd.f32 %v2030, %v2125
      %v2246 = vadd.f32 %v2031, %v2128
      %v2247 = vadd.f32 %v2032, %v2133
      %v2248 = vadd.f32 %v2033, %v2136
      %v2249 = vadd.f32 %v2034, %v2141
      %v2250 = vadd.f32 %v2035, %v2144
      %v2251 = vadd.f32 %v2036, %v2149
      %v2252 = vadd.f32 %v2037, %v2152
      %v2253 = vadd.f32 %v2038, %v2157
      %v2254 = vadd.f32 %v2039, %v2160
      %v2255 = vadd.f32 %v2040, %v2165
      %v2256 = vadd.f32 %v2041, %v2168
      %v2257 = vadd.f32 %v2042, %v2173
      %v2258 = vadd.f32 %v2043, %v2176
      %v2259 = vadd.f32 %v2044, %v2181
      %v2260 = vadd.f32 %v2045, %v2184
      %v2261 = vadd.f32 %v2046, %v2189
      %v2262 = vadd.f32 %v2047, %v2192
      %v2263 = vadd.f32 %v2048, %v2197
      %v2264 = vadd.f32 %v2049, %v2200
      %v2265 = vadd.f32 %v2050, %v2205
      %v2266 = vadd.f32 %v2051, %v2208
      %v2267 = vadd.f32 %v2052, %v2213
      %v2268 = vadd.f32 %v2053, %v2216
      %v2269 = vadd.f32 %v2054, %v2221
      %v2270 = vadd.f32 %v2055, %v2224
      %v2271 = vadd.f32 %v2056, %v2229
      %v2272 = vadd.f32 %v2057, %v2232
      %v2273 = vadd.f32 %v2058, %v2237
      %v2274 = vadd.f32 %v2059, %v2240
      %v2275 = vld [vmem:[%s1 + $0xc] sm:$0x3]
      %v2278 = vunpack.c.l.b16 %v250
      %v2279 = vunpack.c.l.b16 %v251
      %v2280 = vpack.c.b16 %v2279, %v2278
      %v2282 = vsel %vm694, %v2280, 0
      %v2285 = vsel %vm743, %v2275, 0
      %2287 = vmatprep.subr.bf16.mxu0 0
      %2288 = vmatpush1.bf16.msra.mxu0 %v2285
      %2289 = vmatprep.subr.bf16.mxu0 0
      %2290 = vmatpush1.bf16.msra.mxu0 0
      %2291 = vmatprep.subr.bf16.mxu0 0
      %2292 = vmatpush1.bf16.msra.mxu0 0
      %2293 = vmatprep.subr.bf16.mxu0 0
      %2294 = vmatpush1.bf16.msra.mxu0 0
      %2295 = vmatprep.subr.bf16.mxu0 0
      %2296 = vmatpush1.bf16.msra.mxu0 0
      %2297 = vmatprep.subr.bf16.mxu0 0
      %2298 = vmatpush1.bf16.msra.mxu0 0
      %2299 = vmatprep.subr.bf16.mxu0 0
      %2300 = vmatpush1.bf16.msra.mxu0 0
      %2301 = vmatprep.subr.bf16.mxu0 0
      %2302 = vmatpush1.bf16.msra.mxu0 0
      %2303 = vmatprep.subr.bf16.mxu0 0
      %2304 = vmatpush1.bf16.msra.mxu0 0
      %2305 = vmatprep.subr.bf16.mxu0 0
      %2306 = vmatpush1.bf16.msra.mxu0 0
      %2307 = vmatprep.subr.bf16.mxu0 0
      %2308 = vmatpush1.bf16.msra.mxu0 0
      %2309 = vmatprep.subr.bf16.mxu0 0
      %2310 = vmatpush1.bf16.msra.mxu0 0
      %2311 = vmatprep.subr.bf16.mxu0 0
      %2312 = vmatpush1.bf16.msra.mxu0 0
      %2313 = vmatprep.subr.bf16.mxu0 0
      %2314 = vmatpush1.bf16.msra.mxu0 0
      %2315 = vmatprep.subr.bf16.mxu0 0
      %2316 = vmatpush1.bf16.msra.mxu0 0
      %2317 = vmatprep.subr.bf16.mxu0 0
      %2318 = vmatpush1.bf16.msra.mxu0 0
      %2319 = vmatprep.mubr.bf16.mxu0 0
      %2320 = vmatmul.mubr.bf16.gmra.mrb[0].mxu0 %v995
      %v2321 = vpop.f32.mrb[0].mxu0
      %v2322 = vadd.f32 0.0, %v2321
      %v2323 = vpop.f32.mrb[0].mxu0
      %v2324 = vpop.f32.mrb[0].mxu0
      %v2325 = vadd.f32 0.0, %v2324
      %v2326 = vpop.f32.mrb[0].mxu0
      %2327 = vmatprep.mubr.bf16.mxu0 0
      %2328 = vmatmul.mubr.bf16.gmra.mrb[0].mxu0 %v998
      %v2329 = vpop.f32.mrb[0].mxu0
      %v2330 = vadd.f32 0.0, %v2329
      %v2331 = vpop.f32.mrb[0].mxu0
      %v2332 = vpop.f32.mrb[0].mxu0
      %v2333 = vadd.f32 0.0, %v2332
      %v2334 = vpop.f32.mrb[0].mxu0
      %2335 = vmatprep.mubr.bf16.mxu0 0
      %2336 = vmatmul.mubr.bf16.gmra.mrb[0].mxu0 %v1001
      %v2337 = vpop.f32.mrb[0].mxu0
      %v2338 = vadd.f32 0.0, %v2337
      %v2339 = vpop.f32.mrb[0].mxu0
      %v2340 = vpop.f32.mrb[0].mxu0
      %v2341 = vadd.f32 0.0, %v2340
      %v2342 = vpop.f32.mrb[0].mxu0
      %2343 = vmatprep.mubr.bf16.mxu0 0
      %2344 = vmatmul.mubr.bf16.gmra.mrb[0].mxu0 %v1004
      %v2345 = vpop.f32.mrb[0].mxu0
      %v2346 = vadd.f32 0.0, %v2345
      %v2347 = vpop.f32.mrb[0].mxu0
      %v2348 = vpop.f32.mrb[0].mxu0
      %v2349 = vadd.f32 0.0, %v2348
      %v2350 = vpop.f32.mrb[0].mxu0
      %2351 = vmatprep.mubr.bf16.mxu0 0
      %2352 = vmatmul.mubr.bf16.gmra.mrb[0].mxu0 %v1007
      %v2353 = vpop.f32.mrb[0].mxu0
      %v2354 = vadd.f32 0.0, %v2353
      %v2355 = vpop.f32.mrb[0].mxu0
      %v2356 = vpop.f32.mrb[0].mxu0
      %v2357 = vadd.f32 0.0, %v2356
      %v2358 = vpop.f32.mrb[0].mxu0
      %2359 = vmatprep.mubr.bf16.mxu0 0
      %2360 = vmatmul.mubr.bf16.gmra.mrb[0].mxu0 %v1010
      %v2361 = vpop.f32.mrb[0].mxu0
      %v2362 = vadd.f32 0.0, %v2361
      %v2363 = vpop.f32.mrb[0].mxu0
      %v2364 = vpop.f32.mrb[0].mxu0
      %v2365 = vadd.f32 0.0, %v2364
      %v2366 = vpop.f32.mrb[0].mxu0
      %2367 = vmatprep.mubr.bf16.mxu0 0
      %2368 = vmatmul.mubr.bf16.gmra.mrb[0].mxu0 %v1013
      %v2369 = vpop.f32.mrb[0].mxu0
      %v2370 = vadd.f32 0.0, %v2369
      %v2371 = vpop.f32.mrb[0].mxu0
      %v2372 = vpop.f32.mrb[0].mxu0
      %v2373 = vadd.f32 0.0, %v2372
      %v2374 = vpop.f32.mrb[0].mxu0
      %2375 = vmatprep.mubr.bf16.mxu0 0
      %2376 = vmatmul.mubr.bf16.gmra.mrb[0].mxu0 %v1016
      %v2377 = vpop.f32.mrb[0].mxu0
      %v2378 = vadd.f32 0.0, %v2377
      %v2379 = vpop.f32.mrb[0].mxu0
      %v2380 = vpop.f32.mrb[0].mxu0
      %v2381 = vadd.f32 0.0, %v2380
      %v2382 = vpop.f32.mrb[0].mxu0
      %2383 = vmatprep.mubr.bf16.mxu0 0
      %2384 = vmatmul.mubr.bf16.gmra.mrb[0].mxu0 %v1019
      %v2385 = vpop.f32.mrb[0].mxu0
      %v2386 = vadd.f32 0.0, %v2385
      %v2387 = vpop.f32.mrb[0].mxu0
      %v2388 = vpop.f32.mrb[0].mxu0
      %v2389 = vadd.f32 0.0, %v2388
      %v2390 = vpop.f32.mrb[0].mxu0
      %2391 = vmatprep.mubr.bf16.mxu0 0
      %2392 = vmatmul.mubr.bf16.gmra.mrb[0].mxu0 %v1022
      %v2393 = vpop.f32.mrb[0].mxu0
      %v2394 = vadd.f32 0.0, %v2393
      %v2395 = vpop.f32.mrb[0].mxu0
      %v2396 = vpop.f32.mrb[0].mxu0
      %v2397 = vadd.f32 0.0, %v2396
      %v2398 = vpop.f32.mrb[0].mxu0
      %2399 = vmatprep.mubr.bf16.mxu0 0
      %2400 = vmatmul.mubr.bf16.gmra.mrb[0].mxu0 %v1025
      %v2401 = vpop.f32.mrb[0].mxu0
      %v2402 = vadd.f32 0.0, %v2401
      %v2403 = vpop.f32.mrb[0].mxu0
      %v2404 = vpop.f32.mrb[0].mxu0
      %v2405 = vadd.f32 0.0, %v2404
      %v2406 = vpop.f32.mrb[0].mxu0
      %2407 = vmatprep.mubr.bf16.mxu0 0
      %2408 = vmatmul.mubr.bf16.gmra.mrb[0].mxu0 %v1028
      %v2409 = vpop.f32.mrb[0].mxu0
      %v2410 = vadd.f32 0.0, %v2409
      %v2411 = vpop.f32.mrb[0].mxu0
      %v2412 = vpop.f32.mrb[0].mxu0
      %v2413 = vadd.f32 0.0, %v2412
      %v2414 = vpop.f32.mrb[0].mxu0
      %2415 = vmatprep.mubr.bf16.mxu0 0
      %2416 = vmatmul.mubr.bf16.gmra.mrb[0].mxu0 %v1031
      %v2417 = vpop.f32.mrb[0].mxu0
      %v2418 = vadd.f32 0.0, %v2417
      %v2419 = vpop.f32.mrb[0].mxu0
      %v2420 = vpop.f32.mrb[0].mxu0
      %v2421 = vadd.f32 0.0, %v2420
      %v2422 = vpop.f32.mrb[0].mxu0
      %2423 = vmatprep.mubr.bf16.mxu0 0
      %2424 = vmatmul.mubr.bf16.gmra.mrb[0].mxu0 %v1034
      %v2425 = vpop.f32.mrb[0].mxu0
      %v2426 = vadd.f32 0.0, %v2425
      %v2427 = vpop.f32.mrb[0].mxu0
      %v2428 = vpop.f32.mrb[0].mxu0
      %v2429 = vadd.f32 0.0, %v2428
      %v2430 = vpop.f32.mrb[0].mxu0
      %2431 = vmatprep.mubr.bf16.mxu0 0
      %2432 = vmatmul.mubr.bf16.gmra.mrb[0].mxu0 %v1635
      %v2433 = vpop.f32.mrb[0].mxu0
      %v2434 = vadd.f32 0.0, %v2433
      %v2435 = vpop.f32.mrb[0].mxu0
      %v2436 = vpop.f32.mrb[0].mxu0
      %v2437 = vadd.f32 0.0, %v2436
      %v2438 = vpop.f32.mrb[0].mxu0
      %2439 = vmatprep.mubr.bf16.mxu0 0
      %2440 = vmatmul.mubr.bf16.gmra.mrb[0].mxu0 %v2282
      %v2441 = vpop.f32.mrb[0].mxu0
      %v2442 = vadd.f32 0.0, %v2441
      %v2443 = vpop.f32.mrb[0].mxu0
      %v2444 = vpop.f32.mrb[0].mxu0
      %v2445 = vadd.f32 0.0, %v2444
      %v2446 = vpop.f32.mrb[0].mxu0
      %2447 = vdwg.mxu0
      %v2448 = vadd.f32 %v2243, %v2322
      %v2449 = vadd.f32 %v2244, %v2325
      %v2450 = vadd.f32 %v2245, %v2330
      %v2451 = vadd.f32 %v2246, %v2333
      %v2452 = vadd.f32 %v2247, %v2338
      %v2453 = vadd.f32 %v2248, %v2341
      %v2454 = vadd.f32 %v2249, %v2346
      %v2455 = vadd.f32 %v2250, %v2349
      %v2456 = vadd.f32 %v2251, %v2354
      %v2457 = vadd.f32 %v2252, %v2357
      %v2458 = vadd.f32 %v2253, %v2362
      %v2459 = vadd.f32 %v2254, %v2365
      %v2460 = vadd.f32 %v2255, %v2370
      %v2461 = vadd.f32 %v2256, %v2373
      %v2462 = vadd.f32 %v2257, %v2378
      %v2463 = vadd.f32 %v2258, %v2381
      %v2464 = vadd.f32 %v2259, %v2386
      %v2465 = vadd.f32 %v2260, %v2389
      %v2466 = vadd.f32 %v2261, %v2394
      %v2467 = vadd.f32 %v2262, %v2397
      %v2468 = vadd.f32 %v2263, %v2402
      %v2469 = vadd.f32 %v2264, %v2405
      %v2470 = vadd.f32 %v2265, %v2410
      %v2471 = vadd.f32 %v2266, %v2413
      %v2472 = vadd.f32 %v2267, %v2418
      %v2473 = vadd.f32 %v2268, %v2421
      %v2474 = vadd.f32 %v2269, %v2426
      %v2475 = vadd.f32 %v2270, %v2429
      %v2476 = vadd.f32 %v2271, %v2434
      %v2477 = vadd.f32 %v2272, %v2437
      %v2478 = vadd.f32 %v2273, %v2442
      %v2479 = vadd.f32 %v2274, %v2445
      %v2481 = vshrl.u32 %v250, 16
      %v2483 = vrot.slane %v2481, 4
      %v2484 = vshll.u32 %v250, 16
      %v2486 = vrot.slane %v2484, 5
      %v2487 = vor.u32 %v2483, %v2486
      %v2488 = vrot.slane %v2487, 4
      %v2490 = vshll.u32 %v251, 16
      %v2492 = vrot.slane %v2490, 5
      %v2493 = vsel %vm256, %v2488, %v2492
      %v2494 = vshrl.u32 %v251, 16
      %v2496 = vrot.slane %v2494, 4
      %v2497 = vor.u32 %v2496, %v2492
      %v2498 = vrot.slane %v2497, 4
      %v2500 = vshll.u32 %v252, 16
      %v2502 = vrot.slane %v2500, 5
      %v2503 = vsel %vm256, %v2498, %v2502
      %v2504 = vld [vmem:[%s1 + $0xc] sm:$0xc]
      %v2505 = vunpack.c.l.b16 %v2493
      %v2506 = vunpack.c.l.b16 %v2503
      %v2507 = vpack.c.b16 %v2506, %v2505
      %v2509 = vunpack.c.l.b16 %v2504
      %v2510 = vpack.c.b16 %v2509, %v2509
      %v2511 = vrot.slane %v2510, 2
      %v2513 = vsel %vm694, %v2507, 0
      %v2516 = vsel %vm743, %v2511, 0
      %2518 = vmatprep.subr.bf16.mxu0 0
      %2519 = vmatpush1.bf16.msra.mxu0 %v2516
      %2520 = vmatprep.subr.bf16.mxu0 0
      %2521 = vmatpush1.bf16.msra.mxu0 0
      %2522 = vmatprep.subr.bf16.mxu0 0
      %2523 = vmatpush1.bf16.msra.mxu0 0
      %2524 = vmatprep.subr.bf16.mxu0 0
      %2525 = vmatpush1.bf16.msra.mxu0 0
      %2526 = vmatprep.subr.bf16.mxu0 0
      %2527 = vmatpush1.bf16.msra.mxu0 0
      %2528 = vmatprep.subr.bf16.mxu0 0
      %2529 = vmatpush1.bf16.msra.mxu0 0
      %2530 = vmatprep.subr.bf16.mxu0 0
      %2531 = vmatpush1.bf16.msra.mxu0 0
      %2532 = vmatprep.subr.bf16.mxu0 0
      %2533 = vmatpush1.bf16.msra.mxu0 0
      %2534 = vmatprep.subr.bf16.mxu0 0
      %2535 = vmatpush1.bf16.msra.mxu0 0
      %2536 = vmatprep.subr.bf16.mxu0 0
      %2537 = vmatpush1.bf16.msra.mxu0 0
      %2538 = vmatprep.subr.bf16.mxu0 0
      %2539 = vmatpush1.bf16.msra.mxu0 0
      %2540 = vmatprep.subr.bf16.mxu0 0
      %2541 = vmatpush1.bf16.msra.mxu0 0
      %2542 = vmatprep.subr.bf16.mxu0 0
      %2543 = vmatpush1.bf16.msra.mxu0 0
      %2544 = vmatprep.subr.bf16.mxu0 0
      %2545 = vmatpush1.bf16.msra.mxu0 0
      %2546 = vmatprep.subr.bf16.mxu0 0
      %2547 = vmatpush1.bf16.msra.mxu0 0
      %2548 = vmatprep.subr.bf16.mxu0 0
      %2549 = vmatpush1.bf16.msra.mxu0 0
      %2550 = vmatprep.mubr.bf16.mxu0 0
      %2551 = vmatmul.mubr.bf16.gmra.mrb[0].mxu0 %v702
      %v2552 = vpop.f32.mrb[0].mxu0
      %v2553 = vadd.f32 0.0, %v2552
      %v2554 = vpop.f32.mrb[0].mxu0
      %v2555 = vpop.f32.mrb[0].mxu0
      %v2556 = vadd.f32 0.0, %v2555
      %v2557 = vpop.f32.mrb[0].mxu0
      %2558 = vmatprep.mubr.bf16.mxu0 0
      %2559 = vmatmul.mubr.bf16.gmra.mrb[0].mxu0 %v705
      %v2560 = vpop.f32.mrb[0].mxu0
      %v2561 = vadd.f32 0.0, %v2560
      %v2562 = vpop.f32.mrb[0].mxu0
      %v2563 = vpop.f32.mrb[0].mxu0
      %v2564 = vadd.f32 0.0, %v2563
      %v2565 = vpop.f32.mrb[0].mxu0
      %2566 = vmatprep.mubr.bf16.mxu0 0
      %2567 = vmatmul.mubr.bf16.gmra.mrb[0].mxu0 %v708
      %v2568 = vpop.f32.mrb[0].mxu0
      %v2569 = vadd.f32 0.0, %v2568
      %v2570 = vpop.f32.mrb[0].mxu0
      %v2571 = vpop.f32.mrb[0].mxu0
      %v2572 = vadd.f32 0.0, %v2571
      %v2573 = vpop.f32.mrb[0].mxu0
      %2574 = vmatprep.mubr.bf16.mxu0 0
      %2575 = vmatmul.mubr.bf16.gmra.mrb[0].mxu0 %v711
      %v2576 = vpop.f32.mrb[0].mxu0
      %v2577 = vadd.f32 0.0, %v2576
      %v2578 = vpop.f32.mrb[0].mxu0
      %v2579 = vpop.f32.mrb[0].mxu0
      %v2580 = vadd.f32 0.0, %v2579
      %v2581 = vpop.f32.mrb[0].mxu0
      %2582 = vmatprep.mubr.bf16.mxu0 0
      %2583 = vmatmul.mubr.bf16.gmra.mrb[0].mxu0 %v714
      %v2584 = vpop.f32.mrb[0].mxu0
      %v2585 = vadd.f32 0.0, %v2584
      %v2586 = vpop.f32.mrb[0].mxu0
      %v2587 = vpop.f32.mrb[0].mxu0
      %v2588 = vadd.f32 0.0, %v2587
      %v2589 = vpop.f32.mrb[0].mxu0
      %2590 = vmatprep.mubr.bf16.mxu0 0
      %2591 = vmatmul.mubr.bf16.gmra.mrb[0].mxu0 %v717
      %v2592 = vpop.f32.mrb[0].mxu0
      %v2593 = vadd.f32 0.0, %v2592
      %v2594 = vpop.f32.mrb[0].mxu0
      %v2595 = vpop.f32.mrb[0].mxu0
      %v2596 = vadd.f32 0.0, %v2595
      %v2597 = vpop.f32.mrb[0].mxu0
      %2598 = vmatprep.mubr.bf16.mxu0 0
      %2599 = vmatmul.mubr.bf16.gmra.mrb[0].mxu0 %v720
      %v2600 = vpop.f32.mrb[0].mxu0
      %v2601 = vadd.f32 0.0, %v2600
      %v2602 = vpop.f32.mrb[0].mxu0
      %v2603 = vpop.f32.mrb[0].mxu0
      %v2604 = vadd.f32 0.0, %v2603
      %v2605 = vpop.f32.mrb[0].mxu0
      %2606 = vmatprep.mubr.bf16.mxu0 0
      %2607 = vmatmul.mubr.bf16.gmra.mrb[0].mxu0 %v723
      %v2608 = vpop.f32.mrb[0].mxu0
      %v2609 = vadd.f32 0.0, %v2608
      %v2610 = vpop.f32.mrb[0].mxu0
      %v2611 = vpop.f32.mrb[0].mxu0
      %v2612 = vadd.f32 0.0, %v2611
      %v2613 = vpop.f32.mrb[0].mxu0
      %2614 = vmatprep.mubr.bf16.mxu0 0
      %2615 = vmatmul.mubr.bf16.gmra.mrb[0].mxu0 %v726
      %v2616 = vpop.f32.mrb[0].mxu0
      %v2617 = vadd.f32 0.0, %v2616
      %v2618 = vpop.f32.mrb[0].mxu0
      %v2619 = vpop.f32.mrb[0].mxu0
      %v2620 = vadd.f32 0.0, %v2619
      %v2621 = vpop.f32.mrb[0].mxu0
      %2622 = vmatprep.mubr.bf16.mxu0 0
      %2623 = vmatmul.mubr.bf16.gmra.mrb[0].mxu0 %v729
      %v2624 = vpop.f32.mrb[0].mxu0
      %v2625 = vadd.f32 0.0, %v2624
      %v2626 = vpop.f32.mrb[0].mxu0
      %v2627 = vpop.f32.mrb[0].mxu0
      %v2628 = vadd.f32 0.0, %v2627
      %v2629 = vpop.f32.mrb[0].mxu0
      %2630 = vmatprep.mubr.bf16.mxu0 0
      %2631 = vmatmul.mubr.bf16.gmra.mrb[0].mxu0 %v732
      %v2632 = vpop.f32.mrb[0].mxu0
      %v2633 = vadd.f32 0.0, %v2632
      %v2634 = vpop.f32.mrb[0].mxu0
      %v2635 = vpop.f32.mrb[0].mxu0
      %v2636 = vadd.f32 0.0, %v2635
      %v2637 = vpop.f32.mrb[0].mxu0
      %2638 = vmatprep.mubr.bf16.mxu0 0
      %2639 = vmatmul.mubr.bf16.gmra.mrb[0].mxu0 %v735
      %v2640 = vpop.f32.mrb[0].mxu0
      %v2641 = vadd.f32 0.0, %v2640
      %v2642 = vpop.f32.mrb[0].mxu0
      %v2643 = vpop.f32.mrb[0].mxu0
      %v2644 = vadd.f32 0.0, %v2643
      %v2645 = vpop.f32.mrb[0].mxu0
      %2646 = vmatprep.mubr.bf16.mxu0 0
      %2647 = vmatmul.mubr.bf16.gmra.mrb[0].mxu0 %v738
      %v2648 = vpop.f32.mrb[0].mxu0
      %v2649 = vadd.f32 0.0, %v2648
      %v2650 = vpop.f32.mrb[0].mxu0
      %v2651 = vpop.f32.mrb[0].mxu0
      %v2652 = vadd.f32 0.0, %v2651
      %v2653 = vpop.f32.mrb[0].mxu0
      %2654 = vmatprep.mubr.bf16.mxu0 0
      %2655 = vmatmul.mubr.bf16.gmra.mrb[0].mxu0 %v741
      %v2656 = vpop.f32.mrb[0].mxu0
      %v2657 = vadd.f32 0.0, %v2656
      %v2658 = vpop.f32.mrb[0].mxu0
      %v2659 = vpop.f32.mrb[0].mxu0
      %v2660 = vadd.f32 0.0, %v2659
      %v2661 = vpop.f32.mrb[0].mxu0
      %2662 = vmatprep.mubr.bf16.mxu0 0
      %2663 = vmatmul.mubr.bf16.gmra.mrb[0].mxu0 %v1862
      %v2664 = vpop.f32.mrb[0].mxu0
      %v2665 = vadd.f32 0.0, %v2664
      %v2666 = vpop.f32.mrb[0].mxu0
      %v2667 = vpop.f32.mrb[0].mxu0
      %v2668 = vadd.f32 0.0, %v2667
      %v2669 = vpop.f32.mrb[0].mxu0
      %2670 = vmatprep.mubr.bf16.mxu0 0
      %2671 = vmatmul.mubr.bf16.gmra.mrb[0].mxu0 %v2513
      %v2672 = vpop.f32.mrb[0].mxu0
      %v2673 = vadd.f32 0.0, %v2672
      %v2674 = vpop.f32.mrb[0].mxu0
      %v2675 = vpop.f32.mrb[0].mxu0
      %v2676 = vadd.f32 0.0, %v2675
      %v2677 = vpop.f32.mrb[0].mxu0
      %2678 = vdwg.mxu0
      %v2679 = vadd.f32 %v2448, %v2553
      %v2680 = vadd.f32 %v2449, %v2556
      %v2681 = vadd.f32 %v2450, %v2561
      %v2682 = vadd.f32 %v2451, %v2564
      %v2683 = vadd.f32 %v2452, %v2569
      %v2684 = vadd.f32 %v2453, %v2572
      %v2685 = vadd.f32 %v2454, %v2577
      %v2686 = vadd.f32 %v2455, %v2580
      %v2687 = vadd.f32 %v2456, %v2585
      %v2688 = vadd.f32 %v2457, %v2588
      %v2689 = vadd.f32 %v2458, %v2593
      %v2690 = vadd.f32 %v2459, %v2596
      %v2691 = vadd.f32 %v2460, %v2601
      %v2692 = vadd.f32 %v2461, %v2604
      %v2693 = vadd.f32 %v2462, %v2609
      %v2694 = vadd.f32 %v2463, %v2612
      %v2695 = vadd.f32 %v2464, %v2617
      %v2696 = vadd.f32 %v2465, %v2620
      %v2697 = vadd.f32 %v2466, %v2625
      %v2698 = vadd.f32 %v2467, %v2628
      %v2699 = vadd.f32 %v2468, %v2633
      %v2700 = vadd.f32 %v2469, %v2636
      %v2701 = vadd.f32 %v2470, %v2641
      %v2702 = vadd.f32 %v2471, %v2644
      %v2703 = vadd.f32 %v2472, %v2649
      %v2704 = vadd.f32 %v2473, %v2652
      %v2705 = vadd.f32 %v2474, %v2657
      %v2706 = vadd.f32 %v2475, %v2660
      %v2707 = vadd.f32 %v2476, %v2665
      %v2708 = vadd.f32 %v2477, %v2668
      %v2709 = vadd.f32 %v2478, %v2673
      %v2710 = vadd.f32 %v2479, %v2676
      %v2712 = vrot.slane %v250, 5
      %v2713 = vrot.slane %v2712, 4
      %v2714 = vrot.slane %v251, 5
      %v2715 = vsel %vm1218, %v2713, %v2714
      %v2716 = vrot.slane %v2714, 4
      %v2717 = vrot.slane %v252, 5
      %v2718 = vsel %vm1218, %v2716, %v2717
      %v2719 = vld [vmem:[%s1 + $0x10] sm:$0x3]
      %v2720 = vunpack.c.l.b16 %v2715
      %v2721 = vunpack.c.l.b16 %v2718
      %v2722 = vpack.c.b16 %v2721, %v2720
      %v2724 = vsel %vm694, %v2722, 0
      %v2727 = vsel %vm743, %v2719, 0
      %2729 = vmatprep.subr.bf16.mxu0 0
      %2730 = vmatpush1.bf16.msra.mxu0 %v2727
      %2731 = vmatprep.subr.bf16.mxu0 0
      %2732 = vmatpush1.bf16.msra.mxu0 0
      %2733 = vmatprep.subr.bf16.mxu0 0
      %2734 = vmatpush1.bf16.msra.mxu0 0
      %2735 = vmatprep.subr.bf16.mxu0 0
      %2736 = vmatpush1.bf16.msra.mxu0 0
      %2737 = vmatprep.subr.bf16.mxu0 0
      %2738 = vmatpush1.bf16.msra.mxu0 0
      %2739 = vmatprep.subr.bf16.mxu0 0
      %2740 = vmatpush1.bf16.msra.mxu0 0
      %2741 = vmatprep.subr.bf16.mxu0 0
      %2742 = vmatpush1.bf16.msra.mxu0 0
      %2743 = vmatprep.subr.bf16.mxu0 0
      %2744 = vmatpush1.bf16.msra.mxu0 0
      %2745 = vmatprep.subr.bf16.mxu0 0
      %2746 = vmatpush1.bf16.msra.mxu0 0
      %2747 = vmatprep.subr.bf16.mxu0 0
      %2748 = vmatpush1.bf16.msra.mxu0 0
      %2749 = vmatprep.subr.bf16.mxu0 0
      %2750 = vmatpush1.bf16.msra.mxu0 0
      %2751 = vmatprep.subr.bf16.mxu0 0
      %2752 = vmatpush1.bf16.msra.mxu0 0
      %2753 = vmatprep.subr.bf16.mxu0 0
      %2754 = vmatpush1.bf16.msra.mxu0 0
      %2755 = vmatprep.subr.bf16.mxu0 0
      %2756 = vmatpush1.bf16.msra.mxu0 0
      %2757 = vmatprep.subr.bf16.mxu0 0
      %2758 = vmatpush1.bf16.msra.mxu0 0
      %2759 = vmatprep.subr.bf16.mxu0 0
      %2760 = vmatpush1.bf16.msra.mxu0 0
      %2761 = vmatprep.mubr.bf16.mxu0 0
      %2762 = vmatmul.mubr.bf16.gmra.mrb[0].mxu0 %v1387
      %v2763 = vpop.f32.mrb[0].mxu0
      %v2764 = vadd.f32 0.0, %v2763
      %v2765 = vpop.f32.mrb[0].mxu0
      %v2766 = vpop.f32.mrb[0].mxu0
      %v2767 = vadd.f32 0.0, %v2766
      %v2768 = vpop.f32.mrb[0].mxu0
      %2769 = vmatprep.mubr.bf16.mxu0 0
      %2770 = vmatmul.mubr.bf16.gmra.mrb[0].mxu0 %v1390
      %v2771 = vpop.f32.mrb[0].mxu0
      %v2772 = vadd.f32 0.0, %v2771
      %v2773 = vpop.f32.mrb[0].mxu0
      %v2774 = vpop.f32.mrb[0].mxu0
      %v2775 = vadd.f32 0.0, %v2774
      %v2776 = vpop.f32.mrb[0].mxu0
      %2777 = vmatprep.mubr.bf16.mxu0 0
      %2778 = vmatmul.mubr.bf16.gmra.mrb[0].mxu0 %v1393
      %v2779 = vpop.f32.mrb[0].mxu0
      %v2780 = vadd.f32 0.0, %v2779
      %v2781 = vpop.f32.mrb[0].mxu0
      %v2782 = vpop.f32.mrb[0].mxu0
      %v2783 = vadd.f32 0.0, %v2782
      %v2784 = vpop.f32.mrb[0].mxu0
      %2785 = vmatprep.mubr.bf16.mxu0 0
      %2786 = vmatmul.mubr.bf16.gmra.mrb[0].mxu0 %v1396
      %v2787 = vpop.f32.mrb[0].mxu0
      %v2788 = vadd.f32 0.0, %v2787
      %v2789 = vpop.f32.mrb[0].mxu0
      %v2790 = vpop.f32.mrb[0].mxu0
      %v2791 = vadd.f32 0.0, %v2790
      %v2792 = vpop.f32.mrb[0].mxu0
      %2793 = vmatprep.mubr.bf16.mxu0 0
      %2794 = vmatmul.mubr.bf16.gmra.mrb[0].mxu0 %v1399
      %v2795 = vpop.f32.mrb[0].mxu0
      %v2796 = vadd.f32 0.0, %v2795
      %v2797 = vpop.f32.mrb[0].mxu0
      %v2798 = vpop.f32.mrb[0].mxu0
      %v2799 = vadd.f32 0.0, %v2798
      %v2800 = vpop.f32.mrb[0].mxu0
      %2801 = vmatprep.mubr.bf16.mxu0 0
      %2802 = vmatmul.mubr.bf16.gmra.mrb[0].mxu0 %v1402
      %v2803 = vpop.f32.mrb[0].mxu0
      %v2804 = vadd.f32 0.0, %v2803
      %v2805 = vpop.f32.mrb[0].mxu0
      %v2806 = vpop.f32.mrb[0].mxu0
      %v2807 = vadd.f32 0.0, %v2806
      %v2808 = vpop.f32.mrb[0].mxu0
      %2809 = vmatprep.mubr.bf16.mxu0 0
      %2810 = vmatmul.mubr.bf16.gmra.mrb[0].mxu0 %v1405
      %v2811 = vpop.f32.mrb[0].mxu0
      %v2812 = vadd.f32 0.0, %v2811
      %v2813 = vpop.f32.mrb[0].mxu0
      %v2814 = vpop.f32.mrb[0].mxu0
      %v2815 = vadd.f32 0.0, %v2814
      %v2816 = vpop.f32.mrb[0].mxu0
      %2817 = vmatprep.mubr.bf16.mxu0 0
      %2818 = vmatmul.mubr.bf16.gmra.mrb[0].mxu0 %v1408
      %v2819 = vpop.f32.mrb[0].mxu0
      %v2820 = vadd.f32 0.0, %v2819
      %v2821 = vpop.f32.mrb[0].mxu0
      %v2822 = vpop.f32.mrb[0].mxu0
      %v2823 = vadd.f32 0.0, %v2822
      %v2824 = vpop.f32.mrb[0].mxu0
      %2825 = vmatprep.mubr.bf16.mxu0 0
      %2826 = vmatmul.mubr.bf16.gmra.mrb[0].mxu0 %v1411
      %v2827 = vpop.f32.mrb[0].mxu0
      %v2828 = vadd.f32 0.0, %v2827
      %v2829 = vpop.f32.mrb[0].mxu0
      %v2830 = vpop.f32.mrb[0].mxu0
      %v2831 = vadd.f32 0.0, %v2830
      %v2832 = vpop.f32.mrb[0].mxu0
      %2833 = vmatprep.mubr.bf16.mxu0 0
      %2834 = vmatmul.mubr.bf16.gmra.mrb[0].mxu0 %v1414
      %v2835 = vpop.f32.mrb[0].mxu0
      %v2836 = vadd.f32 0.0, %v2835
      %v2837 = vpop.f32.mrb[0].mxu0
      %v2838 = vpop.f32.mrb[0].mxu0
      %v2839 = vadd.f32 0.0, %v2838
      %v2840 = vpop.f32.mrb[0].mxu0
      %2841 = vmatprep.mubr.bf16.mxu0 0
      %2842 = vmatmul.mubr.bf16.gmra.mrb[0].mxu0 %v1417
      %v2843 = vpop.f32.mrb[0].mxu0
      %v2844 = vadd.f32 0.0, %v2843
      %v2845 = vpop.f32.mrb[0].mxu0
      %v2846 = vpop.f32.mrb[0].mxu0
      %v2847 = vadd.f32 0.0, %v2846
      %v2848 = vpop.f32.mrb[0].mxu0
      %2849 = vmatprep.mubr.bf16.mxu0 0
      %2850 = vmatmul.mubr.bf16.gmra.mrb[0].mxu0 %v1420
      %v2851 = vpop.f32.mrb[0].mxu0
      %v2852 = vadd.f32 0.0, %v2851
      %v2853 = vpop.f32.mrb[0].mxu0
      %v2854 = vpop.f32.mrb[0].mxu0
      %v2855 = vadd.f32 0.0, %v2854
      %v2856 = vpop.f32.mrb[0].mxu0
      %2857 = vmatprep.mubr.bf16.mxu0 0
      %2858 = vmatmul.mubr.bf16.gmra.mrb[0].mxu0 %v1423
      %v2859 = vpop.f32.mrb[0].mxu0
      %v2860 = vadd.f32 0.0, %v2859
      %v2861 = vpop.f32.mrb[0].mxu0
      %v2862 = vpop.f32.mrb[0].mxu0
      %v2863 = vadd.f32 0.0, %v2862
      %v2864 = vpop.f32.mrb[0].mxu0
      %2865 = vmatprep.mubr.bf16.mxu0 0
      %2866 = vmatmul.mubr.bf16.gmra.mrb[0].mxu0 %v1426
      %v2867 = vpop.f32.mrb[0].mxu0
      %v2868 = vadd.f32 0.0, %v2867
      %v2869 = vpop.f32.mrb[0].mxu0
      %v2870 = vpop.f32.mrb[0].mxu0
      %v2871 = vadd.f32 0.0, %v2870
      %v2872 = vpop.f32.mrb[0].mxu0
      %2873 = vmatprep.mubr.bf16.mxu0 0
      %2874 = vmatmul.mubr.bf16.gmra.mrb[0].mxu0 %v2077
      %v2875 = vpop.f32.mrb[0].mxu0
      %v2876 = vadd.f32 0.0, %v2875
      %v2877 = vpop.f32.mrb[0].mxu0
      %v2878 = vpop.f32.mrb[0].mxu0
      %v2879 = vadd.f32 0.0, %v2878
      %v2880 = vpop.f32.mrb[0].mxu0
      %2881 = vmatprep.mubr.bf16.mxu0 0
      %2882 = vmatmul.mubr.bf16.gmra.mrb[0].mxu0 %v2724
      %v2883 = vpop.f32.mrb[0].mxu0
      %v2884 = vadd.f32 0.0, %v2883
      %v2885 = vpop.f32.mrb[0].mxu0
      %v2886 = vpop.f32.mrb[0].mxu0
      %v2887 = vadd.f32 0.0, %v2886
      %v2888 = vpop.f32.mrb[0].mxu0
      %2889 = vdwg.mxu0
      %v2890 = vadd.f32 %v2679, %v2764
      %v2891 = vadd.f32 %v2680, %v2767
      %v2892 = vadd.f32 %v2681, %v2772
      %v2893 = vadd.f32 %v2682, %v2775
      %v2894 = vadd.f32 %v2683, %v2780
      %v2895 = vadd.f32 %v2684, %v2783
      %v2896 = vadd.f32 %v2685, %v2788
      %v2897 = vadd.f32 %v2686, %v2791
      %v2898 = vadd.f32 %v2687, %v2796
      %v2899 = vadd.f32 %v2688, %v2799
      %v2900 = vadd.f32 %v2689, %v2804
      %v2901 = vadd.f32 %v2690, %v2807
      %v2902 = vadd.f32 %v2691, %v2812
      %v2903 = vadd.f32 %v2692, %v2815
      %v2904 = vadd.f32 %v2693, %v2820
      %v2905 = vadd.f32 %v2694, %v2823
      %v2906 = vadd.f32 %v2695, %v2828
      %v2907 = vadd.f32 %v2696, %v2831
      %v2908 = vadd.f32 %v2697, %v2836
      %v2909 = vadd.f32 %v2698, %v2839
      %v2910 = vadd.f32 %v2699, %v2844
      %v2911 = vadd.f32 %v2700, %v2847
      %v2912 = vadd.f32 %v2701, %v2852
      %v2913 = vadd.f32 %v2702, %v2855
      %v2914 = vadd.f32 %v2703, %v2860
      %v2915 = vadd.f32 %v2704, %v2863
      %v2916 = vadd.f32 %v2705, %v2868
      %v2917 = vadd.f32 %v2706, %v2871
      %v2918 = vadd.f32 %v2707, %v2876
      %v2919 = vadd.f32 %v2708, %v2879
      %v2920 = vadd.f32 %v2709, %v2884
      %v2921 = vadd.f32 %v2710, %v2887
      %vm2922 = vcmask 64512
      %v2923 = vsel %vm2922, %v2890, 0.0
      %v2924 = vsel %vm2922, %v2891, 0.0
      %v2925 = vadd.f32 %v2923, %v2924
      %v2926 = vsel %vm2922, %v2892, 0.0
      %v2927 = vadd.f32 %v2925, %v2926
      %v2928 = vsel %vm2922, %v2893, 0.0
      %v2929 = vadd.f32 %v2927, %v2928
      %v2930 = vsel %vm2922, %v2894, 0.0
      %v2931 = vadd.f32 %v2929, %v2930
      %v2932 = vsel %vm2922, %v2895, 0.0
      %v2933 = vadd.f32 %v2931, %v2932
      %v2934 = vsel %vm2922, %v2896, 0.0
      %v2935 = vadd.f32 %v2933, %v2934
      %v2936 = vsel %vm2922, %v2897, 0.0
      %v2937 = vadd.f32 %v2935, %v2936
      %v2938 = vsel %vm2922, %v2898, 0.0
      %v2939 = vadd.f32 %v2937, %v2938
      %v2940 = vsel %vm2922, %v2899, 0.0
      %v2941 = vadd.f32 %v2939, %v2940
      %v2942 = vsel %vm2922, %v2900, 0.0
      %v2943 = vadd.f32 %v2941, %v2942
      %v2944 = vsel %vm2922, %v2901, 0.0
      %v2945 = vadd.f32 %v2943, %v2944
      %v2946 = vsel %vm2922, %v2902, 0.0
      %v2947 = vadd.f32 %v2945, %v2946
      %v2948 = vsel %vm2922, %v2903, 0.0
      %v2949 = vadd.f32 %v2947, %v2948
      %v2950 = vsel %vm2922, %v2904, 0.0
      %v2951 = vadd.f32 %v2949, %v2950
      %v2952 = vsel %vm2922, %v2905, 0.0
      %v2953 = vadd.f32 %v2951, %v2952
      %v2954 = vsel %vm2922, %v2906, 0.0
      %v2955 = vadd.f32 %v2953, %v2954
      %v2956 = vsel %vm2922, %v2907, 0.0
      %v2957 = vadd.f32 %v2955, %v2956
      %v2958 = vsel %vm2922, %v2908, 0.0
      %v2959 = vadd.f32 %v2957, %v2958
      %v2960 = vsel %vm2922, %v2909, 0.0
      %v2961 = vadd.f32 %v2959, %v2960
      %v2962 = vsel %vm2922, %v2910, 0.0
      %v2963 = vadd.f32 %v2961, %v2962
      %v2964 = vsel %vm2922, %v2911, 0.0
      %v2965 = vadd.f32 %v2963, %v2964
      %v2966 = vsel %vm2922, %v2912, 0.0
      %v2967 = vadd.f32 %v2965, %v2966
      %v2968 = vsel %vm2922, %v2913, 0.0
      %v2969 = vadd.f32 %v2967, %v2968
      %v2970 = vsel %vm2922, %v2914, 0.0
      %v2971 = vadd.f32 %v2969, %v2970
      %v2972 = vsel %vm2922, %v2915, 0.0
      %v2973 = vadd.f32 %v2971, %v2972
      %v2974 = vsel %vm2922, %v2916, 0.0
      %v2975 = vadd.f32 %v2973, %v2974
      %v2976 = vsel %vm2922, %v2917, 0.0
      %v2977 = vadd.f32 %v2975, %v2976
      %v2978 = vsel %vm2922, %v2918, 0.0
      %v2979 = vadd.f32 %v2977, %v2978
      %v2980 = vsel %vm2922, %v2919, 0.0
      %v2981 = vadd.f32 %v2979, %v2980
      %v2982 = vsel %vm2922, %v2920, 0.0
      %v2983 = vadd.f32 %v2981, %v2982
      %v2984 = vsel %vm2922, %v2921, 0.0
      %v2985 = vadd.f32 %v2983, %v2984
      %v2986 = vrot.slane %v2985, 4
      %v2987 = vadd.f32 %v2985, %v2986
      %v2988 = vrot.slane %v2987, 2
      %v2989 = vadd.f32 %v2987, %v2988
      %v2990 = vrot.slane %v2989, 1
      %v2991 = vadd.f32 %v2989, %v2990
      %v2992 = vmul.f32 %v2890, %v2890
      %v2993 = vmul.f32 %v2891, %v2891
      %v2994 = vmul.f32 %v2892, %v2892
      %v2995 = vmul.f32 %v2893, %v2893
      %v2996 = vmul.f32 %v2894, %v2894
      %v2997 = vmul.f32 %v2895, %v2895
      %v2998 = vmul.f32 %v2896, %v2896
      %v2999 = vmul.f32 %v2897, %v2897
      %v3000 = vmul.f32 %v2898, %v2898
      %v3001 = vmul.f32 %v2899, %v2899
      %v3002 = vmul.f32 %v2900, %v2900
      %v3003 = vmul.f32 %v2901, %v2901
      %v3004 = vmul.f32 %v2902, %v2902
      %v3005 = vmul.f32 %v2903, %v2903
      %v3006 = vmul.f32 %v2904, %v2904
      %v3007 = vmul.f32 %v2905, %v2905
      %v3008 = vmul.f32 %v2906, %v2906
      %v3009 = vmul.f32 %v2907, %v2907
      %v3010 = vmul.f32 %v2908, %v2908
      %v3011 = vmul.f32 %v2909, %v2909
      %v3012 = vmul.f32 %v2910, %v2910
      %v3013 = vmul.f32 %v2911, %v2911
      %v3014 = vmul.f32 %v2912, %v2912
      %v3015 = vmul.f32 %v2913, %v2913
      %v3016 = vmul.f32 %v2914, %v2914
      %v3017 = vmul.f32 %v2915, %v2915
      %v3018 = vmul.f32 %v2916, %v2916
      %v3019 = vmul.f32 %v2917, %v2917
      %v3020 = vmul.f32 %v2918, %v2918
      %v3021 = vmul.f32 %v2919, %v2919
      %v3022 = vmul.f32 %v2920, %v2920
      %v3023 = vmul.f32 %v2921, %v2921
      %v3024 = vsel %vm2922, %v2992, 0.0
      %v3025 = vsel %vm2922, %v2993, 0.0
      %v3026 = vadd.f32 %v3024, %v3025
      %v3027 = vsel %vm2922, %v2994, 0.0
      %v3028 = vadd.f32 %v3026, %v3027
      %v3029 = vsel %vm2922, %v2995, 0.0
      %v3030 = vadd.f32 %v3028, %v3029
      %v3031 = vsel %vm2922, %v2996, 0.0
      %v3032 = vadd.f32 %v3030, %v3031
      %v3033 = vsel %vm2922, %v2997, 0.0
      %v3034 = vadd.f32 %v3032, %v3033
      %v3035 = vsel %vm2922, %v2998, 0.0
      %v3036 = vadd.f32 %v3034, %v3035
      %v3037 = vsel %vm2922, %v2999, 0.0
      %v3038 = vadd.f32 %v3036, %v3037
      %v3039 = vsel %vm2922, %v3000, 0.0
      %v3040 = vadd.f32 %v3038, %v3039
      %v3041 = vsel %vm2922, %v3001, 0.0
      %v3042 = vadd.f32 %v3040, %v3041
      %v3043 = vsel %vm2922, %v3002, 0.0
      %v3044 = vadd.f32 %v3042, %v3043
      %v3045 = vsel %vm2922, %v3003, 0.0
      %v3046 = vadd.f32 %v3044, %v3045
      %v3047 = vsel %vm2922, %v3004, 0.0
      %v3048 = vadd.f32 %v3046, %v3047
      %v3049 = vsel %vm2922, %v3005, 0.0
      %v3050 = vadd.f32 %v3048, %v3049
      %v3051 = vsel %vm2922, %v3006, 0.0
      %v3052 = vadd.f32 %v3050, %v3051
      %v3053 = vsel %vm2922, %v3007, 0.0
      %v3054 = vadd.f32 %v3052, %v3053
      %v3055 = vsel %vm2922, %v3008, 0.0
      %v3056 = vadd.f32 %v3054, %v3055
      %v3057 = vsel %vm2922, %v3009, 0.0
      %v3058 = vadd.f32 %v3056, %v3057
      %v3059 = vsel %vm2922, %v3010, 0.0
      %v3060 = vadd.f32 %v3058, %v3059
      %v3061 = vsel %vm2922, %v3011, 0.0
      %v3062 = vadd.f32 %v3060, %v3061
      %v3063 = vsel %vm2922, %v3012, 0.0
      %v3064 = vadd.f32 %v3062, %v3063
      %v3065 = vsel %vm2922, %v3013, 0.0
      %v3066 = vadd.f32 %v3064, %v3065
      %v3067 = vsel %vm2922, %v3014, 0.0
      %v3068 = vadd.f32 %v3066, %v3067
      %v3069 = vsel %vm2922, %v3015, 0.0
      %v3070 = vadd.f32 %v3068, %v3069
      %v3071 = vsel %vm2922, %v3016, 0.0
      %v3072 = vadd.f32 %v3070, %v3071
      %v3073 = vsel %vm2922, %v3017, 0.0
      %v3074 = vadd.f32 %v3072, %v3073
      %v3075 = vsel %vm2922, %v3018, 0.0
      %v3076 = vadd.f32 %v3074, %v3075
      %v3077 = vsel %vm2922, %v3019, 0.0
      %v3078 = vadd.f32 %v3076, %v3077
      %v3079 = vsel %vm2922, %v3020, 0.0
      %v3080 = vadd.f32 %v3078, %v3079
      %v3081 = vsel %vm2922, %v3021, 0.0
      %v3082 = vadd.f32 %v3080, %v3081
      %v3083 = vsel %vm2922, %v3022, 0.0
      %v3084 = vadd.f32 %v3082, %v3083
      %v3085 = vsel %vm2922, %v3023, 0.0
      %v3086 = vadd.f32 %v3084, %v3085
      %v3087 = vrot.slane %v3086, 4
      %v3088 = vadd.f32 %v3086, %v3087
      %v3089 = vrot.slane %v3088, 2
      %v3090 = vadd.f32 %v3088, %v3089
      %v3091 = vrot.slane %v3090, 1
      %v3092 = vadd.f32 %v3090, %v3091
      %vm3093 = vcmask 57344
      %3094 = vst.msk [vmem:[%s191] sm:$0x1] %vm3093, %v2991
      %3095 = vst.msk [vmem:[%s196] sm:$0x1] %vm3093, %v3092
      %s3096 = sadd.s32 %s19, %s20
      %p3097 = scmp.lt.s32.totalorder %s3096, 1
      %s3098 = scalar_select %p3097, %s3096, 1
      %s3099 = scalar_lea.vmem %s2, %s3098
      %s3100 = sadd.s32 %s19, %s20
      %p3101 = scmp.lt.s32.totalorder %s3100, 1
      %s3102 = scalar_select %p3101, %s3100, 1
      %s3103 = scalar_lea.vmem %s3, %s3102
      // Predicated region
      $region29: #{a_call__.3} parent=27 // pred_check
        %p3104 = pneg %p94
      $region30: #{a_call__.3} parent=27 // pred_check_branch
        %3106 = sbr.rel (%p3104) target = $region32
      $region31: #{a_call__.3} parent=27 // pred_region
        %s3107 = sadd.s32 %s19, %s20
      $region32: #{a_call__.3} parent=27 // pred_fallthru
        _
      // Predicated region
      $region33: #{a_call__.3} parent=27 // pred_check
        %p3108 = pneg %p122
      $region34: #{a_call__.3} parent=27 // pred_check_branch
        %3110 = sbr.rel (%p3108) target = $region36
      $region35: #{a_call__.3} parent=27 // pred_region
        %s3111 = sadd.s32 %s19, %s20
      $region36: #{a_call__.3} parent=27 // pred_fallthru
        _
    $region28: #{a_call__.3} parent=5 // pred_fallthru
      _
    %p3112 = scmp.le.s32.totalorder 2, %s10
    // Predicated region
    $region37: #{a_call__.3} parent=5 // pred_check
      %p3113 = pneg %p3112
    $region38: #{a_call__.3} parent=5 // pred_check_branch
      %3115 = sbr.rel (%p3113) target = $region40
    $region39: #{a_call__.3} parent=5 // pred_region
      %s3116 = ssub.s32 %s10, 2
      // Predicated region
      $region41: #{a_call__.3} parent=39 // pred_check
        %p3117 = pneg %p100
      $region42: #{a_call__.3} parent=39 // pred_check_branch
        %3119 = sbr.rel (%p3117) target = $region44
      $region43: #{a_call__.3} parent=39 // pred_region
        %s3120 = sadd.s32 %s21, %s22
        %p3121 = scmp.lt.s32.totalorder %s3120, 1
        %s3122 = scalar_select %p3121, %s3120, 1
        %s3123 = scalar_lea.vmem %s2, %s3122
      $region44: #{a_call__.3} parent=39 // pred_fallthru
        _
      // Predicated region
      $region45: #{a_call__.3} parent=39 // pred_check
        %p3124 = pneg %p128
      $region46: #{a_call__.3} parent=39 // pred_check_branch
        %3126 = sbr.rel (%p3124) target = $region48
      $region47: #{a_call__.3} parent=39 // pred_region
        %s3127 = sadd.s32 %s21, %s22
        %p3128 = scmp.lt.s32.totalorder %s3127, 1
        %s3129 = scalar_select %p3128, %s3127, 1
        %s3130 = scalar_lea.vmem %s3, %s3129
      $region48: #{a_call__.3} parent=39 // pred_fallthru
        _
    $region40: #{a_call__.3} parent=5 // pred_fallthru
      _
  $region6: #{a_call__.3} parent=0 // loop_footer
    %s14 = sadd.s32 1, %s10
  $region7: #{a_call__.3} parent=0 // loop_footer_branch
    %9 = sbr.rel target = $region3
  $region8: #{a_call__.3} parent=0 // loop_exit
    _

// kernel: a_call__.4
$region0: #{a_call__.4}
  #allocation0 [shape = 'u32[]', space=smem, size = 0x4, offset = 0x4, fixed_abs, tag = 'smem constant byte address 0x4 - core index']
  #allocation1 [shape = 'u32[144,128]{1,0:T(1,128)}', space=vmem, size = 0x12000, scoped, tag = 'internal scratch']
  %s0 = inlined_call_operand.vmem [shape: bf16[2,20,18,4], index: 0, kind: input, shape index: {}]
  %s1 = inlined_call_operand.vmem [shape: bf16[36,8], index: 1, kind: input, shape index: {}]
  %s2 = inlined_call_operand.vmem [shape: f32[1,8], index: 2, kind: input, shape index: {}]
  %s3 = inlined_call_operand.vmem [shape: f32[1,8], index: 3, kind: input, shape index: {}]
  %s4 = inlined_call_operand.vmem [shape: bf16[72,8], index: 4, kind: input, shape index: {}]
  %s5 = inlined_call_operand.vmem [shape: bf16[4,8], index: 5, kind: input, shape index: {}]
  %s6 = inlined_call_operand.vmem [shape: bf16[2,16,16,8], index: 6, kind: output, shape index: {0}]
  %s7 = inlined_call_operand.vmem [shape: bf16[2,16,16,8], index: 7, kind: output, shape index: {1}]
  %s8 = inlined_call_operand.vmem [shape: f32[2,1,8], index: 8, kind: output, shape index: {2}]
  %s9 = inlined_call_operand.vmem [shape: f32[2,1,8], index: 9, kind: output, shape index: {3}]
  %s10 = inlined_call_operand.vmem [shape: f32[2,1,8], index: 10, kind: output, shape index: {4}]
  %s11 = inlined_call_operand.vmem [shape: f32[2,1,8], index: 11, kind: output, shape index: {5}]
  %12 = xla_tuple %s6, %s7, %s8, %s9, %s10, %s11
  %s13 = sld [smem:[#allocation0]]
  $region97: #{a_call__.4} parent=0
    _
  %s15 = ssub.s32 1, %s13
  %s16 = scalar_select 0, %s15, %s13
  loop: start=0, step=1, limit=4
  $region2: #{a_call__.4} parent=0 // loop_pre_header
    _
  $region3: #{a_call__.4} parent=0 // loop_header
    %s18 = sphi 0, %s22
    %p19 = scmp.ge.s32.totalorder %s18, 4
    %s25 = sphi 0, %s37
    %s26 = sphi 0, %s33
    %s27 = sphi 0, %s25
    %s28 = sphi 0, %s26
    %s29 = sphi 0, %s27
    %s30 = sphi 0, %s28
    %s40 = sphi 0, %s42
    %s43 = sphi 0, %s40
    %s44 = sphi 0, %s43
    %s60 = sphi 0, %s44
    %s64 = sphi 0, %s64
    %s66 = sphi 0, %s64
    %s67 = sphi 0, %s66
    %s81 = sphi 0, %s67
    %s85 = sphi 0, %s85
    %s87 = sphi 0, %s85
    %s88 = sphi 0, %s87
    %s102 = sphi 0, %s88
    %s106 = sphi 0, %s106
    %s108 = sphi 0, %s106
    %s109 = sphi 0, %s108
    %s123 = sphi 0, %s109
    %s127 = sphi 0, %s127
    %s129 = sphi 0, %s127
    %s130 = sphi 0, %s129
    %s144 = sphi 0, %s130
    %s148 = sphi 0, %s148
    %s150 = sphi 0, %s148
    %s151 = sphi 0, %s150
    %s165 = sphi 0, %s151
    %s173 = sphi 0, %s175
    %s176 = sphi 0, %s173
    %s177 = sphi 0, %s176
    %s193 = sphi 0, %s177
    %s201 = sphi 0, %s203
    %s204 = sphi 0, %s201
    %s205 = sphi 0, %s204
    %s221 = sphi 0, %s205
    %s229 = sphi 0, %s231
    %s232 = sphi 0, %s229
    %s233 = sphi 0, %s232
    %s249 = sphi 0, %s233
    %s257 = sphi 0, %s259
    %s260 = sphi 0, %s257
    %s261 = sphi 0, %s260
    %s277 = sphi 0, %s261
    %s285 = sphi 0, %s287
    %s288 = sphi 0, %s285
    %s289 = sphi 0, %s288
    %s305 = sphi 0, %s289
    %s313 = sphi 0, %s315
    %s316 = sphi 0, %s313
    %s317 = sphi 0, %s316
    %s333 = sphi 0, %s317
  $region4: #{a_call__.4} parent=0 // loop_header_branch
    %21 = sbr.rel (%p19) target = $region8
  $region5: #{a_call__.4} parent=0 // loop_body
    %s23 = ssub.s32 %s18, 1
    %s24 = ssub.s32 %s18, 2
    %s31 = sadd.s32 1, %s26
    %p32 = scmp.ge.s32.totalorder %s31, 1
    %s33 = scalar_select %p32, 0, %s31
    %s34 = sadd.s32 1, %s25
    %s35 = scalar_select %p32, %s34, %s25
    %p36 = scmp.ge.s32.totalorder %s35, 2
    %s37 = scalar_select %p36, 0, %s35
    %s38 = ssub.s32 %s25, %s37
    %p39 = scmp.eq.s32.totalorder %s38, 0
    %s41 = sadd.s32 %s40, 1
    %s42 = scalar_select %p39, %s40, %s41
    %p45 = pneg %p39
    %p46 = scmp.eq.s32.totalorder %s18, 1
    %p47 = por %p45, %p46
    %p48 = scmp.ne.s32.totalorder %s40, %s43
    %p49 = scmp.eq.s32.totalorder %s18, 0
    %p50 = por %p48, %p49
    %p51 = scmp.ne.s32.totalorder %s40, %s43
    %p52 = scmp.eq.s32.totalorder %s23, 1
    %p53 = por %p51, %p52
    %p54 = scmp.ne.s32.totalorder %s43, %s44
    %p55 = scmp.eq.s32.totalorder %s23, 0
    %p56 = por %p54, %p55
    %p57 = scmp.ne.s32.totalorder %s43, %s44
    %p58 = scmp.eq.s32.totalorder %s24, 1
    %p59 = por %p57, %p58
    %p61 = scmp.ne.s32.totalorder %s44, %s60
    %p62 = scmp.eq.s32.totalorder %s24, 0
    %p63 = por %p61, %p62
    %s65 = sadd.s32 %s64, 1
    %p68 = scmp.eq.s32.totalorder %s18, 1
    %p69 = scmp.ne.s32.totalorder %s64, %s66
    %p70 = scmp.eq.s32.totalorder %s18, 0
    %p71 = por %p69, %p70
    %p72 = scmp.ne.s32.totalorder %s64, %s66
    %p73 = scmp.eq.s32.totalorder %s23, 1
    %p74 = por %p72, %p73
    %p75 = scmp.ne.s32.totalorder %s66, %s67
    %p76 = scmp.eq.s32.totalorder %s23, 0
    %p77 = por %p75, %p76
    %p78 = scmp.ne.s32.totalorder %s66, %s67
    %p79 = scmp.eq.s32.totalorder %s24, 1
    %p80 = por %p78, %p79
    %p82 = scmp.ne.s32.totalorder %s67, %s81
    %p83 = scmp.eq.s32.totalorder %s24, 0
    %p84 = por %p82, %p83
    %s86 = sadd.s32 %s85, 1
    %p89 = scmp.eq.s32.totalorder %s18, 1
    %p90 = scmp.ne.s32.totalorder %s85, %s87
    %p91 = scmp.eq.s32.totalorder %s18, 0
    %p92 = por %p90, %p91
    %p93 = scmp.ne.s32.totalorder %s85, %s87
    %p94 = scmp.eq.s32.totalorder %s23, 1
    %p95 = por %p93, %p94
    %p96 = scmp.ne.s32.totalorder %s87, %s88
    %p97 = scmp.eq.s32.totalorder %s23, 0
    %p98 = por %p96, %p97
    %p99 = scmp.ne.s32.totalorder %s87, %s88
    %p100 = scmp.eq.s32.totalorder %s24, 1
    %p101 = por %p99, %p100
    %p103 = scmp.ne.s32.totalorder %s88, %s102
    %p104 = scmp.eq.s32.totalorder %s24, 0
    %p105 = por %p103, %p104
    %s107 = sadd.s32 %s106, 1
    %p110 = scmp.eq.s32.totalorder %s18, 1
    %p111 = scmp.ne.s32.totalorder %s106, %s108
    %p112 = scmp.eq.s32.totalorder %s18, 0
    %p113 = por %p111, %p112
    %p114 = scmp.ne.s32.totalorder %s106, %s108
    %p115 = scmp.eq.s32.totalorder %s23, 1
    %p116 = por %p114, %p115
    %p117 = scmp.ne.s32.totalorder %s108, %s109
    %p118 = scmp.eq.s32.totalorder %s23, 0
    %p119 = por %p117, %p118
    %p120 = scmp.ne.s32.totalorder %s108, %s109
    %p121 = scmp.eq.s32.totalorder %s24, 1
    %p122 = por %p120, %p121
    %p124 = scmp.ne.s32.totalorder %s109, %s123
    %p125 = scmp.eq.s32.totalorder %s24, 0
    %p126 = por %p124, %p125
    %s128 = sadd.s32 %s127, 1
    %p131 = scmp.eq.s32.totalorder %s18, 1
    %p132 = scmp.ne.s32.totalorder %s127, %s129
    %p133 = scmp.eq.s32.totalorder %s18, 0
    %p134 = por %p132, %p133
    %p135 = scmp.ne.s32.totalorder %s127, %s129
    %p136 = scmp.eq.s32.totalorder %s23, 1
    %p137 = por %p135, %p136
    %p138 = scmp.ne.s32.totalorder %s129, %s130
    %p139 = scmp.eq.s32.totalorder %s23, 0
    %p140 = por %p138, %p139
    %p141 = scmp.ne.s32.totalorder %s129, %s130
    %p142 = scmp.eq.s32.totalorder %s24, 1
    %p143 = por %p141, %p142
    %p145 = scmp.ne.s32.totalorder %s130, %s144
    %p146 = scmp.eq.s32.totalorder %s24, 0
    %p147 = por %p145, %p146
    %s149 = sadd.s32 %s148, 1
    %p152 = scmp.eq.s32.totalorder %s18, 1
    %p153 = scmp.ne.s32.totalorder %s148, %s150
    %p154 = scmp.eq.s32.totalorder %s18, 0
    %p155 = por %p153, %p154
    %p156 = scmp.ne.s32.totalorder %s148, %s150
    %p157 = scmp.eq.s32.totalorder %s23, 1
    %p158 = por %p156, %p157
    %p159 = scmp.ne.s32.totalorder %s150, %s151
    %p160 = scmp.eq.s32.totalorder %s23, 0
    %p161 = por %p159, %p160
    %p162 = scmp.ne.s32.totalorder %s150, %s151
    %p163 = scmp.eq.s32.totalorder %s24, 1
    %p164 = por %p162, %p163
    %p166 = scmp.ne.s32.totalorder %s151, %s165
    %p167 = scmp.eq.s32.totalorder %s24, 0
    %p168 = por %p166, %p167
    %s169 = ssub.s32 %s25, %s37
    %s170 = ssub.s32 %s26, %s33
    %s171 = sor.u32 %s169, %s170
    %p172 = scmp.eq.s32.totalorder %s171, 0
    %s174 = sadd.s32 %s173, 1
    %s175 = scalar_select %p172, %s173, %s174
    %p178 = pneg %p172
    %p179 = scmp.eq.s32.totalorder %s18, 1
    %p180 = por %p178, %p179
    %p181 = scmp.ne.s32.totalorder %s173, %s176
    %p182 = scmp.eq.s32.totalorder %s18, 0
    %p183 = por %p181, %p182
    %p184 = scmp.ne.s32.totalorder %s173, %s176
    %p185 = scmp.eq.s32.totalorder %s23, 1
    %p186 = por %p184, %p185
    %p187 = scmp.ne.s32.totalorder %s176, %s177
    %p188 = scmp.eq.s32.totalorder %s23, 0
    %p189 = por %p187, %p188
    %p190 = scmp.ne.s32.totalorder %s176, %s177
    %p191 = scmp.eq.s32.totalorder %s24, 1
    %p192 = por %p190, %p191
    %p194 = scmp.ne.s32.totalorder %s177, %s193
    %p195 = scmp.eq.s32.totalorder %s24, 0
    %p196 = por %p194, %p195
    %s197 = ssub.s32 %s25, %s37
    %s198 = ssub.s32 %s26, %s33
    %s199 = sor.u32 %s197, %s198
    %p200 = scmp.eq.s32.totalorder %s199, 0
    %s202 = sadd.s32 %s201, 1
    %s203 = scalar_select %p200, %s201, %s202
    %p206 = pneg %p200
    %p207 = scmp.eq.s32.totalorder %s18, 1
    %p208 = por %p206, %p207
    %p209 = scmp.ne.s32.totalorder %s201, %s204
    %p210 = scmp.eq.s32.totalorder %s18, 0
    %p211 = por %p209, %p210
    %p212 = scmp.ne.s32.totalorder %s201, %s204
    %p213 = scmp.eq.s32.totalorder %s23, 1
    %p214 = por %p212, %p213
    %p215 = scmp.ne.s32.totalorder %s204, %s205
    %p216 = scmp.eq.s32.totalorder %s23, 0
    %p217 = por %p215, %p216
    %p218 = scmp.ne.s32.totalorder %s204, %s205
    %p219 = scmp.eq.s32.totalorder %s24, 1
    %p220 = por %p218, %p219
    %p222 = scmp.ne.s32.totalorder %s205, %s221
    %p223 = scmp.eq.s32.totalorder %s24, 0
    %p224 = por %p222, %p223
    %s225 = sadd.s32 %s25, %s26
    %s226 = sadd.s32 %s37, %s33
    %s227 = ssub.s32 %s225, %s226
    %p228 = scmp.eq.s32.totalorder %s227, 0
    %s230 = sadd.s32 %s229, 1
    %s231 = scalar_select %p228, %s229, %s230
    %p234 = pneg %p228
    %p235 = scmp.eq.s32.totalorder %s18, 1
    %p236 = por %p234, %p235
    %p237 = scmp.ne.s32.totalorder %s229, %s232
    %p238 = scmp.eq.s32.totalorder %s18, 0
    %p239 = por %p237, %p238
    %p240 = scmp.ne.s32.totalorder %s229, %s232
    %p241 = scmp.eq.s32.totalorder %s23, 1
    %p242 = por %p240, %p241
    %p243 = scmp.ne.s32.totalorder %s232, %s233
    %p244 = scmp.eq.s32.totalorder %s23, 0
    %p245 = por %p243, %p244
    %p246 = scmp.ne.s32.totalorder %s232, %s233
    %p247 = scmp.eq.s32.totalorder %s24, 1
    %p248 = por %p246, %p247
    %p250 = scmp.ne.s32.totalorder %s233, %s249
    %p251 = scmp.eq.s32.totalorder %s24, 0
    %p252 = por %p250, %p251
    %s253 = sadd.s32 %s25, %s26
    %s254 = sadd.s32 %s37, %s33
    %s255 = ssub.s32 %s253, %s254
    %p256 = scmp.eq.s32.totalorder %s255, 0
    %s258 = sadd.s32 %s257, 1
    %s259 = scalar_select %p256, %s257, %s258
    %p262 = pneg %p256
    %p263 = scmp.eq.s32.totalorder %s18, 1
    %p264 = por %p262, %p263
    %p265 = scmp.ne.s32.totalorder %s257, %s260
    %p266 = scmp.eq.s32.totalorder %s18, 0
    %p267 = por %p265, %p266
    %p268 = scmp.ne.s32.totalorder %s257, %s260
    %p269 = scmp.eq.s32.totalorder %s23, 1
    %p270 = por %p268, %p269
    %p271 = scmp.ne.s32.totalorder %s260, %s261
    %p272 = scmp.eq.s32.totalorder %s23, 0
    %p273 = por %p271, %p272
    %p274 = scmp.ne.s32.totalorder %s260, %s261
    %p275 = scmp.eq.s32.totalorder %s24, 1
    %p276 = por %p274, %p275
    %p278 = scmp.ne.s32.totalorder %s261, %s277
    %p279 = scmp.eq.s32.totalorder %s24, 0
    %p280 = por %p278, %p279
    %s281 = sadd.s32 %s25, %s26
    %s282 = sadd.s32 %s37, %s33
    %s283 = ssub.s32 %s281, %s282
    %p284 = scmp.eq.s32.totalorder %s283, 0
    %s286 = sadd.s32 %s285, 1
    %s287 = scalar_select %p284, %s285, %s286
    %p290 = pneg %p284
    %p291 = scmp.eq.s32.totalorder %s18, 1
    %p292 = por %p290, %p291
    %p293 = scmp.ne.s32.totalorder %s285, %s288
    %p294 = scmp.eq.s32.totalorder %s18, 0
    %p295 = por %p293, %p294
    %p296 = scmp.ne.s32.totalorder %s285, %s288
    %p297 = scmp.eq.s32.totalorder %s23, 1
    %p298 = por %p296, %p297
    %p299 = scmp.ne.s32.totalorder %s288, %s289
    %p300 = scmp.eq.s32.totalorder %s23, 0
    %p301 = por %p299, %p300
    %p302 = scmp.ne.s32.totalorder %s288, %s289
    %p303 = scmp.eq.s32.totalorder %s24, 1
    %p304 = por %p302, %p303
    %p306 = scmp.ne.s32.totalorder %s289, %s305
    %p307 = scmp.eq.s32.totalorder %s24, 0
    %p308 = por %p306, %p307
    %s309 = sadd.s32 %s25, %s26
    %s310 = sadd.s32 %s37, %s33
    %s311 = ssub.s32 %s309, %s310
    %p312 = scmp.eq.s32.totalorder %s311, 0
    %s314 = sadd.s32 %s313, 1
    %s315 = scalar_select %p312, %s313, %s314
    %p318 = pneg %p312
    %p319 = scmp.eq.s32.totalorder %s18, 1
    %p320 = por %p318, %p319
    %p321 = scmp.ne.s32.totalorder %s313, %s316
    %p322 = scmp.eq.s32.totalorder %s18, 0
    %p323 = por %p321, %p322
    %p324 = scmp.ne.s32.totalorder %s313, %s316
    %p325 = scmp.eq.s32.totalorder %s23, 1
    %p326 = por %p324, %p325
    %p327 = scmp.ne.s32.totalorder %s316, %s317
    %p328 = scmp.eq.s32.totalorder %s23, 0
    %p329 = por %p327, %p328
    %p330 = scmp.ne.s32.totalorder %s316, %s317
    %p331 = scmp.eq.s32.totalorder %s24, 1
    %p332 = por %p330, %p331
    %p334 = scmp.ne.s32.totalorder %s317, %s333
    %p335 = scmp.eq.s32.totalorder %s24, 0
    %p336 = por %p334, %p335
    %p337 = scmp.le.s32.totalorder 1, %s18
    %p338 = scmp.lt.s32.totalorder %s18, 3
    %p339 = pnand %p337, %p338
    %p340 = pneg %p339
    // Predicated region
    $region9: #{a_call__.4} parent=5 // pred_check
      _
    $region10: #{a_call__.4} parent=5 // pred_check_branch
      %342 = sbr.rel (%p339) target = $region12
    $region11: #{a_call__.4} parent=5 // pred_region
      %s343 = ssub.s32 %s18, 1
      // Predicated region
      $region13: #{a_call__.4} parent=11 // pred_check
        %p344 = pneg %p77
      $region14: #{a_call__.4} parent=11 // pred_check_branch
        %346 = sbr.rel (%p344) target = $region16
      $region15: #{a_call__.4} parent=11 // pred_region
        _
      $region16: #{a_call__.4} parent=11 // pred_fallthru
        _
      // Predicated region
      $region17: #{a_call__.4} parent=11 // pred_check
        %p347 = pneg %p98
      $region18: #{a_call__.4} parent=11 // pred_check_branch
        %349 = sbr.rel (%p347) target = $region20
      $region19: #{a_call__.4} parent=11 // pred_region
        _
      $region20: #{a_call__.4} parent=11 // pred_fallthru
        _
      // Predicated region
      $region21: #{a_call__.4} parent=11 // pred_check
        %p350 = pneg %p119
      $region22: #{a_call__.4} parent=11 // pred_check_branch
        %352 = sbr.rel (%p350) target = $region24
      $region23: #{a_call__.4} parent=11 // pred_region
        _
      $region24: #{a_call__.4} parent=11 // pred_fallthru
        _
      // Predicated region
      $region25: #{a_call__.4} parent=11 // pred_check
        %p353 = pneg %p140
      $region26: #{a_call__.4} parent=11 // pred_check_branch
        %355 = sbr.rel (%p353) target = $region28
      $region27: #{a_call__.4} parent=11 // pred_region
        _
      $region28: #{a_call__.4} parent=11 // pred_fallthru
        _
      // Predicated region
      $region29: #{a_call__.4} parent=11 // pred_check
        %p356 = pneg %p161
      $region30: #{a_call__.4} parent=11 // pred_check_branch
        %358 = sbr.rel (%p356) target = $region32
      $region31: #{a_call__.4} parent=11 // pred_region
        _
      $region32: #{a_call__.4} parent=11 // pred_fallthru
        _
    $region12: #{a_call__.4} parent=5 // pred_fallthru
      _
    %p359 = scmp.lt.s32.totalorder %s18, 2
    // Predicated region
    $region33: #{a_call__.4} parent=5 // pred_check
      %p360 = pneg %p359
    $region34: #{a_call__.4} parent=5 // pred_check_branch
      %362 = sbr.rel (%p360) target = $region36
    $region35: #{a_call__.4} parent=5 // pred_region
      // Predicated region
      $region37: #{a_call__.4} parent=35 // pred_check
        %p363 = pneg %p50
      $region38: #{a_call__.4} parent=35 // pred_check_branch
        %365 = sbr.rel (%p363) target = $region40
      $region39: #{a_call__.4} parent=35 // pred_region
        %p366 = scmp.lt.s32.totalorder %s25, 1
        %s367 = scalar_select %p366, %s25, 1
        %s368 = smul.addr %s367, 60
        %s369 = smul.addr %s368, 4
        %s370 = scalar_lea.vmem %s0, %s369
      $region40: #{a_call__.4} parent=35 // pred_fallthru
        _
    $region36: #{a_call__.4} parent=5 // pred_fallthru
      _
    %p371 = scmp.le.s32.totalorder 1, %s18
    %p372 = scmp.lt.s32.totalorder %s18, 3
    %p373 = pnand %p371, %p372
    %p374 = pneg %p373
    // Predicated region
    $region41: #{a_call__.4} parent=5 // pred_check
      _
    $region42: #{a_call__.4} parent=5 // pred_check_branch
      %376 = sbr.rel (%p373) target = $region44
    $region43: #{a_call__.4} parent=5 // pred_region
      %s377 = ssub.s32 %s18, 1
      %p378 = scmp.lt.s32.totalorder %s27, 1
      %s379 = scalar_select %p378, %s27, 1
      %s380 = smul.addr %s379, 60
      %s381 = smul.addr %s380, 4
      %s382 = scalar_lea.vmem %s0, %s381
      %p383 = pneg %p56
      %p384 = pneg %p53
      %p385 = pneg %p77
      %p386 = pneg %p74
      %p387 = pneg %p98
      %p388 = pneg %p95
      %p389 = pneg %p119
      %p390 = pneg %p116
      %p391 = pneg %p140
      %p392 = pneg %p137
      %p393 = pneg %p161
      %p394 = pneg %p158
      %p395 = pneg %p189
      %p396 = pneg %p186
      %s397 = smul.u32 16, %s28
      %p398 = scmp.lt.s32.totalorder %s27, 1
      %s399 = scalar_select %p398, %s27, 1
      %p400 = scmp.lt.s32.totalorder %s397, 15
      %s401 = scalar_select %p400, %s397, 15
      %s402 = smul.addr %s401, 2
      %s403 = smul.addr %s399, 32
      %s404 = sadd.s32 %s402, %s403
      %s405 = smul.addr %s404, 4
      %s406 = scalar_lea.vmem %s6, %s405
      %p407 = pneg %p217
      %p408 = pneg %p214
      %s409 = smul.u32 16, %s28
      %p410 = scmp.lt.s32.totalorder %s27, 1
      %s411 = scalar_select %p410, %s27, 1
      %p412 = scmp.lt.s32.totalorder %s409, 15
      %s413 = scalar_select %p412, %s409, 15
      %s414 = smul.addr %s413, 2
      %s415 = smul.addr %s411, 32
      %s416 = sadd.s32 %s414, %s415
      %s417 = smul.addr %s416, 4
      %s418 = scalar_lea.vmem %s7, %s417
      %p419 = pneg %p245
      %p420 = pneg %p242
      %s421 = sadd.s32 %s27, %s28
      %p422 = scmp.lt.s32.totalorder %s421, 1
      %s423 = scalar_select %p422, %s421, 1
      %s424 = scalar_lea.vmem %s8, %s423
      %p425 = pneg %p273
      %p426 = pneg %p270
      %s427 = sadd.s32 %s27, %s28
      %p428 = scmp.lt.s32.totalorder %s427, 1
      %s429 = scalar_select %p428, %s427, 1
      %s430 = scalar_lea.vmem %s9, %s429
      %p431 = pneg %p301
      %p432 = pneg %p298
      %s433 = sadd.s32 %s27, %s28
      %p434 = scmp.lt.s32.totalorder %s433, 1
      %s435 = scalar_select %p434, %s433, 1
      %s436 = scalar_lea.vmem %s10, %s435
      %p437 = pneg %p329
      %p438 = pneg %p326
      %s439 = sadd.s32 %s27, %s28
      %p440 = scmp.lt.s32.totalorder %s439, 1
      %s441 = scalar_select %p440, %s439, 1
      %s442 = scalar_lea.vmem %s11, %s441
      %p443 = scmp.lt.s32.totalorder %s27, 1
      %s444 = scalar_select %p443, %s27, 1
      %s445 = smul.addr %s444, 60
      %s446 = smul.addr %s445, 4
      %s447 = scalar_lea.vmem %s0, %s446
      %s448 = smul.u32 16, %s28
      %p449 = scmp.lt.s32.totalorder %s27, 1
      %s450 = scalar_select %p449, %s27, 1
      %p451 = scmp.lt.s32.totalorder %s448, 15
      %s452 = scalar_select %p451, %s448, 15
      %s453 = smul.addr %s452, 2
      %s454 = smul.addr %s450, 32
      %s455 = sadd.s32 %s453, %s454
      %s456 = smul.addr %s455, 4
      %s457 = scalar_lea.vmem %s6, %s456
      %s458 = smul.u32 16, %s28
      %s459 = smul.u32 16, %s28
      %p460 = scmp.lt.s32.totalorder %s27, 1
      %s461 = scalar_select %p460, %s27, 1
      %p462 = scmp.lt.s32.totalorder %s459, 15
      %s463 = scalar_select %p462, %s459, 15
      %s464 = smul.addr %s463, 2
      %s465 = smul.addr %s461, 32
      %s466 = sadd.s32 %s464, %s465
      %s467 = smul.addr %s466, 4
      %s468 = scalar_lea.vmem %s7, %s467
      %s469 = smul.u32 16, %s28
      %s470 = sadd.s32 %s27, %s28
      %p471 = scmp.lt.s32.totalorder %s470, 1
      %s472 = scalar_select %p471, %s470, 1
      %s473 = scalar_lea.vmem %s8, %s472
      %s474 = sadd.s32 %s27, %s28
      %s475 = sadd.s32 %s27, %s28
      %p476 = scmp.lt.s32.totalorder %s475, 1
      %s477 = scalar_select %p476, %s475, 1
      %s478 = scalar_lea.vmem %s9, %s477
      %s479 = sadd.s32 %s27, %s28
      %s480 = sadd.s32 %s27, %s28
      %p481 = scmp.lt.s32.totalorder %s480, 1
      %s482 = scalar_select %p481, %s480, 1
      %s483 = scalar_lea.vmem %s10, %s482
      %s484 = sadd.s32 %s27, %s28
      %s485 = sadd.s32 %s27, %s28
      %p486 = scmp.lt.s32.totalorder %s485, 1
      %s487 = scalar_select %p486, %s485, 1
      %s488 = scalar_lea.vmem %s11, %s487
      %s489 = sadd.s32 %s27, %s28
      %v491 = vld [vmem:[%s447] sm:$0xf]
      %v492 = vld [vmem:[%s447 + $0x4] sm:$0xf]
      %v493 = vld [vmem:[%s447 + $0x8] sm:$0x1]
      %v494 = vld [vmem:[%s447 + $0xc] sm:$0xf]
      %v495 = vld [vmem:[%s447 + $0x10] sm:$0xf]
      %v496 = vld [vmem:[%s447 + $0x14] sm:$0x1]
      %v497 = vld [vmem:[%s447 + $0x18] sm:$0xf]
      %v498 = vld [vmem:[%s447 + $0x1c] sm:$0xf]
      %v499 = vld [vmem:[%s447 + $0x20] sm:$0x1]
      %v500 = vld [vmem:[%s447 + $0x24] sm:$0xf]
      %v501 = vld [vmem:[%s447 + $0x28] sm:$0xf]
      %v502 = vld [vmem:[%s447 + $0x2c] sm:$0x1]
      %v503 = vld [vmem:[%s447 + $0x30] sm:$0xf]
      %v504 = vld [vmem:[%s447 + $0x34] sm:$0xf]
      %v505 = vld [vmem:[%s447 + $0x38] sm:$0x1]
      %v506 = vld [vmem:[%s447 + $0x3c] sm:$0xf]
      %v507 = vld [vmem:[%s447 + $0x40] sm:$0xf]
      %v508 = vld [vmem:[%s447 + $0x44] sm:$0x1]
      %v509 = vld [vmem:[%s447 + $0x48] sm:$0xf]
      %v510 = vld [vmem:[%s447 + $0x4c] sm:$0xf]
      %v511 = vld [vmem:[%s447 + $0x50] sm:$0x1]
      %v512 = vld [vmem:[%s447 + $0x54] sm:$0xf]
      %v513 = vld [vmem:[%s447 + $0x58] sm:$0xf]
      %v514 = vld [vmem:[%s447 + $0x5c] sm:$0x1]
      %v515 = vld [vmem:[%s447 + $0x60] sm:$0xf]
      %v516 = vld [vmem:[%s447 + $0x64] sm:$0xf]
      %v517 = vld [vmem:[%s447 + $0x68] sm:$0x1]
      %v518 = vld [vmem:[%s447 + $0x6c] sm:$0xf]
      %v519 = vld [vmem:[%s447 + $0x70] sm:$0xf]
      %v520 = vld [vmem:[%s447 + $0x74] sm:$0x1]
      %v521 = vld [vmem:[%s447 + $0x78] sm:$0xf]
      %v522 = vld [vmem:[%s447 + $0x7c] sm:$0xf]
      %v523 = vld [vmem:[%s447 + $0x80] sm:$0x1]
      %v524 = vld [vmem:[%s447 + $0x84] sm:$0xf]
      %v525 = vld [vmem:[%s447 + $0x88] sm:$0xf]
      %v526 = vld [vmem:[%s447 + $0x8c] sm:$0x1]
      %v527 = vld [vmem:[%s447 + $0x90] sm:$0xf]
      %v528 = vld [vmem:[%s447 + $0x94] sm:$0xf]
      %v529 = vld [vmem:[%s447 + $0x98] sm:$0x1]
      %v530 = vld [vmem:[%s447 + $0x9c] sm:$0xf]
      %v531 = vld [vmem:[%s447 + $0xa0] sm:$0xf]
      %v532 = vld [vmem:[%s447 + $0xa4] sm:$0x1]
      %v533 = vld [vmem:[%s447 + $0xa8] sm:$0xf]
      %v534 = vld [vmem:[%s447 + $0xac] sm:$0xf]
      %v535 = vld [vmem:[%s447 + $0xb0] sm:$0x1]
      %v536 = vld [vmem:[%s447 + $0xb4] sm:$0xf]
      %v537 = vld [vmem:[%s447 + $0xb8] sm:$0xf]
      %v538 = vld [vmem:[%s447 + $0xbc] sm:$0x1]
      %v539 = vld [vmem:[%s447 + $0xc0] sm:$0xf]
      %v540 = vld [vmem:[%s447 + $0xc4] sm:$0xf]
      %v541 = vld [vmem:[%s447 + $0xc8] sm:$0x1]
      %v542 = vld [vmem:[%s447 + $0xcc] sm:$0xf]
      %v543 = vld [vmem:[%s447 + $0xd0] sm:$0xf]
      %v544 = vld [vmem:[%s447 + $0xd4] sm:$0x1]
      %v545 = vld [vmem:[%s447 + $0xd8] sm:$0xf]
      %v546 = vld [vmem:[%s447 + $0xdc] sm:$0xf]
      %v547 = vld [vmem:[%s447 + $0xe0] sm:$0x1]
      %v548 = vld [vmem:[%s447 + $0xe4] sm:$0xf]
      %v549 = vld [vmem:[%s447 + $0xe8] sm:$0xf]
      %v550 = vld [vmem:[%s447 + $0xec] sm:$0x1]
      %v551 = vld [vmem:[%s1] sm:$0x3]
      %vm552 = vsmask.f32 3328
      %vm553 = vsmask.f32 7440
      %vm554 = vmor %vm552, %vm553
      %v556 = vshrl.u32 %v491, 16
      %v558 = vrot.slane %v556, 4
      %v559 = vshll.u32 %v491, 16
      %v561 = vrot.slane %v559, 5
      %v562 = vor.u32 %v558, %v561
      %v563 = vrot.slane %v562, 4
      %v565 = vshll.u32 %v492, 16
      %v567 = vrot.slane %v565, 5
      %v568 = vsel %vm554, %v563, %v567
      %v569 = vshrl.u32 %v492, 16
      %v571 = vrot.slane %v569, 4
      %v572 = vor.u32 %v571, %v567
      %v573 = vrot.slane %v572, 4
      %v575 = vshll.u32 %v493, 16
      %v577 = vrot.slane %v575, 5
      %v578 = vsel %vm554, %v573, %v577
      %v580 = vshrl.u32 %v494, 16
      %v582 = vrot.slane %v580, 4
      %v583 = vshll.u32 %v494, 16
      %v585 = vrot.slane %v583, 5
      %v586 = vor.u32 %v582, %v585
      %v587 = vrot.slane %v586, 4
      %v589 = vshll.u32 %v495, 16
      %v591 = vrot.slane %v589, 5
      %v592 = vsel %vm554, %v587, %v591
      %v593 = vshrl.u32 %v495, 16
      %v595 = vrot.slane %v593, 4
      %v596 = vor.u32 %v595, %v591
      %v597 = vrot.slane %v596, 4
      %v599 = vshll.u32 %v496, 16
      %v601 = vrot.slane %v599, 5
      %v602 = vsel %vm554, %v597, %v601
      %v604 = vshrl.u32 %v497, 16
      %v606 = vrot.slane %v604, 4
      %v607 = vshll.u32 %v497, 16
      %v609 = vrot.slane %v607, 5
      %v610 = vor.u32 %v606, %v609
      %v611 = vrot.slane %v610, 4
      %v613 = vshll.u32 %v498, 16
      %v615 = vrot.slane %v613, 5
      %v616 = vsel %vm554, %v611, %v615
      %v617 = vshrl.u32 %v498, 16
      %v619 = vrot.slane %v617, 4
      %v620 = vor.u32 %v619, %v615
      %v621 = vrot.slane %v620, 4
      %v623 = vshll.u32 %v499, 16
      %v625 = vrot.slane %v623, 5
      %v626 = vsel %vm554, %v621, %v625
      %v628 = vshrl.u32 %v500, 16
      %v630 = vrot.slane %v628, 4
      %v631 = vshll.u32 %v500, 16
      %v633 = vrot.slane %v631, 5
      %v634 = vor.u32 %v630, %v633
      %v635 = vrot.slane %v634, 4
      %v637 = vshll.u32 %v501, 16
      %v639 = vrot.slane %v637, 5
      %v640 = vsel %vm554, %v635, %v639
      %v641 = vshrl.u32 %v501, 16
      %v643 = vrot.slane %v641, 4
      %v644 = vor.u32 %v643, %v639
      %v645 = vrot.slane %v644, 4
      %v647 = vshll.u32 %v502, 16
      %v649 = vrot.slane %v647, 5
      %v650 = vsel %vm554, %v645, %v649
      %v652 = vshrl.u32 %v503, 16
      %v654 = vrot.slane %v652, 4
      %v655 = vshll.u32 %v503, 16
      %v657 = vrot.slane %v655, 5
      %v658 = vor.u32 %v654, %v657
      %v659 = vrot.slane %v658, 4
      %v661 = vshll.u32 %v504, 16
      %v663 = vrot.slane %v661, 5
      %v664 = vsel %vm554, %v659, %v663
      %v665 = vshrl.u32 %v504, 16
      %v667 = vrot.slane %v665, 4
      %v668 = vor.u32 %v667, %v663
      %v669 = vrot.slane %v668, 4
      %v671 = vshll.u32 %v505, 16
      %v673 = vrot.slane %v671, 5
      %v674 = vsel %vm554, %v669, %v673
      %v676 = vshrl.u32 %v506, 16
      %v678 = vrot.slane %v676, 4
      %v679 = vshll.u32 %v506, 16
      %v681 = vrot.slane %v679, 5
      %v682 = vor.u32 %v678, %v681
      %v683 = vrot.slane %v682, 4
      %v685 = vshll.u32 %v507, 16
      %v687 = vrot.slane %v685, 5
      %v688 = vsel %vm554, %v683, %v687
      %v689 = vshrl.u32 %v507, 16
      %v691 = vrot.slane %v689, 4
      %v692 = vor.u32 %v691, %v687
      %v693 = vrot.slane %v692, 4
      %v695 = vshll.u32 %v508, 16
      %v697 = vrot.slane %v695, 5
      %v698 = vsel %vm554, %v693, %v697
      %v700 = vshrl.u32 %v509, 16
      %v702 = vrot.slane %v700, 4
      %v703 = vshll.u32 %v509, 16
      %v705 = vrot.slane %v703, 5
      %v706 = vor.u32 %v702, %v705
      %v707 = vrot.slane %v706, 4
      %v709 = vshll.u32 %v510, 16
      %v711 = vrot.slane %v709, 5
      %v712 = vsel %vm554, %v707, %v711
      %v713 = vshrl.u32 %v510, 16
      %v715 = vrot.slane %v713, 4
      %v716 = vor.u32 %v715, %v711
      %v717 = vrot.slane %v716, 4
      %v719 = vshll.u32 %v511, 16
      %v721 = vrot.slane %v719, 5
      %v722 = vsel %vm554, %v717, %v721
      %v724 = vshrl.u32 %v512, 16
      %v726 = vrot.slane %v724, 4
      %v727 = vshll.u32 %v512, 16
      %v729 = vrot.slane %v727, 5
      %v730 = vor.u32 %v726, %v729
      %v731 = vrot.slane %v730, 4
      %v733 = vshll.u32 %v513, 16
      %v735 = vrot.slane %v733, 5
      %v736 = vsel %vm554, %v731, %v735
      %v737 = vshrl.u32 %v513, 16
      %v739 = vrot.slane %v737, 4
      %v740 = vor.u32 %v739, %v735
      %v741 = vrot.slane %v740, 4
      %v743 = vshll.u32 %v514, 16
      %v745 = vrot.slane %v743, 5
      %v746 = vsel %vm554, %v741, %v745
      %v748 = vshrl.u32 %v515, 16
      %v750 = vrot.slane %v748, 4
      %v751 = vshll.u32 %v515, 16
      %v753 = vrot.slane %v751, 5
      %v754 = vor.u32 %v750, %v753
      %v755 = vrot.slane %v754, 4
      %v757 = vshll.u32 %v516, 16
      %v759 = vrot.slane %v757, 5
      %v760 = vsel %vm554, %v755, %v759
      %v761 = vshrl.u32 %v516, 16
      %v763 = vrot.slane %v761, 4
      %v764 = vor.u32 %v763, %v759
      %v765 = vrot.slane %v764, 4
      %v767 = vshll.u32 %v517, 16
      %v769 = vrot.slane %v767, 5
      %v770 = vsel %vm554, %v765, %v769
      %v772 = vshrl.u32 %v518, 16
      %v774 = vrot.slane %v772, 4
      %v775 = vshll.u32 %v518, 16
      %v777 = vrot.slane %v775, 5
      %v778 = vor.u32 %v774, %v777
      %v779 = vrot.slane %v778, 4
      %v781 = vshll.u32 %v519, 16
      %v783 = vrot.slane %v781, 5
      %v784 = vsel %vm554, %v779, %v783
      %v785 = vshrl.u32 %v519, 16
      %v787 = vrot.slane %v785, 4
      %v788 = vor.u32 %v787, %v783
      %v789 = vrot.slane %v788, 4
      %v791 = vshll.u32 %v520, 16
      %v793 = vrot.slane %v791, 5
      %v794 = vsel %vm554, %v789, %v793
      %v796 = vshrl.u32 %v521, 16
      %v798 = vrot.slane %v796, 4
      %v799 = vshll.u32 %v521, 16
      %v801 = vrot.slane %v799, 5
      %v802 = vor.u32 %v798, %v801
      %v803 = vrot.slane %v802, 4
      %v805 = vshll.u32 %v522, 16
      %v807 = vrot.slane %v805, 5
      %v808 = vsel %vm554, %v803, %v807
      %v809 = vshrl.u32 %v522, 16
      %v811 = vrot.slane %v809, 4
      %v812 = vor.u32 %v811, %v807
      %v813 = vrot.slane %v812, 4
      %v815 = vshll.u32 %v523, 16
      %v817 = vrot.slane %v815, 5
      %v818 = vsel %vm554, %v813, %v817
      %v820 = vshrl.u32 %v524, 16
      %v822 = vrot.slane %v820, 4
      %v823 = vshll.u32 %v524, 16
      %v825 = vrot.slane %v823, 5
      %v826 = vor.u32 %v822, %v825
      %v827 = vrot.slane %v826, 4
      %v829 = vshll.u32 %v525, 16
      %v831 = vrot.slane %v829, 5
      %v832 = vsel %vm554, %v827, %v831
      %v833 = vshrl.u32 %v525, 16
      %v835 = vrot.slane %v833, 4
      %v836 = vor.u32 %v835, %v831
      %v837 = vrot.slane %v836, 4
      %v839 = vshll.u32 %v526, 16
      %v841 = vrot.slane %v839, 5
      %v842 = vsel %vm554, %v837, %v841
      %v844 = vshrl.u32 %v527, 16
      %v846 = vrot.slane %v844, 4
      %v847 = vshll.u32 %v527, 16
      %v849 = vrot.slane %v847, 5
      %v850 = vor.u32 %v846, %v849
      %v851 = vrot.slane %v850, 4
      %v853 = vshll.u32 %v528, 16
      %v855 = vrot.slane %v853, 5
      %v856 = vsel %vm554, %v851, %v855
      %v857 = vshrl.u32 %v528, 16
      %v859 = vrot.slane %v857, 4
      %v860 = vor.u32 %v859, %v855
      %v861 = vrot.slane %v860, 4
      %v863 = vshll.u32 %v529, 16
      %v865 = vrot.slane %v863, 5
      %v866 = vsel %vm554, %v861, %v865
      %v868 = vshrl.u32 %v530, 16
      %v870 = vrot.slane %v868, 4
      %v871 = vshll.u32 %v530, 16
      %v873 = vrot.slane %v871, 5
      %v874 = vor.u32 %v870, %v873
      %v875 = vrot.slane %v874, 4
      %v877 = vshll.u32 %v531, 16
      %v879 = vrot.slane %v877, 5
      %v880 = vsel %vm554, %v875, %v879
      %v881 = vshrl.u32 %v531, 16
      %v883 = vrot.slane %v881, 4
      %v884 = vor.u32 %v883, %v879
      %v885 = vrot.slane %v884, 4
      %v887 = vshll.u32 %v532, 16
      %v889 = vrot.slane %v887, 5
      %v890 = vsel %vm554, %v885, %v889
      %v892 = vshrl.u32 %v533, 16
      %v894 = vrot.slane %v892, 4
      %v895 = vshll.u32 %v533, 16
      %v897 = vrot.slane %v895, 5
      %v898 = vor.u32 %v894, %v897
      %v899 = vrot.slane %v898, 4
      %v901 = vshll.u32 %v534, 16
      %v903 = vrot.slane %v901, 5
      %v904 = vsel %vm554, %v899, %v903
      %v905 = vshrl.u32 %v534, 16
      %v907 = vrot.slane %v905, 4
      %v908 = vor.u32 %v907, %v903
      %v909 = vrot.slane %v908, 4
      %v911 = vshll.u32 %v535, 16
      %v913 = vrot.slane %v911, 5
      %v914 = vsel %vm554, %v909, %v913
      %v916 = vshrl.u32 %v536, 16
      %v918 = vrot.slane %v916, 4
      %v919 = vshll.u32 %v536, 16
      %v921 = vrot.slane %v919, 5
      %v922 = vor.u32 %v918, %v921
      %v923 = vrot.slane %v922, 4
      %v925 = vshll.u32 %v537, 16
      %v927 = vrot.slane %v925, 5
      %v928 = vsel %vm554, %v923, %v927
      %v929 = vshrl.u32 %v537, 16
      %v931 = vrot.slane %v929, 4
      %v932 = vor.u32 %v931, %v927
      %v933 = vrot.slane %v932, 4
      %v935 = vshll.u32 %v538, 16
      %v937 = vrot.slane %v935, 5
      %v938 = vsel %vm554, %v933, %v937
      %v940 = vshrl.u32 %v539, 16
      %v942 = vrot.slane %v940, 4
      %v943 = vshll.u32 %v539, 16
      %v945 = vrot.slane %v943, 5
      %v946 = vor.u32 %v942, %v945
      %v947 = vrot.slane %v946, 4
      %v949 = vshll.u32 %v540, 16
      %v951 = vrot.slane %v949, 5
      %v952 = vsel %vm554, %v947, %v951
      %v953 = vshrl.u32 %v540, 16
      %v955 = vrot.slane %v953, 4
      %v956 = vor.u32 %v955, %v951
      %v957 = vrot.slane %v956, 4
      %v959 = vshll.u32 %v541, 16
      %v961 = vrot.slane %v959, 5
      %v962 = vsel %vm554, %v957, %v961
      %v964 = vshrl.u32 %v542, 16
      %v966 = vrot.slane %v964, 4
      %v967 = vshll.u32 %v542, 16
      %v969 = vrot.slane %v967, 5
      %v970 = vor.u32 %v966, %v969
      %v971 = vrot.slane %v970, 4
      %v973 = vshll.u32 %v543, 16
      %v975 = vrot.slane %v973, 5
      %v976 = vsel %vm554, %v971, %v975
      %v977 = vshrl.u32 %v543, 16
      %v979 = vrot.slane %v977, 4
      %v980 = vor.u32 %v979, %v975
      %v981 = vrot.slane %v980, 4
      %v983 = vshll.u32 %v544, 16
      %v985 = vrot.slane %v983, 5
      %v986 = vsel %vm554, %v981, %v985
      %v987 = vld [vmem:[%s1] sm:$0xc]
      %v988 = vunpack.c.l.b16 %v568
      %v989 = vunpack.c.l.b16 %v578
      %v990 = vunpack.c.l.b16 %v592
      %v991 = vunpack.c.l.b16 %v602
      %v992 = vunpack.c.l.b16 %v616
      %v993 = vunpack.c.l.b16 %v626
      %v994 = vunpack.c.l.b16 %v640
      %v995 = vunpack.c.l.b16 %v650
      %v996 = vunpack.c.l.b16 %v664
      %v997 = vunpack.c.l.b16 %v674
      %v998 = vunpack.c.l.b16 %v688
      %v999 = vunpack.c.l.b16 %v698
      %v1000 = vunpack.c.l.b16 %v712
      %v1001 = vunpack.c.l.b16 %v722
      %v1002 = vunpack.c.l.b16 %v736
      %v1003 = vunpack.c.l.b16 %v746
      %v1004 = vunpack.c.l.b16 %v760
      %v1005 = vunpack.c.l.b16 %v770
      %v1006 = vunpack.c.l.b16 %v784
      %v1007 = vunpack.c.l.b16 %v794
      %v1008 = vunpack.c.l.b16 %v808
      %v1009 = vunpack.c.l.b16 %v818
      %v1010 = vunpack.c.l.b16 %v832
      %v1011 = vunpack.c.l.b16 %v842
      %v1012 = vunpack.c.l.b16 %v856
      %v1013 = vunpack.c.l.b16 %v866
      %v1014 = vunpack.c.l.b16 %v880
      %v1015 = vunpack.c.l.b16 %v890
      %v1016 = vunpack.c.l.b16 %v904
      %v1017 = vunpack.c.l.b16 %v914
      %v1018 = vunpack.c.l.b16 %v928
      %v1019 = vunpack.c.l.b16 %v938
      %v1020 = vunpack.c.l.b16 %v952
      %v1021 = vunpack.c.l.b16 %v962
      %v1022 = vunpack.c.l.b16 %v976
      %v1023 = vunpack.c.l.b16 %v986
      %v1024 = vpack.c.b16 %v989, %v988
      %v1025 = vpack.c.b16 %v991, %v990
      %v1026 = vpack.c.b16 %v993, %v992
      %v1027 = vpack.c.b16 %v995, %v994
      %v1028 = vpack.c.b16 %v997, %v996
      %v1029 = vpack.c.b16 %v999, %v998
      %v1030 = vpack.c.b16 %v1001, %v1000
      %v1031 = vpack.c.b16 %v1003, %v1002
      %v1032 = vpack.c.b16 %v1005, %v1004
      %v1033 = vpack.c.b16 %v1007, %v1006
      %v1034 = vpack.c.b16 %v1009, %v1008
      %v1035 = vpack.c.b16 %v1011, %v1010
      %v1036 = vpack.c.b16 %v1013, %v1012
      %v1037 = vpack.c.b16 %v1015, %v1014
      %v1038 = vpack.c.b16 %v1017, %v1016
      %v1039 = vpack.c.b16 %v1019, %v1018
      %v1040 = vpack.c.b16 %v1021, %v1020
      %v1041 = vpack.c.b16 %v1023, %v1022
      %v1043 = vunpack.c.l.b16 %v987
      %v1044 = vpack.c.b16 %v1043, %v1043
      %v1045 = vrot.slane %v1044, 2
      %vm1046 = vcmask 31744
      %v1048 = vsel %vm1046, %v1024, 0
      %v1051 = vsel %vm1046, %v1025, 0
      %v1054 = vsel %vm1046, %v1026, 0
      %v1057 = vsel %vm1046, %v1027, 0
      %v1060 = vsel %vm1046, %v1028, 0
      %v1063 = vsel %vm1046, %v1029, 0
      %v1066 = vsel %vm1046, %v1030, 0
      %v1069 = vsel %vm1046, %v1031, 0
      %v1072 = vsel %vm1046, %v1032, 0
      %v1075 = vsel %vm1046, %v1033, 0
      %v1078 = vsel %vm1046, %v1034, 0
      %v1081 = vsel %vm1046, %v1035, 0
      %v1084 = vsel %vm1046, %v1036, 0
      %v1087 = vsel %vm1046, %v1037, 0
      %v1090 = vsel %vm1046, %v1038, 0
      %v1093 = vsel %vm1046, %v1039, 0
      %v1096 = vsel %vm1046, %v1040, 0
      %v1099 = vsel %vm1046, %v1041, 0
      %vm1101 = vcmask 1041408
      %v1103 = vsel %vm1101, %v1045, 0
      %1105 = vmatprep.subr.bf16.mxu0 0
      %1106 = vmatpush1.bf16.msra.mxu0 %v1103
      %1107 = vmatprep.subr.bf16.mxu0 0
      %1108 = vmatpush1.bf16.msra.mxu0 0
      %1109 = vmatprep.subr.bf16.mxu0 0
      %1110 = vmatpush1.bf16.msra.mxu0 0
      %1111 = vmatprep.subr.bf16.mxu0 0
      %1112 = vmatpush1.bf16.msra.mxu0 0
      %1113 = vmatprep.subr.bf16.mxu0 0
      %1114 = vmatpush1.bf16.msra.mxu0 0
      %1115 = vmatprep.subr.bf16.mxu0 0
      %1116 = vmatpush1.bf16.msra.mxu0 0
      %1117 = vmatprep.subr.bf16.mxu0 0
      %1118 = vmatpush1.bf16.msra.mxu0 0
      %1119 = vmatprep.subr.bf16.mxu0 0
      %1120 = vmatpush1.bf16.msra.mxu0 0
      %1121 = vmatprep.subr.bf16.mxu0 0
      %1122 = vmatpush1.bf16.msra.mxu0 0
      %1123 = vmatprep.subr.bf16.mxu0 0
      %1124 = vmatpush1.bf16.msra.mxu0 0
      %1125 = vmatprep.subr.bf16.mxu0 0
      %1126 = vmatpush1.bf16.msra.mxu0 0
      %1127 = vmatprep.subr.bf16.mxu0 0
      %1128 = vmatpush1.bf16.msra.mxu0 0
      %1129 = vmatprep.subr.bf16.mxu0 0
      %1130 = vmatpush1.bf16.msra.mxu0 0
      %1131 = vmatprep.subr.bf16.mxu0 0
      %1132 = vmatpush1.bf16.msra.mxu0 0
      %1133 = vmatprep.subr.bf16.mxu0 0
      %1134 = vmatpush1.bf16.msra.mxu0 0
      %1135 = vmatprep.subr.bf16.mxu0 0
      %1136 = vmatpush1.bf16.msra.mxu0 0
      %1137 = vmatprep.mubr.bf16.mxu0 0
      %1138 = vmatmul.mubr.bf16.gmra.mrb[0].mxu0 %v1048
      %v1139 = vpop.f32.mrb[0].mxu0
      %v1140 = vadd.f32 0.0, %v1139
      %v1141 = vpop.f32.mrb[0].mxu0
      %v1142 = vpop.f32.mrb[0].mxu0
      %v1143 = vadd.f32 0.0, %v1142
      %v1144 = vpop.f32.mrb[0].mxu0
      %1145 = vmatprep.mubr.bf16.mxu0 0
      %1146 = vmatmul.mubr.bf16.gmra.mrb[0].mxu0 %v1051
      %v1147 = vpop.f32.mrb[0].mxu0
      %v1148 = vadd.f32 0.0, %v1147
      %v1149 = vpop.f32.mrb[0].mxu0
      %v1150 = vpop.f32.mrb[0].mxu0
      %v1151 = vadd.f32 0.0, %v1150
      %v1152 = vpop.f32.mrb[0].mxu0
      %1153 = vmatprep.mubr.bf16.mxu0 0
      %1154 = vmatmul.mubr.bf16.gmra.mrb[0].mxu0 %v1054
      %v1155 = vpop.f32.mrb[0].mxu0
      %v1156 = vadd.f32 0.0, %v1155
      %v1157 = vpop.f32.mrb[0].mxu0
      %v1158 = vpop.f32.mrb[0].mxu0
      %v1159 = vadd.f32 0.0, %v1158
      %v1160 = vpop.f32.mrb[0].mxu0
      %1161 = vmatprep.mubr.bf16.mxu0 0
      %1162 = vmatmul.mubr.bf16.gmra.mrb[0].mxu0 %v1057
      %v1163 = vpop.f32.mrb[0].mxu0
      %v1164 = vadd.f32 0.0, %v1163
      %v1165 = vpop.f32.mrb[0].mxu0
      %v1166 = vpop.f32.mrb[0].mxu0
      %v1167 = vadd.f32 0.0, %v1166
      %v1168 = vpop.f32.mrb[0].mxu0
      %1169 = vmatprep.mubr.bf16.mxu0 0
      %1170 = vmatmul.mubr.bf16.gmra.mrb[0].mxu0 %v1060
      %v1171 = vpop.f32.mrb[0].mxu0
      %v1172 = vadd.f32 0.0, %v1171
      %v1173 = vpop.f32.mrb[0].mxu0
      %v1174 = vpop.f32.mrb[0].mxu0
      %v1175 = vadd.f32 0.0, %v1174
      %v1176 = vpop.f32.mrb[0].mxu0
      %1177 = vmatprep.mubr.bf16.mxu0 0
      %1178 = vmatmul.mubr.bf16.gmra.mrb[0].mxu0 %v1063
      %v1179 = vpop.f32.mrb[0].mxu0
      %v1180 = vadd.f32 0.0, %v1179
      %v1181 = vpop.f32.mrb[0].mxu0
      %v1182 = vpop.f32.mrb[0].mxu0
      %v1183 = vadd.f32 0.0, %v1182
      %v1184 = vpop.f32.mrb[0].mxu0
      %1185 = vmatprep.mubr.bf16.mxu0 0
      %1186 = vmatmul.mubr.bf16.gmra.mrb[0].mxu0 %v1066
      %v1187 = vpop.f32.mrb[0].mxu0
      %v1188 = vadd.f32 0.0, %v1187
      %v1189 = vpop.f32.mrb[0].mxu0
      %v1190 = vpop.f32.mrb[0].mxu0
      %v1191 = vadd.f32 0.0, %v1190
      %v1192 = vpop.f32.mrb[0].mxu0
      %1193 = vmatprep.mubr.bf16.mxu0 0
      %1194 = vmatmul.mubr.bf16.gmra.mrb[0].mxu0 %v1069
      %v1195 = vpop.f32.mrb[0].mxu0
      %v1196 = vadd.f32 0.0, %v1195
      %v1197 = vpop.f32.mrb[0].mxu0
      %v1198 = vpop.f32.mrb[0].mxu0
      %v1199 = vadd.f32 0.0, %v1198
      %v1200 = vpop.f32.mrb[0].mxu0
      %1201 = vmatprep.mubr.bf16.mxu0 0
      %1202 = vmatmul.mubr.bf16.gmra.mrb[0].mxu0 %v1072
      %v1203 = vpop.f32.mrb[0].mxu0
      %v1204 = vadd.f32 0.0, %v1203
      %v1205 = vpop.f32.mrb[0].mxu0
      %v1206 = vpop.f32.mrb[0].mxu0
      %v1207 = vadd.f32 0.0, %v1206
      %v1208 = vpop.f32.mrb[0].mxu0
      %1209 = vmatprep.mubr.bf16.mxu0 0
      %1210 = vmatmul.mubr.bf16.gmra.mrb[0].mxu0 %v1075
      %v1211 = vpop.f32.mrb[0].mxu0
      %v1212 = vadd.f32 0.0, %v1211
      %v1213 = vpop.f32.mrb[0].mxu0
      %v1214 = vpop.f32.mrb[0].mxu0
      %v1215 = vadd.f32 0.0, %v1214
      %v1216 = vpop.f32.mrb[0].mxu0
      %1217 = vmatprep.mubr.bf16.mxu0 0
      %1218 = vmatmul.mubr.bf16.gmra.mrb[0].mxu0 %v1078
      %v1219 = vpop.f32.mrb[0].mxu0
      %v1220 = vadd.f32 0.0, %v1219
      %v1221 = vpop.f32.mrb[0].mxu0
      %v1222 = vpop.f32.mrb[0].mxu0
      %v1223 = vadd.f32 0.0, %v1222
      %v1224 = vpop.f32.mrb[0].mxu0
      %1225 = vmatprep.mubr.bf16.mxu0 0
      %1226 = vmatmul.mubr.bf16.gmra.mrb[0].mxu0 %v1081
      %v1227 = vpop.f32.mrb[0].mxu0
      %v1228 = vadd.f32 0.0, %v1227
      %v1229 = vpop.f32.mrb[0].mxu0
      %v1230 = vpop.f32.mrb[0].mxu0
      %v1231 = vadd.f32 0.0, %v1230
      %v1232 = vpop.f32.mrb[0].mxu0
      %1233 = vmatprep.mubr.bf16.mxu0 0
      %1234 = vmatmul.mubr.bf16.gmra.mrb[0].mxu0 %v1084
      %v1235 = vpop.f32.mrb[0].mxu0
      %v1236 = vadd.f32 0.0, %v1235
      %v1237 = vpop.f32.mrb[0].mxu0
      %v1238 = vpop.f32.mrb[0].mxu0
      %v1239 = vadd.f32 0.0, %v1238
      %v1240 = vpop.f32.mrb[0].mxu0
      %1241 = vmatprep.mubr.bf16.mxu0 0
      %1242 = vmatmul.mubr.bf16.gmra.mrb[0].mxu0 %v1087
      %v1243 = vpop.f32.mrb[0].mxu0
      %v1244 = vadd.f32 0.0, %v1243
      %v1245 = vpop.f32.mrb[0].mxu0
      %v1246 = vpop.f32.mrb[0].mxu0
      %v1247 = vadd.f32 0.0, %v1246
      %v1248 = vpop.f32.mrb[0].mxu0
      %1249 = vmatprep.mubr.bf16.mxu0 0
      %1250 = vmatmul.mubr.bf16.gmra.mrb[0].mxu0 %v1090
      %v1251 = vpop.f32.mrb[0].mxu0
      %v1252 = vadd.f32 0.0, %v1251
      %v1253 = vpop.f32.mrb[0].mxu0
      %v1254 = vpop.f32.mrb[0].mxu0
      %v1255 = vadd.f32 0.0, %v1254
      %v1256 = vpop.f32.mrb[0].mxu0
      %1257 = vmatprep.mubr.bf16.mxu0 0
      %1258 = vmatmul.mubr.bf16.gmra.mrb[0].mxu0 %v1093
      %v1259 = vpop.f32.mrb[0].mxu0
      %v1260 = vadd.f32 0.0, %v1259
      %v1261 = vpop.f32.mrb[0].mxu0
      %v1262 = vpop.f32.mrb[0].mxu0
      %v1263 = vadd.f32 0.0, %v1262
      %v1264 = vpop.f32.mrb[0].mxu0
      %1265 = vmatprep.mubr.bf16.mxu0 0
      %1266 = vmatmul.mubr.bf16.gmra.mrb[0].mxu0 %v1096
      %v1267 = vpop.f32.mrb[0].mxu0
      %v1268 = vadd.f32 0.0, %v1267
      %v1269 = vpop.f32.mrb[0].mxu0
      %v1270 = vpop.f32.mrb[0].mxu0
      %v1271 = vadd.f32 0.0, %v1270
      %v1272 = vpop.f32.mrb[0].mxu0
      %1273 = vmatprep.mubr.bf16.mxu0 0
      %1274 = vmatmul.mubr.bf16.gmra.mrb[0].mxu0 %v1099
      %v1275 = vpop.f32.mrb[0].mxu0
      %v1276 = vadd.f32 0.0, %v1275
      %v1277 = vpop.f32.mrb[0].mxu0
      %v1278 = vpop.f32.mrb[0].mxu0
      %v1279 = vadd.f32 0.0, %v1278
      %v1280 = vpop.f32.mrb[0].mxu0
      %1281 = vdwg.mxu0
      %v1318 = vunpack.c.l.b16 %v491
      %v1319 = vunpack.c.l.b16 %v492
      %v1320 = vunpack.c.l.b16 %v494
      %v1321 = vunpack.c.l.b16 %v495
      %v1322 = vunpack.c.l.b16 %v497
      %v1323 = vunpack.c.l.b16 %v498
      %v1324 = vunpack.c.l.b16 %v500
      %v1325 = vunpack.c.l.b16 %v501
      %v1326 = vunpack.c.l.b16 %v503
      %v1327 = vunpack.c.l.b16 %v504
      %v1328 = vunpack.c.l.b16 %v506
      %v1329 = vunpack.c.l.b16 %v507
      %v1330 = vunpack.c.l.b16 %v509
      %v1331 = vunpack.c.l.b16 %v510
      %v1332 = vunpack.c.l.b16 %v512
      %v1333 = vunpack.c.l.b16 %v513
      %v1334 = vunpack.c.l.b16 %v515
      %v1335 = vunpack.c.l.b16 %v516
      %v1336 = vunpack.c.l.b16 %v518
      %v1337 = vunpack.c.l.b16 %v519
      %v1338 = vunpack.c.l.b16 %v521
      %v1339 = vunpack.c.l.b16 %v522
      %v1340 = vunpack.c.l.b16 %v524
      %v1341 = vunpack.c.l.b16 %v525
      %v1342 = vunpack.c.l.b16 %v527
      %v1343 = vunpack.c.l.b16 %v528
      %v1344 = vunpack.c.l.b16 %v530
      %v1345 = vunpack.c.l.b16 %v531
      %v1346 = vunpack.c.l.b16 %v533
      %v1347 = vunpack.c.l.b16 %v534
      %v1348 = vunpack.c.l.b16 %v536
      %v1349 = vunpack.c.l.b16 %v537
      %v1350 = vunpack.c.l.b16 %v539
      %v1351 = vunpack.c.l.b16 %v540
      %v1352 = vunpack.c.l.b16 %v542
      %v1353 = vunpack.c.l.b16 %v543
      %v1354 = vpack.c.b16 %v1319, %v1318
      %v1355 = vpack.c.b16 %v1321, %v1320
      %v1356 = vpack.c.b16 %v1323, %v1322
      %v1357 = vpack.c.b16 %v1325, %v1324
      %v1358 = vpack.c.b16 %v1327, %v1326
      %v1359 = vpack.c.b16 %v1329, %v1328
      %v1360 = vpack.c.b16 %v1331, %v1330
      %v1361 = vpack.c.b16 %v1333, %v1332
      %v1362 = vpack.c.b16 %v1335, %v1334
      %v1363 = vpack.c.b16 %v1337, %v1336
      %v1364 = vpack.c.b16 %v1339, %v1338
      %v1365 = vpack.c.b16 %v1341, %v1340
      %v1366 = vpack.c.b16 %v1343, %v1342
      %v1367 = vpack.c.b16 %v1345, %v1344
      %v1368 = vpack.c.b16 %v1347, %v1346
      %v1369 = vpack.c.b16 %v1349, %v1348
      %v1370 = vpack.c.b16 %v1351, %v1350
      %v1371 = vpack.c.b16 %v1353, %v1352
      %v1373 = vsel %vm1046, %v1354, 0
      %v1376 = vsel %vm1046, %v1355, 0
      %v1379 = vsel %vm1046, %v1356, 0
      %v1382 = vsel %vm1046, %v1357, 0
      %v1385 = vsel %vm1046, %v1358, 0
      %v1388 = vsel %vm1046, %v1359, 0
      %v1391 = vsel %vm1046, %v1360, 0
      %v1394 = vsel %vm1046, %v1361, 0
      %v1397 = vsel %vm1046, %v1362, 0
      %v1400 = vsel %vm1046, %v1363, 0
      %v1403 = vsel %vm1046, %v1364, 0
      %v1406 = vsel %vm1046, %v1365, 0
      %v1409 = vsel %vm1046, %v1366, 0
      %v1412 = vsel %vm1046, %v1367, 0
      %v1415 = vsel %vm1046, %v1368, 0
      %v1418 = vsel %vm1046, %v1369, 0
      %v1421 = vsel %vm1046, %v1370, 0
      %v1424 = vsel %vm1046, %v1371, 0
      %v1427 = vsel %vm1101, %v551, 0
      %1429 = vmatprep.subr.bf16.mxu0 0
      %1430 = vmatpush1.bf16.msra.mxu0 %v1427
      %1431 = vmatprep.subr.bf16.mxu0 0
      %1432 = vmatpush1.bf16.msra.mxu0 0
      %1433 = vmatprep.subr.bf16.mxu0 0
      %1434 = vmatpush1.bf16.msra.mxu0 0
      %1435 = vmatprep.subr.bf16.mxu0 0
      %1436 = vmatpush1.bf16.msra.mxu0 0
      %1437 = vmatprep.subr.bf16.mxu0 0
      %1438 = vmatpush1.bf16.msra.mxu0 0
      %1439 = vmatprep.subr.bf16.mxu0 0
      %1440 = vmatpush1.bf16.msra.mxu0 0
      %1441 = vmatprep.subr.bf16.mxu0 0
      %1442 = vmatpush1.bf16.msra.mxu0 0
      %1443 = vmatprep.subr.bf16.mxu0 0
      %1444 = vmatpush1.bf16.msra.mxu0 0
      %1445 = vmatprep.subr.bf16.mxu0 0
      %1446 = vmatpush1.bf16.msra.mxu0 0
      %1447 = vmatprep.subr.bf16.mxu0 0
      %1448 = vmatpush1.bf16.msra.mxu0 0
      %1449 = vmatprep.subr.bf16.mxu0 0
      %1450 = vmatpush1.bf16.msra.mxu0 0
      %1451 = vmatprep.subr.bf16.mxu0 0
      %1452 = vmatpush1.bf16.msra.mxu0 0
      %1453 = vmatprep.subr.bf16.mxu0 0
      %1454 = vmatpush1.bf16.msra.mxu0 0
      %1455 = vmatprep.subr.bf16.mxu0 0
      %1456 = vmatpush1.bf16.msra.mxu0 0
      %1457 = vmatprep.subr.bf16.mxu0 0
      %1458 = vmatpush1.bf16.msra.mxu0 0
      %1459 = vmatprep.subr.bf16.mxu0 0
      %1460 = vmatpush1.bf16.msra.mxu0 0
      %1461 = vmatprep.mubr.bf16.mxu0 0
      %1462 = vmatmul.mubr.bf16.gmra.mrb[0].mxu0 %v1373
      %v1463 = vpop.f32.mrb[0].mxu0
      %v1464 = vadd.f32 %v1140, %v1463
      %v1465 = vpop.f32.mrb[0].mxu0
      %v1466 = vpop.f32.mrb[0].mxu0
      %v1467 = vadd.f32 %v1143, %v1466
      %v1468 = vpop.f32.mrb[0].mxu0
      %1469 = vmatprep.mubr.bf16.mxu0 0
      %1470 = vmatmul.mubr.bf16.gmra.mrb[0].mxu0 %v1376
      %v1471 = vpop.f32.mrb[0].mxu0
      %v1472 = vadd.f32 %v1148, %v1471
      %v1473 = vpop.f32.mrb[0].mxu0
      %v1474 = vpop.f32.mrb[0].mxu0
      %v1475 = vadd.f32 %v1151, %v1474
      %v1476 = vpop.f32.mrb[0].mxu0
      %1477 = vmatprep.mubr.bf16.mxu0 0
      %1478 = vmatmul.mubr.bf16.gmra.mrb[0].mxu0 %v1379
      %v1479 = vpop.f32.mrb[0].mxu0
      %v1480 = vadd.f32 %v1156, %v1479
      %v1481 = vpop.f32.mrb[0].mxu0
      %v1482 = vpop.f32.mrb[0].mxu0
      %v1483 = vadd.f32 %v1159, %v1482
      %v1484 = vpop.f32.mrb[0].mxu0
      %1485 = vmatprep.mubr.bf16.mxu0 0
      %1486 = vmatmul.mubr.bf16.gmra.mrb[0].mxu0 %v1382
      %v1487 = vpop.f32.mrb[0].mxu0
      %v1488 = vadd.f32 %v1164, %v1487
      %v1489 = vpop.f32.mrb[0].mxu0
      %v1490 = vpop.f32.mrb[0].mxu0
      %v1491 = vadd.f32 %v1167, %v1490
      %v1492 = vpop.f32.mrb[0].mxu0
      %1493 = vmatprep.mubr.bf16.mxu0 0
      %1494 = vmatmul.mubr.bf16.gmra.mrb[0].mxu0 %v1385
      %v1495 = vpop.f32.mrb[0].mxu0
      %v1496 = vadd.f32 %v1172, %v1495
      %v1497 = vpop.f32.mrb[0].mxu0
      %v1498 = vpop.f32.mrb[0].mxu0
      %v1499 = vadd.f32 %v1175, %v1498
      %v1500 = vpop.f32.mrb[0].mxu0
      %1501 = vmatprep.mubr.bf16.mxu0 0
      %1502 = vmatmul.mubr.bf16.gmra.mrb[0].mxu0 %v1388
      %v1503 = vpop.f32.mrb[0].mxu0
      %v1504 = vadd.f32 %v1180, %v1503
      %v1505 = vpop.f32.mrb[0].mxu0
      %v1506 = vpop.f32.mrb[0].mxu0
      %v1507 = vadd.f32 %v1183, %v1506
      %v1508 = vpop.f32.mrb[0].mxu0
      %1509 = vmatprep.mubr.bf16.mxu0 0
      %1510 = vmatmul.mubr.bf16.gmra.mrb[0].mxu0 %v1391
      %v1511 = vpop.f32.mrb[0].mxu0
      %v1512 = vadd.f32 %v1188, %v1511
      %v1513 = vpop.f32.mrb[0].mxu0
      %v1514 = vpop.f32.mrb[0].mxu0
      %v1515 = vadd.f32 %v1191, %v1514
      %v1516 = vpop.f32.mrb[0].mxu0
      %1517 = vmatprep.mubr.bf16.mxu0 0
      %1518 = vmatmul.mubr.bf16.gmra.mrb[0].mxu0 %v1394
      %v1519 = vpop.f32.mrb[0].mxu0
      %v1520 = vadd.f32 %v1196, %v1519
      %v1521 = vpop.f32.mrb[0].mxu0
      %v1522 = vpop.f32.mrb[0].mxu0
      %v1523 = vadd.f32 %v1199, %v1522
      %v1524 = vpop.f32.mrb[0].mxu0
      %1525 = vmatprep.mubr.bf16.mxu0 0
      %1526 = vmatmul.mubr.bf16.gmra.mrb[0].mxu0 %v1397
      %v1527 = vpop.f32.mrb[0].mxu0
      %v1528 = vadd.f32 %v1204, %v1527
      %v1529 = vpop.f32.mrb[0].mxu0
      %v1530 = vpop.f32.mrb[0].mxu0
      %v1531 = vadd.f32 %v1207, %v1530
      %v1532 = vpop.f32.mrb[0].mxu0
      %1533 = vmatprep.mubr.bf16.mxu0 0
      %1534 = vmatmul.mubr.bf16.gmra.mrb[0].mxu0 %v1400
      %v1535 = vpop.f32.mrb[0].mxu0
      %v1536 = vadd.f32 %v1212, %v1535
      %v1537 = vpop.f32.mrb[0].mxu0
      %v1538 = vpop.f32.mrb[0].mxu0
      %v1539 = vadd.f32 %v1215, %v1538
      %v1540 = vpop.f32.mrb[0].mxu0
      %1541 = vmatprep.mubr.bf16.mxu0 0
      %1542 = vmatmul.mubr.bf16.gmra.mrb[0].mxu0 %v1403
      %v1543 = vpop.f32.mrb[0].mxu0
      %v1544 = vadd.f32 %v1220, %v1543
      %v1545 = vpop.f32.mrb[0].mxu0
      %v1546 = vpop.f32.mrb[0].mxu0
      %v1547 = vadd.f32 %v1223, %v1546
      %v1548 = vpop.f32.mrb[0].mxu0
      %1549 = vmatprep.mubr.bf16.mxu0 0
      %1550 = vmatmul.mubr.bf16.gmra.mrb[0].mxu0 %v1406
      %v1551 = vpop.f32.mrb[0].mxu0
      %v1552 = vadd.f32 %v1228, %v1551
      %v1553 = vpop.f32.mrb[0].mxu0
      %v1554 = vpop.f32.mrb[0].mxu0
      %v1555 = vadd.f32 %v1231, %v1554
      %v1556 = vpop.f32.mrb[0].mxu0
      %1557 = vmatprep.mubr.bf16.mxu0 0
      %1558 = vmatmul.mubr.bf16.gmra.mrb[0].mxu0 %v1409
      %v1559 = vpop.f32.mrb[0].mxu0
      %v1560 = vadd.f32 %v1236, %v1559
      %v1561 = vpop.f32.mrb[0].mxu0
      %v1562 = vpop.f32.mrb[0].mxu0
      %v1563 = vadd.f32 %v1239, %v1562
      %v1564 = vpop.f32.mrb[0].mxu0
      %1565 = vmatprep.mubr.bf16.mxu0 0
      %1566 = vmatmul.mubr.bf16.gmra.mrb[0].mxu0 %v1412
      %v1567 = vpop.f32.mrb[0].mxu0
      %v1568 = vadd.f32 %v1244, %v1567
      %v1569 = vpop.f32.mrb[0].mxu0
      %v1570 = vpop.f32.mrb[0].mxu0
      %v1571 = vadd.f32 %v1247, %v1570
      %v1572 = vpop.f32.mrb[0].mxu0
      %1573 = vmatprep.mubr.bf16.mxu0 0
      %1574 = vmatmul.mubr.bf16.gmra.mrb[0].mxu0 %v1415
      %v1575 = vpop.f32.mrb[0].mxu0
      %v1576 = vadd.f32 %v1252, %v1575
      %v1577 = vpop.f32.mrb[0].mxu0
      %v1578 = vpop.f32.mrb[0].mxu0
      %v1579 = vadd.f32 %v1255, %v1578
      %v1580 = vpop.f32.mrb[0].mxu0
      %1581 = vmatprep.mubr.bf16.mxu0 0
      %1582 = vmatmul.mubr.bf16.gmra.mrb[0].mxu0 %v1418
      %v1583 = vpop.f32.mrb[0].mxu0
      %v1584 = vadd.f32 %v1260, %v1583
      %v1585 = vpop.f32.mrb[0].mxu0
      %v1586 = vpop.f32.mrb[0].mxu0
      %v1587 = vadd.f32 %v1263, %v1586
      %v1588 = vpop.f32.mrb[0].mxu0
      %1589 = vmatprep.mubr.bf16.mxu0 0
      %1590 = vmatmul.mubr.bf16.gmra.mrb[0].mxu0 %v1421
      %v1591 = vpop.f32.mrb[0].mxu0
      %v1592 = vadd.f32 %v1268, %v1591
      %v1593 = vpop.f32.mrb[0].mxu0
      %v1594 = vpop.f32.mrb[0].mxu0
      %v1595 = vadd.f32 %v1271, %v1594
      %v1596 = vpop.f32.mrb[0].mxu0
      %1597 = vmatprep.mubr.bf16.mxu0 0
      %1598 = vmatmul.mubr.bf16.gmra.mrb[0].mxu0 %v1424
      %v1599 = vpop.f32.mrb[0].mxu0
      %v1600 = vadd.f32 %v1276, %v1599
      %v1601 = vpop.f32.mrb[0].mxu0
      %v1602 = vpop.f32.mrb[0].mxu0
      %v1603 = vadd.f32 %v1279, %v1602
      %v1604 = vpop.f32.mrb[0].mxu0
      %1605 = vdwg.mxu0
      %vm1624 = vcmask 1042432
      %vm1625 = vcmask 1046532
      %vm1626 = vmor %vm1624, %vm1625
      %v1627 = vrot.slane %v491, 5
      %v1628 = vrot.slane %v1627, 4
      %v1629 = vrot.slane %v492, 5
      %v1630 = vsel %vm1626, %v1628, %v1629
      %v1631 = vrot.slane %v1629, 4
      %v1632 = vrot.slane %v493, 5
      %v1633 = vsel %vm1626, %v1631, %v1632
      %v1634 = vrot.slane %v494, 5
      %v1635 = vrot.slane %v1634, 4
      %v1636 = vrot.slane %v495, 5
      %v1637 = vsel %vm1626, %v1635, %v1636
      %v1638 = vrot.slane %v1636, 4
      %v1639 = vrot.slane %v496, 5
      %v1640 = vsel %vm1626, %v1638, %v1639
      %v1641 = vrot.slane %v497, 5
      %v1642 = vrot.slane %v1641, 4
      %v1643 = vrot.slane %v498, 5
      %v1644 = vsel %vm1626, %v1642, %v1643
      %v1645 = vrot.slane %v1643, 4
      %v1646 = vrot.slane %v499, 5
      %v1647 = vsel %vm1626, %v1645, %v1646
      %v1648 = vrot.slane %v500, 5
      %v1649 = vrot.slane %v1648, 4
      %v1650 = vrot.slane %v501, 5
      %v1651 = vsel %vm1626, %v1649, %v1650
      %v1652 = vrot.slane %v1650, 4
      %v1653 = vrot.slane %v502, 5
      %v1654 = vsel %vm1626, %v1652, %v1653
      %v1655 = vrot.slane %v503, 5
      %v1656 = vrot.slane %v1655, 4
      %v1657 = vrot.slane %v504, 5
      %v1658 = vsel %vm1626, %v1656, %v1657
      %v1659 = vrot.slane %v1657, 4
      %v1660 = vrot.slane %v505, 5
      %v1661 = vsel %vm1626, %v1659, %v1660
      %v1662 = vrot.slane %v506, 5
      %v1663 = vrot.slane %v1662, 4
      %v1664 = vrot.slane %v507, 5
      %v1665 = vsel %vm1626, %v1663, %v1664
      %v1666 = vrot.slane %v1664, 4
      %v1667 = vrot.slane %v508, 5
      %v1668 = vsel %vm1626, %v1666, %v1667
      %v1669 = vrot.slane %v509, 5
      %v1670 = vrot.slane %v1669, 4
      %v1671 = vrot.slane %v510, 5
      %v1672 = vsel %vm1626, %v1670, %v1671
      %v1673 = vrot.slane %v1671, 4
      %v1674 = vrot.slane %v511, 5
      %v1675 = vsel %vm1626, %v1673, %v1674
      %v1676 = vrot.slane %v512, 5
      %v1677 = vrot.slane %v1676, 4
      %v1678 = vrot.slane %v513, 5
      %v1679 = vsel %vm1626, %v1677, %v1678
      %v1680 = vrot.slane %v1678, 4
      %v1681 = vrot.slane %v514, 5
      %v1682 = vsel %vm1626, %v1680, %v1681
      %v1683 = vrot.slane %v515, 5
      %v1684 = vrot.slane %v1683, 4
      %v1685 = vrot.slane %v516, 5
      %v1686 = vsel %vm1626, %v1684, %v1685
      %v1687 = vrot.slane %v1685, 4
      %v1688 = vrot.slane %v517, 5
      %v1689 = vsel %vm1626, %v1687, %v1688
      %v1690 = vrot.slane %v518, 5
      %v1691 = vrot.slane %v1690, 4
      %v1692 = vrot.slane %v519, 5
      %v1693 = vsel %vm1626, %v1691, %v1692
      %v1694 = vrot.slane %v1692, 4
      %v1695 = vrot.slane %v520, 5
      %v1696 = vsel %vm1626, %v1694, %v1695
      %v1697 = vrot.slane %v521, 5
      %v1698 = vrot.slane %v1697, 4
      %v1699 = vrot.slane %v522, 5
      %v1700 = vsel %vm1626, %v1698, %v1699
      %v1701 = vrot.slane %v1699, 4
      %v1702 = vrot.slane %v523, 5
      %v1703 = vsel %vm1626, %v1701, %v1702
      %v1704 = vrot.slane %v524, 5
      %v1705 = vrot.slane %v1704, 4
      %v1706 = vrot.slane %v525, 5
      %v1707 = vsel %vm1626, %v1705, %v1706
      %v1708 = vrot.slane %v1706, 4
      %v1709 = vrot.slane %v526, 5
      %v1710 = vsel %vm1626, %v1708, %v1709
      %v1711 = vrot.slane %v527, 5
      %v1712 = vrot.slane %v1711, 4
      %v1713 = vrot.slane %v528, 5
      %v1714 = vsel %vm1626, %v1712, %v1713
      %v1715 = vrot.slane %v1713, 4
      %v1716 = vrot.slane %v529, 5
      %v1717 = vsel %vm1626, %v1715, %v1716
      %v1718 = vrot.slane %v530, 5
      %v1719 = vrot.slane %v1718, 4
      %v1720 = vrot.slane %v531, 5
      %v1721 = vsel %vm1626, %v1719, %v1720
      %v1722 = vrot.slane %v1720, 4
      %v1723 = vrot.slane %v532, 5
      %v1724 = vsel %vm1626, %v1722, %v1723
      %v1725 = vrot.slane %v533, 5
      %v1726 = vrot.slane %v1725, 4
      %v1727 = vrot.slane %v534, 5
      %v1728 = vsel %vm1626, %v1726, %v1727
      %v1729 = vrot.slane %v1727, 4
      %v1730 = vrot.slane %v535, 5
      %v1731 = vsel %vm1626, %v1729, %v1730
      %v1732 = vrot.slane %v536, 5
      %v1733 = vrot.slane %v1732, 4
      %v1734 = vrot.slane %v537, 5
      %v1735 = vsel %vm1626, %v1733, %v1734
      %v1736 = vrot.slane %v1734, 4
      %v1737 = vrot.slane %v538, 5
      %v1738 = vsel %vm1626, %v1736, %v1737
      %v1739 = vrot.slane %v539, 5
      %v1740 = vrot.slane %v1739, 4
      %v1741 = vrot.slane %v540, 5
      %v1742 = vsel %vm1626, %v1740, %v1741
      %v1743 = vrot.slane %v1741, 4
      %v1744 = vrot.slane %v541, 5
      %v1745 = vsel %vm1626, %v1743, %v1744
      %v1746 = vrot.slane %v542, 5
      %v1747 = vrot.slane %v1746, 4
      %v1748 = vrot.slane %v543, 5
      %v1749 = vsel %vm1626, %v1747, %v1748
      %v1750 = vrot.slane %v1748, 4
      %v1751 = vrot.slane %v544, 5
      %v1752 = vsel %vm1626, %v1750, %v1751
      %v1753 = vld [vmem:[%s1 + $0x4] sm:$0x3]
      %v1754 = vunpack.c.l.b16 %v1630
      %v1755 = vunpack.c.l.b16 %v1633
      %v1756 = vunpack.c.l.b16 %v1637
      %v1757 = vunpack.c.l.b16 %v1640
      %v1758 = vunpack.c.l.b16 %v1644
      %v1759 = vunpack.c.l.b16 %v1647
      %v1760 = vunpack.c.l.b16 %v1651
      %v1761 = vunpack.c.l.b16 %v1654
      %v1762 = vunpack.c.l.b16 %v1658
      %v1763 = vunpack.c.l.b16 %v1661
      %v1764 = vunpack.c.l.b16 %v1665
      %v1765 = vunpack.c.l.b16 %v1668
      %v1766 = vunpack.c.l.b16 %v1672
      %v1767 = vunpack.c.l.b16 %v1675
      %v1768 = vunpack.c.l.b16 %v1679
      %v1769 = vunpack.c.l.b16 %v1682
      %v1770 = vunpack.c.l.b16 %v1686
      %v1771 = vunpack.c.l.b16 %v1689
      %v1772 = vunpack.c.l.b16 %v1693
      %v1773 = vunpack.c.l.b16 %v1696
      %v1774 = vunpack.c.l.b16 %v1700
      %v1775 = vunpack.c.l.b16 %v1703
      %v1776 = vunpack.c.l.b16 %v1707
      %v1777 = vunpack.c.l.b16 %v1710
      %v1778 = vunpack.c.l.b16 %v1714
      %v1779 = vunpack.c.l.b16 %v1717
      %v1780 = vunpack.c.l.b16 %v1721
      %v1781 = vunpack.c.l.b16 %v1724
      %v1782 = vunpack.c.l.b16 %v1728
      %v1783 = vunpack.c.l.b16 %v1731
      %v1784 = vunpack.c.l.b16 %v1735
      %v1785 = vunpack.c.l.b16 %v1738
      %v1786 = vunpack.c.l.b16 %v1742
      %v1787 = vunpack.c.l.b16 %v1745
      %v1788 = vunpack.c.l.b16 %v1749
      %v1789 = vunpack.c.l.b16 %v1752
      %v1790 = vpack.c.b16 %v1755, %v1754
      %v1791 = vpack.c.b16 %v1757, %v1756
      %v1792 = vpack.c.b16 %v1759, %v1758
      %v1793 = vpack.c.b16 %v1761, %v1760
      %v1794 = vpack.c.b16 %v1763, %v1762
      %v1795 = vpack.c.b16 %v1765, %v1764
      %v1796 = vpack.c.b16 %v1767, %v1766
      %v1797 = vpack.c.b16 %v1769, %v1768
      %v1798 = vpack.c.b16 %v1771, %v1770
      %v1799 = vpack.c.b16 %v1773, %v1772
      %v1800 = vpack.c.b16 %v1775, %v1774
      %v1801 = vpack.c.b16 %v1777, %v1776
      %v1802 = vpack.c.b16 %v1779, %v1778
      %v1803 = vpack.c.b16 %v1781, %v1780
      %v1804 = vpack.c.b16 %v1783, %v1782
      %v1805 = vpack.c.b16 %v1785, %v1784
      %v1806 = vpack.c.b16 %v1787, %v1786
      %v1807 = vpack.c.b16 %v1789, %v1788
      %v1809 = vsel %vm1046, %v1790, 0
      %v1812 = vsel %vm1046, %v1791, 0
      %v1815 = vsel %vm1046, %v1792, 0
      %v1818 = vsel %vm1046, %v1793, 0
      %v1821 = vsel %vm1046, %v1794, 0
      %v1824 = vsel %vm1046, %v1795, 0
      %v1827 = vsel %vm1046, %v1796, 0
      %v1830 = vsel %vm1046, %v1797, 0
      %v1833 = vsel %vm1046, %v1798, 0
      %v1836 = vsel %vm1046, %v1799, 0
      %v1839 = vsel %vm1046, %v1800, 0
      %v1842 = vsel %vm1046, %v1801, 0
      %v1845 = vsel %vm1046, %v1802, 0
      %v1848 = vsel %vm1046, %v1803, 0
      %v1851 = vsel %vm1046, %v1804, 0
      %v1854 = vsel %vm1046, %v1805, 0
      %v1857 = vsel %vm1046, %v1806, 0
      %v1860 = vsel %vm1046, %v1807, 0
      %v1863 = vsel %vm1101, %v1753, 0
      %1865 = vmatprep.subr.bf16.mxu0 0
      %1866 = vmatpush1.bf16.msra.mxu0 %v1863
      %1867 = vmatprep.subr.bf16.mxu0 0
      %1868 = vmatpush1.bf16.msra.mxu0 0
      %1869 = vmatprep.subr.bf16.mxu0 0
      %1870 = vmatpush1.bf16.msra.mxu0 0
      %1871 = vmatprep.subr.bf16.mxu0 0
      %1872 = vmatpush1.bf16.msra.mxu0 0
      %1873 = vmatprep.subr.bf16.mxu0 0
      %1874 = vmatpush1.bf16.msra.mxu0 0
      %1875 = vmatprep.subr.bf16.mxu0 0
      %1876 = vmatpush1.bf16.msra.mxu0 0
      %1877 = vmatprep.subr.bf16.mxu0 0
      %1878 = vmatpush1.bf16.msra.mxu0 0
      %1879 = vmatprep.subr.bf16.mxu0 0
      %1880 = vmatpush1.bf16.msra.mxu0 0
      %1881 = vmatprep.subr.bf16.mxu0 0
      %1882 = vmatpush1.bf16.msra.mxu0 0
      %1883 = vmatprep.subr.bf16.mxu0 0
      %1884 = vmatpush1.bf16.msra.mxu0 0
      %1885 = vmatprep.subr.bf16.mxu0 0
      %1886 = vmatpush1.bf16.msra.mxu0 0
      %1887 = vmatprep.subr.bf16.mxu0 0
      %1888 = vmatpush1.bf16.msra.mxu0 0
      %1889 = vmatprep.subr.bf16.mxu0 0
      %1890 = vmatpush1.bf16.msra.mxu0 0
      %1891 = vmatprep.subr.bf16.mxu0 0
      %1892 = vmatpush1.bf16.msra.mxu0 0
      %1893 = vmatprep.subr.bf16.mxu0 0
      %1894 = vmatpush1.bf16.msra.mxu0 0
      %1895 = vmatprep.subr.bf16.mxu0 0
      %1896 = vmatpush1.bf16.msra.mxu0 0
      %1897 = vmatprep.mubr.bf16.mxu0 0
      %1898 = vmatmul.mubr.bf16.gmra.mrb[0].mxu0 %v1809
      %v1899 = vpop.f32.mrb[0].mxu0
      %v1900 = vadd.f32 0.0, %v1899
      %v1901 = vpop.f32.mrb[0].mxu0
      %v1902 = vpop.f32.mrb[0].mxu0
      %v1903 = vadd.f32 0.0, %v1902
      %v1904 = vpop.f32.mrb[0].mxu0
      %1905 = vmatprep.mubr.bf16.mxu0 0
      %1906 = vmatmul.mubr.bf16.gmra.mrb[0].mxu0 %v1812
      %v1907 = vpop.f32.mrb[0].mxu0
      %v1908 = vadd.f32 0.0, %v1907
      %v1909 = vpop.f32.mrb[0].mxu0
      %v1910 = vpop.f32.mrb[0].mxu0
      %v1911 = vadd.f32 0.0, %v1910
      %v1912 = vpop.f32.mrb[0].mxu0
      %1913 = vmatprep.mubr.bf16.mxu0 0
      %1914 = vmatmul.mubr.bf16.gmra.mrb[0].mxu0 %v1815
      %v1915 = vpop.f32.mrb[0].mxu0
      %v1916 = vadd.f32 0.0, %v1915
      %v1917 = vpop.f32.mrb[0].mxu0
      %v1918 = vpop.f32.mrb[0].mxu0
      %v1919 = vadd.f32 0.0, %v1918
      %v1920 = vpop.f32.mrb[0].mxu0
      %1921 = vmatprep.mubr.bf16.mxu0 0
      %1922 = vmatmul.mubr.bf16.gmra.mrb[0].mxu0 %v1818
      %v1923 = vpop.f32.mrb[0].mxu0
      %v1924 = vadd.f32 0.0, %v1923
      %v1925 = vpop.f32.mrb[0].mxu0
      %v1926 = vpop.f32.mrb[0].mxu0
      %v1927 = vadd.f32 0.0, %v1926
      %v1928 = vpop.f32.mrb[0].mxu0
      %1929 = vmatprep.mubr.bf16.mxu0 0
      %1930 = vmatmul.mubr.bf16.gmra.mrb[0].mxu0 %v1821
      %v1931 = vpop.f32.mrb[0].mxu0
      %v1932 = vadd.f32 0.0, %v1931
      %v1933 = vpop.f32.mrb[0].mxu0
      %v1934 = vpop.f32.mrb[0].mxu0
      %v1935 = vadd.f32 0.0, %v1934
      %v1936 = vpop.f32.mrb[0].mxu0
      %1937 = vmatprep.mubr.bf16.mxu0 0
      %1938 = vmatmul.mubr.bf16.gmra.mrb[0].mxu0 %v1824
      %v1939 = vpop.f32.mrb[0].mxu0
      %v1940 = vadd.f32 0.0, %v1939
      %v1941 = vpop.f32.mrb[0].mxu0
      %v1942 = vpop.f32.mrb[0].mxu0
      %v1943 = vadd.f32 0.0, %v1942
      %v1944 = vpop.f32.mrb[0].mxu0
      %1945 = vmatprep.mubr.bf16.mxu0 0
      %1946 = vmatmul.mubr.bf16.gmra.mrb[0].mxu0 %v1827
      %v1947 = vpop.f32.mrb[0].mxu0
      %v1948 = vadd.f32 0.0, %v1947
      %v1949 = vpop.f32.mrb[0].mxu0
      %v1950 = vpop.f32.mrb[0].mxu0
      %v1951 = vadd.f32 0.0, %v1950
      %v1952 = vpop.f32.mrb[0].mxu0
      %1953 = vmatprep.mubr.bf16.mxu0 0
      %1954 = vmatmul.mubr.bf16.gmra.mrb[0].mxu0 %v1830
      %v1955 = vpop.f32.mrb[0].mxu0
      %v1956 = vadd.f32 0.0, %v1955
      %v1957 = vpop.f32.mrb[0].mxu0
      %v1958 = vpop.f32.mrb[0].mxu0
      %v1959 = vadd.f32 0.0, %v1958
      %v1960 = vpop.f32.mrb[0].mxu0
      %1961 = vmatprep.mubr.bf16.mxu0 0
      %1962 = vmatmul.mubr.bf16.gmra.mrb[0].mxu0 %v1833
      %v1963 = vpop.f32.mrb[0].mxu0
      %v1964 = vadd.f32 0.0, %v1963
      %v1965 = vpop.f32.mrb[0].mxu0
      %v1966 = vpop.f32.mrb[0].mxu0
      %v1967 = vadd.f32 0.0, %v1966
      %v1968 = vpop.f32.mrb[0].mxu0
      %1969 = vmatprep.mubr.bf16.mxu0 0
      %1970 = vmatmul.mubr.bf16.gmra.mrb[0].mxu0 %v1836
      %v1971 = vpop.f32.mrb[0].mxu0
      %v1972 = vadd.f32 0.0, %v1971
      %v1973 = vpop.f32.mrb[0].mxu0
      %v1974 = vpop.f32.mrb[0].mxu0
      %v1975 = vadd.f32 0.0, %v1974
      %v1976 = vpop.f32.mrb[0].mxu0
      %1977 = vmatprep.mubr.bf16.mxu0 0
      %1978 = vmatmul.mubr.bf16.gmra.mrb[0].mxu0 %v1839
      %v1979 = vpop.f32.mrb[0].mxu0
      %v1980 = vadd.f32 0.0, %v1979
      %v1981 = vpop.f32.mrb[0].mxu0
      %v1982 = vpop.f32.mrb[0].mxu0
      %v1983 = vadd.f32 0.0, %v1982
      %v1984 = vpop.f32.mrb[0].mxu0
      %1985 = vmatprep.mubr.bf16.mxu0 0
      %1986 = vmatmul.mubr.bf16.gmra.mrb[0].mxu0 %v1842
      %v1987 = vpop.f32.mrb[0].mxu0
      %v1988 = vadd.f32 0.0, %v1987
      %v1989 = vpop.f32.mrb[0].mxu0
      %v1990 = vpop.f32.mrb[0].mxu0
      %v1991 = vadd.f32 0.0, %v1990
      %v1992 = vpop.f32.mrb[0].mxu0
      %1993 = vmatprep.mubr.bf16.mxu0 0
      %1994 = vmatmul.mubr.bf16.gmra.mrb[0].mxu0 %v1845
      %v1995 = vpop.f32.mrb[0].mxu0
      %v1996 = vadd.f32 0.0, %v1995
      %v1997 = vpop.f32.mrb[0].mxu0
      %v1998 = vpop.f32.mrb[0].mxu0
      %v1999 = vadd.f32 0.0, %v1998
      %v2000 = vpop.f32.mrb[0].mxu0
      %2001 = vmatprep.mubr.bf16.mxu0 0
      %2002 = vmatmul.mubr.bf16.gmra.mrb[0].mxu0 %v1848
      %v2003 = vpop.f32.mrb[0].mxu0
      %v2004 = vadd.f32 0.0, %v2003
      %v2005 = vpop.f32.mrb[0].mxu0
      %v2006 = vpop.f32.mrb[0].mxu0
      %v2007 = vadd.f32 0.0, %v2006
      %v2008 = vpop.f32.mrb[0].mxu0
      %2009 = vmatprep.mubr.bf16.mxu0 0
      %2010 = vmatmul.mubr.bf16.gmra.mrb[0].mxu0 %v1851
      %v2011 = vpop.f32.mrb[0].mxu0
      %v2012 = vadd.f32 0.0, %v2011
      %v2013 = vpop.f32.mrb[0].mxu0
      %v2014 = vpop.f32.mrb[0].mxu0
      %v2015 = vadd.f32 0.0, %v2014
      %v2016 = vpop.f32.mrb[0].mxu0
      %2017 = vmatprep.mubr.bf16.mxu0 0
      %2018 = vmatmul.mubr.bf16.gmra.mrb[0].mxu0 %v1854
      %v2019 = vpop.f32.mrb[0].mxu0
      %v2020 = vadd.f32 0.0, %v2019
      %v2021 = vpop.f32.mrb[0].mxu0
      %v2022 = vpop.f32.mrb[0].mxu0
      %v2023 = vadd.f32 0.0, %v2022
      %v2024 = vpop.f32.mrb[0].mxu0
      %2025 = vmatprep.mubr.bf16.mxu0 0
      %2026 = vmatmul.mubr.bf16.gmra.mrb[0].mxu0 %v1857
      %v2027 = vpop.f32.mrb[0].mxu0
      %v2028 = vadd.f32 0.0, %v2027
      %v2029 = vpop.f32.mrb[0].mxu0
      %v2030 = vpop.f32.mrb[0].mxu0
      %v2031 = vadd.f32 0.0, %v2030
      %v2032 = vpop.f32.mrb[0].mxu0
      %2033 = vmatprep.mubr.bf16.mxu0 0
      %2034 = vmatmul.mubr.bf16.gmra.mrb[0].mxu0 %v1860
      %v2035 = vpop.f32.mrb[0].mxu0
      %v2036 = vadd.f32 0.0, %v2035
      %v2037 = vpop.f32.mrb[0].mxu0
      %v2038 = vpop.f32.mrb[0].mxu0
      %v2039 = vadd.f32 0.0, %v2038
      %v2040 = vpop.f32.mrb[0].mxu0
      %2041 = vdwg.mxu0
      %v2042 = vadd.f32 %v1464, %v1900
      %v2043 = vadd.f32 %v1467, %v1903
      %v2044 = vadd.f32 %v1472, %v1908
      %v2045 = vadd.f32 %v1475, %v1911
      %v2046 = vadd.f32 %v1480, %v1916
      %v2047 = vadd.f32 %v1483, %v1919
      %v2048 = vadd.f32 %v1488, %v1924
      %v2049 = vadd.f32 %v1491, %v1927
      %v2050 = vadd.f32 %v1496, %v1932
      %v2051 = vadd.f32 %v1499, %v1935
      %v2052 = vadd.f32 %v1504, %v1940
      %v2053 = vadd.f32 %v1507, %v1943
      %v2054 = vadd.f32 %v1512, %v1948
      %v2055 = vadd.f32 %v1515, %v1951
      %v2056 = vadd.f32 %v1520, %v1956
      %v2057 = vadd.f32 %v1523, %v1959
      %v2058 = vadd.f32 %v1528, %v1964
      %v2059 = vadd.f32 %v1531, %v1967
      %v2060 = vadd.f32 %v1536, %v1972
      %v2061 = vadd.f32 %v1539, %v1975
      %v2062 = vadd.f32 %v1544, %v1980
      %v2063 = vadd.f32 %v1547, %v1983
      %v2064 = vadd.f32 %v1552, %v1988
      %v2065 = vadd.f32 %v1555, %v1991
      %v2066 = vadd.f32 %v1560, %v1996
      %v2067 = vadd.f32 %v1563, %v1999
      %v2068 = vadd.f32 %v1568, %v2004
      %v2069 = vadd.f32 %v1571, %v2007
      %v2070 = vadd.f32 %v1576, %v2012
      %v2071 = vadd.f32 %v1579, %v2015
      %v2072 = vadd.f32 %v1584, %v2020
      %v2073 = vadd.f32 %v1587, %v2023
      %v2074 = vadd.f32 %v1592, %v2028
      %v2075 = vadd.f32 %v1595, %v2031
      %v2076 = vadd.f32 %v1600, %v2036
      %v2077 = vadd.f32 %v1603, %v2039
      %v2078 = vld [vmem:[%s1 + $0x4] sm:$0xc]
      %v2081 = vunpack.c.l.b16 %v545
      %v2082 = vunpack.c.l.b16 %v546
      %v2083 = vpack.c.b16 %v2082, %v2081
      %v2085 = vunpack.c.l.b16 %v2078
      %v2086 = vpack.c.b16 %v2085, %v2085
      %v2087 = vrot.slane %v2086, 2
      %v2089 = vsel %vm1046, %v2083, 0
      %v2092 = vsel %vm1101, %v2087, 0
      %2094 = vmatprep.subr.bf16.mxu0 0
      %2095 = vmatpush1.bf16.msra.mxu0 %v2092
      %2096 = vmatprep.subr.bf16.mxu0 0
      %2097 = vmatpush1.bf16.msra.mxu0 0
      %2098 = vmatprep.subr.bf16.mxu0 0
      %2099 = vmatpush1.bf16.msra.mxu0 0
      %2100 = vmatprep.subr.bf16.mxu0 0
      %2101 = vmatpush1.bf16.msra.mxu0 0
      %2102 = vmatprep.subr.bf16.mxu0 0
      %2103 = vmatpush1.bf16.msra.mxu0 0
      %2104 = vmatprep.subr.bf16.mxu0 0
      %2105 = vmatpush1.bf16.msra.mxu0 0
      %2106 = vmatprep.subr.bf16.mxu0 0
      %2107 = vmatpush1.bf16.msra.mxu0 0
      %2108 = vmatprep.subr.bf16.mxu0 0
      %2109 = vmatpush1.bf16.msra.mxu0 0
      %2110 = vmatprep.subr.bf16.mxu0 0
      %2111 = vmatpush1.bf16.msra.mxu0 0
      %2112 = vmatprep.subr.bf16.mxu0 0
      %2113 = vmatpush1.bf16.msra.mxu0 0
      %2114 = vmatprep.subr.bf16.mxu0 0
      %2115 = vmatpush1.bf16.msra.mxu0 0
      %2116 = vmatprep.subr.bf16.mxu0 0
      %2117 = vmatpush1.bf16.msra.mxu0 0
      %2118 = vmatprep.subr.bf16.mxu0 0
      %2119 = vmatpush1.bf16.msra.mxu0 0
      %2120 = vmatprep.subr.bf16.mxu0 0
      %2121 = vmatpush1.bf16.msra.mxu0 0
      %2122 = vmatprep.subr.bf16.mxu0 0
      %2123 = vmatpush1.bf16.msra.mxu0 0
      %2124 = vmatprep.subr.bf16.mxu0 0
      %2125 = vmatpush1.bf16.msra.mxu0 0
      %2126 = vmatprep.mubr.bf16.mxu0 0
      %2127 = vmatmul.mubr.bf16.gmra.mrb[0].mxu0 %v1376
      %v2128 = vpop.f32.mrb[0].mxu0
      %v2129 = vadd.f32 0.0, %v2128
      %v2130 = vpop.f32.mrb[0].mxu0
      %v2131 = vpop.f32.mrb[0].mxu0
      %v2132 = vadd.f32 0.0, %v2131
      %v2133 = vpop.f32.mrb[0].mxu0
      %2134 = vmatprep.mubr.bf16.mxu0 0
      %2135 = vmatmul.mubr.bf16.gmra.mrb[0].mxu0 %v1379
      %v2136 = vpop.f32.mrb[0].mxu0
      %v2137 = vadd.f32 0.0, %v2136
      %v2138 = vpop.f32.mrb[0].mxu0
      %v2139 = vpop.f32.mrb[0].mxu0
      %v2140 = vadd.f32 0.0, %v2139
      %v2141 = vpop.f32.mrb[0].mxu0
      %2142 = vmatprep.mubr.bf16.mxu0 0
      %2143 = vmatmul.mubr.bf16.gmra.mrb[0].mxu0 %v1382
      %v2144 = vpop.f32.mrb[0].mxu0
      %v2145 = vadd.f32 0.0, %v2144
      %v2146 = vpop.f32.mrb[0].mxu0
      %v2147 = vpop.f32.mrb[0].mxu0
      %v2148 = vadd.f32 0.0, %v2147
      %v2149 = vpop.f32.mrb[0].mxu0
      %2150 = vmatprep.mubr.bf16.mxu0 0
      %2151 = vmatmul.mubr.bf16.gmra.mrb[0].mxu0 %v1385
      %v2152 = vpop.f32.mrb[0].mxu0
      %v2153 = vadd.f32 0.0, %v2152
      %v2154 = vpop.f32.mrb[0].mxu0
      %v2155 = vpop.f32.mrb[0].mxu0
      %v2156 = vadd.f32 0.0, %v2155
      %v2157 = vpop.f32.mrb[0].mxu0
      %2158 = vmatprep.mubr.bf16.mxu0 0
      %2159 = vmatmul.mubr.bf16.gmra.mrb[0].mxu0 %v1388
      %v2160 = vpop.f32.mrb[0].mxu0
      %v2161 = vadd.f32 0.0, %v2160
      %v2162 = vpop.f32.mrb[0].mxu0
      %v2163 = vpop.f32.mrb[0].mxu0
      %v2164 = vadd.f32 0.0, %v2163
      %v2165 = vpop.f32.mrb[0].mxu0
      %2166 = vmatprep.mubr.bf16.mxu0 0
      %2167 = vmatmul.mubr.bf16.gmra.mrb[0].mxu0 %v1391
      %v2168 = vpop.f32.mrb[0].mxu0
      %v2169 = vadd.f32 0.0, %v2168
      %v2170 = vpop.f32.mrb[0].mxu0
      %v2171 = vpop.f32.mrb[0].mxu0
      %v2172 = vadd.f32 0.0, %v2171
      %v2173 = vpop.f32.mrb[0].mxu0
      %2174 = vmatprep.mubr.bf16.mxu0 0
      %2175 = vmatmul.mubr.bf16.gmra.mrb[0].mxu0 %v1394
      %v2176 = vpop.f32.mrb[0].mxu0
      %v2177 = vadd.f32 0.0, %v2176
      %v2178 = vpop.f32.mrb[0].mxu0
      %v2179 = vpop.f32.mrb[0].mxu0
      %v2180 = vadd.f32 0.0, %v2179
      %v2181 = vpop.f32.mrb[0].mxu0
      %2182 = vmatprep.mubr.bf16.mxu0 0
      %2183 = vmatmul.mubr.bf16.gmra.mrb[0].mxu0 %v1397
      %v2184 = vpop.f32.mrb[0].mxu0
      %v2185 = vadd.f32 0.0, %v2184
      %v2186 = vpop.f32.mrb[0].mxu0
      %v2187 = vpop.f32.mrb[0].mxu0
      %v2188 = vadd.f32 0.0, %v2187
      %v2189 = vpop.f32.mrb[0].mxu0
      %2190 = vmatprep.mubr.bf16.mxu0 0
      %2191 = vmatmul.mubr.bf16.gmra.mrb[0].mxu0 %v1400
      %v2192 = vpop.f32.mrb[0].mxu0
      %v2193 = vadd.f32 0.0, %v2192
      %v2194 = vpop.f32.mrb[0].mxu0
      %v2195 = vpop.f32.mrb[0].mxu0
      %v2196 = vadd.f32 0.0, %v2195
      %v2197 = vpop.f32.mrb[0].mxu0
      %2198 = vmatprep.mubr.bf16.mxu0 0
      %2199 = vmatmul.mubr.bf16.gmra.mrb[0].mxu0 %v1403
      %v2200 = vpop.f32.mrb[0].mxu0
      %v2201 = vadd.f32 0.0, %v2200
      %v2202 = vpop.f32.mrb[0].mxu0
      %v2203 = vpop.f32.mrb[0].mxu0
      %v2204 = vadd.f32 0.0, %v2203
      %v2205 = vpop.f32.mrb[0].mxu0
      %2206 = vmatprep.mubr.bf16.mxu0 0
      %2207 = vmatmul.mubr.bf16.gmra.mrb[0].mxu0 %v1406
      %v2208 = vpop.f32.mrb[0].mxu0
      %v2209 = vadd.f32 0.0, %v2208
      %v2210 = vpop.f32.mrb[0].mxu0
      %v2211 = vpop.f32.mrb[0].mxu0
      %v2212 = vadd.f32 0.0, %v2211
      %v2213 = vpop.f32.mrb[0].mxu0
      %2214 = vmatprep.mubr.bf16.mxu0 0
      %2215 = vmatmul.mubr.bf16.gmra.mrb[0].mxu0 %v1409
      %v2216 = vpop.f32.mrb[0].mxu0
      %v2217 = vadd.f32 0.0, %v2216
      %v2218 = vpop.f32.mrb[0].mxu0
      %v2219 = vpop.f32.mrb[0].mxu0
      %v2220 = vadd.f32 0.0, %v2219
      %v2221 = vpop.f32.mrb[0].mxu0
      %2222 = vmatprep.mubr.bf16.mxu0 0
      %2223 = vmatmul.mubr.bf16.gmra.mrb[0].mxu0 %v1412
      %v2224 = vpop.f32.mrb[0].mxu0
      %v2225 = vadd.f32 0.0, %v2224
      %v2226 = vpop.f32.mrb[0].mxu0
      %v2227 = vpop.f32.mrb[0].mxu0
      %v2228 = vadd.f32 0.0, %v2227
      %v2229 = vpop.f32.mrb[0].mxu0
      %2230 = vmatprep.mubr.bf16.mxu0 0
      %2231 = vmatmul.mubr.bf16.gmra.mrb[0].mxu0 %v1415
      %v2232 = vpop.f32.mrb[0].mxu0
      %v2233 = vadd.f32 0.0, %v2232
      %v2234 = vpop.f32.mrb[0].mxu0
      %v2235 = vpop.f32.mrb[0].mxu0
      %v2236 = vadd.f32 0.0, %v2235
      %v2237 = vpop.f32.mrb[0].mxu0
      %2238 = vmatprep.mubr.bf16.mxu0 0
      %2239 = vmatmul.mubr.bf16.gmra.mrb[0].mxu0 %v1418
      %v2240 = vpop.f32.mrb[0].mxu0
      %v2241 = vadd.f32 0.0, %v2240
      %v2242 = vpop.f32.mrb[0].mxu0
      %v2243 = vpop.f32.mrb[0].mxu0
      %v2244 = vadd.f32 0.0, %v2243
      %v2245 = vpop.f32.mrb[0].mxu0
      %2246 = vmatprep.mubr.bf16.mxu0 0
      %2247 = vmatmul.mubr.bf16.gmra.mrb[0].mxu0 %v1421
      %v2248 = vpop.f32.mrb[0].mxu0
      %v2249 = vadd.f32 0.0, %v2248
      %v2250 = vpop.f32.mrb[0].mxu0
      %v2251 = vpop.f32.mrb[0].mxu0
      %v2252 = vadd.f32 0.0, %v2251
      %v2253 = vpop.f32.mrb[0].mxu0
      %2254 = vmatprep.mubr.bf16.mxu0 0
      %2255 = vmatmul.mubr.bf16.gmra.mrb[0].mxu0 %v1424
      %v2256 = vpop.f32.mrb[0].mxu0
      %v2257 = vadd.f32 0.0, %v2256
      %v2258 = vpop.f32.mrb[0].mxu0
      %v2259 = vpop.f32.mrb[0].mxu0
      %v2260 = vadd.f32 0.0, %v2259
      %v2261 = vpop.f32.mrb[0].mxu0
      %2262 = vmatprep.mubr.bf16.mxu0 0
      %2263 = vmatmul.mubr.bf16.gmra.mrb[0].mxu0 %v2089
      %v2264 = vpop.f32.mrb[0].mxu0
      %v2265 = vadd.f32 0.0, %v2264
      %v2266 = vpop.f32.mrb[0].mxu0
      %v2267 = vpop.f32.mrb[0].mxu0
      %v2268 = vadd.f32 0.0, %v2267
      %v2269 = vpop.f32.mrb[0].mxu0
      %2270 = vdwg.mxu0
      %v2271 = vadd.f32 %v2042, %v2129
      %v2272 = vadd.f32 %v2043, %v2132
      %v2273 = vadd.f32 %v2044, %v2137
      %v2274 = vadd.f32 %v2045, %v2140
      %v2275 = vadd.f32 %v2046, %v2145
      %v2276 = vadd.f32 %v2047, %v2148
      %v2277 = vadd.f32 %v2048, %v2153
      %v2278 = vadd.f32 %v2049, %v2156
      %v2279 = vadd.f32 %v2050, %v2161
      %v2280 = vadd.f32 %v2051, %v2164
      %v2281 = vadd.f32 %v2052, %v2169
      %v2282 = vadd.f32 %v2053, %v2172
      %v2283 = vadd.f32 %v2054, %v2177
      %v2284 = vadd.f32 %v2055, %v2180
      %v2285 = vadd.f32 %v2056, %v2185
      %v2286 = vadd.f32 %v2057, %v2188
      %v2287 = vadd.f32 %v2058, %v2193
      %v2288 = vadd.f32 %v2059, %v2196
      %v2289 = vadd.f32 %v2060, %v2201
      %v2290 = vadd.f32 %v2061, %v2204
      %v2291 = vadd.f32 %v2062, %v2209
      %v2292 = vadd.f32 %v2063, %v2212
      %v2293 = vadd.f32 %v2064, %v2217
      %v2294 = vadd.f32 %v2065, %v2220
      %v2295 = vadd.f32 %v2066, %v2225
      %v2296 = vadd.f32 %v2067, %v2228
      %v2297 = vadd.f32 %v2068, %v2233
      %v2298 = vadd.f32 %v2069, %v2236
      %v2299 = vadd.f32 %v2070, %v2241
      %v2300 = vadd.f32 %v2071, %v2244
      %v2301 = vadd.f32 %v2072, %v2249
      %v2302 = vadd.f32 %v2073, %v2252
      %v2303 = vadd.f32 %v2074, %v2257
      %v2304 = vadd.f32 %v2075, %v2260
      %v2305 = vadd.f32 %v2076, %v2265
      %v2306 = vadd.f32 %v2077, %v2268
      %v2308 = vshrl.u32 %v545, 16
      %v2310 = vrot.slane %v2308, 4
      %v2311 = vshll.u32 %v545, 16
      %v2313 = vrot.slane %v2311, 5
      %v2314 = vor.u32 %v2310, %v2313
      %v2315 = vrot.slane %v2314, 4
      %v2317 = vshll.u32 %v546, 16
      %v2319 = vrot.slane %v2317, 5
      %v2320 = vsel %vm554, %v2315, %v2319
      %v2321 = vshrl.u32 %v546, 16
      %v2323 = vrot.slane %v2321, 4
      %v2324 = vor.u32 %v2323, %v2319
      %v2325 = vrot.slane %v2324, 4
      %v2327 = vshll.u32 %v547, 16
      %v2329 = vrot.slane %v2327, 5
      %v2330 = vsel %vm554, %v2325, %v2329
      %v2331 = vld [vmem:[%s1 + $0x8] sm:$0x3]
      %v2332 = vunpack.c.l.b16 %v2320
      %v2333 = vunpack.c.l.b16 %v2330
      %v2334 = vpack.c.b16 %v2333, %v2332
      %v2336 = vsel %vm1046, %v2334, 0
      %v2339 = vsel %vm1101, %v2331, 0
      %2341 = vmatprep.subr.bf16.mxu0 0
      %2342 = vmatpush1.bf16.msra.mxu0 %v2339
      %2343 = vmatprep.subr.bf16.mxu0 0
      %2344 = vmatpush1.bf16.msra.mxu0 0
      %2345 = vmatprep.subr.bf16.mxu0 0
      %2346 = vmatpush1.bf16.msra.mxu0 0
      %2347 = vmatprep.subr.bf16.mxu0 0
      %2348 = vmatpush1.bf16.msra.mxu0 0
      %2349 = vmatprep.subr.bf16.mxu0 0
      %2350 = vmatpush1.bf16.msra.mxu0 0
      %2351 = vmatprep.subr.bf16.mxu0 0
      %2352 = vmatpush1.bf16.msra.mxu0 0
      %2353 = vmatprep.subr.bf16.mxu0 0
      %2354 = vmatpush1.bf16.msra.mxu0 0
      %2355 = vmatprep.subr.bf16.mxu0 0
      %2356 = vmatpush1.bf16.msra.mxu0 0
      %2357 = vmatprep.subr.bf16.mxu0 0
      %2358 = vmatpush1.bf16.msra.mxu0 0
      %2359 = vmatprep.subr.bf16.mxu0 0
      %2360 = vmatpush1.bf16.msra.mxu0 0
      %2361 = vmatprep.subr.bf16.mxu0 0
      %2362 = vmatpush1.bf16.msra.mxu0 0
      %2363 = vmatprep.subr.bf16.mxu0 0
      %2364 = vmatpush1.bf16.msra.mxu0 0
      %2365 = vmatprep.subr.bf16.mxu0 0
      %2366 = vmatpush1.bf16.msra.mxu0 0
      %2367 = vmatprep.subr.bf16.mxu0 0
      %2368 = vmatpush1.bf16.msra.mxu0 0
      %2369 = vmatprep.subr.bf16.mxu0 0
      %2370 = vmatpush1.bf16.msra.mxu0 0
      %2371 = vmatprep.subr.bf16.mxu0 0
      %2372 = vmatpush1.bf16.msra.mxu0 0
      %2373 = vmatprep.mubr.bf16.mxu0 0
      %2374 = vmatmul.mubr.bf16.gmra.mrb[0].mxu0 %v1051
      %v2375 = vpop.f32.mrb[0].mxu0
      %v2376 = vadd.f32 0.0, %v2375
      %v2377 = vpop.f32.mrb[0].mxu0
      %v2378 = vpop.f32.mrb[0].mxu0
      %v2379 = vadd.f32 0.0, %v2378
      %v2380 = vpop.f32.mrb[0].mxu0
      %2381 = vmatprep.mubr.bf16.mxu0 0
      %2382 = vmatmul.mubr.bf16.gmra.mrb[0].mxu0 %v1054
      %v2383 = vpop.f32.mrb[0].mxu0
      %v2384 = vadd.f32 0.0, %v2383
      %v2385 = vpop.f32.mrb[0].mxu0
      %v2386 = vpop.f32.mrb[0].mxu0
      %v2387 = vadd.f32 0.0, %v2386
      %v2388 = vpop.f32.mrb[0].mxu0
      %2389 = vmatprep.mubr.bf16.mxu0 0
      %2390 = vmatmul.mubr.bf16.gmra.mrb[0].mxu0 %v1057
      %v2391 = vpop.f32.mrb[0].mxu0
      %v2392 = vadd.f32 0.0, %v2391
      %v2393 = vpop.f32.mrb[0].mxu0
      %v2394 = vpop.f32.mrb[0].mxu0
      %v2395 = vadd.f32 0.0, %v2394
      %v2396 = vpop.f32.mrb[0].mxu0
      %2397 = vmatprep.mubr.bf16.mxu0 0
      %2398 = vmatmul.mubr.bf16.gmra.mrb[0].mxu0 %v1060
      %v2399 = vpop.f32.mrb[0].mxu0
      %v2400 = vadd.f32 0.0, %v2399
      %v2401 = vpop.f32.mrb[0].mxu0
      %v2402 = vpop.f32.mrb[0].mxu0
      %v2403 = vadd.f32 0.0, %v2402
      %v2404 = vpop.f32.mrb[0].mxu0
      %2405 = vmatprep.mubr.bf16.mxu0 0
      %2406 = vmatmul.mubr.bf16.gmra.mrb[0].mxu0 %v1063
      %v2407 = vpop.f32.mrb[0].mxu0
      %v2408 = vadd.f32 0.0, %v2407
      %v2409 = vpop.f32.mrb[0].mxu0
      %v2410 = vpop.f32.mrb[0].mxu0
      %v2411 = vadd.f32 0.0, %v2410
      %v2412 = vpop.f32.mrb[0].mxu0
      %2413 = vmatprep.mubr.bf16.mxu0 0
      %2414 = vmatmul.mubr.bf16.gmra.mrb[0].mxu0 %v1066
      %v2415 = vpop.f32.mrb[0].mxu0
      %v2416 = vadd.f32 0.0, %v2415
      %v2417 = vpop.f32.mrb[0].mxu0
      %v2418 = vpop.f32.mrb[0].mxu0
      %v2419 = vadd.f32 0.0, %v2418
      %v2420 = vpop.f32.mrb[0].mxu0
      %2421 = vmatprep.mubr.bf16.mxu0 0
      %2422 = vmatmul.mubr.bf16.gmra.mrb[0].mxu0 %v1069
      %v2423 = vpop.f32.mrb[0].mxu0
      %v2424 = vadd.f32 0.0, %v2423
      %v2425 = vpop.f32.mrb[0].mxu0
      %v2426 = vpop.f32.mrb[0].mxu0
      %v2427 = vadd.f32 0.0, %v2426
      %v2428 = vpop.f32.mrb[0].mxu0
      %2429 = vmatprep.mubr.bf16.mxu0 0
      %2430 = vmatmul.mubr.bf16.gmra.mrb[0].mxu0 %v1072
      %v2431 = vpop.f32.mrb[0].mxu0
      %v2432 = vadd.f32 0.0, %v2431
      %v2433 = vpop.f32.mrb[0].mxu0
      %v2434 = vpop.f32.mrb[0].mxu0
      %v2435 = vadd.f32 0.0, %v2434
      %v2436 = vpop.f32.mrb[0].mxu0
      %2437 = vmatprep.mubr.bf16.mxu0 0
      %2438 = vmatmul.mubr.bf16.gmra.mrb[0].mxu0 %v1075
      %v2439 = vpop.f32.mrb[0].mxu0
      %v2440 = vadd.f32 0.0, %v2439
      %v2441 = vpop.f32.mrb[0].mxu0
      %v2442 = vpop.f32.mrb[0].mxu0
      %v2443 = vadd.f32 0.0, %v2442
      %v2444 = vpop.f32.mrb[0].mxu0
      %2445 = vmatprep.mubr.bf16.mxu0 0
      %2446 = vmatmul.mubr.bf16.gmra.mrb[0].mxu0 %v1078
      %v2447 = vpop.f32.mrb[0].mxu0
      %v2448 = vadd.f32 0.0, %v2447
      %v2449 = vpop.f32.mrb[0].mxu0
      %v2450 = vpop.f32.mrb[0].mxu0
      %v2451 = vadd.f32 0.0, %v2450
      %v2452 = vpop.f32.mrb[0].mxu0
      %2453 = vmatprep.mubr.bf16.mxu0 0
      %2454 = vmatmul.mubr.bf16.gmra.mrb[0].mxu0 %v1081
      %v2455 = vpop.f32.mrb[0].mxu0
      %v2456 = vadd.f32 0.0, %v2455
      %v2457 = vpop.f32.mrb[0].mxu0
      %v2458 = vpop.f32.mrb[0].mxu0
      %v2459 = vadd.f32 0.0, %v2458
      %v2460 = vpop.f32.mrb[0].mxu0
      %2461 = vmatprep.mubr.bf16.mxu0 0
      %2462 = vmatmul.mubr.bf16.gmra.mrb[0].mxu0 %v1084
      %v2463 = vpop.f32.mrb[0].mxu0
      %v2464 = vadd.f32 0.0, %v2463
      %v2465 = vpop.f32.mrb[0].mxu0
      %v2466 = vpop.f32.mrb[0].mxu0
      %v2467 = vadd.f32 0.0, %v2466
      %v2468 = vpop.f32.mrb[0].mxu0
      %2469 = vmatprep.mubr.bf16.mxu0 0
      %2470 = vmatmul.mubr.bf16.gmra.mrb[0].mxu0 %v1087
      %v2471 = vpop.f32.mrb[0].mxu0
      %v2472 = vadd.f32 0.0, %v2471
      %v2473 = vpop.f32.mrb[0].mxu0
      %v2474 = vpop.f32.mrb[0].mxu0
      %v2475 = vadd.f32 0.0, %v2474
      %v2476 = vpop.f32.mrb[0].mxu0
      %2477 = vmatprep.mubr.bf16.mxu0 0
      %2478 = vmatmul.mubr.bf16.gmra.mrb[0].mxu0 %v1090
      %v2479 = vpop.f32.mrb[0].mxu0
      %v2480 = vadd.f32 0.0, %v2479
      %v2481 = vpop.f32.mrb[0].mxu0
      %v2482 = vpop.f32.mrb[0].mxu0
      %v2483 = vadd.f32 0.0, %v2482
      %v2484 = vpop.f32.mrb[0].mxu0
      %2485 = vmatprep.mubr.bf16.mxu0 0
      %2486 = vmatmul.mubr.bf16.gmra.mrb[0].mxu0 %v1093
      %v2487 = vpop.f32.mrb[0].mxu0
      %v2488 = vadd.f32 0.0, %v2487
      %v2489 = vpop.f32.mrb[0].mxu0
      %v2490 = vpop.f32.mrb[0].mxu0
      %v2491 = vadd.f32 0.0, %v2490
      %v2492 = vpop.f32.mrb[0].mxu0
      %2493 = vmatprep.mubr.bf16.mxu0 0
      %2494 = vmatmul.mubr.bf16.gmra.mrb[0].mxu0 %v1096
      %v2495 = vpop.f32.mrb[0].mxu0
      %v2496 = vadd.f32 0.0, %v2495
      %v2497 = vpop.f32.mrb[0].mxu0
      %v2498 = vpop.f32.mrb[0].mxu0
      %v2499 = vadd.f32 0.0, %v2498
      %v2500 = vpop.f32.mrb[0].mxu0
      %2501 = vmatprep.mubr.bf16.mxu0 0
      %2502 = vmatmul.mubr.bf16.gmra.mrb[0].mxu0 %v1099
      %v2503 = vpop.f32.mrb[0].mxu0
      %v2504 = vadd.f32 0.0, %v2503
      %v2505 = vpop.f32.mrb[0].mxu0
      %v2506 = vpop.f32.mrb[0].mxu0
      %v2507 = vadd.f32 0.0, %v2506
      %v2508 = vpop.f32.mrb[0].mxu0
      %2509 = vmatprep.mubr.bf16.mxu0 0
      %2510 = vmatmul.mubr.bf16.gmra.mrb[0].mxu0 %v2336
      %v2511 = vpop.f32.mrb[0].mxu0
      %v2512 = vadd.f32 0.0, %v2511
      %v2513 = vpop.f32.mrb[0].mxu0
      %v2514 = vpop.f32.mrb[0].mxu0
      %v2515 = vadd.f32 0.0, %v2514
      %v2516 = vpop.f32.mrb[0].mxu0
      %2517 = vdwg.mxu0
      %v2518 = vadd.f32 %v2271, %v2376
      %v2519 = vadd.f32 %v2272, %v2379
      %v2520 = vadd.f32 %v2273, %v2384
      %v2521 = vadd.f32 %v2274, %v2387
      %v2522 = vadd.f32 %v2275, %v2392
      %v2523 = vadd.f32 %v2276, %v2395
      %v2524 = vadd.f32 %v2277, %v2400
      %v2525 = vadd.f32 %v2278, %v2403
      %v2526 = vadd.f32 %v2279, %v2408
      %v2527 = vadd.f32 %v2280, %v2411
      %v2528 = vadd.f32 %v2281, %v2416
      %v2529 = vadd.f32 %v2282, %v2419
      %v2530 = vadd.f32 %v2283, %v2424
      %v2531 = vadd.f32 %v2284, %v2427
      %v2532 = vadd.f32 %v2285, %v2432
      %v2533 = vadd.f32 %v2286, %v2435
      %v2534 = vadd.f32 %v2287, %v2440
      %v2535 = vadd.f32 %v2288, %v2443
      %v2536 = vadd.f32 %v2289, %v2448
      %v2537 = vadd.f32 %v2290, %v2451
      %v2538 = vadd.f32 %v2291, %v2456
      %v2539 = vadd.f32 %v2292, %v2459
      %v2540 = vadd.f32 %v2293, %v2464
      %v2541 = vadd.f32 %v2294, %v2467
      %v2542 = vadd.f32 %v2295, %v2472
      %v2543 = vadd.f32 %v2296, %v2475
      %v2544 = vadd.f32 %v2297, %v2480
      %v2545 = vadd.f32 %v2298, %v2483
      %v2546 = vadd.f32 %v2299, %v2488
      %v2547 = vadd.f32 %v2300, %v2491
      %v2548 = vadd.f32 %v2301, %v2496
      %v2549 = vadd.f32 %v2302, %v2499
      %v2550 = vadd.f32 %v2303, %v2504
      %v2551 = vadd.f32 %v2304, %v2507
      %v2552 = vadd.f32 %v2305, %v2512
      %v2553 = vadd.f32 %v2306, %v2515
      %v2555 = vrot.slane %v545, 5
      %v2556 = vrot.slane %v2555, 4
      %v2557 = vrot.slane %v546, 5
      %v2558 = vsel %vm1626, %v2556, %v2557
      %v2559 = vrot.slane %v2557, 4
      %v2560 = vrot.slane %v547, 5
      %v2561 = vsel %vm1626, %v2559, %v2560
      %v2562 = vld [vmem:[%s1 + $0x8] sm:$0xc]
      %v2563 = vunpack.c.l.b16 %v2558
      %v2564 = vunpack.c.l.b16 %v2561
      %v2565 = vpack.c.b16 %v2564, %v2563
      %v2567 = vunpack.c.l.b16 %v2562
      %v2568 = vpack.c.b16 %v2567, %v2567
      %v2569 = vrot.slane %v2568, 2
      %v2571 = vsel %vm1046, %v2565, 0
      %v2574 = vsel %vm1101, %v2569, 0
      %2576 = vmatprep.subr.bf16.mxu0 0
      %2577 = vmatpush1.bf16.msra.mxu0 %v2574
      %2578 = vmatprep.subr.bf16.mxu0 0
      %2579 = vmatpush1.bf16.msra.mxu0 0
      %2580 = vmatprep.subr.bf16.mxu0 0
      %2581 = vmatpush1.bf16.msra.mxu0 0
      %2582 = vmatprep.subr.bf16.mxu0 0
      %2583 = vmatpush1.bf16.msra.mxu0 0
      %2584 = vmatprep.subr.bf16.mxu0 0
      %2585 = vmatpush1.bf16.msra.mxu0 0
      %2586 = vmatprep.subr.bf16.mxu0 0
      %2587 = vmatpush1.bf16.msra.mxu0 0
      %2588 = vmatprep.subr.bf16.mxu0 0
      %2589 = vmatpush1.bf16.msra.mxu0 0
      %2590 = vmatprep.subr.bf16.mxu0 0
      %2591 = vmatpush1.bf16.msra.mxu0 0
      %2592 = vmatprep.subr.bf16.mxu0 0
      %2593 = vmatpush1.bf16.msra.mxu0 0
      %2594 = vmatprep.subr.bf16.mxu0 0
      %2595 = vmatpush1.bf16.msra.mxu0 0
      %2596 = vmatprep.subr.bf16.mxu0 0
      %2597 = vmatpush1.bf16.msra.mxu0 0
      %2598 = vmatprep.subr.bf16.mxu0 0
      %2599 = vmatpush1.bf16.msra.mxu0 0
      %2600 = vmatprep.subr.bf16.mxu0 0
      %2601 = vmatpush1.bf16.msra.mxu0 0
      %2602 = vmatprep.subr.bf16.mxu0 0
      %2603 = vmatpush1.bf16.msra.mxu0 0
      %2604 = vmatprep.subr.bf16.mxu0 0
      %2605 = vmatpush1.bf16.msra.mxu0 0
      %2606 = vmatprep.subr.bf16.mxu0 0
      %2607 = vmatpush1.bf16.msra.mxu0 0
      %2608 = vmatprep.mubr.bf16.mxu0 0
      %2609 = vmatmul.mubr.bf16.gmra.mrb[0].mxu0 %v1812
      %v2610 = vpop.f32.mrb[0].mxu0
      %v2611 = vadd.f32 0.0, %v2610
      %v2612 = vpop.f32.mrb[0].mxu0
      %v2613 = vpop.f32.mrb[0].mxu0
      %v2614 = vadd.f32 0.0, %v2613
      %v2615 = vpop.f32.mrb[0].mxu0
      %2616 = vmatprep.mubr.bf16.mxu0 0
      %2617 = vmatmul.mubr.bf16.gmra.mrb[0].mxu0 %v1815
      %v2618 = vpop.f32.mrb[0].mxu0
      %v2619 = vadd.f32 0.0, %v2618
      %v2620 = vpop.f32.mrb[0].mxu0
      %v2621 = vpop.f32.mrb[0].mxu0
      %v2622 = vadd.f32 0.0, %v2621
      %v2623 = vpop.f32.mrb[0].mxu0
      %2624 = vmatprep.mubr.bf16.mxu0 0
      %2625 = vmatmul.mubr.bf16.gmra.mrb[0].mxu0 %v1818
      %v2626 = vpop.f32.mrb[0].mxu0
      %v2627 = vadd.f32 0.0, %v2626
      %v2628 = vpop.f32.mrb[0].mxu0
      %v2629 = vpop.f32.mrb[0].mxu0
      %v2630 = vadd.f32 0.0, %v2629
      %v2631 = vpop.f32.mrb[0].mxu0
      %2632 = vmatprep.mubr.bf16.mxu0 0
      %2633 = vmatmul.mubr.bf16.gmra.mrb[0].mxu0 %v1821
      %v2634 = vpop.f32.mrb[0].mxu0
      %v2635 = vadd.f32 0.0, %v2634
      %v2636 = vpop.f32.mrb[0].mxu0
      %v2637 = vpop.f32.mrb[0].mxu0
      %v2638 = vadd.f32 0.0, %v2637
      %v2639 = vpop.f32.mrb[0].mxu0
      %2640 = vmatprep.mubr.bf16.mxu0 0
      %2641 = vmatmul.mubr.bf16.gmra.mrb[0].mxu0 %v1824
      %v2642 = vpop.f32.mrb[0].mxu0
      %v2643 = vadd.f32 0.0, %v2642
      %v2644 = vpop.f32.mrb[0].mxu0
      %v2645 = vpop.f32.mrb[0].mxu0
      %v2646 = vadd.f32 0.0, %v2645
      %v2647 = vpop.f32.mrb[0].mxu0
      %2648 = vmatprep.mubr.bf16.mxu0 0
      %2649 = vmatmul.mubr.bf16.gmra.mrb[0].mxu0 %v1827
      %v2650 = vpop.f32.mrb[0].mxu0
      %v2651 = vadd.f32 0.0, %v2650
      %v2652 = vpop.f32.mrb[0].mxu0
      %v2653 = vpop.f32.mrb[0].mxu0
      %v2654 = vadd.f32 0.0, %v2653
      %v2655 = vpop.f32.mrb[0].mxu0
      %2656 = vmatprep.mubr.bf16.mxu0 0
      %2657 = vmatmul.mubr.bf16.gmra.mrb[0].mxu0 %v1830
      %v2658 = vpop.f32.mrb[0].mxu0
      %v2659 = vadd.f32 0.0, %v2658
      %v2660 = vpop.f32.mrb[0].mxu0
      %v2661 = vpop.f32.mrb[0].mxu0
      %v2662 = vadd.f32 0.0, %v2661
      %v2663 = vpop.f32.mrb[0].mxu0
      %2664 = vmatprep.mubr.bf16.mxu0 0
      %2665 = vmatmul.mubr.bf16.gmra.mrb[0].mxu0 %v1833
      %v2666 = vpop.f32.mrb[0].mxu0
      %v2667 = vadd.f32 0.0, %v2666
      %v2668 = vpop.f32.mrb[0].mxu0
      %v2669 = vpop.f32.mrb[0].mxu0
      %v2670 = vadd.f32 0.0, %v2669
      %v2671 = vpop.f32.mrb[0].mxu0
      %2672 = vmatprep.mubr.bf16.mxu0 0
      %2673 = vmatmul.mubr.bf16.gmra.mrb[0].mxu0 %v1836
      %v2674 = vpop.f32.mrb[0].mxu0
      %v2675 = vadd.f32 0.0, %v2674
      %v2676 = vpop.f32.mrb[0].mxu0
      %v2677 = vpop.f32.mrb[0].mxu0
      %v2678 = vadd.f32 0.0, %v2677
      %v2679 = vpop.f32.mrb[0].mxu0
      %2680 = vmatprep.mubr.bf16.mxu0 0
      %2681 = vmatmul.mubr.bf16.gmra.mrb[0].mxu0 %v1839
      %v2682 = vpop.f32.mrb[0].mxu0
      %v2683 = vadd.f32 0.0, %v2682
      %v2684 = vpop.f32.mrb[0].mxu0
      %v2685 = vpop.f32.mrb[0].mxu0
      %v2686 = vadd.f32 0.0, %v2685
      %v2687 = vpop.f32.mrb[0].mxu0
      %2688 = vmatprep.mubr.bf16.mxu0 0
      %2689 = vmatmul.mubr.bf16.gmra.mrb[0].mxu0 %v1842
      %v2690 = vpop.f32.mrb[0].mxu0
      %v2691 = vadd.f32 0.0, %v2690
      %v2692 = vpop.f32.mrb[0].mxu0
      %v2693 = vpop.f32.mrb[0].mxu0
      %v2694 = vadd.f32 0.0, %v2693
      %v2695 = vpop.f32.mrb[0].mxu0
      %2696 = vmatprep.mubr.bf16.mxu0 0
      %2697 = vmatmul.mubr.bf16.gmra.mrb[0].mxu0 %v1845
      %v2698 = vpop.f32.mrb[0].mxu0
      %v2699 = vadd.f32 0.0, %v2698
      %v2700 = vpop.f32.mrb[0].mxu0
      %v2701 = vpop.f32.mrb[0].mxu0
      %v2702 = vadd.f32 0.0, %v2701
      %v2703 = vpop.f32.mrb[0].mxu0
      %2704 = vmatprep.mubr.bf16.mxu0 0
      %2705 = vmatmul.mubr.bf16.gmra.mrb[0].mxu0 %v1848
      %v2706 = vpop.f32.mrb[0].mxu0
      %v2707 = vadd.f32 0.0, %v2706
      %v2708 = vpop.f32.mrb[0].mxu0
      %v2709 = vpop.f32.mrb[0].mxu0
      %v2710 = vadd.f32 0.0, %v2709
      %v2711 = vpop.f32.mrb[0].mxu0
      %2712 = vmatprep.mubr.bf16.mxu0 0
      %2713 = vmatmul.mubr.bf16.gmra.mrb[0].mxu0 %v1851
      %v2714 = vpop.f32.mrb[0].mxu0
      %v2715 = vadd.f32 0.0, %v2714
      %v2716 = vpop.f32.mrb[0].mxu0
      %v2717 = vpop.f32.mrb[0].mxu0
      %v2718 = vadd.f32 0.0, %v2717
      %v2719 = vpop.f32.mrb[0].mxu0
      %2720 = vmatprep.mubr.bf16.mxu0 0
      %2721 = vmatmul.mubr.bf16.gmra.mrb[0].mxu0 %v1854
      %v2722 = vpop.f32.mrb[0].mxu0
      %v2723 = vadd.f32 0.0, %v2722
      %v2724 = vpop.f32.mrb[0].mxu0
      %v2725 = vpop.f32.mrb[0].mxu0
      %v2726 = vadd.f32 0.0, %v2725
      %v2727 = vpop.f32.mrb[0].mxu0
      %2728 = vmatprep.mubr.bf16.mxu0 0
      %2729 = vmatmul.mubr.bf16.gmra.mrb[0].mxu0 %v1857
      %v2730 = vpop.f32.mrb[0].mxu0
      %v2731 = vadd.f32 0.0, %v2730
      %v2732 = vpop.f32.mrb[0].mxu0
      %v2733 = vpop.f32.mrb[0].mxu0
      %v2734 = vadd.f32 0.0, %v2733
      %v2735 = vpop.f32.mrb[0].mxu0
      %2736 = vmatprep.mubr.bf16.mxu0 0
      %2737 = vmatmul.mubr.bf16.gmra.mrb[0].mxu0 %v1860
      %v2738 = vpop.f32.mrb[0].mxu0
      %v2739 = vadd.f32 0.0, %v2738
      %v2740 = vpop.f32.mrb[0].mxu0
      %v2741 = vpop.f32.mrb[0].mxu0
      %v2742 = vadd.f32 0.0, %v2741
      %v2743 = vpop.f32.mrb[0].mxu0
      %2744 = vmatprep.mubr.bf16.mxu0 0
      %2745 = vmatmul.mubr.bf16.gmra.mrb[0].mxu0 %v2571
      %v2746 = vpop.f32.mrb[0].mxu0
      %v2747 = vadd.f32 0.0, %v2746
      %v2748 = vpop.f32.mrb[0].mxu0
      %v2749 = vpop.f32.mrb[0].mxu0
      %v2750 = vadd.f32 0.0, %v2749
      %v2751 = vpop.f32.mrb[0].mxu0
      %2752 = vdwg.mxu0
      %v2753 = vadd.f32 %v2518, %v2611
      %v2754 = vadd.f32 %v2519, %v2614
      %v2755 = vadd.f32 %v2520, %v2619
      %v2756 = vadd.f32 %v2521, %v2622
      %v2757 = vadd.f32 %v2522, %v2627
      %v2758 = vadd.f32 %v2523, %v2630
      %v2759 = vadd.f32 %v2524, %v2635
      %v2760 = vadd.f32 %v2525, %v2638
      %v2761 = vadd.f32 %v2526, %v2643
      %v2762 = vadd.f32 %v2527, %v2646
      %v2763 = vadd.f32 %v2528, %v2651
      %v2764 = vadd.f32 %v2529, %v2654
      %v2765 = vadd.f32 %v2530, %v2659
      %v2766 = vadd.f32 %v2531, %v2662
      %v2767 = vadd.f32 %v2532, %v2667
      %v2768 = vadd.f32 %v2533, %v2670
      %v2769 = vadd.f32 %v2534, %v2675
      %v2770 = vadd.f32 %v2535, %v2678
      %v2771 = vadd.f32 %v2536, %v2683
      %v2772 = vadd.f32 %v2537, %v2686
      %v2773 = vadd.f32 %v2538, %v2691
      %v2774 = vadd.f32 %v2539, %v2694
      %v2775 = vadd.f32 %v2540, %v2699
      %v2776 = vadd.f32 %v2541, %v2702
      %v2777 = vadd.f32 %v2542, %v2707
      %v2778 = vadd.f32 %v2543, %v2710
      %v2779 = vadd.f32 %v2544, %v2715
      %v2780 = vadd.f32 %v2545, %v2718
      %v2781 = vadd.f32 %v2546, %v2723
      %v2782 = vadd.f32 %v2547, %v2726
      %v2783 = vadd.f32 %v2548, %v2731
      %v2784 = vadd.f32 %v2549, %v2734
      %v2785 = vadd.f32 %v2550, %v2739
      %v2786 = vadd.f32 %v2551, %v2742
      %v2787 = vadd.f32 %v2552, %v2747
      %v2788 = vadd.f32 %v2553, %v2750
      %v2789 = vld [vmem:[%s1 + $0xc] sm:$0x3]
      %v2792 = vunpack.c.l.b16 %v548
      %v2793 = vunpack.c.l.b16 %v549
      %v2794 = vpack.c.b16 %v2793, %v2792
      %v2796 = vsel %vm1046, %v2794, 0
      %v2799 = vsel %vm1101, %v2789, 0
      %2801 = vmatprep.subr.bf16.mxu0 0
      %2802 = vmatpush1.bf16.msra.mxu0 %v2799
      %2803 = vmatprep.subr.bf16.mxu0 0
      %2804 = vmatpush1.bf16.msra.mxu0 0
      %2805 = vmatprep.subr.bf16.mxu0 0
      %2806 = vmatpush1.bf16.msra.mxu0 0
      %2807 = vmatprep.subr.bf16.mxu0 0
      %2808 = vmatpush1.bf16.msra.mxu0 0
      %2809 = vmatprep.subr.bf16.mxu0 0
      %2810 = vmatpush1.bf16.msra.mxu0 0
      %2811 = vmatprep.subr.bf16.mxu0 0
      %2812 = vmatpush1.bf16.msra.mxu0 0
      %2813 = vmatprep.subr.bf16.mxu0 0
      %2814 = vmatpush1.bf16.msra.mxu0 0
      %2815 = vmatprep.subr.bf16.mxu0 0
      %2816 = vmatpush1.bf16.msra.mxu0 0
      %2817 = vmatprep.subr.bf16.mxu0 0
      %2818 = vmatpush1.bf16.msra.mxu0 0
      %2819 = vmatprep.subr.bf16.mxu0 0
      %2820 = vmatpush1.bf16.msra.mxu0 0
      %2821 = vmatprep.subr.bf16.mxu0 0
      %2822 = vmatpush1.bf16.msra.mxu0 0
      %2823 = vmatprep.subr.bf16.mxu0 0
      %2824 = vmatpush1.bf16.msra.mxu0 0
      %2825 = vmatprep.subr.bf16.mxu0 0
      %2826 = vmatpush1.bf16.msra.mxu0 0
      %2827 = vmatprep.subr.bf16.mxu0 0
      %2828 = vmatpush1.bf16.msra.mxu0 0
      %2829 = vmatprep.subr.bf16.mxu0 0
      %2830 = vmatpush1.bf16.msra.mxu0 0
      %2831 = vmatprep.subr.bf16.mxu0 0
      %2832 = vmatpush1.bf16.msra.mxu0 0
      %2833 = vmatprep.mubr.bf16.mxu0 0
      %2834 = vmatmul.mubr.bf16.gmra.mrb[0].mxu0 %v1379
      %v2835 = vpop.f32.mrb[0].mxu0
      %v2836 = vadd.f32 0.0, %v2835
      %v2837 = vpop.f32.mrb[0].mxu0
      %v2838 = vpop.f32.mrb[0].mxu0
      %v2839 = vadd.f32 0.0, %v2838
      %v2840 = vpop.f32.mrb[0].mxu0
      %2841 = vmatprep.mubr.bf16.mxu0 0
      %2842 = vmatmul.mubr.bf16.gmra.mrb[0].mxu0 %v1382
      %v2843 = vpop.f32.mrb[0].mxu0
      %v2844 = vadd.f32 0.0, %v2843
      %v2845 = vpop.f32.mrb[0].mxu0
      %v2846 = vpop.f32.mrb[0].mxu0
      %v2847 = vadd.f32 0.0, %v2846
      %v2848 = vpop.f32.mrb[0].mxu0
      %2849 = vmatprep.mubr.bf16.mxu0 0
      %2850 = vmatmul.mubr.bf16.gmra.mrb[0].mxu0 %v1385
      %v2851 = vpop.f32.mrb[0].mxu0
      %v2852 = vadd.f32 0.0, %v2851
      %v2853 = vpop.f32.mrb[0].mxu0
      %v2854 = vpop.f32.mrb[0].mxu0
      %v2855 = vadd.f32 0.0, %v2854
      %v2856 = vpop.f32.mrb[0].mxu0
      %2857 = vmatprep.mubr.bf16.mxu0 0
      %2858 = vmatmul.mubr.bf16.gmra.mrb[0].mxu0 %v1388
      %v2859 = vpop.f32.mrb[0].mxu0
      %v2860 = vadd.f32 0.0, %v2859
      %v2861 = vpop.f32.mrb[0].mxu0
      %v2862 = vpop.f32.mrb[0].mxu0
      %v2863 = vadd.f32 0.0, %v2862
      %v2864 = vpop.f32.mrb[0].mxu0
      %2865 = vmatprep.mubr.bf16.mxu0 0
      %2866 = vmatmul.mubr.bf16.gmra.mrb[0].mxu0 %v1391
      %v2867 = vpop.f32.mrb[0].mxu0
      %v2868 = vadd.f32 0.0, %v2867
      %v2869 = vpop.f32.mrb[0].mxu0
      %v2870 = vpop.f32.mrb[0].mxu0
      %v2871 = vadd.f32 0.0, %v2870
      %v2872 = vpop.f32.mrb[0].mxu0
      %2873 = vmatprep.mubr.bf16.mxu0 0
      %2874 = vmatmul.mubr.bf16.gmra.mrb[0].mxu0 %v1394
      %v2875 = vpop.f32.mrb[0].mxu0
      %v2876 = vadd.f32 0.0, %v2875
      %v2877 = vpop.f32.mrb[0].mxu0
      %v2878 = vpop.f32.mrb[0].mxu0
      %v2879 = vadd.f32 0.0, %v2878
      %v2880 = vpop.f32.mrb[0].mxu0
      %2881 = vmatprep.mubr.bf16.mxu0 0
      %2882 = vmatmul.mubr.bf16.gmra.mrb[0].mxu0 %v1397
      %v2883 = vpop.f32.mrb[0].mxu0
      %v2884 = vadd.f32 0.0, %v2883
      %v2885 = vpop.f32.mrb[0].mxu0
      %v2886 = vpop.f32.mrb[0].mxu0
      %v2887 = vadd.f32 0.0, %v2886
      %v2888 = vpop.f32.mrb[0].mxu0
      %2889 = vmatprep.mubr.bf16.mxu0 0
      %2890 = vmatmul.mubr.bf16.gmra.mrb[0].mxu0 %v1400
      %v2891 = vpop.f32.mrb[0].mxu0
      %v2892 = vadd.f32 0.0, %v2891
      %v2893 = vpop.f32.mrb[0].mxu0
      %v2894 = vpop.f32.mrb[0].mxu0
      %v2895 = vadd.f32 0.0, %v2894
      %v2896 = vpop.f32.mrb[0].mxu0
      %2897 = vmatprep.mubr.bf16.mxu0 0
      %2898 = vmatmul.mubr.bf16.gmra.mrb[0].mxu0 %v1403
      %v2899 = vpop.f32.mrb[0].mxu0
      %v2900 = vadd.f32 0.0, %v2899
      %v2901 = vpop.f32.mrb[0].mxu0
      %v2902 = vpop.f32.mrb[0].mxu0
      %v2903 = vadd.f32 0.0, %v2902
      %v2904 = vpop.f32.mrb[0].mxu0
      %2905 = vmatprep.mubr.bf16.mxu0 0
      %2906 = vmatmul.mubr.bf16.gmra.mrb[0].mxu0 %v1406
      %v2907 = vpop.f32.mrb[0].mxu0
      %v2908 = vadd.f32 0.0, %v2907
      %v2909 = vpop.f32.mrb[0].mxu0
      %v2910 = vpop.f32.mrb[0].mxu0
      %v2911 = vadd.f32 0.0, %v2910
      %v2912 = vpop.f32.mrb[0].mxu0
      %2913 = vmatprep.mubr.bf16.mxu0 0
      %2914 = vmatmul.mubr.bf16.gmra.mrb[0].mxu0 %v1409
      %v2915 = vpop.f32.mrb[0].mxu0
      %v2916 = vadd.f32 0.0, %v2915
      %v2917 = vpop.f32.mrb[0].mxu0
      %v2918 = vpop.f32.mrb[0].mxu0
      %v2919 = vadd.f32 0.0, %v2918
      %v2920 = vpop.f32.mrb[0].mxu0
      %2921 = vmatprep.mubr.bf16.mxu0 0
      %2922 = vmatmul.mubr.bf16.gmra.mrb[0].mxu0 %v1412
      %v2923 = vpop.f32.mrb[0].mxu0
      %v2924 = vadd.f32 0.0, %v2923
      %v2925 = vpop.f32.mrb[0].mxu0
      %v2926 = vpop.f32.mrb[0].mxu0
      %v2927 = vadd.f32 0.0, %v2926
      %v2928 = vpop.f32.mrb[0].mxu0
      %2929 = vmatprep.mubr.bf16.mxu0 0
      %2930 = vmatmul.mubr.bf16.gmra.mrb[0].mxu0 %v1415
      %v2931 = vpop.f32.mrb[0].mxu0
      %v2932 = vadd.f32 0.0, %v2931
      %v2933 = vpop.f32.mrb[0].mxu0
      %v2934 = vpop.f32.mrb[0].mxu0
      %v2935 = vadd.f32 0.0, %v2934
      %v2936 = vpop.f32.mrb[0].mxu0
      %2937 = vmatprep.mubr.bf16.mxu0 0
      %2938 = vmatmul.mubr.bf16.gmra.mrb[0].mxu0 %v1418
      %v2939 = vpop.f32.mrb[0].mxu0
      %v2940 = vadd.f32 0.0, %v2939
      %v2941 = vpop.f32.mrb[0].mxu0
      %v2942 = vpop.f32.mrb[0].mxu0
      %v2943 = vadd.f32 0.0, %v2942
      %v2944 = vpop.f32.mrb[0].mxu0
      %2945 = vmatprep.mubr.bf16.mxu0 0
      %2946 = vmatmul.mubr.bf16.gmra.mrb[0].mxu0 %v1421
      %v2947 = vpop.f32.mrb[0].mxu0
      %v2948 = vadd.f32 0.0, %v2947
      %v2949 = vpop.f32.mrb[0].mxu0
      %v2950 = vpop.f32.mrb[0].mxu0
      %v2951 = vadd.f32 0.0, %v2950
      %v2952 = vpop.f32.mrb[0].mxu0
      %2953 = vmatprep.mubr.bf16.mxu0 0
      %2954 = vmatmul.mubr.bf16.gmra.mrb[0].mxu0 %v1424
      %v2955 = vpop.f32.mrb[0].mxu0
      %v2956 = vadd.f32 0.0, %v2955
      %v2957 = vpop.f32.mrb[0].mxu0
      %v2958 = vpop.f32.mrb[0].mxu0
      %v2959 = vadd.f32 0.0, %v2958
      %v2960 = vpop.f32.mrb[0].mxu0
      %2961 = vmatprep.mubr.bf16.mxu0 0
      %2962 = vmatmul.mubr.bf16.gmra.mrb[0].mxu0 %v2089
      %v2963 = vpop.f32.mrb[0].mxu0
      %v2964 = vadd.f32 0.0, %v2963
      %v2965 = vpop.f32.mrb[0].mxu0
      %v2966 = vpop.f32.mrb[0].mxu0
      %v2967 = vadd.f32 0.0, %v2966
      %v2968 = vpop.f32.mrb[0].mxu0
      %2969 = vmatprep.mubr.bf16.mxu0 0
      %2970 = vmatmul.mubr.bf16.gmra.mrb[0].mxu0 %v2796
      %v2971 = vpop.f32.mrb[0].mxu0
      %v2972 = vadd.f32 0.0, %v2971
      %v2973 = vpop.f32.mrb[0].mxu0
      %v2974 = vpop.f32.mrb[0].mxu0
      %v2975 = vadd.f32 0.0, %v2974
      %v2976 = vpop.f32.mrb[0].mxu0
      %2977 = vdwg.mxu0
      %v2978 = vadd.f32 %v2753, %v2836
      %v2979 = vadd.f32 %v2754, %v2839
      %v2980 = vadd.f32 %v2755, %v2844
      %v2981 = vadd.f32 %v2756, %v2847
      %v2982 = vadd.f32 %v2757, %v2852
      %v2983 = vadd.f32 %v2758, %v2855
      %v2984 = vadd.f32 %v2759, %v2860
      %v2985 = vadd.f32 %v2760, %v2863
      %v2986 = vadd.f32 %v2761, %v2868
      %v2987 = vadd.f32 %v2762, %v2871
      %v2988 = vadd.f32 %v2763, %v2876
      %v2989 = vadd.f32 %v2764, %v2879
      %v2990 = vadd.f32 %v2765, %v2884
      %v2991 = vadd.f32 %v2766, %v2887
      %v2992 = vadd.f32 %v2767, %v2892
      %v2993 = vadd.f32 %v2768, %v2895
      %v2994 = vadd.f32 %v2769, %v2900
      %v2995 = vadd.f32 %v2770, %v2903
      %v2996 = vadd.f32 %v2771, %v2908
      %v2997 = vadd.f32 %v2772, %v2911
      %v2998 = vadd.f32 %v2773, %v2916
      %v2999 = vadd.f32 %v2774, %v2919
      %v3000 = vadd.f32 %v2775, %v2924
      %v3001 = vadd.f32 %v2776, %v2927
      %v3002 = vadd.f32 %v2777, %v2932
      %v3003 = vadd.f32 %v2778, %v2935
      %v3004 = vadd.f32 %v2779, %v2940
      %v3005 = vadd.f32 %v2780, %v2943
      %v3006 = vadd.f32 %v2781, %v2948
      %v3007 = vadd.f32 %v2782, %v2951
      %v3008 = vadd.f32 %v2783, %v2956
      %v3009 = vadd.f32 %v2784, %v2959
      %v3010 = vadd.f32 %v2785, %v2964
      %v3011 = vadd.f32 %v2786, %v2967
      %v3012 = vadd.f32 %v2787, %v2972
      %v3013 = vadd.f32 %v2788, %v2975
      %v3015 = vshrl.u32 %v548, 16
      %v3017 = vrot.slane %v3015, 4
      %v3018 = vshll.u32 %v548, 16
      %v3020 = vrot.slane %v3018, 5
      %v3021 = vor.u32 %v3017, %v3020
      %v3022 = vrot.slane %v3021, 4
      %v3024 = vshll.u32 %v549, 16
      %v3026 = vrot.slane %v3024, 5
      %v3027 = vsel %vm554, %v3022, %v3026
      %v3028 = vshrl.u32 %v549, 16
      %v3030 = vrot.slane %v3028, 4
      %v3031 = vor.u32 %v3030, %v3026
      %v3032 = vrot.slane %v3031, 4
      %v3034 = vshll.u32 %v550, 16
      %v3036 = vrot.slane %v3034, 5
      %v3037 = vsel %vm554, %v3032, %v3036
      %v3038 = vld [vmem:[%s1 + $0xc] sm:$0xc]
      %v3039 = vunpack.c.l.b16 %v3027
      %v3040 = vunpack.c.l.b16 %v3037
      %v3041 = vpack.c.b16 %v3040, %v3039
      %v3043 = vunpack.c.l.b16 %v3038
      %v3044 = vpack.c.b16 %v3043, %v3043
      %v3045 = vrot.slane %v3044, 2
      %v3047 = vsel %vm1046, %v3041, 0
      %v3050 = vsel %vm1101, %v3045, 0
      %3052 = vmatprep.subr.bf16.mxu0 0
      %3053 = vmatpush1.bf16.msra.mxu0 %v3050
      %3054 = vmatprep.subr.bf16.mxu0 0
      %3055 = vmatpush1.bf16.msra.mxu0 0
      %3056 = vmatprep.subr.bf16.mxu0 0
      %3057 = vmatpush1.bf16.msra.mxu0 0
      %3058 = vmatprep.subr.bf16.mxu0 0
      %3059 = vmatpush1.bf16.msra.mxu0 0
      %3060 = vmatprep.subr.bf16.mxu0 0
      %3061 = vmatpush1.bf16.msra.mxu0 0
      %3062 = vmatprep.subr.bf16.mxu0 0
      %3063 = vmatpush1.bf16.msra.mxu0 0
      %3064 = vmatprep.subr.bf16.mxu0 0
      %3065 = vmatpush1.bf16.msra.mxu0 0
      %3066 = vmatprep.subr.bf16.mxu0 0
      %3067 = vmatpush1.bf16.msra.mxu0 0
      %3068 = vmatprep.subr.bf16.mxu0 0
      %3069 = vmatpush1.bf16.msra.mxu0 0
      %3070 = vmatprep.subr.bf16.mxu0 0
      %3071 = vmatpush1.bf16.msra.mxu0 0
      %3072 = vmatprep.subr.bf16.mxu0 0
      %3073 = vmatpush1.bf16.msra.mxu0 0
      %3074 = vmatprep.subr.bf16.mxu0 0
      %3075 = vmatpush1.bf16.msra.mxu0 0
      %3076 = vmatprep.subr.bf16.mxu0 0
      %3077 = vmatpush1.bf16.msra.mxu0 0
      %3078 = vmatprep.subr.bf16.mxu0 0
      %3079 = vmatpush1.bf16.msra.mxu0 0
      %3080 = vmatprep.subr.bf16.mxu0 0
      %3081 = vmatpush1.bf16.msra.mxu0 0
      %3082 = vmatprep.subr.bf16.mxu0 0
      %3083 = vmatpush1.bf16.msra.mxu0 0
      %3084 = vmatprep.mubr.bf16.mxu0 0
      %3085 = vmatmul.mubr.bf16.gmra.mrb[0].mxu0 %v1054
      %v3086 = vpop.f32.mrb[0].mxu0
      %v3087 = vadd.f32 0.0, %v3086
      %v3088 = vpop.f32.mrb[0].mxu0
      %v3089 = vpop.f32.mrb[0].mxu0
      %v3090 = vadd.f32 0.0, %v3089
      %v3091 = vpop.f32.mrb[0].mxu0
      %3092 = vmatprep.mubr.bf16.mxu0 0
      %3093 = vmatmul.mubr.bf16.gmra.mrb[0].mxu0 %v1057
      %v3094 = vpop.f32.mrb[0].mxu0
      %v3095 = vadd.f32 0.0, %v3094
      %v3096 = vpop.f32.mrb[0].mxu0
      %v3097 = vpop.f32.mrb[0].mxu0
      %v3098 = vadd.f32 0.0, %v3097
      %v3099 = vpop.f32.mrb[0].mxu0
      %3100 = vmatprep.mubr.bf16.mxu0 0
      %3101 = vmatmul.mubr.bf16.gmra.mrb[0].mxu0 %v1060
      %v3102 = vpop.f32.mrb[0].mxu0
      %v3103 = vadd.f32 0.0, %v3102
      %v3104 = vpop.f32.mrb[0].mxu0
      %v3105 = vpop.f32.mrb[0].mxu0
      %v3106 = vadd.f32 0.0, %v3105
      %v3107 = vpop.f32.mrb[0].mxu0
      %3108 = vmatprep.mubr.bf16.mxu0 0
      %3109 = vmatmul.mubr.bf16.gmra.mrb[0].mxu0 %v1063
      %v3110 = vpop.f32.mrb[0].mxu0
      %v3111 = vadd.f32 0.0, %v3110
      %v3112 = vpop.f32.mrb[0].mxu0
      %v3113 = vpop.f32.mrb[0].mxu0
      %v3114 = vadd.f32 0.0, %v3113
      %v3115 = vpop.f32.mrb[0].mxu0
      %3116 = vmatprep.mubr.bf16.mxu0 0
      %3117 = vmatmul.mubr.bf16.gmra.mrb[0].mxu0 %v1066
      %v3118 = vpop.f32.mrb[0].mxu0
      %v3119 = vadd.f32 0.0, %v3118
      %v3120 = vpop.f32.mrb[0].mxu0
      %v3121 = vpop.f32.mrb[0].mxu0
      %v3122 = vadd.f32 0.0, %v3121
      %v3123 = vpop.f32.mrb[0].mxu0
      %3124 = vmatprep.mubr.bf16.mxu0 0
      %3125 = vmatmul.mubr.bf16.gmra.mrb[0].mxu0 %v1069
      %v3126 = vpop.f32.mrb[0].mxu0
      %v3127 = vadd.f32 0.0, %v3126
      %v3128 = vpop.f32.mrb[0].mxu0
      %v3129 = vpop.f32.mrb[0].mxu0
      %v3130 = vadd.f32 0.0, %v3129
      %v3131 = vpop.f32.mrb[0].mxu0
      %3132 = vmatprep.mubr.bf16.mxu0 0
      %3133 = vmatmul.mubr.bf16.gmra.mrb[0].mxu0 %v1072
      %v3134 = vpop.f32.mrb[0].mxu0
      %v3135 = vadd.f32 0.0, %v3134
      %v3136 = vpop.f32.mrb[0].mxu0
      %v3137 = vpop.f32.mrb[0].mxu0
      %v3138 = vadd.f32 0.0, %v3137
      %v3139 = vpop.f32.mrb[0].mxu0
      %3140 = vmatprep.mubr.bf16.mxu0 0
      %3141 = vmatmul.mubr.bf16.gmra.mrb[0].mxu0 %v1075
      %v3142 = vpop.f32.mrb[0].mxu0
      %v3143 = vadd.f32 0.0, %v3142
      %v3144 = vpop.f32.mrb[0].mxu0
      %v3145 = vpop.f32.mrb[0].mxu0
      %v3146 = vadd.f32 0.0, %v3145
      %v3147 = vpop.f32.mrb[0].mxu0
      %3148 = vmatprep.mubr.bf16.mxu0 0
      %3149 = vmatmul.mubr.bf16.gmra.mrb[0].mxu0 %v1078
      %v3150 = vpop.f32.mrb[0].mxu0
      %v3151 = vadd.f32 0.0, %v3150
      %v3152 = vpop.f32.mrb[0].mxu0
      %v3153 = vpop.f32.mrb[0].mxu0
      %v3154 = vadd.f32 0.0, %v3153
      %v3155 = vpop.f32.mrb[0].mxu0
      %3156 = vmatprep.mubr.bf16.mxu0 0
      %3157 = vmatmul.mubr.bf16.gmra.mrb[0].mxu0 %v1081
      %v3158 = vpop.f32.mrb[0].mxu0
      %v3159 = vadd.f32 0.0, %v3158
      %v3160 = vpop.f32.mrb[0].mxu0
      %v3161 = vpop.f32.mrb[0].mxu0
      %v3162 = vadd.f32 0.0, %v3161
      %v3163 = vpop.f32.mrb[0].mxu0
      %3164 = vmatprep.mubr.bf16.mxu0 0
      %3165 = vmatmul.mubr.bf16.gmra.mrb[0].mxu0 %v1084
      %v3166 = vpop.f32.mrb[0].mxu0
      %v3167 = vadd.f32 0.0, %v3166
      %v3168 = vpop.f32.mrb[0].mxu0
      %v3169 = vpop.f32.mrb[0].mxu0
      %v3170 = vadd.f32 0.0, %v3169
      %v3171 = vpop.f32.mrb[0].mxu0
      %3172 = vmatprep.mubr.bf16.mxu0 0
      %3173 = vmatmul.mubr.bf16.gmra.mrb[0].mxu0 %v1087
      %v3174 = vpop.f32.mrb[0].mxu0
      %v3175 = vadd.f32 0.0, %v3174
      %v3176 = vpop.f32.mrb[0].mxu0
      %v3177 = vpop.f32.mrb[0].mxu0
      %v3178 = vadd.f32 0.0, %v3177
      %v3179 = vpop.f32.mrb[0].mxu0
      %3180 = vmatprep.mubr.bf16.mxu0 0
      %3181 = vmatmul.mubr.bf16.gmra.mrb[0].mxu0 %v1090
      %v3182 = vpop.f32.mrb[0].mxu0
      %v3183 = vadd.f32 0.0, %v3182
      %v3184 = vpop.f32.mrb[0].mxu0
      %v3185 = vpop.f32.mrb[0].mxu0
      %v3186 = vadd.f32 0.0, %v3185
      %v3187 = vpop.f32.mrb[0].mxu0
      %3188 = vmatprep.mubr.bf16.mxu0 0
      %3189 = vmatmul.mubr.bf16.gmra.mrb[0].mxu0 %v1093
      %v3190 = vpop.f32.mrb[0].mxu0
      %v3191 = vadd.f32 0.0, %v3190
      %v3192 = vpop.f32.mrb[0].mxu0
      %v3193 = vpop.f32.mrb[0].mxu0
      %v3194 = vadd.f32 0.0, %v3193
      %v3195 = vpop.f32.mrb[0].mxu0
      %3196 = vmatprep.mubr.bf16.mxu0 0
      %3197 = vmatmul.mubr.bf16.gmra.mrb[0].mxu0 %v1096
      %v3198 = vpop.f32.mrb[0].mxu0
      %v3199 = vadd.f32 0.0, %v3198
      %v3200 = vpop.f32.mrb[0].mxu0
      %v3201 = vpop.f32.mrb[0].mxu0
      %v3202 = vadd.f32 0.0, %v3201
      %v3203 = vpop.f32.mrb[0].mxu0
      %3204 = vmatprep.mubr.bf16.mxu0 0
      %3205 = vmatmul.mubr.bf16.gmra.mrb[0].mxu0 %v1099
      %v3206 = vpop.f32.mrb[0].mxu0
      %v3207 = vadd.f32 0.0, %v3206
      %v3208 = vpop.f32.mrb[0].mxu0
      %v3209 = vpop.f32.mrb[0].mxu0
      %v3210 = vadd.f32 0.0, %v3209
      %v3211 = vpop.f32.mrb[0].mxu0
      %3212 = vmatprep.mubr.bf16.mxu0 0
      %3213 = vmatmul.mubr.bf16.gmra.mrb[0].mxu0 %v2336
      %v3214 = vpop.f32.mrb[0].mxu0
      %v3215 = vadd.f32 0.0, %v3214
      %v3216 = vpop.f32.mrb[0].mxu0
      %v3217 = vpop.f32.mrb[0].mxu0
      %v3218 = vadd.f32 0.0, %v3217
      %v3219 = vpop.f32.mrb[0].mxu0
      %3220 = vmatprep.mubr.bf16.mxu0 0
      %3221 = vmatmul.mubr.bf16.gmra.mrb[0].mxu0 %v3047
      %v3222 = vpop.f32.mrb[0].mxu0
      %v3223 = vadd.f32 0.0, %v3222
      %v3224 = vpop.f32.mrb[0].mxu0
      %v3225 = vpop.f32.mrb[0].mxu0
      %v3226 = vadd.f32 0.0, %v3225
      %v3227 = vpop.f32.mrb[0].mxu0
      %3228 = vdwg.mxu0
      %v3229 = vadd.f32 %v2978, %v3087
      %v3230 = vadd.f32 %v2979, %v3090
      %v3231 = vadd.f32 %v2980, %v3095
      %v3232 = vadd.f32 %v2981, %v3098
      %v3233 = vadd.f32 %v2982, %v3103
      %v3234 = vadd.f32 %v2983, %v3106
      %v3235 = vadd.f32 %v2984, %v3111
      %v3236 = vadd.f32 %v2985, %v3114
      %v3237 = vadd.f32 %v2986, %v3119
      %v3238 = vadd.f32 %v2987, %v3122
      %v3239 = vadd.f32 %v2988, %v3127
      %v3240 = vadd.f32 %v2989, %v3130
      %v3241 = vadd.f32 %v2990, %v3135
      %v3242 = vadd.f32 %v2991, %v3138
      %v3243 = vadd.f32 %v2992, %v3143
      %v3244 = vadd.f32 %v2993, %v3146
      %v3245 = vadd.f32 %v2994, %v3151
      %v3246 = vadd.f32 %v2995, %v3154
      %v3247 = vadd.f32 %v2996, %v3159
      %v3248 = vadd.f32 %v2997, %v3162
      %v3249 = vadd.f32 %v2998, %v3167
      %v3250 = vadd.f32 %v2999, %v3170
      %v3251 = vadd.f32 %v3000, %v3175
      %v3252 = vadd.f32 %v3001, %v3178
      %v3253 = vadd.f32 %v3002, %v3183
      %v3254 = vadd.f32 %v3003, %v3186
      %v3255 = vadd.f32 %v3004, %v3191
      %v3256 = vadd.f32 %v3005, %v3194
      %v3257 = vadd.f32 %v3006, %v3199
      %v3258 = vadd.f32 %v3007, %v3202
      %v3259 = vadd.f32 %v3008, %v3207
      %v3260 = vadd.f32 %v3009, %v3210
      %v3261 = vadd.f32 %v3010, %v3215
      %v3262 = vadd.f32 %v3011, %v3218
      %v3263 = vadd.f32 %v3012, %v3223
      %v3264 = vadd.f32 %v3013, %v3226
      %v3266 = vrot.slane %v548, 5
      %v3267 = vrot.slane %v3266, 4
      %v3268 = vrot.slane %v549, 5
      %v3269 = vsel %vm1626, %v3267, %v3268
      %v3270 = vrot.slane %v3268, 4
      %v3271 = vrot.slane %v550, 5
      %v3272 = vsel %vm1626, %v3270, %v3271
      %v3273 = vld [vmem:[%s1 + $0x10] sm:$0x3]
      %v3274 = vunpack.c.l.b16 %v3269
      %v3275 = vunpack.c.l.b16 %v3272
      %v3276 = vpack.c.b16 %v3275, %v3274
      %v3278 = vsel %vm1046, %v3276, 0
      %v3281 = vsel %vm1101, %v3273, 0
      %3283 = vmatprep.subr.bf16.mxu0 0
      %3284 = vmatpush1.bf16.msra.mxu0 %v3281
      %3285 = vmatprep.subr.bf16.mxu0 0
      %3286 = vmatpush1.bf16.msra.mxu0 0
      %3287 = vmatprep.subr.bf16.mxu0 0
      %3288 = vmatpush1.bf16.msra.mxu0 0
      %3289 = vmatprep.subr.bf16.mxu0 0
      %3290 = vmatpush1.bf16.msra.mxu0 0
      %3291 = vmatprep.subr.bf16.mxu0 0
      %3292 = vmatpush1.bf16.msra.mxu0 0
      %3293 = vmatprep.subr.bf16.mxu0 0
      %3294 = vmatpush1.bf16.msra.mxu0 0
      %3295 = vmatprep.subr.bf16.mxu0 0
      %3296 = vmatpush1.bf16.msra.mxu0 0
      %3297 = vmatprep.subr.bf16.mxu0 0
      %3298 = vmatpush1.bf16.msra.mxu0 0
      %3299 = vmatprep.subr.bf16.mxu0 0
      %3300 = vmatpush1.bf16.msra.mxu0 0
      %3301 = vmatprep.subr.bf16.mxu0 0
      %3302 = vmatpush1.bf16.msra.mxu0 0
      %3303 = vmatprep.subr.bf16.mxu0 0
      %3304 = vmatpush1.bf16.msra.mxu0 0
      %3305 = vmatprep.subr.bf16.mxu0 0
      %3306 = vmatpush1.bf16.msra.mxu0 0
      %3307 = vmatprep.subr.bf16.mxu0 0
      %3308 = vmatpush1.bf16.msra.mxu0 0
      %3309 = vmatprep.subr.bf16.mxu0 0
      %3310 = vmatpush1.bf16.msra.mxu0 0
      %3311 = vmatprep.subr.bf16.mxu0 0
      %3312 = vmatpush1.bf16.msra.mxu0 0
      %3313 = vmatprep.subr.bf16.mxu0 0
      %3314 = vmatpush1.bf16.msra.mxu0 0
      %3315 = vmatprep.mubr.bf16.mxu0 0
      %3316 = vmatmul.mubr.bf16.gmra.mrb[0].mxu0 %v1815
      %v3317 = vpop.f32.mrb[0].mxu0
      %v3318 = vadd.f32 0.0, %v3317
      %v3319 = vpop.f32.mrb[0].mxu0
      %v3320 = vpop.f32.mrb[0].mxu0
      %v3321 = vadd.f32 0.0, %v3320
      %v3322 = vpop.f32.mrb[0].mxu0
      %3323 = vmatprep.mubr.bf16.mxu0 0
      %3324 = vmatmul.mubr.bf16.gmra.mrb[0].mxu0 %v1818
      %v3325 = vpop.f32.mrb[0].mxu0
      %v3326 = vadd.f32 0.0, %v3325
      %v3327 = vpop.f32.mrb[0].mxu0
      %v3328 = vpop.f32.mrb[0].mxu0
      %v3329 = vadd.f32 0.0, %v3328
      %v3330 = vpop.f32.mrb[0].mxu0
      %3331 = vmatprep.mubr.bf16.mxu0 0
      %3332 = vmatmul.mubr.bf16.gmra.mrb[0].mxu0 %v1821
      %v3333 = vpop.f32.mrb[0].mxu0
      %v3334 = vadd.f32 0.0, %v3333
      %v3335 = vpop.f32.mrb[0].mxu0
      %v3336 = vpop.f32.mrb[0].mxu0
      %v3337 = vadd.f32 0.0, %v3336
      %v3338 = vpop.f32.mrb[0].mxu0
      %3339 = vmatprep.mubr.bf16.mxu0 0
      %3340 = vmatmul.mubr.bf16.gmra.mrb[0].mxu0 %v1824
      %v3341 = vpop.f32.mrb[0].mxu0
      %v3342 = vadd.f32 0.0, %v3341
      %v3343 = vpop.f32.mrb[0].mxu0
      %v3344 = vpop.f32.mrb[0].mxu0
      %v3345 = vadd.f32 0.0, %v3344
      %v3346 = vpop.f32.mrb[0].mxu0
      %3347 = vmatprep.mubr.bf16.mxu0 0
      %3348 = vmatmul.mubr.bf16.gmra.mrb[0].mxu0 %v1827
      %v3349 = vpop.f32.mrb[0].mxu0
      %v3350 = vadd.f32 0.0, %v3349
      %v3351 = vpop.f32.mrb[0].mxu0
      %v3352 = vpop.f32.mrb[0].mxu0
      %v3353 = vadd.f32 0.0, %v3352
      %v3354 = vpop.f32.mrb[0].mxu0
      %3355 = vmatprep.mubr.bf16.mxu0 0
      %3356 = vmatmul.mubr.bf16.gmra.mrb[0].mxu0 %v1830
      %v3357 = vpop.f32.mrb[0].mxu0
      %v3358 = vadd.f32 0.0, %v3357
      %v3359 = vpop.f32.mrb[0].mxu0
      %v3360 = vpop.f32.mrb[0].mxu0
      %v3361 = vadd.f32 0.0, %v3360
      %v3362 = vpop.f32.mrb[0].mxu0
      %3363 = vmatprep.mubr.bf16.mxu0 0
      %3364 = vmatmul.mubr.bf16.gmra.mrb[0].mxu0 %v1833
      %v3365 = vpop.f32.mrb[0].mxu0
      %v3366 = vadd.f32 0.0, %v3365
      %v3367 = vpop.f32.mrb[0].mxu0
      %v3368 = vpop.f32.mrb[0].mxu0
      %v3369 = vadd.f32 0.0, %v3368
      %v3370 = vpop.f32.mrb[0].mxu0
      %3371 = vmatprep.mubr.bf16.mxu0 0
      %3372 = vmatmul.mubr.bf16.gmra.mrb[0].mxu0 %v1836
      %v3373 = vpop.f32.mrb[0].mxu0
      %v3374 = vadd.f32 0.0, %v3373
      %v3375 = vpop.f32.mrb[0].mxu0
      %v3376 = vpop.f32.mrb[0].mxu0
      %v3377 = vadd.f32 0.0, %v3376
      %v3378 = vpop.f32.mrb[0].mxu0
      %3379 = vmatprep.mubr.bf16.mxu0 0
      %3380 = vmatmul.mubr.bf16.gmra.mrb[0].mxu0 %v1839
      %v3381 = vpop.f32.mrb[0].mxu0
      %v3382 = vadd.f32 0.0, %v3381
      %v3383 = vpop.f32.mrb[0].mxu0
      %v3384 = vpop.f32.mrb[0].mxu0
      %v3385 = vadd.f32 0.0, %v3384
      %v3386 = vpop.f32.mrb[0].mxu0
      %3387 = vmatprep.mubr.bf16.mxu0 0
      %3388 = vmatmul.mubr.bf16.gmra.mrb[0].mxu0 %v1842
      %v3389 = vpop.f32.mrb[0].mxu0
      %v3390 = vadd.f32 0.0, %v3389
      %v3391 = vpop.f32.mrb[0].mxu0
      %v3392 = vpop.f32.mrb[0].mxu0
      %v3393 = vadd.f32 0.0, %v3392
      %v3394 = vpop.f32.mrb[0].mxu0
      %3395 = vmatprep.mubr.bf16.mxu0 0
      %3396 = vmatmul.mubr.bf16.gmra.mrb[0].mxu0 %v1845
      %v3397 = vpop.f32.mrb[0].mxu0
      %v3398 = vadd.f32 0.0, %v3397
      %v3399 = vpop.f32.mrb[0].mxu0
      %v3400 = vpop.f32.mrb[0].mxu0
      %v3401 = vadd.f32 0.0, %v3400
      %v3402 = vpop.f32.mrb[0].mxu0
      %3403 = vmatprep.mubr.bf16.mxu0 0
      %3404 = vmatmul.mubr.bf16.gmra.mrb[0].mxu0 %v1848
      %v3405 = vpop.f32.mrb[0].mxu0
      %v3406 = vadd.f32 0.0, %v3405
      %v3407 = vpop.f32.mrb[0].mxu0
      %v3408 = vpop.f32.mrb[0].mxu0
      %v3409 = vadd.f32 0.0, %v3408
      %v3410 = vpop.f32.mrb[0].mxu0
      %3411 = vmatprep.mubr.bf16.mxu0 0
      %3412 = vmatmul.mubr.bf16.gmra.mrb[0].mxu0 %v1851
      %v3413 = vpop.f32.mrb[0].mxu0
      %v3414 = vadd.f32 0.0, %v3413
      %v3415 = vpop.f32.mrb[0].mxu0
      %v3416 = vpop.f32.mrb[0].mxu0
      %v3417 = vadd.f32 0.0, %v3416
      %v3418 = vpop.f32.mrb[0].mxu0
      %3419 = vmatprep.mubr.bf16.mxu0 0
      %3420 = vmatmul.mubr.bf16.gmra.mrb[0].mxu0 %v1854
      %v3421 = vpop.f32.mrb[0].mxu0
      %v3422 = vadd.f32 0.0, %v3421
      %v3423 = vpop.f32.mrb[0].mxu0
      %v3424 = vpop.f32.mrb[0].mxu0
      %v3425 = vadd.f32 0.0, %v3424
      %v3426 = vpop.f32.mrb[0].mxu0
      %3427 = vmatprep.mubr.bf16.mxu0 0
      %3428 = vmatmul.mubr.bf16.gmra.mrb[0].mxu0 %v1857
      %v3429 = vpop.f32.mrb[0].mxu0
      %v3430 = vadd.f32 0.0, %v3429
      %v3431 = vpop.f32.mrb[0].mxu0
      %v3432 = vpop.f32.mrb[0].mxu0
      %v3433 = vadd.f32 0.0, %v3432
      %v3434 = vpop.f32.mrb[0].mxu0
      %3435 = vmatprep.mubr.bf16.mxu0 0
      %3436 = vmatmul.mubr.bf16.gmra.mrb[0].mxu0 %v1860
      %v3437 = vpop.f32.mrb[0].mxu0
      %v3438 = vadd.f32 0.0, %v3437
      %v3439 = vpop.f32.mrb[0].mxu0
      %v3440 = vpop.f32.mrb[0].mxu0
      %v3441 = vadd.f32 0.0, %v3440
      %v3442 = vpop.f32.mrb[0].mxu0
      %3443 = vmatprep.mubr.bf16.mxu0 0
      %3444 = vmatmul.mubr.bf16.gmra.mrb[0].mxu0 %v2571
      %v3445 = vpop.f32.mrb[0].mxu0
      %v3446 = vadd.f32 0.0, %v3445
      %v3447 = vpop.f32.mrb[0].mxu0
      %v3448 = vpop.f32.mrb[0].mxu0
      %v3449 = vadd.f32 0.0, %v3448
      %v3450 = vpop.f32.mrb[0].mxu0
      %3451 = vmatprep.mubr.bf16.mxu0 0
      %3452 = vmatmul.mubr.bf16.gmra.mrb[0].mxu0 %v3278
      %v3453 = vpop.f32.mrb[0].mxu0
      %v3454 = vadd.f32 0.0, %v3453
      %v3455 = vpop.f32.mrb[0].mxu0
      %v3456 = vpop.f32.mrb[0].mxu0
      %v3457 = vadd.f32 0.0, %v3456
      %v3458 = vpop.f32.mrb[0].mxu0
      %3459 = vdwg.mxu0
      %v3460 = vadd.f32 %v3229, %v3318
      %v3461 = vadd.f32 %v3230, %v3321
      %v3462 = vadd.f32 %v3231, %v3326
      %v3463 = vadd.f32 %v3232, %v3329
      %v3464 = vadd.f32 %v3233, %v3334
      %v3465 = vadd.f32 %v3234, %v3337
      %v3466 = vadd.f32 %v3235, %v3342
      %v3467 = vadd.f32 %v3236, %v3345
      %v3468 = vadd.f32 %v3237, %v3350
      %v3469 = vadd.f32 %v3238, %v3353
      %v3470 = vadd.f32 %v3239, %v3358
      %v3471 = vadd.f32 %v3240, %v3361
      %v3472 = vadd.f32 %v3241, %v3366
      %v3473 = vadd.f32 %v3242, %v3369
      %v3474 = vadd.f32 %v3243, %v3374
      %v3475 = vadd.f32 %v3244, %v3377
      %v3476 = vadd.f32 %v3245, %v3382
      %v3477 = vadd.f32 %v3246, %v3385
      %v3478 = vadd.f32 %v3247, %v3390
      %v3479 = vadd.f32 %v3248, %v3393
      %v3480 = vadd.f32 %v3249, %v3398
      %v3481 = vadd.f32 %v3250, %v3401
      %v3482 = vadd.f32 %v3251, %v3406
      %v3483 = vadd.f32 %v3252, %v3409
      %v3484 = vadd.f32 %v3253, %v3414
      %v3485 = vadd.f32 %v3254, %v3417
      %v3486 = vadd.f32 %v3255, %v3422
      %v3487 = vadd.f32 %v3256, %v3425
      %v3488 = vadd.f32 %v3257, %v3430
      %v3489 = vadd.f32 %v3258, %v3433
      %v3490 = vadd.f32 %v3259, %v3438
      %v3491 = vadd.f32 %v3260, %v3441
      %v3492 = vadd.f32 %v3261, %v3446
      %v3493 = vadd.f32 %v3262, %v3449
      %v3494 = vadd.f32 %v3263, %v3454
      %v3495 = vadd.f32 %v3264, %v3457
      %v3496 = vld [vmem:[%s2] sm:$0x1]
      %v3498 = vlaneseq
      %v3499 = vshrl.u32 %v3498, 7
      %v3500 = vsub.s32 0, %v3499
      %v3501 = vrot.slane %v3496, %v3500
      %v3503 = vmul.f32 %v3460, %v3501
      %v3504 = vmul.f32 %v3461, %v3501
      %v3505 = vmul.f32 %v3462, %v3501
      %v3506 = vmul.f32 %v3463, %v3501
      %v3507 = vmul.f32 %v3464, %v3501
      %v3508 = vmul.f32 %v3465, %v3501
      %v3509 = vmul.f32 %v3466, %v3501
      %v3510 = vmul.f32 %v3467, %v3501
      %v3511 = vmul.f32 %v3468, %v3501
      %v3512 = vmul.f32 %v3469, %v3501
      %v3513 = vmul.f32 %v3470, %v3501
      %v3514 = vmul.f32 %v3471, %v3501
      %v3515 = vmul.f32 %v3472, %v3501
      %v3516 = vmul.f32 %v3473, %v3501
      %v3517 = vmul.f32 %v3474, %v3501
      %v3518 = vmul.f32 %v3475, %v3501
      %v3519 = vmul.f32 %v3476, %v3501
      %v3520 = vmul.f32 %v3477, %v3501
      %v3521 = vmul.f32 %v3478, %v3501
      %v3522 = vmul.f32 %v3479, %v3501
      %v3523 = vmul.f32 %v3480, %v3501
      %v3524 = vmul.f32 %v3481, %v3501
      %v3525 = vmul.f32 %v3482, %v3501
      %v3526 = vmul.f32 %v3483, %v3501
      %v3527 = vmul.f32 %v3484, %v3501
      %v3528 = vmul.f32 %v3485, %v3501
      %v3529 = vmul.f32 %v3486, %v3501
      %v3530 = vmul.f32 %v3487, %v3501
      %v3531 = vmul.f32 %v3488, %v3501
      %v3532 = vmul.f32 %v3489, %v3501
      %v3533 = vmul.f32 %v3490, %v3501
      %v3534 = vmul.f32 %v3491, %v3501
      %v3535 = vmul.f32 %v3492, %v3501
      %v3536 = vmul.f32 %v3493, %v3501
      %v3537 = vmul.f32 %v3494, %v3501
      %v3538 = vmul.f32 %v3495, %v3501
      %v3539 = vld [vmem:[%s3] sm:$0x1]
      %v3541 = vlaneseq
      %v3542 = vshrl.u32 %v3541, 7
      %v3543 = vsub.s32 0, %v3542
      %v3544 = vrot.slane %v3539, %v3543
      %v3546 = vadd.f32 %v3503, %v3544
      %v3547 = vadd.f32 %v3504, %v3544
      %v3548 = vadd.f32 %v3505, %v3544
      %v3549 = vadd.f32 %v3506, %v3544
      %v3550 = vadd.f32 %v3507, %v3544
      %v3551 = vadd.f32 %v3508, %v3544
      %v3552 = vadd.f32 %v3509, %v3544
      %v3553 = vadd.f32 %v3510, %v3544
      %v3554 = vadd.f32 %v3511, %v3544
      %v3555 = vadd.f32 %v3512, %v3544
      %v3556 = vadd.f32 %v3513, %v3544
      %v3557 = vadd.f32 %v3514, %v3544
      %v3558 = vadd.f32 %v3515, %v3544
      %v3559 = vadd.f32 %v3516, %v3544
      %v3560 = vadd.f32 %v3517, %v3544
      %v3561 = vadd.f32 %v3518, %v3544
      %v3562 = vadd.f32 %v3519, %v3544
      %v3563 = vadd.f32 %v3520, %v3544
      %v3564 = vadd.f32 %v3521, %v3544
      %v3565 = vadd.f32 %v3522, %v3544
      %v3566 = vadd.f32 %v3523, %v3544
      %v3567 = vadd.f32 %v3524, %v3544
      %v3568 = vadd.f32 %v3525, %v3544
      %v3569 = vadd.f32 %v3526, %v3544
      %v3570 = vadd.f32 %v3527, %v3544
      %v3571 = vadd.f32 %v3528, %v3544
      %v3572 = vadd.f32 %v3529, %v3544
      %v3573 = vadd.f32 %v3530, %v3544
      %v3574 = vadd.f32 %v3531, %v3544
      %v3575 = vadd.f32 %v3532, %v3544
      %v3576 = vadd.f32 %v3533, %v3544
      %v3577 = vadd.f32 %v3534, %v3544
      %v3578 = vadd.f32 %v3535, %v3544
      %v3579 = vadd.f32 %v3536, %v3544
      %v3580 = vadd.f32 %v3537, %v3544
      %v3581 = vadd.f32 %v3538, %v3544
      %v3582 = vmax.f32 %v3546, 0.0
      %v3583 = vmax.f32 %v3547, 0.0
      %v3584 = vmax.f32 %v3548, 0.0
      %v3585 = vmax.f32 %v3549, 0.0
      %v3586 = vmax.f32 %v3550, 0.0
      %v3587 = vmax.f32 %v3551, 0.0
      %v3588 = vmax.f32 %v3552, 0.0
      %v3589 = vmax.f32 %v3553, 0.0
      %v3590 = vmax.f32 %v3554, 0.0
      %v3591 = vmax.f32 %v3555, 0.0
      %v3592 = vmax.f32 %v3556, 0.0
      %v3593 = vmax.f32 %v3557, 0.0
      %v3594 = vmax.f32 %v3558, 0.0
      %v3595 = vmax.f32 %v3559, 0.0
      %v3596 = vmax.f32 %v3560, 0.0
      %v3597 = vmax.f32 %v3561, 0.0
      %v3598 = vmax.f32 %v3562, 0.0
      %v3599 = vmax.f32 %v3563, 0.0
      %v3600 = vmax.f32 %v3564, 0.0
      %v3601 = vmax.f32 %v3565, 0.0
      %v3602 = vmax.f32 %v3566, 0.0
      %v3603 = vmax.f32 %v3567, 0.0
      %v3604 = vmax.f32 %v3568, 0.0
      %v3605 = vmax.f32 %v3569, 0.0
      %v3606 = vmax.f32 %v3570, 0.0
      %v3607 = vmax.f32 %v3571, 0.0
      %v3608 = vmax.f32 %v3572, 0.0
      %v3609 = vmax.f32 %v3573, 0.0
      %v3610 = vmax.f32 %v3574, 0.0
      %v3611 = vmax.f32 %v3575, 0.0
      %v3612 = vmax.f32 %v3576, 0.0
      %v3613 = vmax.f32 %v3577, 0.0
      %v3614 = vmax.f32 %v3578, 0.0
      %v3615 = vmax.f32 %v3579, 0.0
      %v3616 = vmax.f32 %v3580, 0.0
      %v3617 = vmax.f32 %v3581, 0.0
      %s3618 = smul.u32 %s28, 16
      %s3619 = ssub.s32 %s3618, 1
      %v3620 = vstv %s3619
      %v3621 = vadd.s32 %v3620, 1
      %v3622 = vadd.s32 %v3620, 2
      %v3623 = vadd.s32 %v3620, 3
      %v3624 = vadd.s32 %v3620, 4
      %v3625 = vadd.s32 %v3620, 5
      %v3626 = vadd.s32 %v3620, 6
      %v3627 = vadd.s32 %v3620, 7
      %v3628 = vadd.s32 %v3620, 8
      %v3629 = vadd.s32 %v3620, 9
      %v3630 = vadd.s32 %v3620, 10
      %v3631 = vadd.s32 %v3620, 11
      %v3632 = vadd.s32 %v3620, 12
      %v3633 = vadd.s32 %v3620, 13
      %v3634 = vadd.s32 %v3620, 14
      %v3635 = vadd.s32 %v3620, 15
      %v3636 = vadd.s32 %v3620, 16
      %v3637 = vadd.s32 %v3620, 17
      %vm3638 = vcmp.ge.s32.totalorder %v3620, 0
      %vm3639 = vcmp.ge.s32.totalorder %v3621, 0
      %vm3640 = vcmp.ge.s32.totalorder %v3622, 0
      %vm3641 = vcmp.ge.s32.totalorder %v3623, 0
      %vm3642 = vcmp.ge.s32.totalorder %v3624, 0
      %vm3643 = vcmp.ge.s32.totalorder %v3625, 0
      %vm3644 = vcmp.ge.s32.totalorder %v3626, 0
      %vm3645 = vcmp.ge.s32.totalorder %v3627, 0
      %vm3646 = vcmp.ge.s32.totalorder %v3628, 0
      %vm3647 = vcmp.ge.s32.totalorder %v3629, 0
      %vm3648 = vcmp.ge.s32.totalorder %v3630, 0
      %vm3649 = vcmp.ge.s32.totalorder %v3631, 0
      %vm3650 = vcmp.ge.s32.totalorder %v3632, 0
      %vm3651 = vcmp.ge.s32.totalorder %v3633, 0
      %vm3652 = vcmp.ge.s32.totalorder %v3634, 0
      %vm3653 = vcmp.ge.s32.totalorder %v3635, 0
      %vm3654 = vcmp.ge.s32.totalorder %v3636, 0
      %vm3655 = vcmp.ge.s32.totalorder %v3637, 0
      %vm3656 = vcmp.lt.s32.totalorder %v3620, 16
      %vm3657 = vcmp.lt.s32.totalorder %v3621, 16
      %vm3658 = vcmp.lt.s32.totalorder %v3622, 16
      %vm3659 = vcmp.lt.s32.totalorder %v3623, 16
      %vm3660 = vcmp.lt.s32.totalorder %v3624, 16
      %vm3661 = vcmp.lt.s32.totalorder %v3625, 16
      %vm3662 = vcmp.lt.s32.totalorder %v3626, 16
      %vm3663 = vcmp.lt.s32.totalorder %v3627, 16
      %vm3664 = vcmp.lt.s32.totalorder %v3628, 16
      %vm3665 = vcmp.lt.s32.totalorder %v3629, 16
      %vm3666 = vcmp.lt.s32.totalorder %v3630, 16
      %vm3667 = vcmp.lt.s32.totalorder %v3631, 16
      %vm3668 = vcmp.lt.s32.totalorder %v3632, 16
      %vm3669 = vcmp.lt.s32.totalorder %v3633, 16
      %vm3670 = vcmp.lt.s32.totalorder %v3634, 16
      %vm3671 = vcmp.lt.s32.totalorder %v3635, 16
      %vm3672 = vcmp.lt.s32.totalorder %v3636, 16
      %vm3673 = vcmp.lt.s32.totalorder %v3637, 16
      %vm3674 = vmand %vm3638, %vm3656
      %vm3675 = vmand %vm3639, %vm3657
      %vm3676 = vmand %vm3640, %vm3658
      %vm3677 = vmand %vm3641, %vm3659
      %vm3678 = vmand %vm3642, %vm3660
      %vm3679 = vmand %vm3643, %vm3661
      %vm3680 = vmand %vm3644, %vm3662
      %vm3681 = vmand %vm3645, %vm3663
      %vm3682 = vmand %vm3646, %vm3664
      %vm3683 = vmand %vm3647, %vm3665
      %vm3684 = vmand %vm3648, %vm3666
      %vm3685 = vmand %vm3649, %vm3667
      %vm3686 = vmand %vm3650, %vm3668
      %vm3687 = vmand %vm3651, %vm3669
      %vm3688 = vmand %vm3652, %vm3670
      %vm3689 = vmand %vm3653, %vm3671
      %vm3690 = vmand %vm3654, %vm3672
      %vm3691 = vmand %vm3655, %vm3673
      %v3692 = vsel %vm3674, 1, 0
      %v3693 = vsel %vm3675, 1, 0
      %v3694 = vsel %vm3676, 1, 0
      %v3695 = vsel %vm3677, 1, 0
      %v3696 = vsel %vm3678, 1, 0
      %v3697 = vsel %vm3679, 1, 0
      %v3698 = vsel %vm3680, 1, 0
      %v3699 = vsel %vm3681, 1, 0
      %v3700 = vsel %vm3682, 1, 0
      %v3701 = vsel %vm3683, 1, 0
      %v3702 = vsel %vm3684, 1, 0
      %v3703 = vsel %vm3685, 1, 0
      %v3704 = vsel %vm3686, 1, 0
      %v3705 = vsel %vm3687, 1, 0
      %v3706 = vsel %vm3688, 1, 0
      %v3707 = vsel %vm3689, 1, 0
      %v3708 = vsel %vm3690, 1, 0
      %v3709 = vsel %vm3691, 1, 0
      %vm3710 = vcmp.eq.s32.totalorder %v3692, 1
      %vm3711 = vcmp.eq.s32.totalorder %v3693, 1
      %vm3712 = vcmp.eq.s32.totalorder %v3694, 1
      %vm3713 = vcmp.eq.s32.totalorder %v3695, 1
      %vm3714 = vcmp.eq.s32.totalorder %v3696, 1
      %vm3715 = vcmp.eq.s32.totalorder %v3697, 1
      %vm3716 = vcmp.eq.s32.totalorder %v3698, 1
      %vm3717 = vcmp.eq.s32.totalorder %v3699, 1
      %vm3718 = vcmp.eq.s32.totalorder %v3700, 1
      %vm3719 = vcmp.eq.s32.totalorder %v3701, 1
      %vm3720 = vcmp.eq.s32.totalorder %v3702, 1
      %vm3721 = vcmp.eq.s32.totalorder %v3703, 1
      %vm3722 = vcmp.eq.s32.totalorder %v3704, 1
      %vm3723 = vcmp.eq.s32.totalorder %v3705, 1
      %vm3724 = vcmp.eq.s32.totalorder %v3706, 1
      %vm3725 = vcmp.eq.s32.totalorder %v3707, 1
      %vm3726 = vcmp.eq.s32.totalorder %v3708, 1
      %vm3727 = vcmp.eq.s32.totalorder %v3709, 1
      %v3728 = vsel %vm3710, %v3582, 0.0
      %v3729 = vsel %vm3710, %v3583, 0.0
      %v3730 = vsel %vm3711, %v3584, 0.0
      %v3731 = vsel %vm3711, %v3585, 0.0
      %v3732 = vsel %vm3712, %v3586, 0.0
      %v3733 = vsel %vm3712, %v3587, 0.0
      %v3734 = vsel %vm3713, %v3588, 0.0
      %v3735 = vsel %vm3713, %v3589, 0.0
      %v3736 = vsel %vm3714, %v3590, 0.0
      %v3737 = vsel %vm3714, %v3591, 0.0
      %v3738 = vsel %vm3715, %v3592, 0.0
      %v3739 = vsel %vm3715, %v3593, 0.0
      %v3740 = vsel %vm3716, %v3594, 0.0
      %v3741 = vsel %vm3716, %v3595, 0.0
      %v3742 = vsel %vm3717, %v3596, 0.0
      %v3743 = vsel %vm3717, %v3597, 0.0
      %v3744 = vsel %vm3718, %v3598, 0.0
      %v3745 = vsel %vm3718, %v3599, 0.0
      %v3746 = vsel %vm3719, %v3600, 0.0
      %v3747 = vsel %vm3719, %v3601, 0.0
      %v3748 = vsel %vm3720, %v3602, 0.0
      %v3749 = vsel %vm3720, %v3603, 0.0
      %v3750 = vsel %vm3721, %v3604, 0.0
      %v3751 = vsel %vm3721, %v3605, 0.0
      %v3752 = vsel %vm3722, %v3606, 0.0
      %v3753 = vsel %vm3722, %v3607, 0.0
      %v3754 = vsel %vm3723, %v3608, 0.0
      %v3755 = vsel %vm3723, %v3609, 0.0
      %v3756 = vsel %vm3724, %v3610, 0.0
      %v3757 = vsel %vm3724, %v3611, 0.0
      %v3758 = vsel %vm3725, %v3612, 0.0
      %v3759 = vsel %vm3725, %v3613, 0.0
      %v3760 = vsel %vm3726, %v3614, 0.0
      %v3761 = vsel %vm3726, %v3615, 0.0
      %v3762 = vsel %vm3727, %v3616, 0.0
      %v3763 = vsel %vm3727, %v3617, 0.0
      %v3764 = vpack.c.bf16 %v3729, %v3728
      %v3765 = vpack.c.bf16 %v3731, %v3730
      %v3766 = vpack.c.bf16 %v3733, %v3732
      %v3767 = vpack.c.bf16 %v3735, %v3734
      %v3768 = vpack.c.bf16 %v3737, %v3736
      %v3769 = vpack.c.bf16 %v3739, %v3738
      %v3770 = vpack.c.bf16 %v3741, %v3740
      %v3771 = vpack.c.bf16 %v3743, %v3742
      %v3772 = vpack.c.bf16 %v3745, %v3744
      %v3773 = vpack.c.bf16 %v3747, %v3746
      %v3774 = vpack.c.bf16 %v3749, %v3748
      %v3775 = vpack.c.bf16 %v3751, %v3750
      %v3776 = vpack.c.bf16 %v3753, %v3752
      %v3777 = vpack.c.bf16 %v3755, %v3754
      %v3778 = vpack.c.bf16 %v3757, %v3756
      %v3779 = vpack.c.bf16 %v3759, %v3758
      %v3780 = vpack.c.bf16 %v3761, %v3760
      %v3781 = vpack.c.bf16 %v3763, %v3762
      %v3783 = vshrl.u32 %v3764, 16
      %v3785 = vrot.slane %v3783, 7
      %v3786 = vshll.u32 %v3764, 16
      %v3788 = vor.u32 %v3785, %v3786
      %v3790 = vshrl.u32 %v3765, 16
      %v3792 = vrot.slane %v3790, 7
      %v3793 = vshll.u32 %v3765, 16
      %v3795 = vor.u32 %v3792, %v3793
      %v3797 = vshrl.u32 %v3766, 16
      %v3799 = vrot.slane %v3797, 7
      %v3800 = vshll.u32 %v3766, 16
      %v3802 = vor.u32 %v3799, %v3800
      %v3804 = vshrl.u32 %v3767, 16
      %v3806 = vrot.slane %v3804, 7
      %v3807 = vshll.u32 %v3767, 16
      %v3809 = vor.u32 %v3806, %v3807
      %v3811 = vshrl.u32 %v3768, 16
      %v3813 = vrot.slane %v3811, 7
      %v3814 = vshll.u32 %v3768, 16
      %v3816 = vor.u32 %v3813, %v3814
      %v3818 = vshrl.u32 %v3769, 16
      %v3820 = vrot.slane %v3818, 7
      %v3821 = vshll.u32 %v3769, 16
      %v3823 = vor.u32 %v3820, %v3821
      %v3825 = vshrl.u32 %v3770, 16
      %v3827 = vrot.slane %v3825, 7
      %v3828 = vshll.u32 %v3770, 16
      %v3830 = vor.u32 %v3827, %v3828
      %v3832 = vshrl.u32 %v3771, 16
      %v3834 = vrot.slane %v3832, 7
      %v3835 = vshll.u32 %v3771, 16
      %v3837 = vor.u32 %v3834, %v3835
      %v3839 = vshrl.u32 %v3772, 16
      %v3841 = vrot.slane %v3839, 7
      %v3842 = vshll.u32 %v3772, 16
      %v3844 = vor.u32 %v3841, %v3842
      %v3846 = vshrl.u32 %v3773, 16
      %v3848 = vrot.slane %v3846, 7
      %v3849 = vshll.u32 %v3773, 16
      %v3851 = vor.u32 %v3848, %v3849
      %v3853 = vshrl.u32 %v3774, 16
      %v3855 = vrot.slane %v3853, 7
      %v3856 = vshll.u32 %v3774, 16
      %v3858 = vor.u32 %v3855, %v3856
      %v3860 = vshrl.u32 %v3775, 16
      %v3862 = vrot.slane %v3860, 7
      %v3863 = vshll.u32 %v3775, 16
      %v3865 = vor.u32 %v3862, %v3863
      %v3867 = vshrl.u32 %v3776, 16
      %v3869 = vrot.slane %v3867, 7
      %v3870 = vshll.u32 %v3776, 16
      %v3872 = vor.u32 %v3869, %v3870
      %v3874 = vshrl.u32 %v3777, 16
      %v3876 = vrot.slane %v3874, 7
      %v3877 = vshll.u32 %v3777, 16
      %v3879 = vor.u32 %v3876, %v3877
      %v3881 = vshrl.u32 %v3778, 16
      %v3883 = vrot.slane %v3881, 7
      %v3884 = vshll.u32 %v3778, 16
      %v3886 = vor.u32 %v3883, %v3884
      %v3888 = vshrl.u32 %v3779, 16
      %v3890 = vrot.slane %v3888, 7
      %v3891 = vshll.u32 %v3779, 16
      %v3893 = vor.u32 %v3890, %v3891
      %v3895 = vshrl.u32 %v3780, 16
      %v3897 = vrot.slane %v3895, 7
      %v3898 = vshll.u32 %v3780, 16
      %v3900 = vor.u32 %v3897, %v3898
      %v3902 = vshrl.u32 %v3781, 16
      %v3904 = vrot.slane %v3902, 7
      %v3905 = vshll.u32 %v3781, 16
      %v3907 = vor.u32 %v3904, %v3905
      %vm3944 = vcmask 1040384
      %vm3945 = vsmask.f32 256
      %vm3946 = vmand %vm3944, %vm3945
      %v3947 = vsel %vm3946, 0, %v3788
      %v3948 = vsel %vm3946, 0, %v3795
      %v3949 = vsel %vm3946, 0, %v3802
      %v3950 = vsel %vm3946, 0, %v3809
      %v3951 = vsel %vm3946, 0, %v3816
      %v3952 = vsel %vm3946, 0, %v3823
      %v3953 = vsel %vm3946, 0, %v3830
      %v3954 = vsel %vm3946, 0, %v3837
      %v3955 = vsel %vm3946, 0, %v3844
      %v3956 = vsel %vm3946, 0, %v3851
      %v3957 = vsel %vm3946, 0, %v3858
      %v3958 = vsel %vm3946, 0, %v3865
      %v3959 = vsel %vm3946, 0, %v3872
      %v3960 = vsel %vm3946, 0, %v3879
      %v3961 = vsel %vm3946, 0, %v3886
      %v3962 = vsel %vm3946, 0, %v3893
      %v3963 = vsel %vm3946, 0, %v3900
      %v3964 = vsel %vm3946, 0, %v3907
      %v3965 = vsel %vm3946, %v3785, 0
      %v3966 = vsel %vm3946, %v3792, 0
      %v3967 = vsel %vm3946, %v3799, 0
      %v3968 = vsel %vm3946, %v3806, 0
      %v3969 = vsel %vm3946, %v3813, 0
      %v3970 = vsel %vm3946, %v3820, 0
      %v3971 = vsel %vm3946, %v3827, 0
      %v3972 = vsel %vm3946, %v3834, 0
      %v3973 = vsel %vm3946, %v3841, 0
      %v3974 = vsel %vm3946, %v3848, 0
      %v3975 = vsel %vm3946, %v3855, 0
      %v3976 = vsel %vm3946, %v3862, 0
      %v3977 = vsel %vm3946, %v3869, 0
      %v3978 = vsel %vm3946, %v3876, 0
      %v3979 = vsel %vm3946, %v3883, 0
      %v3980 = vsel %vm3946, %v3890, 0
      %v3981 = vsel %vm3946, %v3897, 0
      %v3982 = vsel %vm3946, %v3904, 0
      %v3983 = vld [vmem:[%s4] sm:$0xf]
      %vm3984 = vsmask.f32 7424
      %v3986 = vshrl.u32 %v3947, 16
      %v3988 = vshll.u32 %v3947, 16
      %v3990 = vrot.slane %v3988, 1
      %v3991 = vor.u32 %v3986, %v3990
      %v3993 = vshll.u32 %v3965, 16
      %v3995 = vrot.slane %v3993, 1
      %v3996 = vsel %vm3984, %v3991, %v3995
      %v3998 = vshrl.u32 %v3948, 16
      %v4000 = vshll.u32 %v3948, 16
      %v4002 = vrot.slane %v4000, 1
      %v4003 = vor.u32 %v3998, %v4002
      %v4005 = vshll.u32 %v3966, 16
      %v4007 = vrot.slane %v4005, 1
      %v4008 = vsel %vm3984, %v4003, %v4007
      %v4010 = vshrl.u32 %v3949, 16
      %v4012 = vshll.u32 %v3949, 16
      %v4014 = vrot.slane %v4012, 1
      %v4015 = vor.u32 %v4010, %v4014
      %v4017 = vshll.u32 %v3967, 16
      %v4019 = vrot.slane %v4017, 1
      %v4020 = vsel %vm3984, %v4015, %v4019
      %v4022 = vshrl.u32 %v3950, 16
      %v4024 = vshll.u32 %v3950, 16
      %v4026 = vrot.slane %v4024, 1
      %v4027 = vor.u32 %v4022, %v4026
      %v4029 = vshll.u32 %v3968, 16
      %v4031 = vrot.slane %v4029, 1
      %v4032 = vsel %vm3984, %v4027, %v4031
      %v4034 = vshrl.u32 %v3951, 16
      %v4036 = vshll.u32 %v3951, 16
      %v4038 = vrot.slane %v4036, 1
      %v4039 = vor.u32 %v4034, %v4038
      %v4041 = vshll.u32 %v3969, 16
      %v4043 = vrot.slane %v4041, 1
      %v4044 = vsel %vm3984, %v4039, %v4043
      %v4046 = vshrl.u32 %v3952, 16
      %v4048 = vshll.u32 %v3952, 16
      %v4050 = vrot.slane %v4048, 1
      %v4051 = vor.u32 %v4046, %v4050
      %v4053 = vshll.u32 %v3970, 16
      %v4055 = vrot.slane %v4053, 1
      %v4056 = vsel %vm3984, %v4051, %v4055
      %v4058 = vshrl.u32 %v3953, 16
      %v4060 = vshll.u32 %v3953, 16
      %v4062 = vrot.slane %v4060, 1
      %v4063 = vor.u32 %v4058, %v4062
      %v4065 = vshll.u32 %v3971, 16
      %v4067 = vrot.slane %v4065, 1
      %v4068 = vsel %vm3984, %v4063, %v4067
      %v4070 = vshrl.u32 %v3954, 16
      %v4072 = vshll.u32 %v3954, 16
      %v4074 = vrot.slane %v4072, 1
      %v4075 = vor.u32 %v4070, %v4074
      %v4077 = vshll.u32 %v3972, 16
      %v4079 = vrot.slane %v4077, 1
      %v4080 = vsel %vm3984, %v4075, %v4079
      %v4082 = vshrl.u32 %v3955, 16
      %v4084 = vshll.u32 %v3955, 16
      %v4086 = vrot.slane %v4084, 1
      %v4087 = vor.u32 %v4082, %v4086
      %v4089 = vshll.u32 %v3973, 16
      %v4091 = vrot.slane %v4089, 1
      %v4092 = vsel %vm3984, %v4087, %v4091
      %v4094 = vshrl.u32 %v3956, 16
      %v4096 = vshll.u32 %v3956, 16
      %v4098 = vrot.slane %v4096, 1
      %v4099 = vor.u32 %v4094, %v4098
      %v4101 = vshll.u32 %v3974, 16
      %v4103 = vrot.slane %v4101, 1
      %v4104 = vsel %vm3984, %v4099, %v4103
      %v4106 = vshrl.u32 %v3957, 16
      %v4108 = vshll.u32 %v3957, 16
      %v4110 = vrot.slane %v4108, 1
      %v4111 = vor.u32 %v4106, %v4110
      %v4113 = vshll.u32 %v3975, 16
      %v4115 = vrot.slane %v4113, 1
      %v4116 = vsel %vm3984, %v4111, %v4115
      %v4118 = vshrl.u32 %v3958, 16
      %v4120 = vshll.u32 %v3958, 16
      %v4122 = vrot.slane %v4120, 1
      %v4123 = vor.u32 %v4118, %v4122
      %v4125 = vshll.u32 %v3976, 16
      %v4127 = vrot.slane %v4125, 1
      %v4128 = vsel %vm3984, %v4123, %v4127
      %v4130 = vshrl.u32 %v3959, 16
      %v4132 = vshll.u32 %v3959, 16
      %v4134 = vrot.slane %v4132, 1
      %v4135 = vor.u32 %v4130, %v4134
      %v4137 = vshll.u32 %v3977, 16
      %v4139 = vrot.slane %v4137, 1
      %v4140 = vsel %vm3984, %v4135, %v4139
      %v4142 = vshrl.u32 %v3960, 16
      %v4144 = vshll.u32 %v3960, 16
      %v4146 = vrot.slane %v4144, 1
      %v4147 = vor.u32 %v4142, %v4146
      %v4149 = vshll.u32 %v3978, 16
      %v4151 = vrot.slane %v4149, 1
      %v4152 = vsel %vm3984, %v4147, %v4151
      %v4154 = vshrl.u32 %v3961, 16
      %v4156 = vshll.u32 %v3961, 16
      %v4158 = vrot.slane %v4156, 1
      %v4159 = vor.u32 %v4154, %v4158
      %v4161 = vshll.u32 %v3979, 16
      %v4163 = vrot.slane %v4161, 1
      %v4164 = vsel %vm3984, %v4159, %v4163
      %v4166 = vshrl.u32 %v3962, 16
      %v4168 = vshll.u32 %v3962, 16
      %v4170 = vrot.slane %v4168, 1
      %v4171 = vor.u32 %v4166, %v4170
      %v4173 = vshll.u32 %v3980, 16
      %v4175 = vrot.slane %v4173, 1
      %v4176 = vsel %vm3984, %v4171, %v4175
      %v4177 = vld [vmem:[%s4 + $0x4] sm:$0xf]
      %vm4178 = vcmask 64512
      %v4180 = vsel %vm4178, %v3996, 0
      %v4183 = vsel %vm4178, %v4008, 0
      %v4186 = vsel %vm4178, %v4020, 0
      %v4189 = vsel %vm4178, %v4032, 0
      %v4192 = vsel %vm4178, %v4044, 0
      %v4195 = vsel %vm4178, %v4056, 0
      %v4198 = vsel %vm4178, %v4068, 0
      %v4201 = vsel %vm4178, %v4080, 0
      %v4204 = vsel %vm4178, %v4092, 0
      %v4207 = vsel %vm4178, %v4104, 0
      %v4210 = vsel %vm4178, %v4116, 0
      %v4213 = vsel %vm4178, %v4128, 0
      %v4216 = vsel %vm4178, %v4140, 0
      %v4219 = vsel %vm4178, %v4152, 0
      %v4222 = vsel %vm4178, %v4164, 0
      %v4225 = vsel %vm4178, %v4176, 0
      %vm4227 = vcmask 1043456
      %v4229 = vsel %vm4227, %v4177, 0
      %4231 = vmatprep.subr.bf16.mxu0 0
      %4232 = vmatpush1.bf16.msra.mxu0 %v4229
      %4233 = vmatprep.subr.bf16.mxu0 0
      %4234 = vmatpush1.bf16.msra.mxu0 0
      %4235 = vmatprep.subr.bf16.mxu0 0
      %4236 = vmatpush1.bf16.msra.mxu0 0
      %4237 = vmatprep.subr.bf16.mxu0 0
      %4238 = vmatpush1.bf16.msra.mxu0 0
      %4239 = vmatprep.subr.bf16.mxu0 0
      %4240 = vmatpush1.bf16.msra.mxu0 0
      %4241 = vmatprep.subr.bf16.mxu0 0
      %4242 = vmatpush1.bf16.msra.mxu0 0
      %4243 = vmatprep.subr.bf16.mxu0 0
      %4244 = vmatpush1.bf16.msra.mxu0 0
      %4245 = vmatprep.subr.bf16.mxu0 0
      %4246 = vmatpush1.bf16.msra.mxu0 0
      %4247 = vmatprep.subr.bf16.mxu0 0
      %4248 = vmatpush1.bf16.msra.mxu0 0
      %4249 = vmatprep.subr.bf16.mxu0 0
      %4250 = vmatpush1.bf16.msra.mxu0 0
      %4251 = vmatprep.subr.bf16.mxu0 0
      %4252 = vmatpush1.bf16.msra.mxu0 0
      %4253 = vmatprep.subr.bf16.mxu0 0
      %4254 = vmatpush1.bf16.msra.mxu0 0
      %4255 = vmatprep.subr.bf16.mxu0 0
      %4256 = vmatpush1.bf16.msra.mxu0 0
      %4257 = vmatprep.subr.bf16.mxu0 0
      %4258 = vmatpush1.bf16.msra.mxu0 0
      %4259 = vmatprep.subr.bf16.mxu0 0
      %4260 = vmatpush1.bf16.msra.mxu0 0
      %4261 = vmatprep.subr.bf16.mxu0 0
      %4262 = vmatpush1.bf16.msra.mxu0 0
      %4263 = vmatprep.mubr.bf16.mxu0 0
      %4264 = vmatmul.mubr.bf16.gmra.mrb[0].mxu0 %v4180
      %v4265 = vpop.f32.mrb[0].mxu0
      %v4266 = vadd.f32 0.0, %v4265
      %v4267 = vpop.f32.mrb[0].mxu0
      %v4268 = vpop.f32.mrb[0].mxu0
      %v4269 = vadd.f32 0.0, %v4268
      %v4270 = vpop.f32.mrb[0].mxu0
      %4271 = vmatprep.mubr.bf16.mxu0 0
      %4272 = vmatmul.mubr.bf16.gmra.mrb[0].mxu0 %v4183
      %v4273 = vpop.f32.mrb[0].mxu0
      %v4274 = vadd.f32 0.0, %v4273
      %v4275 = vpop.f32.mrb[0].mxu0
      %v4276 = vpop.f32.mrb[0].mxu0
      %v4277 = vadd.f32 0.0, %v4276
      %v4278 = vpop.f32.mrb[0].mxu0
      %4279 = vmatprep.mubr.bf16.mxu0 0
      %4280 = vmatmul.mubr.bf16.gmra.mrb[0].mxu0 %v4186
      %v4281 = vpop.f32.mrb[0].mxu0
      %v4282 = vadd.f32 0.0, %v4281
      %v4283 = vpop.f32.mrb[0].mxu0
      %v4284 = vpop.f32.mrb[0].mxu0
      %v4285 = vadd.f32 0.0, %v4284
      %v4286 = vpop.f32.mrb[0].mxu0
      %4287 = vmatprep.mubr.bf16.mxu0 0
      %4288 = vmatmul.mubr.bf16.gmra.mrb[0].mxu0 %v4189
      %v4289 = vpop.f32.mrb[0].mxu0
      %v4290 = vadd.f32 0.0, %v4289
      %v4291 = vpop.f32.mrb[0].mxu0
      %v4292 = vpop.f32.mrb[0].mxu0
      %v4293 = vadd.f32 0.0, %v4292
      %v4294 = vpop.f32.mrb[0].mxu0
      %4295 = vmatprep.mubr.bf16.mxu0 0
      %4296 = vmatmul.mubr.bf16.gmra.mrb[0].mxu0 %v4192
      %v4297 = vpop.f32.mrb[0].mxu0
      %v4298 = vadd.f32 0.0, %v4297
      %v4299 = vpop.f32.mrb[0].mxu0
      %v4300 = vpop.f32.mrb[0].mxu0
      %v4301 = vadd.f32 0.0, %v4300
      %v4302 = vpop.f32.mrb[0].mxu0
      %4303 = vmatprep.mubr.bf16.mxu0 0
      %4304 = vmatmul.mubr.bf16.gmra.mrb[0].mxu0 %v4195
      %v4305 = vpop.f32.mrb[0].mxu0
      %v4306 = vadd.f32 0.0, %v4305
      %v4307 = vpop.f32.mrb[0].mxu0
      %v4308 = vpop.f32.mrb[0].mxu0
      %v4309 = vadd.f32 0.0, %v4308
      %v4310 = vpop.f32.mrb[0].mxu0
      %4311 = vmatprep.mubr.bf16.mxu0 0
      %4312 = vmatmul.mubr.bf16.gmra.mrb[0].mxu0 %v4198
      %v4313 = vpop.f32.mrb[0].mxu0
      %v4314 = vadd.f32 0.0, %v4313
      %v4315 = vpop.f32.mrb[0].mxu0
      %v4316 = vpop.f32.mrb[0].mxu0
      %v4317 = vadd.f32 0.0, %v4316
      %v4318 = vpop.f32.mrb[0].mxu0
      %4319 = vmatprep.mubr.bf16.mxu0 0
      %4320 = vmatmul.mubr.bf16.gmra.mrb[0].mxu0 %v4201
      %v4321 = vpop.f32.mrb[0].mxu0
      %v4322 = vadd.f32 0.0, %v4321
      %v4323 = vpop.f32.mrb[0].mxu0
      %v4324 = vpop.f32.mrb[0].mxu0
      %v4325 = vadd.f32 0.0, %v4324
      %v4326 = vpop.f32.mrb[0].mxu0
      %4327 = vmatprep.mubr.bf16.mxu0 0
      %4328 = vmatmul.mubr.bf16.gmra.mrb[0].mxu0 %v4204
      %v4329 = vpop.f32.mrb[0].mxu0
      %v4330 = vadd.f32 0.0, %v4329
      %v4331 = vpop.f32.mrb[0].mxu0
      %v4332 = vpop.f32.mrb[0].mxu0
      %v4333 = vadd.f32 0.0, %v4332
      %v4334 = vpop.f32.mrb[0].mxu0
      %4335 = vmatprep.mubr.bf16.mxu0 0
      %4336 = vmatmul.mubr.bf16.gmra.mrb[0].mxu0 %v4207
      %v4337 = vpop.f32.mrb[0].mxu0
      %v4338 = vadd.f32 0.0, %v4337
      %v4339 = vpop.f32.mrb[0].mxu0
      %v4340 = vpop.f32.mrb[0].mxu0
      %v4341 = vadd.f32 0.0, %v4340
      %v4342 = vpop.f32.mrb[0].mxu0
      %4343 = vmatprep.mubr.bf16.mxu0 0
      %4344 = vmatmul.mubr.bf16.gmra.mrb[0].mxu0 %v4210
      %v4345 = vpop.f32.mrb[0].mxu0
      %v4346 = vadd.f32 0.0, %v4345
      %v4347 = vpop.f32.mrb[0].mxu0
      %v4348 = vpop.f32.mrb[0].mxu0
      %v4349 = vadd.f32 0.0, %v4348
      %v4350 = vpop.f32.mrb[0].mxu0
      %4351 = vmatprep.mubr.bf16.mxu0 0
      %4352 = vmatmul.mubr.bf16.gmra.mrb[0].mxu0 %v4213
      %v4353 = vpop.f32.mrb[0].mxu0
      %v4354 = vadd.f32 0.0, %v4353
      %v4355 = vpop.f32.mrb[0].mxu0
      %v4356 = vpop.f32.mrb[0].mxu0
      %v4357 = vadd.f32 0.0, %v4356
      %v4358 = vpop.f32.mrb[0].mxu0
      %4359 = vmatprep.mubr.bf16.mxu0 0
      %4360 = vmatmul.mubr.bf16.gmra.mrb[0].mxu0 %v4216
      %v4361 = vpop.f32.mrb[0].mxu0
      %v4362 = vadd.f32 0.0, %v4361
      %v4363 = vpop.f32.mrb[0].mxu0
      %v4364 = vpop.f32.mrb[0].mxu0
      %v4365 = vadd.f32 0.0, %v4364
      %v4366 = vpop.f32.mrb[0].mxu0
      %4367 = vmatprep.mubr.bf16.mxu0 0
      %4368 = vmatmul.mubr.bf16.gmra.mrb[0].mxu0 %v4219
      %v4369 = vpop.f32.mrb[0].mxu0
      %v4370 = vadd.f32 0.0, %v4369
      %v4371 = vpop.f32.mrb[0].mxu0
      %v4372 = vpop.f32.mrb[0].mxu0
      %v4373 = vadd.f32 0.0, %v4372
      %v4374 = vpop.f32.mrb[0].mxu0
      %4375 = vmatprep.mubr.bf16.mxu0 0
      %4376 = vmatmul.mubr.bf16.gmra.mrb[0].mxu0 %v4222
      %v4377 = vpop.f32.mrb[0].mxu0
      %v4378 = vadd.f32 0.0, %v4377
      %v4379 = vpop.f32.mrb[0].mxu0
      %v4380 = vpop.f32.mrb[0].mxu0
      %v4381 = vadd.f32 0.0, %v4380
      %v4382 = vpop.f32.mrb[0].mxu0
      %4383 = vmatprep.mubr.bf16.mxu0 0
      %4384 = vmatmul.mubr.bf16.gmra.mrb[0].mxu0 %v4225
      %v4385 = vpop.f32.mrb[0].mxu0
      %v4386 = vadd.f32 0.0, %v4385
      %v4387 = vpop.f32.mrb[0].mxu0
      %v4388 = vpop.f32.mrb[0].mxu0
      %v4389 = vadd.f32 0.0, %v4388
      %v4390 = vpop.f32.mrb[0].mxu0
      %4391 = vdwg.mxu0
      %v4392 = vsel %vm4178, %v3947, 0
      %v4394 = vsel %vm4178, %v3948, 0
      %v4396 = vsel %vm4178, %v3949, 0
      %v4398 = vsel %vm4178, %v3950, 0
      %v4400 = vsel %vm4178, %v3951, 0
      %v4402 = vsel %vm4178, %v3952, 0
      %v4404 = vsel %vm4178, %v3953, 0
      %v4406 = vsel %vm4178, %v3954, 0
      %v4408 = vsel %vm4178, %v3955, 0
      %v4410 = vsel %vm4178, %v3956, 0
      %v4412 = vsel %vm4178, %v3957, 0
      %v4414 = vsel %vm4178, %v3958, 0
      %v4416 = vsel %vm4178, %v3959, 0
      %v4418 = vsel %vm4178, %v3960, 0
      %v4420 = vsel %vm4178, %v3961, 0
      %v4422 = vsel %vm4178, %v3962, 0
      %v4425 = vsel %vm4227, %v3983, 0
      %4427 = vmatprep.subr.bf16.mxu0 0
      %4428 = vmatpush1.bf16.msra.mxu0 %v4425
      %4429 = vmatprep.subr.bf16.mxu0 0
      %4430 = vmatpush1.bf16.msra.mxu0 0
      %4431 = vmatprep.subr.bf16.mxu0 0
      %4432 = vmatpush1.bf16.msra.mxu0 0
      %4433 = vmatprep.subr.bf16.mxu0 0
      %4434 = vmatpush1.bf16.msra.mxu0 0
      %4435 = vmatprep.subr.bf16.mxu0 0
      %4436 = vmatpush1.bf16.msra.mxu0 0
      %4437 = vmatprep.subr.bf16.mxu0 0
      %4438 = vmatpush1.bf16.msra.mxu0 0
      %4439 = vmatprep.subr.bf16.mxu0 0
      %4440 = vmatpush1.bf16.msra.mxu0 0
      %4441 = vmatprep.subr.bf16.mxu0 0
      %4442 = vmatpush1.bf16.msra.mxu0 0
      %4443 = vmatprep.subr.bf16.mxu0 0
      %4444 = vmatpush1.bf16.msra.mxu0 0
      %4445 = vmatprep.subr.bf16.mxu0 0
      %4446 = vmatpush1.bf16.msra.mxu0 0
      %4447 = vmatprep.subr.bf16.mxu0 0
      %4448 = vmatpush1.bf16.msra.mxu0 0
      %4449 = vmatprep.subr.bf16.mxu0 0
      %4450 = vmatpush1.bf16.msra.mxu0 0
      %4451 = vmatprep.subr.bf16.mxu0 0
      %4452 = vmatpush1.bf16.msra.mxu0 0
      %4453 = vmatprep.subr.bf16.mxu0 0
      %4454 = vmatpush1.bf16.msra.mxu0 0
      %4455 = vmatprep.subr.bf16.mxu0 0
      %4456 = vmatpush1.bf16.msra.mxu0 0
      %4457 = vmatprep.subr.bf16.mxu0 0
      %4458 = vmatpush1.bf16.msra.mxu0 0
      %4459 = vmatprep.mubr.bf16.mxu0 0
      %4460 = vmatmul.mubr.bf16.gmra.mrb[0].mxu0 %v4392
      %v4461 = vpop.f32.mrb[0].mxu0
      %v4462 = vadd.f32 %v4266, %v4461
      %v4463 = vpop.f32.mrb[0].mxu0
      %v4464 = vpop.f32.mrb[0].mxu0
      %v4465 = vadd.f32 %v4269, %v4464
      %v4466 = vpop.f32.mrb[0].mxu0
      %4467 = vmatprep.mubr.bf16.mxu0 0
      %4468 = vmatmul.mubr.bf16.gmra.mrb[0].mxu0 %v4394
      %v4469 = vpop.f32.mrb[0].mxu0
      %v4470 = vadd.f32 %v4274, %v4469
      %v4471 = vpop.f32.mrb[0].mxu0
      %v4472 = vpop.f32.mrb[0].mxu0
      %v4473 = vadd.f32 %v4277, %v4472
      %v4474 = vpop.f32.mrb[0].mxu0
      %4475 = vmatprep.mubr.bf16.mxu0 0
      %4476 = vmatmul.mubr.bf16.gmra.mrb[0].mxu0 %v4396
      %v4477 = vpop.f32.mrb[0].mxu0
      %v4478 = vadd.f32 %v4282, %v4477
      %v4479 = vpop.f32.mrb[0].mxu0
      %v4480 = vpop.f32.mrb[0].mxu0
      %v4481 = vadd.f32 %v4285, %v4480
      %v4482 = vpop.f32.mrb[0].mxu0
      %4483 = vmatprep.mubr.bf16.mxu0 0
      %4484 = vmatmul.mubr.bf16.gmra.mrb[0].mxu0 %v4398
      %v4485 = vpop.f32.mrb[0].mxu0
      %v4486 = vadd.f32 %v4290, %v4485
      %v4487 = vpop.f32.mrb[0].mxu0
      %v4488 = vpop.f32.mrb[0].mxu0
      %v4489 = vadd.f32 %v4293, %v4488
      %v4490 = vpop.f32.mrb[0].mxu0
      %4491 = vmatprep.mubr.bf16.mxu0 0
      %4492 = vmatmul.mubr.bf16.gmra.mrb[0].mxu0 %v4400
      %v4493 = vpop.f32.mrb[0].mxu0
      %v4494 = vadd.f32 %v4298, %v4493
      %v4495 = vpop.f32.mrb[0].mxu0
      %v4496 = vpop.f32.mrb[0].mxu0
      %v4497 = vadd.f32 %v4301, %v4496
      %v4498 = vpop.f32.mrb[0].mxu0
      %4499 = vmatprep.mubr.bf16.mxu0 0
      %4500 = vmatmul.mubr.bf16.gmra.mrb[0].mxu0 %v4402
      %v4501 = vpop.f32.mrb[0].mxu0
      %v4502 = vadd.f32 %v4306, %v4501
      %v4503 = vpop.f32.mrb[0].mxu0
      %v4504 = vpop.f32.mrb[0].mxu0
      %v4505 = vadd.f32 %v4309, %v4504
      %v4506 = vpop.f32.mrb[0].mxu0
      %4507 = vmatprep.mubr.bf16.mxu0 0
      %4508 = vmatmul.mubr.bf16.gmra.mrb[0].mxu0 %v4404
      %v4509 = vpop.f32.mrb[0].mxu0
      %v4510 = vadd.f32 %v4314, %v4509
      %v4511 = vpop.f32.mrb[0].mxu0
      %v4512 = vpop.f32.mrb[0].mxu0
      %v4513 = vadd.f32 %v4317, %v4512
      %v4514 = vpop.f32.mrb[0].mxu0
      %4515 = vmatprep.mubr.bf16.mxu0 0
      %4516 = vmatmul.mubr.bf16.gmra.mrb[0].mxu0 %v4406
      %v4517 = vpop.f32.mrb[0].mxu0
      %v4518 = vadd.f32 %v4322, %v4517
      %v4519 = vpop.f32.mrb[0].mxu0
      %v4520 = vpop.f32.mrb[0].mxu0
      %v4521 = vadd.f32 %v4325, %v4520
      %v4522 = vpop.f32.mrb[0].mxu0
      %4523 = vmatprep.mubr.bf16.mxu0 0
      %4524 = vmatmul.mubr.bf16.gmra.mrb[0].mxu0 %v4408
      %v4525 = vpop.f32.mrb[0].mxu0
      %v4526 = vadd.f32 %v4330, %v4525
      %v4527 = vpop.f32.mrb[0].mxu0
      %v4528 = vpop.f32.mrb[0].mxu0
      %v4529 = vadd.f32 %v4333, %v4528
      %v4530 = vpop.f32.mrb[0].mxu0
      %4531 = vmatprep.mubr.bf16.mxu0 0
      %4532 = vmatmul.mubr.bf16.gmra.mrb[0].mxu0 %v4410
      %v4533 = vpop.f32.mrb[0].mxu0
      %v4534 = vadd.f32 %v4338, %v4533
      %v4535 = vpop.f32.mrb[0].mxu0
      %v4536 = vpop.f32.mrb[0].mxu0
      %v4537 = vadd.f32 %v4341, %v4536
      %v4538 = vpop.f32.mrb[0].mxu0
      %4539 = vmatprep.mubr.bf16.mxu0 0
      %4540 = vmatmul.mubr.bf16.gmra.mrb[0].mxu0 %v4412
      %v4541 = vpop.f32.mrb[0].mxu0
      %v4542 = vadd.f32 %v4346, %v4541
      %v4543 = vpop.f32.mrb[0].mxu0
      %v4544 = vpop.f32.mrb[0].mxu0
      %v4545 = vadd.f32 %v4349, %v4544
      %v4546 = vpop.f32.mrb[0].mxu0
      %4547 = vmatprep.mubr.bf16.mxu0 0
      %4548 = vmatmul.mubr.bf16.gmra.mrb[0].mxu0 %v4414
      %v4549 = vpop.f32.mrb[0].mxu0
      %v4550 = vadd.f32 %v4354, %v4549
      %v4551 = vpop.f32.mrb[0].mxu0
      %v4552 = vpop.f32.mrb[0].mxu0
      %v4553 = vadd.f32 %v4357, %v4552
      %v4554 = vpop.f32.mrb[0].mxu0
      %4555 = vmatprep.mubr.bf16.mxu0 0
      %4556 = vmatmul.mubr.bf16.gmra.mrb[0].mxu0 %v4416
      %v4557 = vpop.f32.mrb[0].mxu0
      %v4558 = vadd.f32 %v4362, %v4557
      %v4559 = vpop.f32.mrb[0].mxu0
      %v4560 = vpop.f32.mrb[0].mxu0
      %v4561 = vadd.f32 %v4365, %v4560
      %v4562 = vpop.f32.mrb[0].mxu0
      %4563 = vmatprep.mubr.bf16.mxu0 0
      %4564 = vmatmul.mubr.bf16.gmra.mrb[0].mxu0 %v4418
      %v4565 = vpop.f32.mrb[0].mxu0
      %v4566 = vadd.f32 %v4370, %v4565
      %v4567 = vpop.f32.mrb[0].mxu0
      %v4568 = vpop.f32.mrb[0].mxu0
      %v4569 = vadd.f32 %v4373, %v4568
      %v4570 = vpop.f32.mrb[0].mxu0
      %4571 = vmatprep.mubr.bf16.mxu0 0
      %4572 = vmatmul.mubr.bf16.gmra.mrb[0].mxu0 %v4420
      %v4573 = vpop.f32.mrb[0].mxu0
      %v4574 = vadd.f32 %v4378, %v4573
      %v4575 = vpop.f32.mrb[0].mxu0
      %v4576 = vpop.f32.mrb[0].mxu0
      %v4577 = vadd.f32 %v4381, %v4576
      %v4578 = vpop.f32.mrb[0].mxu0
      %4579 = vmatprep.mubr.bf16.mxu0 0
      %4580 = vmatmul.mubr.bf16.gmra.mrb[0].mxu0 %v4422
      %v4581 = vpop.f32.mrb[0].mxu0
      %v4582 = vadd.f32 %v4386, %v4581
      %v4583 = vpop.f32.mrb[0].mxu0
      %v4584 = vpop.f32.mrb[0].mxu0
      %v4585 = vadd.f32 %v4389, %v4584
      %v4586 = vpop.f32.mrb[0].mxu0
      %4587 = vdwg.mxu0
      %vm4620 = vcmask 1046528
      %v4621 = vrot.slane %v3947, 1
      %v4622 = vrot.slane %v3965, 1
      %v4623 = vsel %vm4620, %v4621, %v4622
      %v4624 = vrot.slane %v3948, 1
      %v4625 = vrot.slane %v3966, 1
      %v4626 = vsel %vm4620, %v4624, %v4625
      %v4627 = vrot.slane %v3949, 1
      %v4628 = vrot.slane %v3967, 1
      %v4629 = vsel %vm4620, %v4627, %v4628
      %v4630 = vrot.slane %v3950, 1
      %v4631 = vrot.slane %v3968, 1
      %v4632 = vsel %vm4620, %v4630, %v4631
      %v4633 = vrot.slane %v3951, 1
      %v4634 = vrot.slane %v3969, 1
      %v4635 = vsel %vm4620, %v4633, %v4634
      %v4636 = vrot.slane %v3952, 1
      %v4637 = vrot.slane %v3970, 1
      %v4638 = vsel %vm4620, %v4636, %v4637
      %v4639 = vrot.slane %v3953, 1
      %v4640 = vrot.slane %v3971, 1
      %v4641 = vsel %vm4620, %v4639, %v4640
      %v4642 = vrot.slane %v3954, 1
      %v4643 = vrot.slane %v3972, 1
      %v4644 = vsel %vm4620, %v4642, %v4643
      %v4645 = vrot.slane %v3955, 1
      %v4646 = vrot.slane %v3973, 1
      %v4647 = vsel %vm4620, %v4645, %v4646
      %v4648 = vrot.slane %v3956, 1
      %v4649 = vrot.slane %v3974, 1
      %v4650 = vsel %vm4620, %v4648, %v4649
      %v4651 = vrot.slane %v3957, 1
      %v4652 = vrot.slane %v3975, 1
      %v4653 = vsel %vm4620, %v4651, %v4652
      %v4654 = vrot.slane %v3958, 1
      %v4655 = vrot.slane %v3976, 1
      %v4656 = vsel %vm4620, %v4654, %v4655
      %v4657 = vrot.slane %v3959, 1
      %v4658 = vrot.slane %v3977, 1
      %v4659 = vsel %vm4620, %v4657, %v4658
      %v4660 = vrot.slane %v3960, 1
      %v4661 = vrot.slane %v3978, 1
      %v4662 = vsel %vm4620, %v4660, %v4661
      %v4663 = vrot.slane %v3961, 1
      %v4664 = vrot.slane %v3979, 1
      %v4665 = vsel %vm4620, %v4663, %v4664
      %v4666 = vrot.slane %v3962, 1
      %v4667 = vrot.slane %v3980, 1
      %v4668 = vsel %vm4620, %v4666, %v4667
      %v4669 = vld [vmem:[%s4 + $0x8] sm:$0xf]
      %v4671 = vsel %vm4178, %v4623, 0
      %v4674 = vsel %vm4178, %v4626, 0
      %v4677 = vsel %vm4178, %v4629, 0
      %v4680 = vsel %vm4178, %v4632, 0
      %v4683 = vsel %vm4178, %v4635, 0
      %v4686 = vsel %vm4178, %v4638, 0
      %v4689 = vsel %vm4178, %v4641, 0
      %v4692 = vsel %vm4178, %v4644, 0
      %v4695 = vsel %vm4178, %v4647, 0
      %v4698 = vsel %vm4178, %v4650, 0
      %v4701 = vsel %vm4178, %v4653, 0
      %v4704 = vsel %vm4178, %v4656, 0
      %v4707 = vsel %vm4178, %v4659, 0
      %v4710 = vsel %vm4178, %v4662, 0
      %v4713 = vsel %vm4178, %v4665, 0
      %v4716 = vsel %vm4178, %v4668, 0
      %v4719 = vsel %vm4227, %v4669, 0
      %4721 = vmatprep.subr.bf16.mxu0 0
      %4722 = vmatpush1.bf16.msra.mxu0 %v4719
      %4723 = vmatprep.subr.bf16.mxu0 0
      %4724 = vmatpush1.bf16.msra.mxu0 0
      %4725 = vmatprep.subr.bf16.mxu0 0
      %4726 = vmatpush1.bf16.msra.mxu0 0
      %4727 = vmatprep.subr.bf16.mxu0 0
      %4728 = vmatpush1.bf16.msra.mxu0 0
      %4729 = vmatprep.subr.bf16.mxu0 0
      %4730 = vmatpush1.bf16.msra.mxu0 0
      %4731 = vmatprep.subr.bf16.mxu0 0
      %4732 = vmatpush1.bf16.msra.mxu0 0
      %4733 = vmatprep.subr.bf16.mxu0 0
      %4734 = vmatpush1.bf16.msra.mxu0 0
      %4735 = vmatprep.subr.bf16.mxu0 0
      %4736 = vmatpush1.bf16.msra.mxu0 0
      %4737 = vmatprep.subr.bf16.mxu0 0
      %4738 = vmatpush1.bf16.msra.mxu0 0
      %4739 = vmatprep.subr.bf16.mxu0 0
      %4740 = vmatpush1.bf16.msra.mxu0 0
      %4741 = vmatprep.subr.bf16.mxu0 0
      %4742 = vmatpush1.bf16.msra.mxu0 0
      %4743 = vmatprep.subr.bf16.mxu0 0
      %4744 = vmatpush1.bf16.msra.mxu0 0
      %4745 = vmatprep.subr.bf16.mxu0 0
      %4746 = vmatpush1.bf16.msra.mxu0 0
      %4747 = vmatprep.subr.bf16.mxu0 0
      %4748 = vmatpush1.bf16.msra.mxu0 0
      %4749 = vmatprep.subr.bf16.mxu0 0
      %4750 = vmatpush1.bf16.msra.mxu0 0
      %4751 = vmatprep.subr.bf16.mxu0 0
      %4752 = vmatpush1.bf16.msra.mxu0 0
      %4753 = vmatprep.mubr.bf16.mxu0 0
      %4754 = vmatmul.mubr.bf16.gmra.mrb[0].mxu0 %v4671
      %v4755 = vpop.f32.mrb[0].mxu0
      %v4756 = vadd.f32 0.0, %v4755
      %v4757 = vpop.f32.mrb[0].mxu0
      %v4758 = vpop.f32.mrb[0].mxu0
      %v4759 = vadd.f32 0.0, %v4758
      %v4760 = vpop.f32.mrb[0].mxu0
      %4761 = vmatprep.mubr.bf16.mxu0 0
      %4762 = vmatmul.mubr.bf16.gmra.mrb[0].mxu0 %v4674
      %v4763 = vpop.f32.mrb[0].mxu0
      %v4764 = vadd.f32 0.0, %v4763
      %v4765 = vpop.f32.mrb[0].mxu0
      %v4766 = vpop.f32.mrb[0].mxu0
      %v4767 = vadd.f32 0.0, %v4766
      %v4768 = vpop.f32.mrb[0].mxu0
      %4769 = vmatprep.mubr.bf16.mxu0 0
      %4770 = vmatmul.mubr.bf16.gmra.mrb[0].mxu0 %v4677
      %v4771 = vpop.f32.mrb[0].mxu0
      %v4772 = vadd.f32 0.0, %v4771
      %v4773 = vpop.f32.mrb[0].mxu0
      %v4774 = vpop.f32.mrb[0].mxu0
      %v4775 = vadd.f32 0.0, %v4774
      %v4776 = vpop.f32.mrb[0].mxu0
      %4777 = vmatprep.mubr.bf16.mxu0 0
      %4778 = vmatmul.mubr.bf16.gmra.mrb[0].mxu0 %v4680
      %v4779 = vpop.f32.mrb[0].mxu0
      %v4780 = vadd.f32 0.0, %v4779
      %v4781 = vpop.f32.mrb[0].mxu0
      %v4782 = vpop.f32.mrb[0].mxu0
      %v4783 = vadd.f32 0.0, %v4782
      %v4784 = vpop.f32.mrb[0].mxu0
      %4785 = vmatprep.mubr.bf16.mxu0 0
      %4786 = vmatmul.mubr.bf16.gmra.mrb[0].mxu0 %v4683
      %v4787 = vpop.f32.mrb[0].mxu0
      %v4788 = vadd.f32 0.0, %v4787
      %v4789 = vpop.f32.mrb[0].mxu0
      %v4790 = vpop.f32.mrb[0].mxu0
      %v4791 = vadd.f32 0.0, %v4790
      %v4792 = vpop.f32.mrb[0].mxu0
      %4793 = vmatprep.mubr.bf16.mxu0 0
      %4794 = vmatmul.mubr.bf16.gmra.mrb[0].mxu0 %v4686
      %v4795 = vpop.f32.mrb[0].mxu0
      %v4796 = vadd.f32 0.0, %v4795
      %v4797 = vpop.f32.mrb[0].mxu0
      %v4798 = vpop.f32.mrb[0].mxu0
      %v4799 = vadd.f32 0.0, %v4798
      %v4800 = vpop.f32.mrb[0].mxu0
      %4801 = vmatprep.mubr.bf16.mxu0 0
      %4802 = vmatmul.mubr.bf16.gmra.mrb[0].mxu0 %v4689
      %v4803 = vpop.f32.mrb[0].mxu0
      %v4804 = vadd.f32 0.0, %v4803
      %v4805 = vpop.f32.mrb[0].mxu0
      %v4806 = vpop.f32.mrb[0].mxu0
      %v4807 = vadd.f32 0.0, %v4806
      %v4808 = vpop.f32.mrb[0].mxu0
      %4809 = vmatprep.mubr.bf16.mxu0 0
      %4810 = vmatmul.mubr.bf16.gmra.mrb[0].mxu0 %v4692
      %v4811 = vpop.f32.mrb[0].mxu0
      %v4812 = vadd.f32 0.0, %v4811
      %v4813 = vpop.f32.mrb[0].mxu0
      %v4814 = vpop.f32.mrb[0].mxu0
      %v4815 = vadd.f32 0.0, %v4814
      %v4816 = vpop.f32.mrb[0].mxu0
      %4817 = vmatprep.mubr.bf16.mxu0 0
      %4818 = vmatmul.mubr.bf16.gmra.mrb[0].mxu0 %v4695
      %v4819 = vpop.f32.mrb[0].mxu0
      %v4820 = vadd.f32 0.0, %v4819
      %v4821 = vpop.f32.mrb[0].mxu0
      %v4822 = vpop.f32.mrb[0].mxu0
      %v4823 = vadd.f32 0.0, %v4822
      %v4824 = vpop.f32.mrb[0].mxu0
      %4825 = vmatprep.mubr.bf16.mxu0 0
      %4826 = vmatmul.mubr.bf16.gmra.mrb[0].mxu0 %v4698
      %v4827 = vpop.f32.mrb[0].mxu0
      %v4828 = vadd.f32 0.0, %v4827
      %v4829 = vpop.f32.mrb[0].mxu0
      %v4830 = vpop.f32.mrb[0].mxu0
      %v4831 = vadd.f32 0.0, %v4830
      %v4832 = vpop.f32.mrb[0].mxu0
      %4833 = vmatprep.mubr.bf16.mxu0 0
      %4834 = vmatmul.mubr.bf16.gmra.mrb[0].mxu0 %v4701
      %v4835 = vpop.f32.mrb[0].mxu0
      %v4836 = vadd.f32 0.0, %v4835
      %v4837 = vpop.f32.mrb[0].mxu0
      %v4838 = vpop.f32.mrb[0].mxu0
      %v4839 = vadd.f32 0.0, %v4838
      %v4840 = vpop.f32.mrb[0].mxu0
      %4841 = vmatprep.mubr.bf16.mxu0 0
      %4842 = vmatmul.mubr.bf16.gmra.mrb[0].mxu0 %v4704
      %v4843 = vpop.f32.mrb[0].mxu0
      %v4844 = vadd.f32 0.0, %v4843
      %v4845 = vpop.f32.mrb[0].mxu0
      %v4846 = vpop.f32.mrb[0].mxu0
      %v4847 = vadd.f32 0.0, %v4846
      %v4848 = vpop.f32.mrb[0].mxu0
      %4849 = vmatprep.mubr.bf16.mxu0 0
      %4850 = vmatmul.mubr.bf16.gmra.mrb[0].mxu0 %v4707
      %v4851 = vpop.f32.mrb[0].mxu0
      %v4852 = vadd.f32 0.0, %v4851
      %v4853 = vpop.f32.mrb[0].mxu0
      %v4854 = vpop.f32.mrb[0].mxu0
      %v4855 = vadd.f32 0.0, %v4854
      %v4856 = vpop.f32.mrb[0].mxu0
      %4857 = vmatprep.mubr.bf16.mxu0 0
      %4858 = vmatmul.mubr.bf16.gmra.mrb[0].mxu0 %v4710
      %v4859 = vpop.f32.mrb[0].mxu0
      %v4860 = vadd.f32 0.0, %v4859
      %v4861 = vpop.f32.mrb[0].mxu0
      %v4862 = vpop.f32.mrb[0].mxu0
      %v4863 = vadd.f32 0.0, %v4862
      %v4864 = vpop.f32.mrb[0].mxu0
      %4865 = vmatprep.mubr.bf16.mxu0 0
      %4866 = vmatmul.mubr.bf16.gmra.mrb[0].mxu0 %v4713
      %v4867 = vpop.f32.mrb[0].mxu0
      %v4868 = vadd.f32 0.0, %v4867
      %v4869 = vpop.f32.mrb[0].mxu0
      %v4870 = vpop.f32.mrb[0].mxu0
      %v4871 = vadd.f32 0.0, %v4870
      %v4872 = vpop.f32.mrb[0].mxu0
      %4873 = vmatprep.mubr.bf16.mxu0 0
      %4874 = vmatmul.mubr.bf16.gmra.mrb[0].mxu0 %v4716
      %v4875 = vpop.f32.mrb[0].mxu0
      %v4876 = vadd.f32 0.0, %v4875
      %v4877 = vpop.f32.mrb[0].mxu0
      %v4878 = vpop.f32.mrb[0].mxu0
      %v4879 = vadd.f32 0.0, %v4878
      %v4880 = vpop.f32.mrb[0].mxu0
      %4881 = vdwg.mxu0
      %v4882 = vadd.f32 %v4462, %v4756
      %v4883 = vadd.f32 %v4465, %v4759
      %v4884 = vadd.f32 %v4470, %v4764
      %v4885 = vadd.f32 %v4473, %v4767
      %v4886 = vadd.f32 %v4478, %v4772
      %v4887 = vadd.f32 %v4481, %v4775
      %v4888 = vadd.f32 %v4486, %v4780
      %v4889 = vadd.f32 %v4489, %v4783
      %v4890 = vadd.f32 %v4494, %v4788
      %v4891 = vadd.f32 %v4497, %v4791
      %v4892 = vadd.f32 %v4502, %v4796
      %v4893 = vadd.f32 %v4505, %v4799
      %v4894 = vadd.f32 %v4510, %v4804
      %v4895 = vadd.f32 %v4513, %v4807
      %v4896 = vadd.f32 %v4518, %v4812
      %v4897 = vadd.f32 %v4521, %v4815
      %v4898 = vadd.f32 %v4526, %v4820
      %v4899 = vadd.f32 %v4529, %v4823
      %v4900 = vadd.f32 %v4534, %v4828
      %v4901 = vadd.f32 %v4537, %v4831
      %v4902 = vadd.f32 %v4542, %v4836
      %v4903 = vadd.f32 %v4545, %v4839
      %v4904 = vadd.f32 %v4550, %v4844
      %v4905 = vadd.f32 %v4553, %v4847
      %v4906 = vadd.f32 %v4558, %v4852
      %v4907 = vadd.f32 %v4561, %v4855
      %v4908 = vadd.f32 %v4566, %v4860
      %v4909 = vadd.f32 %v4569, %v4863
      %v4910 = vadd.f32 %v4574, %v4868
      %v4911 = vadd.f32 %v4577, %v4871
      %v4912 = vadd.f32 %v4582, %v4876
      %v4913 = vadd.f32 %v4585, %v4879
      %v4914 = vld [vmem:[%s4 + $0xc] sm:$0xf]
      %v4916 = vsel %vm4178, %v3963, 0
      %v4919 = vsel %vm4227, %v4914, 0
      %4921 = vmatprep.subr.bf16.mxu0 0
      %4922 = vmatpush1.bf16.msra.mxu0 %v4919
      %4923 = vmatprep.subr.bf16.mxu0 0
      %4924 = vmatpush1.bf16.msra.mxu0 0
      %4925 = vmatprep.subr.bf16.mxu0 0
      %4926 = vmatpush1.bf16.msra.mxu0 0
      %4927 = vmatprep.subr.bf16.mxu0 0
      %4928 = vmatpush1.bf16.msra.mxu0 0
      %4929 = vmatprep.subr.bf16.mxu0 0
      %4930 = vmatpush1.bf16.msra.mxu0 0
      %4931 = vmatprep.subr.bf16.mxu0 0
      %4932 = vmatpush1.bf16.msra.mxu0 0
      %4933 = vmatprep.subr.bf16.mxu0 0
      %4934 = vmatpush1.bf16.msra.mxu0 0
      %4935 = vmatprep.subr.bf16.mxu0 0
      %4936 = vmatpush1.bf16.msra.mxu0 0
      %4937 = vmatprep.subr.bf16.mxu0 0
      %4938 = vmatpush1.bf16.msra.mxu0 0
      %4939 = vmatprep.subr.bf16.mxu0 0
      %4940 = vmatpush1.bf16.msra.mxu0 0
      %4941 = vmatprep.subr.bf16.mxu0 0
      %4942 = vmatpush1.bf16.msra.mxu0 0
      %4943 = vmatprep.subr.bf16.mxu0 0
      %4944 = vmatpush1.bf16.msra.mxu0 0
      %4945 = vmatprep.subr.bf16.mxu0 0
      %4946 = vmatpush1.bf16.msra.mxu0 0
      %4947 = vmatprep.subr.bf16.mxu0 0
      %4948 = vmatpush1.bf16.msra.mxu0 0
      %4949 = vmatprep.subr.bf16.mxu0 0
      %4950 = vmatpush1.bf16.msra.mxu0 0
      %4951 = vmatprep.subr.bf16.mxu0 0
      %4952 = vmatpush1.bf16.msra.mxu0 0
      %4953 = vmatprep.mubr.bf16.mxu0 0
      %4954 = vmatmul.mubr.bf16.gmra.mrb[0].mxu0 %v4394
      %v4955 = vpop.f32.mrb[0].mxu0
      %v4956 = vadd.f32 0.0, %v4955
      %v4957 = vpop.f32.mrb[0].mxu0
      %v4958 = vpop.f32.mrb[0].mxu0
      %v4959 = vadd.f32 0.0, %v4958
      %v4960 = vpop.f32.mrb[0].mxu0
      %4961 = vmatprep.mubr.bf16.mxu0 0
      %4962 = vmatmul.mubr.bf16.gmra.mrb[0].mxu0 %v4396
      %v4963 = vpop.f32.mrb[0].mxu0
      %v4964 = vadd.f32 0.0, %v4963
      %v4965 = vpop.f32.mrb[0].mxu0
      %v4966 = vpop.f32.mrb[0].mxu0
      %v4967 = vadd.f32 0.0, %v4966
      %v4968 = vpop.f32.mrb[0].mxu0
      %4969 = vmatprep.mubr.bf16.mxu0 0
      %4970 = vmatmul.mubr.bf16.gmra.mrb[0].mxu0 %v4398
      %v4971 = vpop.f32.mrb[0].mxu0
      %v4972 = vadd.f32 0.0, %v4971
      %v4973 = vpop.f32.mrb[0].mxu0
      %v4974 = vpop.f32.mrb[0].mxu0
      %v4975 = vadd.f32 0.0, %v4974
      %v4976 = vpop.f32.mrb[0].mxu0
      %4977 = vmatprep.mubr.bf16.mxu0 0
      %4978 = vmatmul.mubr.bf16.gmra.mrb[0].mxu0 %v4400
      %v4979 = vpop.f32.mrb[0].mxu0
      %v4980 = vadd.f32 0.0, %v4979
      %v4981 = vpop.f32.mrb[0].mxu0
      %v4982 = vpop.f32.mrb[0].mxu0
      %v4983 = vadd.f32 0.0, %v4982
      %v4984 = vpop.f32.mrb[0].mxu0
      %4985 = vmatprep.mubr.bf16.mxu0 0
      %4986 = vmatmul.mubr.bf16.gmra.mrb[0].mxu0 %v4402
      %v4987 = vpop.f32.mrb[0].mxu0
      %v4988 = vadd.f32 0.0, %v4987
      %v4989 = vpop.f32.mrb[0].mxu0
      %v4990 = vpop.f32.mrb[0].mxu0
      %v4991 = vadd.f32 0.0, %v4990
      %v4992 = vpop.f32.mrb[0].mxu0
      %4993 = vmatprep.mubr.bf16.mxu0 0
      %4994 = vmatmul.mubr.bf16.gmra.mrb[0].mxu0 %v4404
      %v4995 = vpop.f32.mrb[0].mxu0
      %v4996 = vadd.f32 0.0, %v4995
      %v4997 = vpop.f32.mrb[0].mxu0
      %v4998 = vpop.f32.mrb[0].mxu0
      %v4999 = vadd.f32 0.0, %v4998
      %v5000 = vpop.f32.mrb[0].mxu0
      %5001 = vmatprep.mubr.bf16.mxu0 0
      %5002 = vmatmul.mubr.bf16.gmra.mrb[0].mxu0 %v4406
      %v5003 = vpop.f32.mrb[0].mxu0
      %v5004 = vadd.f32 0.0, %v5003
      %v5005 = vpop.f32.mrb[0].mxu0
      %v5006 = vpop.f32.mrb[0].mxu0
      %v5007 = vadd.f32 0.0, %v5006
      %v5008 = vpop.f32.mrb[0].mxu0
      %5009 = vmatprep.mubr.bf16.mxu0 0
      %5010 = vmatmul.mubr.bf16.gmra.mrb[0].mxu0 %v4408
      %v5011 = vpop.f32.mrb[0].mxu0
      %v5012 = vadd.f32 0.0, %v5011
      %v5013 = vpop.f32.mrb[0].mxu0
      %v5014 = vpop.f32.mrb[0].mxu0
      %v5015 = vadd.f32 0.0, %v5014
      %v5016 = vpop.f32.mrb[0].mxu0
      %5017 = vmatprep.mubr.bf16.mxu0 0
      %5018 = vmatmul.mubr.bf16.gmra.mrb[0].mxu0 %v4410
      %v5019 = vpop.f32.mrb[0].mxu0
      %v5020 = vadd.f32 0.0, %v5019
      %v5021 = vpop.f32.mrb[0].mxu0
      %v5022 = vpop.f32.mrb[0].mxu0
      %v5023 = vadd.f32 0.0, %v5022
      %v5024 = vpop.f32.mrb[0].mxu0
      %5025 = vmatprep.mubr.bf16.mxu0 0
      %5026 = vmatmul.mubr.bf16.gmra.mrb[0].mxu0 %v4412
      %v5027 = vpop.f32.mrb[0].mxu0
      %v5028 = vadd.f32 0.0, %v5027
      %v5029 = vpop.f32.mrb[0].mxu0
      %v5030 = vpop.f32.mrb[0].mxu0
      %v5031 = vadd.f32 0.0, %v5030
      %v5032 = vpop.f32.mrb[0].mxu0
      %5033 = vmatprep.mubr.bf16.mxu0 0
      %5034 = vmatmul.mubr.bf16.gmra.mrb[0].mxu0 %v4414
      %v5035 = vpop.f32.mrb[0].mxu0
      %v5036 = vadd.f32 0.0, %v5035
      %v5037 = vpop.f32.mrb[0].mxu0
      %v5038 = vpop.f32.mrb[0].mxu0
      %v5039 = vadd.f32 0.0, %v5038
      %v5040 = vpop.f32.mrb[0].mxu0
      %5041 = vmatprep.mubr.bf16.mxu0 0
      %5042 = vmatmul.mubr.bf16.gmra.mrb[0].mxu0 %v4416
      %v5043 = vpop.f32.mrb[0].mxu0
      %v5044 = vadd.f32 0.0, %v5043
      %v5045 = vpop.f32.mrb[0].mxu0
      %v5046 = vpop.f32.mrb[0].mxu0
      %v5047 = vadd.f32 0.0, %v5046
      %v5048 = vpop.f32.mrb[0].mxu0
      %5049 = vmatprep.mubr.bf16.mxu0 0
      %5050 = vmatmul.mubr.bf16.gmra.mrb[0].mxu0 %v4418
      %v5051 = vpop.f32.mrb[0].mxu0
      %v5052 = vadd.f32 0.0, %v5051
      %v5053 = vpop.f32.mrb[0].mxu0
      %v5054 = vpop.f32.mrb[0].mxu0
      %v5055 = vadd.f32 0.0, %v5054
      %v5056 = vpop.f32.mrb[0].mxu0
      %5057 = vmatprep.mubr.bf16.mxu0 0
      %5058 = vmatmul.mubr.bf16.gmra.mrb[0].mxu0 %v4420
      %v5059 = vpop.f32.mrb[0].mxu0
      %v5060 = vadd.f32 0.0, %v5059
      %v5061 = vpop.f32.mrb[0].mxu0
      %v5062 = vpop.f32.mrb[0].mxu0
      %v5063 = vadd.f32 0.0, %v5062
      %v5064 = vpop.f32.mrb[0].mxu0
      %5065 = vmatprep.mubr.bf16.mxu0 0
      %5066 = vmatmul.mubr.bf16.gmra.mrb[0].mxu0 %v4422
      %v5067 = vpop.f32.mrb[0].mxu0
      %v5068 = vadd.f32 0.0, %v5067
      %v5069 = vpop.f32.mrb[0].mxu0
      %v5070 = vpop.f32.mrb[0].mxu0
      %v5071 = vadd.f32 0.0, %v5070
      %v5072 = vpop.f32.mrb[0].mxu0
      %5073 = vmatprep.mubr.bf16.mxu0 0
      %5074 = vmatmul.mubr.bf16.gmra.mrb[0].mxu0 %v4916
      %v5075 = vpop.f32.mrb[0].mxu0
      %v5076 = vadd.f32 0.0, %v5075
      %v5077 = vpop.f32.mrb[0].mxu0
      %v5078 = vpop.f32.mrb[0].mxu0
      %v5079 = vadd.f32 0.0, %v5078
      %v5080 = vpop.f32.mrb[0].mxu0
      %5081 = vdwg.mxu0
      %v5082 = vadd.f32 %v4882, %v4956
      %v5083 = vadd.f32 %v4883, %v4959
      %v5084 = vadd.f32 %v4884, %v4964
      %v5085 = vadd.f32 %v4885, %v4967
      %v5086 = vadd.f32 %v4886, %v4972
      %v5087 = vadd.f32 %v4887, %v4975
      %v5088 = vadd.f32 %v4888, %v4980
      %v5089 = vadd.f32 %v4889, %v4983
      %v5090 = vadd.f32 %v4890, %v4988
      %v5091 = vadd.f32 %v4891, %v4991
      %v5092 = vadd.f32 %v4892, %v4996
      %v5093 = vadd.f32 %v4893, %v4999
      %v5094 = vadd.f32 %v4894, %v5004
      %v5095 = vadd.f32 %v4895, %v5007
      %v5096 = vadd.f32 %v4896, %v5012
      %v5097 = vadd.f32 %v4897, %v5015
      %v5098 = vadd.f32 %v4898, %v5020
      %v5099 = vadd.f32 %v4899, %v5023
      %v5100 = vadd.f32 %v4900, %v5028
      %v5101 = vadd.f32 %v4901, %v5031
      %v5102 = vadd.f32 %v4902, %v5036
      %v5103 = vadd.f32 %v4903, %v5039
      %v5104 = vadd.f32 %v4904, %v5044
      %v5105 = vadd.f32 %v4905, %v5047
      %v5106 = vadd.f32 %v4906, %v5052
      %v5107 = vadd.f32 %v4907, %v5055
      %v5108 = vadd.f32 %v4908, %v5060
      %v5109 = vadd.f32 %v4909, %v5063
      %v5110 = vadd.f32 %v4910, %v5068
      %v5111 = vadd.f32 %v4911, %v5071
      %v5112 = vadd.f32 %v4912, %v5076
      %v5113 = vadd.f32 %v4913, %v5079
      %v5114 = vshrl.u32 %v3963, 16
      %v5116 = vshll.u32 %v3963, 16
      %v5118 = vrot.slane %v5116, 1
      %v5119 = vor.u32 %v5114, %v5118
      %v5121 = vshll.u32 %v3981, 16
      %v5123 = vrot.slane %v5121, 1
      %v5124 = vsel %vm3984, %v5119, %v5123
      %v5125 = vld [vmem:[%s4 + $0x10] sm:$0xf]
      %v5127 = vsel %vm4178, %v5124, 0
      %v5130 = vsel %vm4227, %v5125, 0
      %5132 = vmatprep.subr.bf16.mxu0 0
      %5133 = vmatpush1.bf16.msra.mxu0 %v5130
      %5134 = vmatprep.subr.bf16.mxu0 0
      %5135 = vmatpush1.bf16.msra.mxu0 0
      %5136 = vmatprep.subr.bf16.mxu0 0
      %5137 = vmatpush1.bf16.msra.mxu0 0
      %5138 = vmatprep.subr.bf16.mxu0 0
      %5139 = vmatpush1.bf16.msra.mxu0 0
      %5140 = vmatprep.subr.bf16.mxu0 0
      %5141 = vmatpush1.bf16.msra.mxu0 0
      %5142 = vmatprep.subr.bf16.mxu0 0
      %5143 = vmatpush1.bf16.msra.mxu0 0
      %5144 = vmatprep.subr.bf16.mxu0 0
      %5145 = vmatpush1.bf16.msra.mxu0 0
      %5146 = vmatprep.subr.bf16.mxu0 0
      %5147 = vmatpush1.bf16.msra.mxu0 0
      %5148 = vmatprep.subr.bf16.mxu0 0
      %5149 = vmatpush1.bf16.msra.mxu0 0
      %5150 = vmatprep.subr.bf16.mxu0 0
      %5151 = vmatpush1.bf16.msra.mxu0 0
      %5152 = vmatprep.subr.bf16.mxu0 0
      %5153 = vmatpush1.bf16.msra.mxu0 0
      %5154 = vmatprep.subr.bf16.mxu0 0
      %5155 = vmatpush1.bf16.msra.mxu0 0
      %5156 = vmatprep.subr.bf16.mxu0 0
      %5157 = vmatpush1.bf16.msra.mxu0 0
      %5158 = vmatprep.subr.bf16.mxu0 0
      %5159 = vmatpush1.bf16.msra.mxu0 0
      %5160 = vmatprep.subr.bf16.mxu0 0
      %5161 = vmatpush1.bf16.msra.mxu0 0
      %5162 = vmatprep.subr.bf16.mxu0 0
      %5163 = vmatpush1.bf16.msra.mxu0 0
      %5164 = vmatprep.mubr.bf16.mxu0 0
      %5165 = vmatmul.mubr.bf16.gmra.mrb[0].mxu0 %v4183
      %v5166 = vpop.f32.mrb[0].mxu0
      %v5167 = vadd.f32 0.0, %v5166
      %v5168 = vpop.f32.mrb[0].mxu0
      %v5169 = vpop.f32.mrb[0].mxu0
      %v5170 = vadd.f32 0.0, %v5169
      %v5171 = vpop.f32.mrb[0].mxu0
      %5172 = vmatprep.mubr.bf16.mxu0 0
      %5173 = vmatmul.mubr.bf16.gmra.mrb[0].mxu0 %v4186
      %v5174 = vpop.f32.mrb[0].mxu0
      %v5175 = vadd.f32 0.0, %v5174
      %v5176 = vpop.f32.mrb[0].mxu0
      %v5177 = vpop.f32.mrb[0].mxu0
      %v5178 = vadd.f32 0.0, %v5177
      %v5179 = vpop.f32.mrb[0].mxu0
      %5180 = vmatprep.mubr.bf16.mxu0 0
      %5181 = vmatmul.mubr.bf16.gmra.mrb[0].mxu0 %v4189
      %v5182 = vpop.f32.mrb[0].mxu0
      %v5183 = vadd.f32 0.0, %v5182
      %v5184 = vpop.f32.mrb[0].mxu0
      %v5185 = vpop.f32.mrb[0].mxu0
      %v5186 = vadd.f32 0.0, %v5185
      %v5187 = vpop.f32.mrb[0].mxu0
      %5188 = vmatprep.mubr.bf16.mxu0 0
      %5189 = vmatmul.mubr.bf16.gmra.mrb[0].mxu0 %v4192
      %v5190 = vpop.f32.mrb[0].mxu0
      %v5191 = vadd.f32 0.0, %v5190
      %v5192 = vpop.f32.mrb[0].mxu0
      %v5193 = vpop.f32.mrb[0].mxu0
      %v5194 = vadd.f32 0.0, %v5193
      %v5195 = vpop.f32.mrb[0].mxu0
      %5196 = vmatprep.mubr.bf16.mxu0 0
      %5197 = vmatmul.mubr.bf16.gmra.mrb[0].mxu0 %v4195
      %v5198 = vpop.f32.mrb[0].mxu0
      %v5199 = vadd.f32 0.0, %v5198
      %v5200 = vpop.f32.mrb[0].mxu0
      %v5201 = vpop.f32.mrb[0].mxu0
      %v5202 = vadd.f32 0.0, %v5201
      %v5203 = vpop.f32.mrb[0].mxu0
      %5204 = vmatprep.mubr.bf16.mxu0 0
      %5205 = vmatmul.mubr.bf16.gmra.mrb[0].mxu0 %v4198
      %v5206 = vpop.f32.mrb[0].mxu0
      %v5207 = vadd.f32 0.0, %v5206
      %v5208 = vpop.f32.mrb[0].mxu0
      %v5209 = vpop.f32.mrb[0].mxu0
      %v5210 = vadd.f32 0.0, %v5209
      %v5211 = vpop.f32.mrb[0].mxu0
      %5212 = vmatprep.mubr.bf16.mxu0 0
      %5213 = vmatmul.mubr.bf16.gmra.mrb[0].mxu0 %v4201
      %v5214 = vpop.f32.mrb[0].mxu0
      %v5215 = vadd.f32 0.0, %v5214
      %v5216 = vpop.f32.mrb[0].mxu0
      %v5217 = vpop.f32.mrb[0].mxu0
      %v5218 = vadd.f32 0.0, %v5217
      %v5219 = vpop.f32.mrb[0].mxu0
      %5220 = vmatprep.mubr.bf16.mxu0 0
      %5221 = vmatmul.mubr.bf16.gmra.mrb[0].mxu0 %v4204
      %v5222 = vpop.f32.mrb[0].mxu0
      %v5223 = vadd.f32 0.0, %v5222
      %v5224 = vpop.f32.mrb[0].mxu0
      %v5225 = vpop.f32.mrb[0].mxu0
      %v5226 = vadd.f32 0.0, %v5225
      %v5227 = vpop.f32.mrb[0].mxu0
      %5228 = vmatprep.mubr.bf16.mxu0 0
      %5229 = vmatmul.mubr.bf16.gmra.mrb[0].mxu0 %v4207
      %v5230 = vpop.f32.mrb[0].mxu0
      %v5231 = vadd.f32 0.0, %v5230
      %v5232 = vpop.f32.mrb[0].mxu0
      %v5233 = vpop.f32.mrb[0].mxu0
      %v5234 = vadd.f32 0.0, %v5233
      %v5235 = vpop.f32.mrb[0].mxu0
      %5236 = vmatprep.mubr.bf16.mxu0 0
      %5237 = vmatmul.mubr.bf16.gmra.mrb[0].mxu0 %v4210
      %v5238 = vpop.f32.mrb[0].mxu0
      %v5239 = vadd.f32 0.0, %v5238
      %v5240 = vpop.f32.mrb[0].mxu0
      %v5241 = vpop.f32.mrb[0].mxu0
      %v5242 = vadd.f32 0.0, %v5241
      %v5243 = vpop.f32.mrb[0].mxu0
      %5244 = vmatprep.mubr.bf16.mxu0 0
      %5245 = vmatmul.mubr.bf16.gmra.mrb[0].mxu0 %v4213
      %v5246 = vpop.f32.mrb[0].mxu0
      %v5247 = vadd.f32 0.0, %v5246
      %v5248 = vpop.f32.mrb[0].mxu0
      %v5249 = vpop.f32.mrb[0].mxu0
      %v5250 = vadd.f32 0.0, %v5249
      %v5251 = vpop.f32.mrb[0].mxu0
      %5252 = vmatprep.mubr.bf16.mxu0 0
      %5253 = vmatmul.mubr.bf16.gmra.mrb[0].mxu0 %v4216
      %v5254 = vpop.f32.mrb[0].mxu0
      %v5255 = vadd.f32 0.0, %v5254
      %v5256 = vpop.f32.mrb[0].mxu0
      %v5257 = vpop.f32.mrb[0].mxu0
      %v5258 = vadd.f32 0.0, %v5257
      %v5259 = vpop.f32.mrb[0].mxu0
      %5260 = vmatprep.mubr.bf16.mxu0 0
      %5261 = vmatmul.mubr.bf16.gmra.mrb[0].mxu0 %v4219
      %v5262 = vpop.f32.mrb[0].mxu0
      %v5263 = vadd.f32 0.0, %v5262
      %v5264 = vpop.f32.mrb[0].mxu0
      %v5265 = vpop.f32.mrb[0].mxu0
      %v5266 = vadd.f32 0.0, %v5265
      %v5267 = vpop.f32.mrb[0].mxu0
      %5268 = vmatprep.mubr.bf16.mxu0 0
      %5269 = vmatmul.mubr.bf16.gmra.mrb[0].mxu0 %v4222
      %v5270 = vpop.f32.mrb[0].mxu0
      %v5271 = vadd.f32 0.0, %v5270
      %v5272 = vpop.f32.mrb[0].mxu0
      %v5273 = vpop.f32.mrb[0].mxu0
      %v5274 = vadd.f32 0.0, %v5273
      %v5275 = vpop.f32.mrb[0].mxu0
      %5276 = vmatprep.mubr.bf16.mxu0 0
      %5277 = vmatmul.mubr.bf16.gmra.mrb[0].mxu0 %v4225
      %v5278 = vpop.f32.mrb[0].mxu0
      %v5279 = vadd.f32 0.0, %v5278
      %v5280 = vpop.f32.mrb[0].mxu0
      %v5281 = vpop.f32.mrb[0].mxu0
      %v5282 = vadd.f32 0.0, %v5281
      %v5283 = vpop.f32.mrb[0].mxu0
      %5284 = vmatprep.mubr.bf16.mxu0 0
      %5285 = vmatmul.mubr.bf16.gmra.mrb[0].mxu0 %v5127
      %v5286 = vpop.f32.mrb[0].mxu0
      %v5287 = vadd.f32 0.0, %v5286
      %v5288 = vpop.f32.mrb[0].mxu0
      %v5289 = vpop.f32.mrb[0].mxu0
      %v5290 = vadd.f32 0.0, %v5289
      %v5291 = vpop.f32.mrb[0].mxu0
      %5292 = vdwg.mxu0
      %v5293 = vadd.f32 %v5082, %v5167
      %v5294 = vadd.f32 %v5083, %v5170
      %v5295 = vadd.f32 %v5084, %v5175
      %v5296 = vadd.f32 %v5085, %v5178
      %v5297 = vadd.f32 %v5086, %v5183
      %v5298 = vadd.f32 %v5087, %v5186
      %v5299 = vadd.f32 %v5088, %v5191
      %v5300 = vadd.f32 %v5089, %v5194
      %v5301 = vadd.f32 %v5090, %v5199
      %v5302 = vadd.f32 %v5091, %v5202
      %v5303 = vadd.f32 %v5092, %v5207
      %v5304 = vadd.f32 %v5093, %v5210
      %v5305 = vadd.f32 %v5094, %v5215
      %v5306 = vadd.f32 %v5095, %v5218
      %v5307 = vadd.f32 %v5096, %v5223
      %v5308 = vadd.f32 %v5097, %v5226
      %v5309 = vadd.f32 %v5098, %v5231
      %v5310 = vadd.f32 %v5099, %v5234
      %v5311 = vadd.f32 %v5100, %v5239
      %v5312 = vadd.f32 %v5101, %v5242
      %v5313 = vadd.f32 %v5102, %v5247
      %v5314 = vadd.f32 %v5103, %v5250
      %v5315 = vadd.f32 %v5104, %v5255
      %v5316 = vadd.f32 %v5105, %v5258
      %v5317 = vadd.f32 %v5106, %v5263
      %v5318 = vadd.f32 %v5107, %v5266
      %v5319 = vadd.f32 %v5108, %v5271
      %v5320 = vadd.f32 %v5109, %v5274
      %v5321 = vadd.f32 %v5110, %v5279
      %v5322 = vadd.f32 %v5111, %v5282
      %v5323 = vadd.f32 %v5112, %v5287
      %v5324 = vadd.f32 %v5113, %v5290
      %v5327 = vrot.slane %v3963, 1
      %v5328 = vrot.slane %v3981, 1
      %v5329 = vsel %vm4620, %v5327, %v5328
      %v5330 = vld [vmem:[%s4 + $0x14] sm:$0xf]
      %v5332 = vsel %vm4178, %v5329, 0
      %v5335 = vsel %vm4227, %v5330, 0
      %5337 = vmatprep.subr.bf16.mxu0 0
      %5338 = vmatpush1.bf16.msra.mxu0 %v5335
      %5339 = vmatprep.subr.bf16.mxu0 0
      %5340 = vmatpush1.bf16.msra.mxu0 0
      %5341 = vmatprep.subr.bf16.mxu0 0
      %5342 = vmatpush1.bf16.msra.mxu0 0
      %5343 = vmatprep.subr.bf16.mxu0 0
      %5344 = vmatpush1.bf16.msra.mxu0 0
      %5345 = vmatprep.subr.bf16.mxu0 0
      %5346 = vmatpush1.bf16.msra.mxu0 0
      %5347 = vmatprep.subr.bf16.mxu0 0
      %5348 = vmatpush1.bf16.msra.mxu0 0
      %5349 = vmatprep.subr.bf16.mxu0 0
      %5350 = vmatpush1.bf16.msra.mxu0 0
      %5351 = vmatprep.subr.bf16.mxu0 0
      %5352 = vmatpush1.bf16.msra.mxu0 0
      %5353 = vmatprep.subr.bf16.mxu0 0
      %5354 = vmatpush1.bf16.msra.mxu0 0
      %5355 = vmatprep.subr.bf16.mxu0 0
      %5356 = vmatpush1.bf16.msra.mxu0 0
      %5357 = vmatprep.subr.bf16.mxu0 0
      %5358 = vmatpush1.bf16.msra.mxu0 0
      %5359 = vmatprep.subr.bf16.mxu0 0
      %5360 = vmatpush1.bf16.msra.mxu0 0
      %5361 = vmatprep.subr.bf16.mxu0 0
      %5362 = vmatpush1.bf16.msra.mxu0 0
      %5363 = vmatprep.subr.bf16.mxu0 0
      %5364 = vmatpush1.bf16.msra.mxu0 0
      %5365 = vmatprep.subr.bf16.mxu0 0
      %5366 = vmatpush1.bf16.msra.mxu0 0
      %5367 = vmatprep.subr.bf16.mxu0 0
      %5368 = vmatpush1.bf16.msra.mxu0 0
      %5369 = vmatprep.mubr.bf16.mxu0 0
      %5370 = vmatmul.mubr.bf16.gmra.mrb[0].mxu0 %v4674
      %v5371 = vpop.f32.mrb[0].mxu0
      %v5372 = vadd.f32 0.0, %v5371
      %v5373 = vpop.f32.mrb[0].mxu0
      %v5374 = vpop.f32.mrb[0].mxu0
      %v5375 = vadd.f32 0.0, %v5374
      %v5376 = vpop.f32.mrb[0].mxu0
      %5377 = vmatprep.mubr.bf16.mxu0 0
      %5378 = vmatmul.mubr.bf16.gmra.mrb[0].mxu0 %v4677
      %v5379 = vpop.f32.mrb[0].mxu0
      %v5380 = vadd.f32 0.0, %v5379
      %v5381 = vpop.f32.mrb[0].mxu0
      %v5382 = vpop.f32.mrb[0].mxu0
      %v5383 = vadd.f32 0.0, %v5382
      %v5384 = vpop.f32.mrb[0].mxu0
      %5385 = vmatprep.mubr.bf16.mxu0 0
      %5386 = vmatmul.mubr.bf16.gmra.mrb[0].mxu0 %v4680
      %v5387 = vpop.f32.mrb[0].mxu0
      %v5388 = vadd.f32 0.0, %v5387
      %v5389 = vpop.f32.mrb[0].mxu0
      %v5390 = vpop.f32.mrb[0].mxu0
      %v5391 = vadd.f32 0.0, %v5390
      %v5392 = vpop.f32.mrb[0].mxu0
      %5393 = vmatprep.mubr.bf16.mxu0 0
      %5394 = vmatmul.mubr.bf16.gmra.mrb[0].mxu0 %v4683
      %v5395 = vpop.f32.mrb[0].mxu0
      %v5396 = vadd.f32 0.0, %v5395
      %v5397 = vpop.f32.mrb[0].mxu0
      %v5398 = vpop.f32.mrb[0].mxu0
      %v5399 = vadd.f32 0.0, %v5398
      %v5400 = vpop.f32.mrb[0].mxu0
      %5401 = vmatprep.mubr.bf16.mxu0 0
      %5402 = vmatmul.mubr.bf16.gmra.mrb[0].mxu0 %v4686
      %v5403 = vpop.f32.mrb[0].mxu0
      %v5404 = vadd.f32 0.0, %v5403
      %v5405 = vpop.f32.mrb[0].mxu0
      %v5406 = vpop.f32.mrb[0].mxu0
      %v5407 = vadd.f32 0.0, %v5406
      %v5408 = vpop.f32.mrb[0].mxu0
      %5409 = vmatprep.mubr.bf16.mxu0 0
      %5410 = vmatmul.mubr.bf16.gmra.mrb[0].mxu0 %v4689
      %v5411 = vpop.f32.mrb[0].mxu0
      %v5412 = vadd.f32 0.0, %v5411
      %v5413 = vpop.f32.mrb[0].mxu0
      %v5414 = vpop.f32.mrb[0].mxu0
      %v5415 = vadd.f32 0.0, %v5414
      %v5416 = vpop.f32.mrb[0].mxu0
      %5417 = vmatprep.mubr.bf16.mxu0 0
      %5418 = vmatmul.mubr.bf16.gmra.mrb[0].mxu0 %v4692
      %v5419 = vpop.f32.mrb[0].mxu0
      %v5420 = vadd.f32 0.0, %v5419
      %v5421 = vpop.f32.mrb[0].mxu0
      %v5422 = vpop.f32.mrb[0].mxu0
      %v5423 = vadd.f32 0.0, %v5422
      %v5424 = vpop.f32.mrb[0].mxu0
      %5425 = vmatprep.mubr.bf16.mxu0 0
      %5426 = vmatmul.mubr.bf16.gmra.mrb[0].mxu0 %v4695
      %v5427 = vpop.f32.mrb[0].mxu0
      %v5428 = vadd.f32 0.0, %v5427
      %v5429 = vpop.f32.mrb[0].mxu0
      %v5430 = vpop.f32.mrb[0].mxu0
      %v5431 = vadd.f32 0.0, %v5430
      %v5432 = vpop.f32.mrb[0].mxu0
      %5433 = vmatprep.mubr.bf16.mxu0 0
      %5434 = vmatmul.mubr.bf16.gmra.mrb[0].mxu0 %v4698
      %v5435 = vpop.f32.mrb[0].mxu0
      %v5436 = vadd.f32 0.0, %v5435
      %v5437 = vpop.f32.mrb[0].mxu0
      %v5438 = vpop.f32.mrb[0].mxu0
      %v5439 = vadd.f32 0.0, %v5438
      %v5440 = vpop.f32.mrb[0].mxu0
      %5441 = vmatprep.mubr.bf16.mxu0 0
      %5442 = vmatmul.mubr.bf16.gmra.mrb[0].mxu0 %v4701
      %v5443 = vpop.f32.mrb[0].mxu0
      %v5444 = vadd.f32 0.0, %v5443
      %v5445 = vpop.f32.mrb[0].mxu0
      %v5446 = vpop.f32.mrb[0].mxu0
      %v5447 = vadd.f32 0.0, %v5446
      %v5448 = vpop.f32.mrb[0].mxu0
      %5449 = vmatprep.mubr.bf16.mxu0 0
      %5450 = vmatmul.mubr.bf16.gmra.mrb[0].mxu0 %v4704
      %v5451 = vpop.f32.mrb[0].mxu0
      %v5452 = vadd.f32 0.0, %v5451
      %v5453 = vpop.f32.mrb[0].mxu0
      %v5454 = vpop.f32.mrb[0].mxu0
      %v5455 = vadd.f32 0.0, %v5454
      %v5456 = vpop.f32.mrb[0].mxu0
      %5457 = vmatprep.mubr.bf16.mxu0 0
      %5458 = vmatmul.mubr.bf16.gmra.mrb[0].mxu0 %v4707
      %v5459 = vpop.f32.mrb[0].mxu0
      %v5460 = vadd.f32 0.0, %v5459
      %v5461 = vpop.f32.mrb[0].mxu0
      %v5462 = vpop.f32.mrb[0].mxu0
      %v5463 = vadd.f32 0.0, %v5462
      %v5464 = vpop.f32.mrb[0].mxu0
      %5465 = vmatprep.mubr.bf16.mxu0 0
      %5466 = vmatmul.mubr.bf16.gmra.mrb[0].mxu0 %v4710
      %v5467 = vpop.f32.mrb[0].mxu0
      %v5468 = vadd.f32 0.0, %v5467
      %v5469 = vpop.f32.mrb[0].mxu0
      %v5470 = vpop.f32.mrb[0].mxu0
      %v5471 = vadd.f32 0.0, %v5470
      %v5472 = vpop.f32.mrb[0].mxu0
      %5473 = vmatprep.mubr.bf16.mxu0 0
      %5474 = vmatmul.mubr.bf16.gmra.mrb[0].mxu0 %v4713
      %v5475 = vpop.f32.mrb[0].mxu0
      %v5476 = vadd.f32 0.0, %v5475
      %v5477 = vpop.f32.mrb[0].mxu0
      %v5478 = vpop.f32.mrb[0].mxu0
      %v5479 = vadd.f32 0.0, %v5478
      %v5480 = vpop.f32.mrb[0].mxu0
      %5481 = vmatprep.mubr.bf16.mxu0 0
      %5482 = vmatmul.mubr.bf16.gmra.mrb[0].mxu0 %v4716
      %v5483 = vpop.f32.mrb[0].mxu0
      %v5484 = vadd.f32 0.0, %v5483
      %v5485 = vpop.f32.mrb[0].mxu0
      %v5486 = vpop.f32.mrb[0].mxu0
      %v5487 = vadd.f32 0.0, %v5486
      %v5488 = vpop.f32.mrb[0].mxu0
      %5489 = vmatprep.mubr.bf16.mxu0 0
      %5490 = vmatmul.mubr.bf16.gmra.mrb[0].mxu0 %v5332
      %v5491 = vpop.f32.mrb[0].mxu0
      %v5492 = vadd.f32 0.0, %v5491
      %v5493 = vpop.f32.mrb[0].mxu0
      %v5494 = vpop.f32.mrb[0].mxu0
      %v5495 = vadd.f32 0.0, %v5494
      %v5496 = vpop.f32.mrb[0].mxu0
      %5497 = vdwg.mxu0
      %v5498 = vadd.f32 %v5293, %v5372
      %v5499 = vadd.f32 %v5294, %v5375
      %v5500 = vadd.f32 %v5295, %v5380
      %v5501 = vadd.f32 %v5296, %v5383
      %v5502 = vadd.f32 %v5297, %v5388
      %v5503 = vadd.f32 %v5298, %v5391
      %v5504 = vadd.f32 %v5299, %v5396
      %v5505 = vadd.f32 %v5300, %v5399
      %v5506 = vadd.f32 %v5301, %v5404
      %v5507 = vadd.f32 %v5302, %v5407
      %v5508 = vadd.f32 %v5303, %v5412
      %v5509 = vadd.f32 %v5304, %v5415
      %v5510 = vadd.f32 %v5305, %v5420
      %v5511 = vadd.f32 %v5306, %v5423
      %v5512 = vadd.f32 %v5307, %v5428
      %v5513 = vadd.f32 %v5308, %v5431
      %v5514 = vadd.f32 %v5309, %v5436
      %v5515 = vadd.f32 %v5310, %v5439
      %v5516 = vadd.f32 %v5311, %v5444
      %v5517 = vadd.f32 %v5312, %v5447
      %v5518 = vadd.f32 %v5313, %v5452
      %v5519 = vadd.f32 %v5314, %v5455
      %v5520 = vadd.f32 %v5315, %v5460
      %v5521 = vadd.f32 %v5316, %v5463
      %v5522 = vadd.f32 %v5317, %v5468
      %v5523 = vadd.f32 %v5318, %v5471
      %v5524 = vadd.f32 %v5319, %v5476
      %v5525 = vadd.f32 %v5320, %v5479
      %v5526 = vadd.f32 %v5321, %v5484
      %v5527 = vadd.f32 %v5322, %v5487
      %v5528 = vadd.f32 %v5323, %v5492
      %v5529 = vadd.f32 %v5324, %v5495
      %v5530 = vld [vmem:[%s4 + $0x18] sm:$0xf]
      %v5532 = vsel %vm4178, %v3964, 0
      %v5535 = vsel %vm4227, %v5530, 0
      %5537 = vmatprep.subr.bf16.mxu0 0
      %5538 = vmatpush1.bf16.msra.mxu0 %v5535
      %5539 = vmatprep.subr.bf16.mxu0 0
      %5540 = vmatpush1.bf16.msra.mxu0 0
      %5541 = vmatprep.subr.bf16.mxu0 0
      %5542 = vmatpush1.bf16.msra.mxu0 0
      %5543 = vmatprep.subr.bf16.mxu0 0
      %5544 = vmatpush1.bf16.msra.mxu0 0
      %5545 = vmatprep.subr.bf16.mxu0 0
      %5546 = vmatpush1.bf16.msra.mxu0 0
      %5547 = vmatprep.subr.bf16.mxu0 0
      %5548 = vmatpush1.bf16.msra.mxu0 0
      %5549 = vmatprep.subr.bf16.mxu0 0
      %5550 = vmatpush1.bf16.msra.mxu0 0
      %5551 = vmatprep.subr.bf16.mxu0 0
      %5552 = vmatpush1.bf16.msra.mxu0 0
      %5553 = vmatprep.subr.bf16.mxu0 0
      %5554 = vmatpush1.bf16.msra.mxu0 0
      %5555 = vmatprep.subr.bf16.mxu0 0
      %5556 = vmatpush1.bf16.msra.mxu0 0
      %5557 = vmatprep.subr.bf16.mxu0 0
      %5558 = vmatpush1.bf16.msra.mxu0 0
      %5559 = vmatprep.subr.bf16.mxu0 0
      %5560 = vmatpush1.bf16.msra.mxu0 0
      %5561 = vmatprep.subr.bf16.mxu0 0
      %5562 = vmatpush1.bf16.msra.mxu0 0
      %5563 = vmatprep.subr.bf16.mxu0 0
      %5564 = vmatpush1.bf16.msra.mxu0 0
      %5565 = vmatprep.subr.bf16.mxu0 0
      %5566 = vmatpush1.bf16.msra.mxu0 0
      %5567 = vmatprep.subr.bf16.mxu0 0
      %5568 = vmatpush1.bf16.msra.mxu0 0
      %5569 = vmatprep.mubr.bf16.mxu0 0
      %5570 = vmatmul.mubr.bf16.gmra.mrb[0].mxu0 %v4396
      %v5571 = vpop.f32.mrb[0].mxu0
      %v5572 = vadd.f32 0.0, %v5571
      %v5573 = vpop.f32.mrb[0].mxu0
      %v5574 = vpop.f32.mrb[0].mxu0
      %v5575 = vadd.f32 0.0, %v5574
      %v5576 = vpop.f32.mrb[0].mxu0
      %5577 = vmatprep.mubr.bf16.mxu0 0
      %5578 = vmatmul.mubr.bf16.gmra.mrb[0].mxu0 %v4398
      %v5579 = vpop.f32.mrb[0].mxu0
      %v5580 = vadd.f32 0.0, %v5579
      %v5581 = vpop.f32.mrb[0].mxu0
      %v5582 = vpop.f32.mrb[0].mxu0
      %v5583 = vadd.f32 0.0, %v5582
      %v5584 = vpop.f32.mrb[0].mxu0
      %5585 = vmatprep.mubr.bf16.mxu0 0
      %5586 = vmatmul.mubr.bf16.gmra.mrb[0].mxu0 %v4400
      %v5587 = vpop.f32.mrb[0].mxu0
      %v5588 = vadd.f32 0.0, %v5587
      %v5589 = vpop.f32.mrb[0].mxu0
      %v5590 = vpop.f32.mrb[0].mxu0
      %v5591 = vadd.f32 0.0, %v5590
      %v5592 = vpop.f32.mrb[0].mxu0
      %5593 = vmatprep.mubr.bf16.mxu0 0
      %5594 = vmatmul.mubr.bf16.gmra.mrb[0].mxu0 %v4402
      %v5595 = vpop.f32.mrb[0].mxu0
      %v5596 = vadd.f32 0.0, %v5595
      %v5597 = vpop.f32.mrb[0].mxu0
      %v5598 = vpop.f32.mrb[0].mxu0
      %v5599 = vadd.f32 0.0, %v5598
      %v5600 = vpop.f32.mrb[0].mxu0
      %5601 = vmatprep.mubr.bf16.mxu0 0
      %5602 = vmatmul.mubr.bf16.gmra.mrb[0].mxu0 %v4404
      %v5603 = vpop.f32.mrb[0].mxu0
      %v5604 = vadd.f32 0.0, %v5603
      %v5605 = vpop.f32.mrb[0].mxu0
      %v5606 = vpop.f32.mrb[0].mxu0
      %v5607 = vadd.f32 0.0, %v5606
      %v5608 = vpop.f32.mrb[0].mxu0
      %5609 = vmatprep.mubr.bf16.mxu0 0
      %5610 = vmatmul.mubr.bf16.gmra.mrb[0].mxu0 %v4406
      %v5611 = vpop.f32.mrb[0].mxu0
      %v5612 = vadd.f32 0.0, %v5611
      %v5613 = vpop.f32.mrb[0].mxu0
      %v5614 = vpop.f32.mrb[0].mxu0
      %v5615 = vadd.f32 0.0, %v5614
      %v5616 = vpop.f32.mrb[0].mxu0
      %5617 = vmatprep.mubr.bf16.mxu0 0
      %5618 = vmatmul.mubr.bf16.gmra.mrb[0].mxu0 %v4408
      %v5619 = vpop.f32.mrb[0].mxu0
      %v5620 = vadd.f32 0.0, %v5619
      %v5621 = vpop.f32.mrb[0].mxu0
      %v5622 = vpop.f32.mrb[0].mxu0
      %v5623 = vadd.f32 0.0, %v5622
      %v5624 = vpop.f32.mrb[0].mxu0
      %5625 = vmatprep.mubr.bf16.mxu0 0
      %5626 = vmatmul.mubr.bf16.gmra.mrb[0].mxu0 %v4410
      %v5627 = vpop.f32.mrb[0].mxu0
      %v5628 = vadd.f32 0.0, %v5627
      %v5629 = vpop.f32.mrb[0].mxu0
      %v5630 = vpop.f32.mrb[0].mxu0
      %v5631 = vadd.f32 0.0, %v5630
      %v5632 = vpop.f32.mrb[0].mxu0
      %5633 = vmatprep.mubr.bf16.mxu0 0
      %5634 = vmatmul.mubr.bf16.gmra.mrb[0].mxu0 %v4412
      %v5635 = vpop.f32.mrb[0].mxu0
      %v5636 = vadd.f32 0.0, %v5635
      %v5637 = vpop.f32.mrb[0].mxu0
      %v5638 = vpop.f32.mrb[0].mxu0
      %v5639 = vadd.f32 0.0, %v5638
      %v5640 = vpop.f32.mrb[0].mxu0
      %5641 = vmatprep.mubr.bf16.mxu0 0
      %5642 = vmatmul.mubr.bf16.gmra.mrb[0].mxu0 %v4414
      %v5643 = vpop.f32.mrb[0].mxu0
      %v5644 = vadd.f32 0.0, %v5643
      %v5645 = vpop.f32.mrb[0].mxu0
      %v5646 = vpop.f32.mrb[0].mxu0
      %v5647 = vadd.f32 0.0, %v5646
      %v5648 = vpop.f32.mrb[0].mxu0
      %5649 = vmatprep.mubr.bf16.mxu0 0
      %5650 = vmatmul.mubr.bf16.gmra.mrb[0].mxu0 %v4416
      %v5651 = vpop.f32.mrb[0].mxu0
      %v5652 = vadd.f32 0.0, %v5651
      %v5653 = vpop.f32.mrb[0].mxu0
      %v5654 = vpop.f32.mrb[0].mxu0
      %v5655 = vadd.f32 0.0, %v5654
      %v5656 = vpop.f32.mrb[0].mxu0
      %5657 = vmatprep.mubr.bf16.mxu0 0
      %5658 = vmatmul.mubr.bf16.gmra.mrb[0].mxu0 %v4418
      %v5659 = vpop.f32.mrb[0].mxu0
      %v5660 = vadd.f32 0.0, %v5659
      %v5661 = vpop.f32.mrb[0].mxu0
      %v5662 = vpop.f32.mrb[0].mxu0
      %v5663 = vadd.f32 0.0, %v5662
      %v5664 = vpop.f32.mrb[0].mxu0
      %5665 = vmatprep.mubr.bf16.mxu0 0
      %5666 = vmatmul.mubr.bf16.gmra.mrb[0].mxu0 %v4420
      %v5667 = vpop.f32.mrb[0].mxu0
      %v5668 = vadd.f32 0.0, %v5667
      %v5669 = vpop.f32.mrb[0].mxu0
      %v5670 = vpop.f32.mrb[0].mxu0
      %v5671 = vadd.f32 0.0, %v5670
      %v5672 = vpop.f32.mrb[0].mxu0
      %5673 = vmatprep.mubr.bf16.mxu0 0
      %5674 = vmatmul.mubr.bf16.gmra.mrb[0].mxu0 %v4422
      %v5675 = vpop.f32.mrb[0].mxu0
      %v5676 = vadd.f32 0.0, %v5675
      %v5677 = vpop.f32.mrb[0].mxu0
      %v5678 = vpop.f32.mrb[0].mxu0
      %v5679 = vadd.f32 0.0, %v5678
      %v5680 = vpop.f32.mrb[0].mxu0
      %5681 = vmatprep.mubr.bf16.mxu0 0
      %5682 = vmatmul.mubr.bf16.gmra.mrb[0].mxu0 %v4916
      %v5683 = vpop.f32.mrb[0].mxu0
      %v5684 = vadd.f32 0.0, %v5683
      %v5685 = vpop.f32.mrb[0].mxu0
      %v5686 = vpop.f32.mrb[0].mxu0
      %v5687 = vadd.f32 0.0, %v5686
      %v5688 = vpop.f32.mrb[0].mxu0
      %5689 = vmatprep.mubr.bf16.mxu0 0
      %5690 = vmatmul.mubr.bf16.gmra.mrb[0].mxu0 %v5532
      %v5691 = vpop.f32.mrb[0].mxu0
      %v5692 = vadd.f32 0.0, %v5691
      %v5693 = vpop.f32.mrb[0].mxu0
      %v5694 = vpop.f32.mrb[0].mxu0
      %v5695 = vadd.f32 0.0, %v5694
      %v5696 = vpop.f32.mrb[0].mxu0
      %5697 = vdwg.mxu0
      %v5698 = vadd.f32 %v5498, %v5572
      %v5699 = vadd.f32 %v5499, %v5575
      %v5700 = vadd.f32 %v5500, %v5580
      %v5701 = vadd.f32 %v5501, %v5583
      %v5702 = vadd.f32 %v5502, %v5588
      %v5703 = vadd.f32 %v5503, %v5591
      %v5704 = vadd.f32 %v5504, %v5596
      %v5705 = vadd.f32 %v5505, %v5599
      %v5706 = vadd.f32 %v5506, %v5604
      %v5707 = vadd.f32 %v5507, %v5607
      %v5708 = vadd.f32 %v5508, %v5612
      %v5709 = vadd.f32 %v5509, %v5615
      %v5710 = vadd.f32 %v5510, %v5620
      %v5711 = vadd.f32 %v5511, %v5623
      %v5712 = vadd.f32 %v5512, %v5628
      %v5713 = vadd.f32 %v5513, %v5631
      %v5714 = vadd.f32 %v5514, %v5636
      %v5715 = vadd.f32 %v5515, %v5639
      %v5716 = vadd.f32 %v5516, %v5644
      %v5717 = vadd.f32 %v5517, %v5647
      %v5718 = vadd.f32 %v5518, %v5652
      %v5719 = vadd.f32 %v5519, %v5655
      %v5720 = vadd.f32 %v5520, %v5660
      %v5721 = vadd.f32 %v5521, %v5663
      %v5722 = vadd.f32 %v5522, %v5668
      %v5723 = vadd.f32 %v5523, %v5671
      %v5724 = vadd.f32 %v5524, %v5676
      %v5725 = vadd.f32 %v5525, %v5679
      %v5726 = vadd.f32 %v5526, %v5684
      %v5727 = vadd.f32 %v5527, %v5687
      %v5728 = vadd.f32 %v5528, %v5692
      %v5729 = vadd.f32 %v5529, %v5695
      %v5730 = vshrl.u32 %v3964, 16
      %v5732 = vshll.u32 %v3964, 16
      %v5734 = vrot.slane %v5732, 1
      %v5735 = vor.u32 %v5730, %v5734
      %v5737 = vshll.u32 %v3982, 16
      %v5739 = vrot.slane %v5737, 1
      %v5740 = vsel %vm3984, %v5735, %v5739
      %v5741 = vld [vmem:[%s4 + $0x1c] sm:$0xf]
      %v5743 = vsel %vm4178, %v5740, 0
      %v5746 = vsel %vm4227, %v5741, 0
      %5748 = vmatprep.subr.bf16.mxu0 0
      %5749 = vmatpush1.bf16.msra.mxu0 %v5746
      %5750 = vmatprep.subr.bf16.mxu0 0
      %5751 = vmatpush1.bf16.msra.mxu0 0
      %5752 = vmatprep.subr.bf16.mxu0 0
      %5753 = vmatpush1.bf16.msra.mxu0 0
      %5754 = vmatprep.subr.bf16.mxu0 0
      %5755 = vmatpush1.bf16.msra.mxu0 0
      %5756 = vmatprep.subr.bf16.mxu0 0
      %5757 = vmatpush1.bf16.msra.mxu0 0
      %5758 = vmatprep.subr.bf16.mxu0 0
      %5759 = vmatpush1.bf16.msra.mxu0 0
      %5760 = vmatprep.subr.bf16.mxu0 0
      %5761 = vmatpush1.bf16.msra.mxu0 0
      %5762 = vmatprep.subr.bf16.mxu0 0
      %5763 = vmatpush1.bf16.msra.mxu0 0
      %5764 = vmatprep.subr.bf16.mxu0 0
      %5765 = vmatpush1.bf16.msra.mxu0 0
      %5766 = vmatprep.subr.bf16.mxu0 0
      %5767 = vmatpush1.bf16.msra.mxu0 0
      %5768 = vmatprep.subr.bf16.mxu0 0
      %5769 = vmatpush1.bf16.msra.mxu0 0
      %5770 = vmatprep.subr.bf16.mxu0 0
      %5771 = vmatpush1.bf16.msra.mxu0 0
      %5772 = vmatprep.subr.bf16.mxu0 0
      %5773 = vmatpush1.bf16.msra.mxu0 0
      %5774 = vmatprep.subr.bf16.mxu0 0
      %5775 = vmatpush1.bf16.msra.mxu0 0
      %5776 = vmatprep.subr.bf16.mxu0 0
      %5777 = vmatpush1.bf16.msra.mxu0 0
      %5778 = vmatprep.subr.bf16.mxu0 0
      %5779 = vmatpush1.bf16.msra.mxu0 0
      %5780 = vmatprep.mubr.bf16.mxu0 0
      %5781 = vmatmul.mubr.bf16.gmra.mrb[0].mxu0 %v4186
      %v5782 = vpop.f32.mrb[0].mxu0
      %v5783 = vadd.f32 0.0, %v5782
      %v5784 = vpop.f32.mrb[0].mxu0
      %v5785 = vpop.f32.mrb[0].mxu0
      %v5786 = vadd.f32 0.0, %v5785
      %v5787 = vpop.f32.mrb[0].mxu0
      %5788 = vmatprep.mubr.bf16.mxu0 0
      %5789 = vmatmul.mubr.bf16.gmra.mrb[0].mxu0 %v4189
      %v5790 = vpop.f32.mrb[0].mxu0
      %v5791 = vadd.f32 0.0, %v5790
      %v5792 = vpop.f32.mrb[0].mxu0
      %v5793 = vpop.f32.mrb[0].mxu0
      %v5794 = vadd.f32 0.0, %v5793
      %v5795 = vpop.f32.mrb[0].mxu0
      %5796 = vmatprep.mubr.bf16.mxu0 0
      %5797 = vmatmul.mubr.bf16.gmra.mrb[0].mxu0 %v4192
      %v5798 = vpop.f32.mrb[0].mxu0
      %v5799 = vadd.f32 0.0, %v5798
      %v5800 = vpop.f32.mrb[0].mxu0
      %v5801 = vpop.f32.mrb[0].mxu0
      %v5802 = vadd.f32 0.0, %v5801
      %v5803 = vpop.f32.mrb[0].mxu0
      %5804 = vmatprep.mubr.bf16.mxu0 0
      %5805 = vmatmul.mubr.bf16.gmra.mrb[0].mxu0 %v4195
      %v5806 = vpop.f32.mrb[0].mxu0
      %v5807 = vadd.f32 0.0, %v5806
      %v5808 = vpop.f32.mrb[0].mxu0
      %v5809 = vpop.f32.mrb[0].mxu0
      %v5810 = vadd.f32 0.0, %v5809
      %v5811 = vpop.f32.mrb[0].mxu0
      %5812 = vmatprep.mubr.bf16.mxu0 0
      %5813 = vmatmul.mubr.bf16.gmra.mrb[0].mxu0 %v4198
      %v5814 = vpop.f32.mrb[0].mxu0
      %v5815 = vadd.f32 0.0, %v5814
      %v5816 = vpop.f32.mrb[0].mxu0
      %v5817 = vpop.f32.mrb[0].mxu0
      %v5818 = vadd.f32 0.0, %v5817
      %v5819 = vpop.f32.mrb[0].mxu0
      %5820 = vmatprep.mubr.bf16.mxu0 0
      %5821 = vmatmul.mubr.bf16.gmra.mrb[0].mxu0 %v4201
      %v5822 = vpop.f32.mrb[0].mxu0
      %v5823 = vadd.f32 0.0, %v5822
      %v5824 = vpop.f32.mrb[0].mxu0
      %v5825 = vpop.f32.mrb[0].mxu0
      %v5826 = vadd.f32 0.0, %v5825
      %v5827 = vpop.f32.mrb[0].mxu0
      %5828 = vmatprep.mubr.bf16.mxu0 0
      %5829 = vmatmul.mubr.bf16.gmra.mrb[0].mxu0 %v4204
      %v5830 = vpop.f32.mrb[0].mxu0
      %v5831 = vadd.f32 0.0, %v5830
      %v5832 = vpop.f32.mrb[0].mxu0
      %v5833 = vpop.f32.mrb[0].mxu0
      %v5834 = vadd.f32 0.0, %v5833
      %v5835 = vpop.f32.mrb[0].mxu0
      %5836 = vmatprep.mubr.bf16.mxu0 0
      %5837 = vmatmul.mubr.bf16.gmra.mrb[0].mxu0 %v4207
      %v5838 = vpop.f32.mrb[0].mxu0
      %v5839 = vadd.f32 0.0, %v5838
      %v5840 = vpop.f32.mrb[0].mxu0
      %v5841 = vpop.f32.mrb[0].mxu0
      %v5842 = vadd.f32 0.0, %v5841
      %v5843 = vpop.f32.mrb[0].mxu0
      %5844 = vmatprep.mubr.bf16.mxu0 0
      %5845 = vmatmul.mubr.bf16.gmra.mrb[0].mxu0 %v4210
      %v5846 = vpop.f32.mrb[0].mxu0
      %v5847 = vadd.f32 0.0, %v5846
      %v5848 = vpop.f32.mrb[0].mxu0
      %v5849 = vpop.f32.mrb[0].mxu0
      %v5850 = vadd.f32 0.0, %v5849
      %v5851 = vpop.f32.mrb[0].mxu0
      %5852 = vmatprep.mubr.bf16.mxu0 0
      %5853 = vmatmul.mubr.bf16.gmra.mrb[0].mxu0 %v4213
      %v5854 = vpop.f32.mrb[0].mxu0
      %v5855 = vadd.f32 0.0, %v5854
      %v5856 = vpop.f32.mrb[0].mxu0
      %v5857 = vpop.f32.mrb[0].mxu0
      %v5858 = vadd.f32 0.0, %v5857
      %v5859 = vpop.f32.mrb[0].mxu0
      %5860 = vmatprep.mubr.bf16.mxu0 0
      %5861 = vmatmul.mubr.bf16.gmra.mrb[0].mxu0 %v4216
      %v5862 = vpop.f32.mrb[0].mxu0
      %v5863 = vadd.f32 0.0, %v5862
      %v5864 = vpop.f32.mrb[0].mxu0
      %v5865 = vpop.f32.mrb[0].mxu0
      %v5866 = vadd.f32 0.0, %v5865
      %v5867 = vpop.f32.mrb[0].mxu0
      %5868 = vmatprep.mubr.bf16.mxu0 0
      %5869 = vmatmul.mubr.bf16.gmra.mrb[0].mxu0 %v4219
      %v5870 = vpop.f32.mrb[0].mxu0
      %v5871 = vadd.f32 0.0, %v5870
      %v5872 = vpop.f32.mrb[0].mxu0
      %v5873 = vpop.f32.mrb[0].mxu0
      %v5874 = vadd.f32 0.0, %v5873
      %v5875 = vpop.f32.mrb[0].mxu0
      %5876 = vmatprep.mubr.bf16.mxu0 0
      %5877 = vmatmul.mubr.bf16.gmra.mrb[0].mxu0 %v4222
      %v5878 = vpop.f32.mrb[0].mxu0
      %v5879 = vadd.f32 0.0, %v5878
      %v5880 = vpop.f32.mrb[0].mxu0
      %v5881 = vpop.f32.mrb[0].mxu0
      %v5882 = vadd.f32 0.0, %v5881
      %v5883 = vpop.f32.mrb[0].mxu0
      %5884 = vmatprep.mubr.bf16.mxu0 0
      %5885 = vmatmul.mubr.bf16.gmra.mrb[0].mxu0 %v4225
      %v5886 = vpop.f32.mrb[0].mxu0
      %v5887 = vadd.f32 0.0, %v5886
      %v5888 = vpop.f32.mrb[0].mxu0
      %v5889 = vpop.f32.mrb[0].mxu0
      %v5890 = vadd.f32 0.0, %v5889
      %v5891 = vpop.f32.mrb[0].mxu0
      %5892 = vmatprep.mubr.bf16.mxu0 0
      %5893 = vmatmul.mubr.bf16.gmra.mrb[0].mxu0 %v5127
      %v5894 = vpop.f32.mrb[0].mxu0
      %v5895 = vadd.f32 0.0, %v5894
      %v5896 = vpop.f32.mrb[0].mxu0
      %v5897 = vpop.f32.mrb[0].mxu0
      %v5898 = vadd.f32 0.0, %v5897
      %v5899 = vpop.f32.mrb[0].mxu0
      %5900 = vmatprep.mubr.bf16.mxu0 0
      %5901 = vmatmul.mubr.bf16.gmra.mrb[0].mxu0 %v5743
      %v5902 = vpop.f32.mrb[0].mxu0
      %v5903 = vadd.f32 0.0, %v5902
      %v5904 = vpop.f32.mrb[0].mxu0
      %v5905 = vpop.f32.mrb[0].mxu0
      %v5906 = vadd.f32 0.0, %v5905
      %v5907 = vpop.f32.mrb[0].mxu0
      %5908 = vdwg.mxu0
      %v5909 = vadd.f32 %v5698, %v5783
      %v5910 = vadd.f32 %v5699, %v5786
      %v5911 = vadd.f32 %v5700, %v5791
      %v5912 = vadd.f32 %v5701, %v5794
      %v5913 = vadd.f32 %v5702, %v5799
      %v5914 = vadd.f32 %v5703, %v5802
      %v5915 = vadd.f32 %v5704, %v5807
      %v5916 = vadd.f32 %v5705, %v5810
      %v5917 = vadd.f32 %v5706, %v5815
      %v5918 = vadd.f32 %v5707, %v5818
      %v5919 = vadd.f32 %v5708, %v5823
      %v5920 = vadd.f32 %v5709, %v5826
      %v5921 = vadd.f32 %v5710, %v5831
      %v5922 = vadd.f32 %v5711, %v5834
      %v5923 = vadd.f32 %v5712, %v5839
      %v5924 = vadd.f32 %v5713, %v5842
      %v5925 = vadd.f32 %v5714, %v5847
      %v5926 = vadd.f32 %v5715, %v5850
      %v5927 = vadd.f32 %v5716, %v5855
      %v5928 = vadd.f32 %v5717, %v5858
      %v5929 = vadd.f32 %v5718, %v5863
      %v5930 = vadd.f32 %v5719, %v5866
      %v5931 = vadd.f32 %v5720, %v5871
      %v5932 = vadd.f32 %v5721, %v5874
      %v5933 = vadd.f32 %v5722, %v5879
      %v5934 = vadd.f32 %v5723, %v5882
      %v5935 = vadd.f32 %v5724, %v5887
      %v5936 = vadd.f32 %v5725, %v5890
      %v5937 = vadd.f32 %v5726, %v5895
      %v5938 = vadd.f32 %v5727, %v5898
      %v5939 = vadd.f32 %v5728, %v5903
      %v5940 = vadd.f32 %v5729, %v5906
      %v5943 = vrot.slane %v3964, 1
      %v5944 = vrot.slane %v3982, 1
      %v5945 = vsel %vm4620, %v5943, %v5944
      %v5946 = vld [vmem:[%s4 + $0x20] sm:$0xf]
      %v5948 = vsel %vm4178, %v5945, 0
      %v5951 = vsel %vm4227, %v5946, 0
      %5953 = vmatprep.subr.bf16.mxu0 0
      %5954 = vmatpush1.bf16.msra.mxu0 %v5951
      %5955 = vmatprep.subr.bf16.mxu0 0
      %5956 = vmatpush1.bf16.msra.mxu0 0
      %5957 = vmatprep.subr.bf16.mxu0 0
      %5958 = vmatpush1.bf16.msra.mxu0 0
      %5959 = vmatprep.subr.bf16.mxu0 0
      %5960 = vmatpush1.bf16.msra.mxu0 0
      %5961 = vmatprep.subr.bf16.mxu0 0
      %5962 = vmatpush1.bf16.msra.mxu0 0
      %5963 = vmatprep.subr.bf16.mxu0 0
      %5964 = vmatpush1.bf16.msra.mxu0 0
      %5965 = vmatprep.subr.bf16.mxu0 0
      %5966 = vmatpush1.bf16.msra.mxu0 0
      %5967 = vmatprep.subr.bf16.mxu0 0
      %5968 = vmatpush1.bf16.msra.mxu0 0
      %5969 = vmatprep.subr.bf16.mxu0 0
      %5970 = vmatpush1.bf16.msra.mxu0 0
      %5971 = vmatprep.subr.bf16.mxu0 0
      %5972 = vmatpush1.bf16.msra.mxu0 0
      %5973 = vmatprep.subr.bf16.mxu0 0
      %5974 = vmatpush1.bf16.msra.mxu0 0
      %5975 = vmatprep.subr.bf16.mxu0 0
      %5976 = vmatpush1.bf16.msra.mxu0 0
      %5977 = vmatprep.subr.bf16.mxu0 0
      %5978 = vmatpush1.bf16.msra.mxu0 0
      %5979 = vmatprep.subr.bf16.mxu0 0
      %5980 = vmatpush1.bf16.msra.mxu0 0
      %5981 = vmatprep.subr.bf16.mxu0 0
      %5982 = vmatpush1.bf16.msra.mxu0 0
      %5983 = vmatprep.subr.bf16.mxu0 0
      %5984 = vmatpush1.bf16.msra.mxu0 0
      %5985 = vmatprep.mubr.bf16.mxu0 0
      %5986 = vmatmul.mubr.bf16.gmra.mrb[0].mxu0 %v4677
      %v5987 = vpop.f32.mrb[0].mxu0
      %v5988 = vadd.f32 0.0, %v5987
      %v5989 = vpop.f32.mrb[0].mxu0
      %v5990 = vpop.f32.mrb[0].mxu0
      %v5991 = vadd.f32 0.0, %v5990
      %v5992 = vpop.f32.mrb[0].mxu0
      %5993 = vmatprep.mubr.bf16.mxu0 0
      %5994 = vmatmul.mubr.bf16.gmra.mrb[0].mxu0 %v4680
      %v5995 = vpop.f32.mrb[0].mxu0
      %v5996 = vadd.f32 0.0, %v5995
      %v5997 = vpop.f32.mrb[0].mxu0
      %v5998 = vpop.f32.mrb[0].mxu0
      %v5999 = vadd.f32 0.0, %v5998
      %v6000 = vpop.f32.mrb[0].mxu0
      %6001 = vmatprep.mubr.bf16.mxu0 0
      %6002 = vmatmul.mubr.bf16.gmra.mrb[0].mxu0 %v4683
      %v6003 = vpop.f32.mrb[0].mxu0
      %v6004 = vadd.f32 0.0, %v6003
      %v6005 = vpop.f32.mrb[0].mxu0
      %v6006 = vpop.f32.mrb[0].mxu0
      %v6007 = vadd.f32 0.0, %v6006
      %v6008 = vpop.f32.mrb[0].mxu0
      %6009 = vmatprep.mubr.bf16.mxu0 0
      %6010 = vmatmul.mubr.bf16.gmra.mrb[0].mxu0 %v4686
      %v6011 = vpop.f32.mrb[0].mxu0
      %v6012 = vadd.f32 0.0, %v6011
      %v6013 = vpop.f32.mrb[0].mxu0
      %v6014 = vpop.f32.mrb[0].mxu0
      %v6015 = vadd.f32 0.0, %v6014
      %v6016 = vpop.f32.mrb[0].mxu0
      %6017 = vmatprep.mubr.bf16.mxu0 0
      %6018 = vmatmul.mubr.bf16.gmra.mrb[0].mxu0 %v4689
      %v6019 = vpop.f32.mrb[0].mxu0
      %v6020 = vadd.f32 0.0, %v6019
      %v6021 = vpop.f32.mrb[0].mxu0
      %v6022 = vpop.f32.mrb[0].mxu0
      %v6023 = vadd.f32 0.0, %v6022
      %v6024 = vpop.f32.mrb[0].mxu0
      %6025 = vmatprep.mubr.bf16.mxu0 0
      %6026 = vmatmul.mubr.bf16.gmra.mrb[0].mxu0 %v4692
      %v6027 = vpop.f32.mrb[0].mxu0
      %v6028 = vadd.f32 0.0, %v6027
      %v6029 = vpop.f32.mrb[0].mxu0
      %v6030 = vpop.f32.mrb[0].mxu0
      %v6031 = vadd.f32 0.0, %v6030
      %v6032 = vpop.f32.mrb[0].mxu0
      %6033 = vmatprep.mubr.bf16.mxu0 0
      %6034 = vmatmul.mubr.bf16.gmra.mrb[0].mxu0 %v4695
      %v6035 = vpop.f32.mrb[0].mxu0
      %v6036 = vadd.f32 0.0, %v6035
      %v6037 = vpop.f32.mrb[0].mxu0
      %v6038 = vpop.f32.mrb[0].mxu0
      %v6039 = vadd.f32 0.0, %v6038
      %v6040 = vpop.f32.mrb[0].mxu0
      %6041 = vmatprep.mubr.bf16.mxu0 0
      %6042 = vmatmul.mubr.bf16.gmra.mrb[0].mxu0 %v4698
      %v6043 = vpop.f32.mrb[0].mxu0
      %v6044 = vadd.f32 0.0, %v6043
      %v6045 = vpop.f32.mrb[0].mxu0
      %v6046 = vpop.f32.mrb[0].mxu0
      %v6047 = vadd.f32 0.0, %v6046
      %v6048 = vpop.f32.mrb[0].mxu0
      %6049 = vmatprep.mubr.bf16.mxu0 0
      %6050 = vmatmul.mubr.bf16.gmra.mrb[0].mxu0 %v4701
      %v6051 = vpop.f32.mrb[0].mxu0
      %v6052 = vadd.f32 0.0, %v6051
      %v6053 = vpop.f32.mrb[0].mxu0
      %v6054 = vpop.f32.mrb[0].mxu0
      %v6055 = vadd.f32 0.0, %v6054
      %v6056 = vpop.f32.mrb[0].mxu0
      %6057 = vmatprep.mubr.bf16.mxu0 0
      %6058 = vmatmul.mubr.bf16.gmra.mrb[0].mxu0 %v4704
      %v6059 = vpop.f32.mrb[0].mxu0
      %v6060 = vadd.f32 0.0, %v6059
      %v6061 = vpop.f32.mrb[0].mxu0
      %v6062 = vpop.f32.mrb[0].mxu0
      %v6063 = vadd.f32 0.0, %v6062
      %v6064 = vpop.f32.mrb[0].mxu0
      %6065 = vmatprep.mubr.bf16.mxu0 0
      %6066 = vmatmul.mubr.bf16.gmra.mrb[0].mxu0 %v4707
      %v6067 = vpop.f32.mrb[0].mxu0
      %v6068 = vadd.f32 0.0, %v6067
      %v6069 = vpop.f32.mrb[0].mxu0
      %v6070 = vpop.f32.mrb[0].mxu0
      %v6071 = vadd.f32 0.0, %v6070
      %v6072 = vpop.f32.mrb[0].mxu0
      %6073 = vmatprep.mubr.bf16.mxu0 0
      %6074 = vmatmul.mubr.bf16.gmra.mrb[0].mxu0 %v4710
      %v6075 = vpop.f32.mrb[0].mxu0
      %v6076 = vadd.f32 0.0, %v6075
      %v6077 = vpop.f32.mrb[0].mxu0
      %v6078 = vpop.f32.mrb[0].mxu0
      %v6079 = vadd.f32 0.0, %v6078
      %v6080 = vpop.f32.mrb[0].mxu0
      %6081 = vmatprep.mubr.bf16.mxu0 0
      %6082 = vmatmul.mubr.bf16.gmra.mrb[0].mxu0 %v4713
      %v6083 = vpop.f32.mrb[0].mxu0
      %v6084 = vadd.f32 0.0, %v6083
      %v6085 = vpop.f32.mrb[0].mxu0
      %v6086 = vpop.f32.mrb[0].mxu0
      %v6087 = vadd.f32 0.0, %v6086
      %v6088 = vpop.f32.mrb[0].mxu0
      %6089 = vmatprep.mubr.bf16.mxu0 0
      %6090 = vmatmul.mubr.bf16.gmra.mrb[0].mxu0 %v4716
      %v6091 = vpop.f32.mrb[0].mxu0
      %v6092 = vadd.f32 0.0, %v6091
      %v6093 = vpop.f32.mrb[0].mxu0
      %v6094 = vpop.f32.mrb[0].mxu0
      %v6095 = vadd.f32 0.0, %v6094
      %v6096 = vpop.f32.mrb[0].mxu0
      %6097 = vmatprep.mubr.bf16.mxu0 0
      %6098 = vmatmul.mubr.bf16.gmra.mrb[0].mxu0 %v5332
      %v6099 = vpop.f32.mrb[0].mxu0
      %v6100 = vadd.f32 0.0, %v6099
      %v6101 = vpop.f32.mrb[0].mxu0
      %v6102 = vpop.f32.mrb[0].mxu0
      %v6103 = vadd.f32 0.0, %v6102
      %v6104 = vpop.f32.mrb[0].mxu0
      %6105 = vmatprep.mubr.bf16.mxu0 0
      %6106 = vmatmul.mubr.bf16.gmra.mrb[0].mxu0 %v5948
      %v6107 = vpop.f32.mrb[0].mxu0
      %v6108 = vadd.f32 0.0, %v6107
      %v6109 = vpop.f32.mrb[0].mxu0
      %v6110 = vpop.f32.mrb[0].mxu0
      %v6111 = vadd.f32 0.0, %v6110
      %v6112 = vpop.f32.mrb[0].mxu0
      %6113 = vdwg.mxu0
      %v6114 = vadd.f32 %v5909, %v5988
      %v6115 = vadd.f32 %v5910, %v5991
      %v6116 = vadd.f32 %v5911, %v5996
      %v6117 = vadd.f32 %v5912, %v5999
      %v6118 = vadd.f32 %v5913, %v6004
      %v6119 = vadd.f32 %v5914, %v6007
      %v6120 = vadd.f32 %v5915, %v6012
      %v6121 = vadd.f32 %v5916, %v6015
      %v6122 = vadd.f32 %v5917, %v6020
      %v6123 = vadd.f32 %v5918, %v6023
      %v6124 = vadd.f32 %v5919, %v6028
      %v6125 = vadd.f32 %v5920, %v6031
      %v6126 = vadd.f32 %v5921, %v6036
      %v6127 = vadd.f32 %v5922, %v6039
      %v6128 = vadd.f32 %v5923, %v6044
      %v6129 = vadd.f32 %v5924, %v6047
      %v6130 = vadd.f32 %v5925, %v6052
      %v6131 = vadd.f32 %v5926, %v6055
      %v6132 = vadd.f32 %v5927, %v6060
      %v6133 = vadd.f32 %v5928, %v6063
      %v6134 = vadd.f32 %v5929, %v6068
      %v6135 = vadd.f32 %v5930, %v6071
      %v6136 = vadd.f32 %v5931, %v6076
      %v6137 = vadd.f32 %v5932, %v6079
      %v6138 = vadd.f32 %v5933, %v6084
      %v6139 = vadd.f32 %v5934, %v6087
      %v6140 = vadd.f32 %v5935, %v6092
      %v6141 = vadd.f32 %v5936, %v6095
      %v6142 = vadd.f32 %v5937, %v6100
      %v6143 = vadd.f32 %v5938, %v6103
      %v6144 = vadd.f32 %v5939, %v6108
      %v6145 = vadd.f32 %v5940, %v6111
      %v6146 = vpack.c.bf16 %v6115, %v6114
      %v6147 = vpack.c.bf16 %v6117, %v6116
      %v6148 = vpack.c.bf16 %v6119, %v6118
      %v6149 = vpack.c.bf16 %v6121, %v6120
      %v6150 = vpack.c.bf16 %v6123, %v6122
      %v6151 = vpack.c.bf16 %v6125, %v6124
      %v6152 = vpack.c.bf16 %v6127, %v6126
      %v6153 = vpack.c.bf16 %v6129, %v6128
      %v6154 = vpack.c.bf16 %v6131, %v6130
      %v6155 = vpack.c.bf16 %v6133, %v6132
      %v6156 = vpack.c.bf16 %v6135, %v6134
      %v6157 = vpack.c.bf16 %v6137, %v6136
      %v6158 = vpack.c.bf16 %v6139, %v6138
      %v6159 = vpack.c.bf16 %v6141, %v6140
      %v6160 = vpack.c.bf16 %v6143, %v6142
      %v6161 = vpack.c.bf16 %v6145, %v6144
      %v6178 = vunpack.c.l.b16 %v6146
      %v6179 = vunpack.c.h.b16 %v6146
      %v6180 = vunpack.c.l.b16 %v6147
      %v6181 = vunpack.c.h.b16 %v6147
      %v6182 = vunpack.c.l.b16 %v6148
      %v6183 = vunpack.c.h.b16 %v6148
      %v6184 = vunpack.c.l.b16 %v6149
      %v6185 = vunpack.c.h.b16 %v6149
      %v6186 = vunpack.c.l.b16 %v6150
      %v6187 = vunpack.c.h.b16 %v6150
      %v6188 = vunpack.c.l.b16 %v6151
      %v6189 = vunpack.c.h.b16 %v6151
      %v6190 = vunpack.c.l.b16 %v6152
      %v6191 = vunpack.c.h.b16 %v6152
      %v6192 = vunpack.c.l.b16 %v6153
      %v6193 = vunpack.c.h.b16 %v6153
      %v6194 = vunpack.c.l.b16 %v6154
      %v6195 = vunpack.c.h.b16 %v6154
      %v6196 = vunpack.c.l.b16 %v6155
      %v6197 = vunpack.c.h.b16 %v6155
      %v6198 = vunpack.c.l.b16 %v6156
      %v6199 = vunpack.c.h.b16 %v6156
      %v6200 = vunpack.c.l.b16 %v6157
      %v6201 = vunpack.c.h.b16 %v6157
      %v6202 = vunpack.c.l.b16 %v6158
      %v6203 = vunpack.c.h.b16 %v6158
      %v6204 = vunpack.c.l.b16 %v6159
      %v6205 = vunpack.c.h.b16 %v6159
      %v6206 = vunpack.c.l.b16 %v6160
      %v6207 = vunpack.c.h.b16 %v6160
      %v6208 = vunpack.c.l.b16 %v6161
      %v6209 = vunpack.c.h.b16 %v6161
      %v6210 = vpack.c.b16 %v6178, %v6178
      %v6211 = vpack.c.b16 %v6179, %v6179
      %v6212 = vpack.c.b16 %v6180, %v6180
      %v6213 = vpack.c.b16 %v6181, %v6181
      %v6214 = vpack.c.b16 %v6182, %v6182
      %v6215 = vpack.c.b16 %v6183, %v6183
      %v6216 = vpack.c.b16 %v6184, %v6184
      %v6217 = vpack.c.b16 %v6185, %v6185
      %v6218 = vpack.c.b16 %v6186, %v6186
      %v6219 = vpack.c.b16 %v6187, %v6187
      %v6220 = vpack.c.b16 %v6188, %v6188
      %v6221 = vpack.c.b16 %v6189, %v6189
      %v6222 = vpack.c.b16 %v6190, %v6190
      %v6223 = vpack.c.b16 %v6191, %v6191
      %v6224 = vpack.c.b16 %v6192, %v6192
      %v6225 = vpack.c.b16 %v6193, %v6193
      %v6226 = vpack.c.b16 %v6194, %v6194
      %v6227 = vpack.c.b16 %v6195, %v6195
      %v6228 = vpack.c.b16 %v6196, %v6196
      %v6229 = vpack.c.b16 %v6197, %v6197
      %v6230 = vpack.c.b16 %v6198, %v6198
      %v6231 = vpack.c.b16 %v6199, %v6199
      %v6232 = vpack.c.b16 %v6200, %v6200
      %v6233 = vpack.c.b16 %v6201, %v6201
      %v6234 = vpack.c.b16 %v6202, %v6202
      %v6235 = vpack.c.b16 %v6203, %v6203
      %v6236 = vpack.c.b16 %v6204, %v6204
      %v6237 = vpack.c.b16 %v6205, %v6205
      %v6238 = vpack.c.b16 %v6206, %v6206
      %v6239 = vpack.c.b16 %v6207, %v6207
      %v6240 = vpack.c.b16 %v6208, %v6208
      %v6241 = vpack.c.b16 %v6209, %v6209
      %vm6274 = vcmask 60416
      %6275 = vst.msk [vmem:[%s457] sm:$0xf] %vm6274, %v6210
      %6276 = vst.msk [vmem:[%s457 + $0x4] sm:$0xf] %vm6274, %v6211
      %6277 = vst.msk [vmem:[%s457 + $0x8] sm:$0xf] %vm6274, %v6212
      %6278 = vst.msk [vmem:[%s457 + $0xc] sm:$0xf] %vm6274, %v6213
      %6279 = vst.msk [vmem:[%s457 + $0x10] sm:$0xf] %vm6274, %v6214
      %6280 = vst.msk [vmem:[%s457 + $0x14] sm:$0xf] %vm6274, %v6215
      %6281 = vst.msk [vmem:[%s457 + $0x18] sm:$0xf] %vm6274, %v6216
      %6282 = vst.msk [vmem:[%s457 + $0x1c] sm:$0xf] %vm6274, %v6217
      %6283 = vst.msk [vmem:[%s457 + $0x20] sm:$0xf] %vm6274, %v6218
      %6284 = vst.msk [vmem:[%s457 + $0x24] sm:$0xf] %vm6274, %v6219
      %6285 = vst.msk [vmem:[%s457 + $0x28] sm:$0xf] %vm6274, %v6220
      %6286 = vst.msk [vmem:[%s457 + $0x2c] sm:$0xf] %vm6274, %v6221
      %6287 = vst.msk [vmem:[%s457 + $0x30] sm:$0xf] %vm6274, %v6222
      %6288 = vst.msk [vmem:[%s457 + $0x34] sm:$0xf] %vm6274, %v6223
      %6289 = vst.msk [vmem:[%s457 + $0x38] sm:$0xf] %vm6274, %v6224
      %6290 = vst.msk [vmem:[%s457 + $0x3c] sm:$0xf] %vm6274, %v6225
      %6291 = vst.msk [vmem:[%s457 + $0x40] sm:$0xf] %vm6274, %v6226
      %6292 = vst.msk [vmem:[%s457 + $0x44] sm:$0xf] %vm6274, %v6227
      %6293 = vst.msk [vmem:[%s457 + $0x48] sm:$0xf] %vm6274, %v6228
      %6294 = vst.msk [vmem:[%s457 + $0x4c] sm:$0xf] %vm6274, %v6229
      %6295 = vst.msk [vmem:[%s457 + $0x50] sm:$0xf] %vm6274, %v6230
      %6296 = vst.msk [vmem:[%s457 + $0x54] sm:$0xf] %vm6274, %v6231
      %6297 = vst.msk [vmem:[%s457 + $0x58] sm:$0xf] %vm6274, %v6232
      %6298 = vst.msk [vmem:[%s457 + $0x5c] sm:$0xf] %vm6274, %v6233
      %6299 = vst.msk [vmem:[%s457 + $0x60] sm:$0xf] %vm6274, %v6234
      %6300 = vst.msk [vmem:[%s457 + $0x64] sm:$0xf] %vm6274, %v6235
      %6301 = vst.msk [vmem:[%s457 + $0x68] sm:$0xf] %vm6274, %v6236
      %6302 = vst.msk [vmem:[%s457 + $0x6c] sm:$0xf] %vm6274, %v6237
      %6303 = vst.msk [vmem:[%s457 + $0x70] sm:$0xf] %vm6274, %v6238
      %6304 = vst.msk [vmem:[%s457 + $0x74] sm:$0xf] %vm6274, %v6239
      %6305 = vst.msk [vmem:[%s457 + $0x78] sm:$0xf] %vm6274, %v6240
      %6306 = vst.msk [vmem:[%s457 + $0x7c] sm:$0xf] %vm6274, %v6241
      %v6307 = vunpack.c.l.bf16 %v6146
      %v6308 = vunpack.c.h.bf16 %v6146
      %v6309 = vunpack.c.l.bf16 %v6147
      %v6310 = vunpack.c.h.bf16 %v6147
      %v6311 = vunpack.c.l.bf16 %v6148
      %v6312 = vunpack.c.h.bf16 %v6148
      %v6313 = vunpack.c.l.bf16 %v6149
      %v6314 = vunpack.c.h.bf16 %v6149
      %v6315 = vunpack.c.l.bf16 %v6150
      %v6316 = vunpack.c.h.bf16 %v6150
      %v6317 = vunpack.c.l.bf16 %v6151
      %v6318 = vunpack.c.h.bf16 %v6151
      %v6319 = vunpack.c.l.bf16 %v6152
      %v6320 = vunpack.c.h.bf16 %v6152
      %v6321 = vunpack.c.l.bf16 %v6153
      %v6322 = vunpack.c.h.bf16 %v6153
      %v6323 = vunpack.c.l.bf16 %v6154
      %v6324 = vunpack.c.h.bf16 %v6154
      %v6325 = vunpack.c.l.bf16 %v6155
      %v6326 = vunpack.c.h.bf16 %v6155
      %v6327 = vunpack.c.l.bf16 %v6156
      %v6328 = vunpack.c.h.bf16 %v6156
      %v6329 = vunpack.c.l.bf16 %v6157
      %v6330 = vunpack.c.h.bf16 %v6157
      %v6331 = vunpack.c.l.bf16 %v6158
      %v6332 = vunpack.c.h.bf16 %v6158
      %v6333 = vunpack.c.l.bf16 %v6159
      %v6334 = vunpack.c.h.bf16 %v6159
      %v6335 = vunpack.c.l.bf16 %v6160
      %v6336 = vunpack.c.h.bf16 %v6160
      %v6337 = vunpack.c.l.bf16 %v6161
      %v6338 = vunpack.c.h.bf16 %v6161
      %v6339 = vsel %vm4178, %v6307, 0.0
      %v6340 = vsel %vm4178, %v6308, 0.0
      %v6341 = vadd.f32 %v6339, %v6340
      %v6342 = vsel %vm4178, %v6309, 0.0
      %v6343 = vadd.f32 %v6341, %v6342
      %v6344 = vsel %vm4178, %v6310, 0.0
      %v6345 = vadd.f32 %v6343, %v6344
      %v6346 = vsel %vm4178, %v6311, 0.0
      %v6347 = vadd.f32 %v6345, %v6346
      %v6348 = vsel %vm4178, %v6312, 0.0
      %v6349 = vadd.f32 %v6347, %v6348
      %v6350 = vsel %vm4178, %v6313, 0.0
      %v6351 = vadd.f32 %v6349, %v6350
      %v6352 = vsel %vm4178, %v6314, 0.0
      %v6353 = vadd.f32 %v6351, %v6352
      %v6354 = vsel %vm4178, %v6315, 0.0
      %v6355 = vadd.f32 %v6353, %v6354
      %v6356 = vsel %vm4178, %v6316, 0.0
      %v6357 = vadd.f32 %v6355, %v6356
      %v6358 = vsel %vm4178, %v6317, 0.0
      %v6359 = vadd.f32 %v6357, %v6358
      %v6360 = vsel %vm4178, %v6318, 0.0
      %v6361 = vadd.f32 %v6359, %v6360
      %v6362 = vsel %vm4178, %v6319, 0.0
      %v6363 = vadd.f32 %v6361, %v6362
      %v6364 = vsel %vm4178, %v6320, 0.0
      %v6365 = vadd.f32 %v6363, %v6364
      %v6366 = vsel %vm4178, %v6321, 0.0
      %v6367 = vadd.f32 %v6365, %v6366
      %v6368 = vsel %vm4178, %v6322, 0.0
      %v6369 = vadd.f32 %v6367, %v6368
      %v6370 = vsel %vm4178, %v6323, 0.0
      %v6371 = vadd.f32 %v6369, %v6370
      %v6372 = vsel %vm4178, %v6324, 0.0
      %v6373 = vadd.f32 %v6371, %v6372
      %v6374 = vsel %vm4178, %v6325, 0.0
      %v6375 = vadd.f32 %v6373, %v6374
      %v6376 = vsel %vm4178, %v6326, 0.0
      %v6377 = vadd.f32 %v6375, %v6376
      %v6378 = vsel %vm4178, %v6327, 0.0
      %v6379 = vadd.f32 %v6377, %v6378
      %v6380 = vsel %vm4178, %v6328, 0.0
      %v6381 = vadd.f32 %v6379, %v6380
      %v6382 = vsel %vm4178, %v6329, 0.0
      %v6383 = vadd.f32 %v6381, %v6382
      %v6384 = vsel %vm4178, %v6330, 0.0
      %v6385 = vadd.f32 %v6383, %v6384
      %v6386 = vsel %vm4178, %v6331, 0.0
      %v6387 = vadd.f32 %v6385, %v6386
      %v6388 = vsel %vm4178, %v6332, 0.0
      %v6389 = vadd.f32 %v6387, %v6388
      %v6390 = vsel %vm4178, %v6333, 0.0
      %v6391 = vadd.f32 %v6389, %v6390
      %v6392 = vsel %vm4178, %v6334, 0.0
      %v6393 = vadd.f32 %v6391, %v6392
      %v6394 = vsel %vm4178, %v6335, 0.0
      %v6395 = vadd.f32 %v6393, %v6394
      %v6396 = vsel %vm4178, %v6336, 0.0
      %v6397 = vadd.f32 %v6395, %v6396
      %v6398 = vsel %vm4178, %v6337, 0.0
      %v6399 = vadd.f32 %v6397, %v6398
      %v6400 = vsel %vm4178, %v6338, 0.0
      %v6401 = vadd.f32 %v6399, %v6400
      %v6402 = vrot.slane %v6401, 4
      %v6403 = vadd.f32 %v6401, %v6402
      %v6404 = vrot.slane %v6403, 2
      %v6405 = vadd.f32 %v6403, %v6404
      %v6406 = vrot.slane %v6405, 1
      %v6407 = vadd.f32 %v6405, %v6406
      %v6408 = vmul.f32 %v6307, %v6307
      %v6409 = vmul.f32 %v6308, %v6308
      %v6410 = vmul.f32 %v6309, %v6309
      %v6411 = vmul.f32 %v6310, %v6310
      %v6412 = vmul.f32 %v6311, %v6311
      %v6413 = vmul.f32 %v6312, %v6312
      %v6414 = vmul.f32 %v6313, %v6313
      %v6415 = vmul.f32 %v6314, %v6314
      %v6416 = vmul.f32 %v6315, %v6315
      %v6417 = vmul.f32 %v6316, %v6316
      %v6418 = vmul.f32 %v6317, %v6317
      %v6419 = vmul.f32 %v6318, %v6318
      %v6420 = vmul.f32 %v6319, %v6319
      %v6421 = vmul.f32 %v6320, %v6320
      %v6422 = vmul.f32 %v6321, %v6321
      %v6423 = vmul.f32 %v6322, %v6322
      %v6424 = vmul.f32 %v6323, %v6323
      %v6425 = vmul.f32 %v6324, %v6324
      %v6426 = vmul.f32 %v6325, %v6325
      %v6427 = vmul.f32 %v6326, %v6326
      %v6428 = vmul.f32 %v6327, %v6327
      %v6429 = vmul.f32 %v6328, %v6328
      %v6430 = vmul.f32 %v6329, %v6329
      %v6431 = vmul.f32 %v6330, %v6330
      %v6432 = vmul.f32 %v6331, %v6331
      %v6433 = vmul.f32 %v6332, %v6332
      %v6434 = vmul.f32 %v6333, %v6333
      %v6435 = vmul.f32 %v6334, %v6334
      %v6436 = vmul.f32 %v6335, %v6335
      %v6437 = vmul.f32 %v6336, %v6336
      %v6438 = vmul.f32 %v6337, %v6337
      %v6439 = vmul.f32 %v6338, %v6338
      %v6440 = vsel %vm4178, %v6408, 0.0
      %v6441 = vsel %vm4178, %v6409, 0.0
      %v6442 = vadd.f32 %v6440, %v6441
      %v6443 = vsel %vm4178, %v6410, 0.0
      %v6444 = vadd.f32 %v6442, %v6443
      %v6445 = vsel %vm4178, %v6411, 0.0
      %v6446 = vadd.f32 %v6444, %v6445
      %v6447 = vsel %vm4178, %v6412, 0.0
      %v6448 = vadd.f32 %v6446, %v6447
      %v6449 = vsel %vm4178, %v6413, 0.0
      %v6450 = vadd.f32 %v6448, %v6449
      %v6451 = vsel %vm4178, %v6414, 0.0
      %v6452 = vadd.f32 %v6450, %v6451
      %v6453 = vsel %vm4178, %v6415, 0.0
      %v6454 = vadd.f32 %v6452, %v6453
      %v6455 = vsel %vm4178, %v6416, 0.0
      %v6456 = vadd.f32 %v6454, %v6455
      %v6457 = vsel %vm4178, %v6417, 0.0
      %v6458 = vadd.f32 %v6456, %v6457
      %v6459 = vsel %vm4178, %v6418, 0.0
      %v6460 = vadd.f32 %v6458, %v6459
      %v6461 = vsel %vm4178, %v6419, 0.0
      %v6462 = vadd.f32 %v6460, %v6461
      %v6463 = vsel %vm4178, %v6420, 0.0
      %v6464 = vadd.f32 %v6462, %v6463
      %v6465 = vsel %vm4178, %v6421, 0.0
      %v6466 = vadd.f32 %v6464, %v6465
      %v6467 = vsel %vm4178, %v6422, 0.0
      %v6468 = vadd.f32 %v6466, %v6467
      %v6469 = vsel %vm4178, %v6423, 0.0
      %v6470 = vadd.f32 %v6468, %v6469
      %v6471 = vsel %vm4178, %v6424, 0.0
      %v6472 = vadd.f32 %v6470, %v6471
      %v6473 = vsel %vm4178, %v6425, 0.0
      %v6474 = vadd.f32 %v6472, %v6473
      %v6475 = vsel %vm4178, %v6426, 0.0
      %v6476 = vadd.f32 %v6474, %v6475
      %v6477 = vsel %vm4178, %v6427, 0.0
      %v6478 = vadd.f32 %v6476, %v6477
      %v6479 = vsel %vm4178, %v6428, 0.0
      %v6480 = vadd.f32 %v6478, %v6479
      %v6481 = vsel %vm4178, %v6429, 0.0
      %v6482 = vadd.f32 %v6480, %v6481
      %v6483 = vsel %vm4178, %v6430, 0.0
      %v6484 = vadd.f32 %v6482, %v6483
      %v6485 = vsel %vm4178, %v6431, 0.0
      %v6486 = vadd.f32 %v6484, %v6485
      %v6487 = vsel %vm4178, %v6432, 0.0
      %v6488 = vadd.f32 %v6486, %v6487
      %v6489 = vsel %vm4178, %v6433, 0.0
      %v6490 = vadd.f32 %v6488, %v6489
      %v6491 = vsel %vm4178, %v6434, 0.0
      %v6492 = vadd.f32 %v6490, %v6491
      %v6493 = vsel %vm4178, %v6435, 0.0
      %v6494 = vadd.f32 %v6492, %v6493
      %v6495 = vsel %vm4178, %v6436, 0.0
      %v6496 = vadd.f32 %v6494, %v6495
      %v6497 = vsel %vm4178, %v6437, 0.0
      %v6498 = vadd.f32 %v6496, %v6497
      %v6499 = vsel %vm4178, %v6438, 0.0
      %v6500 = vadd.f32 %v6498, %v6499
      %v6501 = vsel %vm4178, %v6439, 0.0
      %v6502 = vadd.f32 %v6500, %v6501
      %v6503 = vrot.slane %v6502, 4
      %v6504 = vadd.f32 %v6502, %v6503
      %v6505 = vrot.slane %v6504, 2
      %v6506 = vadd.f32 %v6504, %v6505
      %v6507 = vrot.slane %v6506, 1
      %v6508 = vadd.f32 %v6506, %v6507
      %vm6509 = vcmask 57344
      %6510 = vst.msk [vmem:[%s473] sm:$0x1] %vm6509, %v6407
      %6511 = vst.msk [vmem:[%s478] sm:$0x1] %vm6509, %v6508
      %v6512 = vld [vmem:[%s5] sm:$0x3]
      %v6514 = vsel %vm1101, %v6512, 0
      %6516 = vmatprep.subr.bf16.mxu0 0
      %6517 = vmatpush1.bf16.msra.mxu0 %v6514
      %6518 = vmatprep.subr.bf16.mxu0 0
      %6519 = vmatpush1.bf16.msra.mxu0 0
      %6520 = vmatprep.subr.bf16.mxu0 0
      %6521 = vmatpush1.bf16.msra.mxu0 0
      %6522 = vmatprep.subr.bf16.mxu0 0
      %6523 = vmatpush1.bf16.msra.mxu0 0
      %6524 = vmatprep.subr.bf16.mxu0 0
      %6525 = vmatpush1.bf16.msra.mxu0 0
      %6526 = vmatprep.subr.bf16.mxu0 0
      %6527 = vmatpush1.bf16.msra.mxu0 0
      %6528 = vmatprep.subr.bf16.mxu0 0
      %6529 = vmatpush1.bf16.msra.mxu0 0
      %6530 = vmatprep.subr.bf16.mxu0 0
      %6531 = vmatpush1.bf16.msra.mxu0 0
      %6532 = vmatprep.subr.bf16.mxu0 0
      %6533 = vmatpush1.bf16.msra.mxu0 0
      %6534 = vmatprep.subr.bf16.mxu0 0
      %6535 = vmatpush1.bf16.msra.mxu0 0
      %6536 = vmatprep.subr.bf16.mxu0 0
      %6537 = vmatpush1.bf16.msra.mxu0 0
      %6538 = vmatprep.subr.bf16.mxu0 0
      %6539 = vmatpush1.bf16.msra.mxu0 0
      %6540 = vmatprep.subr.bf16.mxu0 0
      %6541 = vmatpush1.bf16.msra.mxu0 0
      %6542 = vmatprep.subr.bf16.mxu0 0
      %6543 = vmatpush1.bf16.msra.mxu0 0
      %6544 = vmatprep.subr.bf16.mxu0 0
      %6545 = vmatpush1.bf16.msra.mxu0 0
      %6546 = vmatprep.subr.bf16.mxu0 0
      %6547 = vmatpush1.bf16.msra.mxu0 0
      %6548 = vmatprep.mubr.bf16.mxu0 0
      %6549 = vmatmul.mubr.bf16.gmra.mrb[0].mxu0 %v1054
      %v6550 = vpop.f32.mrb[0].mxu0
      %v6551 = vadd.f32 0.0, %v6550
      %v6552 = vpop.f32.mrb[0].mxu0
      %v6553 = vpop.f32.mrb[0].mxu0
      %v6554 = vadd.f32 0.0, %v6553
      %v6555 = vpop.f32.mrb[0].mxu0
      %6556 = vmatprep.mubr.bf16.mxu0 0
      %6557 = vmatmul.mubr.bf16.gmra.mrb[0].mxu0 %v1057
      %v6558 = vpop.f32.mrb[0].mxu0
      %v6559 = vadd.f32 0.0, %v6558
      %v6560 = vpop.f32.mrb[0].mxu0
      %v6561 = vpop.f32.mrb[0].mxu0
      %v6562 = vadd.f32 0.0, %v6561
      %v6563 = vpop.f32.mrb[0].mxu0
      %6564 = vmatprep.mubr.bf16.mxu0 0
      %6565 = vmatmul.mubr.bf16.gmra.mrb[0].mxu0 %v1060
      %v6566 = vpop.f32.mrb[0].mxu0
      %v6567 = vadd.f32 0.0, %v6566
      %v6568 = vpop.f32.mrb[0].mxu0
      %v6569 = vpop.f32.mrb[0].mxu0
      %v6570 = vadd.f32 0.0, %v6569
      %v6571 = vpop.f32.mrb[0].mxu0
      %6572 = vmatprep.mubr.bf16.mxu0 0
      %6573 = vmatmul.mubr.bf16.gmra.mrb[0].mxu0 %v1063
      %v6574 = vpop.f32.mrb[0].mxu0
      %v6575 = vadd.f32 0.0, %v6574
      %v6576 = vpop.f32.mrb[0].mxu0
      %v6577 = vpop.f32.mrb[0].mxu0
      %v6578 = vadd.f32 0.0, %v6577
      %v6579 = vpop.f32.mrb[0].mxu0
      %6580 = vmatprep.mubr.bf16.mxu0 0
      %6581 = vmatmul.mubr.bf16.gmra.mrb[0].mxu0 %v1066
      %v6582 = vpop.f32.mrb[0].mxu0
      %v6583 = vadd.f32 0.0, %v6582
      %v6584 = vpop.f32.mrb[0].mxu0
      %v6585 = vpop.f32.mrb[0].mxu0
      %v6586 = vadd.f32 0.0, %v6585
      %v6587 = vpop.f32.mrb[0].mxu0
      %6588 = vmatprep.mubr.bf16.mxu0 0
      %6589 = vmatmul.mubr.bf16.gmra.mrb[0].mxu0 %v1069
      %v6590 = vpop.f32.mrb[0].mxu0
      %v6591 = vadd.f32 0.0, %v6590
      %v6592 = vpop.f32.mrb[0].mxu0
      %v6593 = vpop.f32.mrb[0].mxu0
      %v6594 = vadd.f32 0.0, %v6593
      %v6595 = vpop.f32.mrb[0].mxu0
      %6596 = vmatprep.mubr.bf16.mxu0 0
      %6597 = vmatmul.mubr.bf16.gmra.mrb[0].mxu0 %v1072
      %v6598 = vpop.f32.mrb[0].mxu0
      %v6599 = vadd.f32 0.0, %v6598
      %v6600 = vpop.f32.mrb[0].mxu0
      %v6601 = vpop.f32.mrb[0].mxu0
      %v6602 = vadd.f32 0.0, %v6601
      %v6603 = vpop.f32.mrb[0].mxu0
      %6604 = vmatprep.mubr.bf16.mxu0 0
      %6605 = vmatmul.mubr.bf16.gmra.mrb[0].mxu0 %v1075
      %v6606 = vpop.f32.mrb[0].mxu0
      %v6607 = vadd.f32 0.0, %v6606
      %v6608 = vpop.f32.mrb[0].mxu0
      %v6609 = vpop.f32.mrb[0].mxu0
      %v6610 = vadd.f32 0.0, %v6609
      %v6611 = vpop.f32.mrb[0].mxu0
      %6612 = vmatprep.mubr.bf16.mxu0 0
      %6613 = vmatmul.mubr.bf16.gmra.mrb[0].mxu0 %v1078
      %v6614 = vpop.f32.mrb[0].mxu0
      %v6615 = vadd.f32 0.0, %v6614
      %v6616 = vpop.f32.mrb[0].mxu0
      %v6617 = vpop.f32.mrb[0].mxu0
      %v6618 = vadd.f32 0.0, %v6617
      %v6619 = vpop.f32.mrb[0].mxu0
      %6620 = vmatprep.mubr.bf16.mxu0 0
      %6621 = vmatmul.mubr.bf16.gmra.mrb[0].mxu0 %v1081
      %v6622 = vpop.f32.mrb[0].mxu0
      %v6623 = vadd.f32 0.0, %v6622
      %v6624 = vpop.f32.mrb[0].mxu0
      %v6625 = vpop.f32.mrb[0].mxu0
      %v6626 = vadd.f32 0.0, %v6625
      %v6627 = vpop.f32.mrb[0].mxu0
      %6628 = vmatprep.mubr.bf16.mxu0 0
      %6629 = vmatmul.mubr.bf16.gmra.mrb[0].mxu0 %v1084
      %v6630 = vpop.f32.mrb[0].mxu0
      %v6631 = vadd.f32 0.0, %v6630
      %v6632 = vpop.f32.mrb[0].mxu0
      %v6633 = vpop.f32.mrb[0].mxu0
      %v6634 = vadd.f32 0.0, %v6633
      %v6635 = vpop.f32.mrb[0].mxu0
      %6636 = vmatprep.mubr.bf16.mxu0 0
      %6637 = vmatmul.mubr.bf16.gmra.mrb[0].mxu0 %v1087
      %v6638 = vpop.f32.mrb[0].mxu0
      %v6639 = vadd.f32 0.0, %v6638
      %v6640 = vpop.f32.mrb[0].mxu0
      %v6641 = vpop.f32.mrb[0].mxu0
      %v6642 = vadd.f32 0.0, %v6641
      %v6643 = vpop.f32.mrb[0].mxu0
      %6644 = vmatprep.mubr.bf16.mxu0 0
      %6645 = vmatmul.mubr.bf16.gmra.mrb[0].mxu0 %v1090
      %v6646 = vpop.f32.mrb[0].mxu0
      %v6647 = vadd.f32 0.0, %v6646
      %v6648 = vpop.f32.mrb[0].mxu0
      %v6649 = vpop.f32.mrb[0].mxu0
      %v6650 = vadd.f32 0.0, %v6649
      %v6651 = vpop.f32.mrb[0].mxu0
      %6652 = vmatprep.mubr.bf16.mxu0 0
      %6653 = vmatmul.mubr.bf16.gmra.mrb[0].mxu0 %v1093
      %v6654 = vpop.f32.mrb[0].mxu0
      %v6655 = vadd.f32 0.0, %v6654
      %v6656 = vpop.f32.mrb[0].mxu0
      %v6657 = vpop.f32.mrb[0].mxu0
      %v6658 = vadd.f32 0.0, %v6657
      %v6659 = vpop.f32.mrb[0].mxu0
      %6660 = vmatprep.mubr.bf16.mxu0 0
      %6661 = vmatmul.mubr.bf16.gmra.mrb[0].mxu0 %v1096
      %v6662 = vpop.f32.mrb[0].mxu0
      %v6663 = vadd.f32 0.0, %v6662
      %v6664 = vpop.f32.mrb[0].mxu0
      %v6665 = vpop.f32.mrb[0].mxu0
      %v6666 = vadd.f32 0.0, %v6665
      %v6667 = vpop.f32.mrb[0].mxu0
      %6668 = vmatprep.mubr.bf16.mxu0 0
      %6669 = vmatmul.mubr.bf16.gmra.mrb[0].mxu0 %v1099
      %v6670 = vpop.f32.mrb[0].mxu0
      %v6671 = vadd.f32 0.0, %v6670
      %v6672 = vpop.f32.mrb[0].mxu0
      %v6673 = vpop.f32.mrb[0].mxu0
      %v6674 = vadd.f32 0.0, %v6673
      %v6675 = vpop.f32.mrb[0].mxu0
      %6676 = vdwg.mxu0
      %v6677 = vpack.c.bf16 %v6554, %v6551
      %v6678 = vpack.c.bf16 %v6562, %v6559
      %v6679 = vpack.c.bf16 %v6570, %v6567
      %v6680 = vpack.c.bf16 %v6578, %v6575
      %v6681 = vpack.c.bf16 %v6586, %v6583
      %v6682 = vpack.c.bf16 %v6594, %v6591
      %v6683 = vpack.c.bf16 %v6602, %v6599
      %v6684 = vpack.c.bf16 %v6610, %v6607
      %v6685 = vpack.c.bf16 %v6618, %v6615
      %v6686 = vpack.c.bf16 %v6626, %v6623
      %v6687 = vpack.c.bf16 %v6634, %v6631
      %v6688 = vpack.c.bf16 %v6642, %v6639
      %v6689 = vpack.c.bf16 %v6650, %v6647
      %v6690 = vpack.c.bf16 %v6658, %v6655
      %v6691 = vpack.c.bf16 %v6666, %v6663
      %v6692 = vpack.c.bf16 %v6674, %v6671
      %v6709 = vunpack.c.l.b16 %v6677
      %v6710 = vunpack.c.h.b16 %v6677
      %v6711 = vunpack.c.l.b16 %v6678
      %v6712 = vunpack.c.h.b16 %v6678
      %v6713 = vunpack.c.l.b16 %v6679
      %v6714 = vunpack.c.h.b16 %v6679
      %v6715 = vunpack.c.l.b16 %v6680
      %v6716 = vunpack.c.h.b16 %v6680
      %v6717 = vunpack.c.l.b16 %v6681
      %v6718 = vunpack.c.h.b16 %v6681
      %v6719 = vunpack.c.l.b16 %v6682
      %v6720 = vunpack.c.h.b16 %v6682
      %v6721 = vunpack.c.l.b16 %v6683
      %v6722 = vunpack.c.h.b16 %v6683
      %v6723 = vunpack.c.l.b16 %v6684
      %v6724 = vunpack.c.h.b16 %v6684
      %v6725 = vunpack.c.l.b16 %v6685
      %v6726 = vunpack.c.h.b16 %v6685
      %v6727 = vunpack.c.l.b16 %v6686
      %v6728 = vunpack.c.h.b16 %v6686
      %v6729 = vunpack.c.l.b16 %v6687
      %v6730 = vunpack.c.h.b16 %v6687
      %v6731 = vunpack.c.l.b16 %v6688
      %v6732 = vunpack.c.h.b16 %v6688
      %v6733 = vunpack.c.l.b16 %v6689
      %v6734 = vunpack.c.h.b16 %v6689
      %v6735 = vunpack.c.l.b16 %v6690
      %v6736 = vunpack.c.h.b16 %v6690
      %v6737 = vunpack.c.l.b16 %v6691
      %v6738 = vunpack.c.h.b16 %v6691
      %v6739 = vunpack.c.l.b16 %v6692
      %v6740 = vunpack.c.h.b16 %v6692
      %v6741 = vpack.c.b16 %v6709, %v6709
      %v6742 = vpack.c.b16 %v6710, %v6710
      %v6743 = vpack.c.b16 %v6711, %v6711
      %v6744 = vpack.c.b16 %v6712, %v6712
      %v6745 = vpack.c.b16 %v6713, %v6713
      %v6746 = vpack.c.b16 %v6714, %v6714
      %v6747 = vpack.c.b16 %v6715, %v6715
      %v6748 = vpack.c.b16 %v6716, %v6716
      %v6749 = vpack.c.b16 %v6717, %v6717
      %v6750 = vpack.c.b16 %v6718, %v6718
      %v6751 = vpack.c.b16 %v6719, %v6719
      %v6752 = vpack.c.b16 %v6720, %v6720
      %v6753 = vpack.c.b16 %v6721, %v6721
      %v6754 = vpack.c.b16 %v6722, %v6722
      %v6755 = vpack.c.b16 %v6723, %v6723
      %v6756 = vpack.c.b16 %v6724, %v6724
      %v6757 = vpack.c.b16 %v6725, %v6725
      %v6758 = vpack.c.b16 %v6726, %v6726
      %v6759 = vpack.c.b16 %v6727, %v6727
      %v6760 = vpack.c.b16 %v6728, %v6728
      %v6761 = vpack.c.b16 %v6729, %v6729
      %v6762 = vpack.c.b16 %v6730, %v6730
      %v6763 = vpack.c.b16 %v6731, %v6731
      %v6764 = vpack.c.b16 %v6732, %v6732
      %v6765 = vpack.c.b16 %v6733, %v6733
      %v6766 = vpack.c.b16 %v6734, %v6734
      %v6767 = vpack.c.b16 %v6735, %v6735
      %v6768 = vpack.c.b16 %v6736, %v6736
      %v6769 = vpack.c.b16 %v6737, %v6737
      %v6770 = vpack.c.b16 %v6738, %v6738
      %v6771 = vpack.c.b16 %v6739, %v6739
      %v6772 = vpack.c.b16 %v6740, %v6740
      %6805 = vst.msk [vmem:[%s468] sm:$0xf] %vm6274, %v6741
      %6806 = vst.msk [vmem:[%s468 + $0x4] sm:$0xf] %vm6274, %v6742
      %6807 = vst.msk [vmem:[%s468 + $0x8] sm:$0xf] %vm6274, %v6743
      %6808 = vst.msk [vmem:[%s468 + $0xc] sm:$0xf] %vm6274, %v6744
      %6809 = vst.msk [vmem:[%s468 + $0x10] sm:$0xf] %vm6274, %v6745
      %6810 = vst.msk [vmem:[%s468 + $0x14] sm:$0xf] %vm6274, %v6746
      %6811 = vst.msk [vmem:[%s468 + $0x18] sm:$0xf] %vm6274, %v6747
      %6812 = vst.msk [vmem:[%s468 + $0x1c] sm:$0xf] %vm6274, %v6748
      %6813 = vst.msk [vmem:[%s468 + $0x20] sm:$0xf] %vm6274, %v6749
      %6814 = vst.msk [vmem:[%s468 + $0x24] sm:$0xf] %vm6274, %v6750
      %6815 = vst.msk [vmem:[%s468 + $0x28] sm:$0xf] %vm6274, %v6751
      %6816 = vst.msk [vmem:[%s468 + $0x2c] sm:$0xf] %vm6274, %v6752
      %6817 = vst.msk [vmem:[%s468 + $0x30] sm:$0xf] %vm6274, %v6753
      %6818 = vst.msk [vmem:[%s468 + $0x34] sm:$0xf] %vm6274, %v6754
      %6819 = vst.msk [vmem:[%s468 + $0x38] sm:$0xf] %vm6274, %v6755
      %6820 = vst.msk [vmem:[%s468 + $0x3c] sm:$0xf] %vm6274, %v6756
      %6821 = vst.msk [vmem:[%s468 + $0x40] sm:$0xf] %vm6274, %v6757
      %6822 = vst.msk [vmem:[%s468 + $0x44] sm:$0xf] %vm6274, %v6758
      %6823 = vst.msk [vmem:[%s468 + $0x48] sm:$0xf] %vm6274, %v6759
      %6824 = vst.msk [vmem:[%s468 + $0x4c] sm:$0xf] %vm6274, %v6760
      %6825 = vst.msk [vmem:[%s468 + $0x50] sm:$0xf] %vm6274, %v6761
      %6826 = vst.msk [vmem:[%s468 + $0x54] sm:$0xf] %vm6274, %v6762
      %6827 = vst.msk [vmem:[%s468 + $0x58] sm:$0xf] %vm6274, %v6763
      %6828 = vst.msk [vmem:[%s468 + $0x5c] sm:$0xf] %vm6274, %v6764
      %6829 = vst.msk [vmem:[%s468 + $0x60] sm:$0xf] %vm6274, %v6765
      %6830 = vst.msk [vmem:[%s468 + $0x64] sm:$0xf] %vm6274, %v6766
      %6831 = vst.msk [vmem:[%s468 + $0x68] sm:$0xf] %vm6274, %v6767
      %6832 = vst.msk [vmem:[%s468 + $0x6c] sm:$0xf] %vm6274, %v6768
      %6833 = vst.msk [vmem:[%s468 + $0x70] sm:$0xf] %vm6274, %v6769
      %6834 = vst.msk [vmem:[%s468 + $0x74] sm:$0xf] %vm6274, %v6770
      %6835 = vst.msk [vmem:[%s468 + $0x78] sm:$0xf] %vm6274, %v6771
      %6836 = vst.msk [vmem:[%s468 + $0x7c] sm:$0xf] %vm6274, %v6772
      %v6837 = vunpack.c.l.bf16 %v6677
      %v6838 = vunpack.c.h.bf16 %v6677
      %v6839 = vunpack.c.l.bf16 %v6678
      %v6840 = vunpack.c.h.bf16 %v6678
      %v6841 = vunpack.c.l.bf16 %v6679
      %v6842 = vunpack.c.h.bf16 %v6679
      %v6843 = vunpack.c.l.bf16 %v6680
      %v6844 = vunpack.c.h.bf16 %v6680
      %v6845 = vunpack.c.l.bf16 %v6681
      %v6846 = vunpack.c.h.bf16 %v6681
      %v6847 = vunpack.c.l.bf16 %v6682
      %v6848 = vunpack.c.h.bf16 %v6682
      %v6849 = vunpack.c.l.bf16 %v6683
      %v6850 = vunpack.c.h.bf16 %v6683
      %v6851 = vunpack.c.l.bf16 %v6684
      %v6852 = vunpack.c.h.bf16 %v6684
      %v6853 = vunpack.c.l.bf16 %v6685
      %v6854 = vunpack.c.h.bf16 %v6685
      %v6855 = vunpack.c.l.bf16 %v6686
      %v6856 = vunpack.c.h.bf16 %v6686
      %v6857 = vunpack.c.l.bf16 %v6687
      %v6858 = vunpack.c.h.bf16 %v6687
      %v6859 = vunpack.c.l.bf16 %v6688
      %v6860 = vunpack.c.h.bf16 %v6688
      %v6861 = vunpack.c.l.bf16 %v6689
      %v6862 = vunpack.c.h.bf16 %v6689
      %v6863 = vunpack.c.l.bf16 %v6690
      %v6864 = vunpack.c.h.bf16 %v6690
      %v6865 = vunpack.c.l.bf16 %v6691
      %v6866 = vunpack.c.h.bf16 %v6691
      %v6867 = vunpack.c.l.bf16 %v6692
      %v6868 = vunpack.c.h.bf16 %v6692
      %v6869 = vsel %vm4178, %v6837, 0.0
      %v6870 = vsel %vm4178, %v6838, 0.0
      %v6871 = vadd.f32 %v6869, %v6870
      %v6872 = vsel %vm4178, %v6839, 0.0
      %v6873 = vadd.f32 %v6871, %v6872
      %v6874 = vsel %vm4178, %v6840, 0.0
      %v6875 = vadd.f32 %v6873, %v6874
      %v6876 = vsel %vm4178, %v6841, 0.0
      %v6877 = vadd.f32 %v6875, %v6876
      %v6878 = vsel %vm4178, %v6842, 0.0
      %v6879 = vadd.f32 %v6877, %v6878
      %v6880 = vsel %vm4178, %v6843, 0.0
      %v6881 = vadd.f32 %v6879, %v6880
      %v6882 = vsel %vm4178, %v6844, 0.0
      %v6883 = vadd.f32 %v6881, %v6882
      %v6884 = vsel %vm4178, %v6845, 0.0
      %v6885 = vadd.f32 %v6883, %v6884
      %v6886 = vsel %vm4178, %v6846, 0.0
      %v6887 = vadd.f32 %v6885, %v6886
      %v6888 = vsel %vm4178, %v6847, 0.0
      %v6889 = vadd.f32 %v6887, %v6888
      %v6890 = vsel %vm4178, %v6848, 0.0
      %v6891 = vadd.f32 %v6889, %v6890
      %v6892 = vsel %vm4178, %v6849, 0.0
      %v6893 = vadd.f32 %v6891, %v6892
      %v6894 = vsel %vm4178, %v6850, 0.0
      %v6895 = vadd.f32 %v6893, %v6894
      %v6896 = vsel %vm4178, %v6851, 0.0
      %v6897 = vadd.f32 %v6895, %v6896
      %v6898 = vsel %vm4178, %v6852, 0.0
      %v6899 = vadd.f32 %v6897, %v6898
      %v6900 = vsel %vm4178, %v6853, 0.0
      %v6901 = vadd.f32 %v6899, %v6900
      %v6902 = vsel %vm4178, %v6854, 0.0
      %v6903 = vadd.f32 %v6901, %v6902
      %v6904 = vsel %vm4178, %v6855, 0.0
      %v6905 = vadd.f32 %v6903, %v6904
      %v6906 = vsel %vm4178, %v6856, 0.0
      %v6907 = vadd.f32 %v6905, %v6906
      %v6908 = vsel %vm4178, %v6857, 0.0
      %v6909 = vadd.f32 %v6907, %v6908
      %v6910 = vsel %vm4178, %v6858, 0.0
      %v6911 = vadd.f32 %v6909, %v6910
      %v6912 = vsel %vm4178, %v6859, 0.0
      %v6913 = vadd.f32 %v6911, %v6912
      %v6914 = vsel %vm4178, %v6860, 0.0
      %v6915 = vadd.f32 %v6913, %v6914
      %v6916 = vsel %vm4178, %v6861, 0.0
      %v6917 = vadd.f32 %v6915, %v6916
      %v6918 = vsel %vm4178, %v6862, 0.0
      %v6919 = vadd.f32 %v6917, %v6918
      %v6920 = vsel %vm4178, %v6863, 0.0
      %v6921 = vadd.f32 %v6919, %v6920
      %v6922 = vsel %vm4178, %v6864, 0.0
      %v6923 = vadd.f32 %v6921, %v6922
      %v6924 = vsel %vm4178, %v6865, 0.0
      %v6925 = vadd.f32 %v6923, %v6924
      %v6926 = vsel %vm4178, %v6866, 0.0
      %v6927 = vadd.f32 %v6925, %v6926
      %v6928 = vsel %vm4178, %v6867, 0.0
      %v6929 = vadd.f32 %v6927, %v6928
      %v6930 = vsel %vm4178, %v6868, 0.0
      %v6931 = vadd.f32 %v6929, %v6930
      %v6932 = vrot.slane %v6931, 4
      %v6933 = vadd.f32 %v6931, %v6932
      %v6934 = vrot.slane %v6933, 2
      %v6935 = vadd.f32 %v6933, %v6934
      %v6936 = vrot.slane %v6935, 1
      %v6937 = vadd.f32 %v6935, %v6936
      %v6938 = vmul.f32 %v6837, %v6837
      %v6939 = vmul.f32 %v6838, %v6838
      %v6940 = vmul.f32 %v6839, %v6839
      %v6941 = vmul.f32 %v6840, %v6840
      %v6942 = vmul.f32 %v6841, %v6841
      %v6943 = vmul.f32 %v6842, %v6842
      %v6944 = vmul.f32 %v6843, %v6843
      %v6945 = vmul.f32 %v6844, %v6844
      %v6946 = vmul.f32 %v6845, %v6845
      %v6947 = vmul.f32 %v6846, %v6846
      %v6948 = vmul.f32 %v6847, %v6847
      %v6949 = vmul.f32 %v6848, %v6848
      %v6950 = vmul.f32 %v6849, %v6849
      %v6951 = vmul.f32 %v6850, %v6850
      %v6952 = vmul.f32 %v6851, %v6851
      %v6953 = vmul.f32 %v6852, %v6852
      %v6954 = vmul.f32 %v6853, %v6853
      %v6955 = vmul.f32 %v6854, %v6854
      %v6956 = vmul.f32 %v6855, %v6855
      %v6957 = vmul.f32 %v6856, %v6856
      %v6958 = vmul.f32 %v6857, %v6857
      %v6959 = vmul.f32 %v6858, %v6858
      %v6960 = vmul.f32 %v6859, %v6859
      %v6961 = vmul.f32 %v6860, %v6860
      %v6962 = vmul.f32 %v6861, %v6861
      %v6963 = vmul.f32 %v6862, %v6862
      %v6964 = vmul.f32 %v6863, %v6863
      %v6965 = vmul.f32 %v6864, %v6864
      %v6966 = vmul.f32 %v6865, %v6865
      %v6967 = vmul.f32 %v6866, %v6866
      %v6968 = vmul.f32 %v6867, %v6867
      %v6969 = vmul.f32 %v6868, %v6868
      %v6970 = vsel %vm4178, %v6938, 0.0
      %v6971 = vsel %vm4178, %v6939, 0.0
      %v6972 = vadd.f32 %v6970, %v6971
      %v6973 = vsel %vm4178, %v6940, 0.0
      %v6974 = vadd.f32 %v6972, %v6973
      %v6975 = vsel %vm4178, %v6941, 0.0
      %v6976 = vadd.f32 %v6974, %v6975
      %v6977 = vsel %vm4178, %v6942, 0.0
      %v6978 = vadd.f32 %v6976, %v6977
      %v6979 = vsel %vm4178, %v6943, 0.0
      %v6980 = vadd.f32 %v6978, %v6979
      %v6981 = vsel %vm4178, %v6944, 0.0
      %v6982 = vadd.f32 %v6980, %v6981
      %v6983 = vsel %vm4178, %v6945, 0.0
      %v6984 = vadd.f32 %v6982, %v6983
      %v6985 = vsel %vm4178, %v6946, 0.0
      %v6986 = vadd.f32 %v6984, %v6985
      %v6987 = vsel %vm4178, %v6947, 0.0
      %v6988 = vadd.f32 %v6986, %v6987
      %v6989 = vsel %vm4178, %v6948, 0.0
      %v6990 = vadd.f32 %v6988, %v6989
      %v6991 = vsel %vm4178, %v6949, 0.0
      %v6992 = vadd.f32 %v6990, %v6991
      %v6993 = vsel %vm4178, %v6950, 0.0
      %v6994 = vadd.f32 %v6992, %v6993
      %v6995 = vsel %vm4178, %v6951, 0.0
      %v6996 = vadd.f32 %v6994, %v6995
      %v6997 = vsel %vm4178, %v6952, 0.0
      %v6998 = vadd.f32 %v6996, %v6997
      %v6999 = vsel %vm4178, %v6953, 0.0
      %v7000 = vadd.f32 %v6998, %v6999
      %v7001 = vsel %vm4178, %v6954, 0.0
      %v7002 = vadd.f32 %v7000, %v7001
      %v7003 = vsel %vm4178, %v6955, 0.0
      %v7004 = vadd.f32 %v7002, %v7003
      %v7005 = vsel %vm4178, %v6956, 0.0
      %v7006 = vadd.f32 %v7004, %v7005
      %v7007 = vsel %vm4178, %v6957, 0.0
      %v7008 = vadd.f32 %v7006, %v7007
      %v7009 = vsel %vm4178, %v6958, 0.0
      %v7010 = vadd.f32 %v7008, %v7009
      %v7011 = vsel %vm4178, %v6959, 0.0
      %v7012 = vadd.f32 %v7010, %v7011
      %v7013 = vsel %vm4178, %v6960, 0.0
      %v7014 = vadd.f32 %v7012, %v7013
      %v7015 = vsel %vm4178, %v6961, 0.0
      %v7016 = vadd.f32 %v7014, %v7015
      %v7017 = vsel %vm4178, %v6962, 0.0
      %v7018 = vadd.f32 %v7016, %v7017
      %v7019 = vsel %vm4178, %v6963, 0.0
      %v7020 = vadd.f32 %v7018, %v7019
      %v7021 = vsel %vm4178, %v6964, 0.0
      %v7022 = vadd.f32 %v7020, %v7021
      %v7023 = vsel %vm4178, %v6965, 0.0
      %v7024 = vadd.f32 %v7022, %v7023
      %v7025 = vsel %vm4178, %v6966, 0.0
      %v7026 = vadd.f32 %v7024, %v7025
      %v7027 = vsel %vm4178, %v6967, 0.0
      %v7028 = vadd.f32 %v7026, %v7027
      %v7029 = vsel %vm4178, %v6968, 0.0
      %v7030 = vadd.f32 %v7028, %v7029
      %v7031 = vsel %vm4178, %v6969, 0.0
      %v7032 = vadd.f32 %v7030, %v7031
      %v7033 = vrot.slane %v7032, 4
      %v7034 = vadd.f32 %v7032, %v7033
      %v7035 = vrot.slane %v7034, 2
      %v7036 = vadd.f32 %v7034, %v7035
      %v7037 = vrot.slane %v7036, 1
      %v7038 = vadd.f32 %v7036, %v7037
      %7039 = vst.msk [vmem:[%s483] sm:$0x1] %vm6509, %v6937
      %7040 = vst.msk [vmem:[%s488] sm:$0x1] %vm6509, %v7038
      %s7041 = smul.u32 16, %s28
      %p7042 = scmp.lt.s32.totalorder %s27, 1
      %s7043 = scalar_select %p7042, %s27, 1
      %p7044 = scmp.lt.s32.totalorder %s7041, 15
      %s7045 = scalar_select %p7044, %s7041, 15
      %s7046 = smul.addr %s7045, 2
      %s7047 = smul.addr %s7043, 32
      %s7048 = sadd.s32 %s7046, %s7047
      %s7049 = smul.addr %s7048, 4
      %s7050 = scalar_lea.vmem %s6, %s7049
      %s7051 = smul.u32 16, %s28
      %p7052 = scmp.lt.s32.totalorder %s27, 1
      %s7053 = scalar_select %p7052, %s27, 1
      %p7054 = scmp.lt.s32.totalorder %s7051, 15
      %s7055 = scalar_select %p7054, %s7051, 15
      %s7056 = smul.addr %s7055, 2
      %s7057 = smul.addr %s7053, 32
      %s7058 = sadd.s32 %s7056, %s7057
      %s7059 = smul.addr %s7058, 4
      %s7060 = scalar_lea.vmem %s7, %s7059
      %s7061 = sadd.s32 %s27, %s28
      %p7062 = scmp.lt.s32.totalorder %s7061, 1
      %s7063 = scalar_select %p7062, %s7061, 1
      %s7064 = scalar_lea.vmem %s8, %s7063
      %s7065 = sadd.s32 %s27, %s28
      %p7066 = scmp.lt.s32.totalorder %s7065, 1
      %s7067 = scalar_select %p7066, %s7065, 1
      %s7068 = scalar_lea.vmem %s9, %s7067
      %s7069 = sadd.s32 %s27, %s28
      %p7070 = scmp.lt.s32.totalorder %s7069, 1
      %s7071 = scalar_select %p7070, %s7069, 1
      %s7072 = scalar_lea.vmem %s10, %s7071
      %s7073 = sadd.s32 %s27, %s28
      %p7074 = scmp.lt.s32.totalorder %s7073, 1
      %s7075 = scalar_select %p7074, %s7073, 1
      %s7076 = scalar_lea.vmem %s11, %s7075
      // Predicated region
      $region45: #{a_call__.4} parent=43 // pred_check
        %p7077 = pneg %p186
      $region46: #{a_call__.4} parent=43 // pred_check_branch
        %7079 = sbr.rel (%p7077) target = $region48
      $region47: #{a_call__.4} parent=43 // pred_region
        %s7080 = smul.u32 16, %s28
      $region48: #{a_call__.4} parent=43 // pred_fallthru
        _
      // Predicated region
      $region49: #{a_call__.4} parent=43 // pred_check
        %p7081 = pneg %p214
      $region50: #{a_call__.4} parent=43 // pred_check_branch
        %7083 = sbr.rel (%p7081) target = $region52
      $region51: #{a_call__.4} parent=43 // pred_region
        %s7084 = smul.u32 16, %s28
      $region52: #{a_call__.4} parent=43 // pred_fallthru
        _
      // Predicated region
      $region53: #{a_call__.4} parent=43 // pred_check
        %p7085 = pneg %p242
      $region54: #{a_call__.4} parent=43 // pred_check_branch
        %7087 = sbr.rel (%p7085) target = $region56
      $region55: #{a_call__.4} parent=43 // pred_region
        %s7088 = sadd.s32 %s27, %s28
      $region56: #{a_call__.4} parent=43 // pred_fallthru
        _
      // Predicated region
      $region57: #{a_call__.4} parent=43 // pred_check
        %p7089 = pneg %p270
      $region58: #{a_call__.4} parent=43 // pred_check_branch
        %7091 = sbr.rel (%p7089) target = $region60
      $region59: #{a_call__.4} parent=43 // pred_region
        %s7092 = sadd.s32 %s27, %s28
      $region60: #{a_call__.4} parent=43 // pred_fallthru
        _
      // Predicated region
      $region61: #{a_call__.4} parent=43 // pred_check
        %p7093 = pneg %p298
      $region62: #{a_call__.4} parent=43 // pred_check_branch
        %7095 = sbr.rel (%p7093) target = $region64
      $region63: #{a_call__.4} parent=43 // pred_region
        %s7096 = sadd.s32 %s27, %s28
      $region64: #{a_call__.4} parent=43 // pred_fallthru
        _
      // Predicated region
      $region65: #{a_call__.4} parent=43 // pred_check
        %p7097 = pneg %p326
      $region66: #{a_call__.4} parent=43 // pred_check_branch
        %7099 = sbr.rel (%p7097) target = $region68
      $region67: #{a_call__.4} parent=43 // pred_region
        %s7100 = sadd.s32 %s27, %s28
      $region68: #{a_call__.4} parent=43 // pred_fallthru
        _
    $region44: #{a_call__.4} parent=5 // pred_fallthru
      _
    %p7101 = scmp.le.s32.totalorder 2, %s18
    // Predicated region
    $region69: #{a_call__.4} parent=5 // pred_check
      %p7102 = pneg %p7101
    $region70: #{a_call__.4} parent=5 // pred_check_branch
      %7104 = sbr.rel (%p7102) target = $region72
    $region71: #{a_call__.4} parent=5 // pred_region
      %s7105 = ssub.s32 %s18, 2
      // Predicated region
      $region73: #{a_call__.4} parent=71 // pred_check
        %p7106 = pneg %p192
      $region74: #{a_call__.4} parent=71 // pred_check_branch
        %7108 = sbr.rel (%p7106) target = $region76
      $region75: #{a_call__.4} parent=71 // pred_region
        %s7109 = smul.u32 16, %s30
        %p7110 = scmp.lt.s32.totalorder %s29, 1
        %s7111 = scalar_select %p7110, %s29, 1
        %p7112 = scmp.lt.s32.totalorder %s7109, 15
        %s7113 = scalar_select %p7112, %s7109, 15
        %s7114 = smul.addr %s7113, 2
        %s7115 = smul.addr %s7111, 32
        %s7116 = sadd.s32 %s7114, %s7115
        %s7117 = smul.addr %s7116, 4
        %s7118 = scalar_lea.vmem %s6, %s7117
      $region76: #{a_call__.4} parent=71 // pred_fallthru
        _
      // Predicated region
      $region77: #{a_call__.4} parent=71 // pred_check
        %p7119 = pneg %p220
      $region78: #{a_call__.4} parent=71 // pred_check_branch
        %7121 = sbr.rel (%p7119) target = $region80
      $region79: #{a_call__.4} parent=71 // pred_region
        %s7122 = smul.u32 16, %s30
        %p7123 = scmp.lt.s32.totalorder %s29, 1
        %s7124 = scalar_select %p7123, %s29, 1
        %p7125 = scmp.lt.s32.totalorder %s7122, 15
        %s7126 = scalar_select %p7125, %s7122, 15
        %s7127 = smul.addr %s7126, 2
        %s7128 = smul.addr %s7124, 32
        %s7129 = sadd.s32 %s7127, %s7128
        %s7130 = smul.addr %s7129, 4
        %s7131 = scalar_lea.vmem %s7, %s7130
      $region80: #{a_call__.4} parent=71 // pred_fallthru
        _
      // Predicated region
      $region81: #{a_call__.4} parent=71 // pred_check
        %p7132 = pneg %p248
      $region82: #{a_call__.4} parent=71 // pred_check_branch
        %7134 = sbr.rel (%p7132) target = $region84
      $region83: #{a_call__.4} parent=71 // pred_region
        %s7135 = sadd.s32 %s29, %s30
        %p7136 = scmp.lt.s32.totalorder %s7135, 1
        %s7137 = scalar_select %p7136, %s7135, 1
        %s7138 = scalar_lea.vmem %s8, %s7137
      $region84: #{a_call__.4} parent=71 // pred_fallthru
        _
      // Predicated region
      $region85: #{a_call__.4} parent=71 // pred_check
        %p7139 = pneg %p276
      $region86: #{a_call__.4} parent=71 // pred_check_branch
        %7141 = sbr.rel (%p7139) target = $region88
      $region87: #{a_call__.4} parent=71 // pred_region
        %s7142 = sadd.s32 %s29, %s30
        %p7143 = scmp.lt.s32.totalorder %s7142, 1
        %s7144 = scalar_select %p7143, %s7142, 1
        %s7145 = scalar_lea.vmem %s9, %s7144
      $region88: #{a_call__.4} parent=71 // pred_fallthru
        _
      // Predicated region
      $region89: #{a_call__.4} parent=71 // pred_check
        %p7146 = pneg %p304
      $region90: #{a_call__.4} parent=71 // pred_check_branch
        %7148 = sbr.rel (%p7146) target = $region92
      $region91: #{a_call__.4} parent=71 // pred_region
        %s7149 = sadd.s32 %s29, %s30
        %p7150 = scmp.lt.s32.totalorder %s7149, 1
        %s7151 = scalar_select %p7150, %s7149, 1
        %s7152 = scalar_lea.vmem %s10, %s7151
      $region92: #{a_call__.4} parent=71 // pred_fallthru
        _
      // Predicated region
      $region93: #{a_call__.4} parent=71 // pred_check
        %p7153 = pneg %p332
      $region94: #{a_call__.4} parent=71 // pred_check_branch
        %7155 = sbr.rel (%p7153) target = $region96
      $region95: #{a_call__.4} parent=71 // pred_region
        %s7156 = sadd.s32 %s29, %s30
        %p7157 = scmp.lt.s32.totalorder %s7156, 1
        %s7158 = scalar_select %p7157, %s7156, 1
        %s7159 = scalar_lea.vmem %s11, %s7158
      $region96: #{a_call__.4} parent=71 // pred_fallthru
        _
    $region72: #{a_call__.4} parent=5 // pred_fallthru
      _
  $region6: #{a_call__.4} parent=0 // loop_footer
    %s22 = sadd.s32 1, %s18
  $region7: #{a_call__.4} parent=0 // loop_footer_branch
    %17 = sbr.rel target = $region3
  $region8: #{a_call__.4} parent=0 // loop_exit
    _

</llo_original>
